<compile_context>
chip_gen: v5e
topology: v5e:2x2
jax: 0.10.0
libtpu: 0.0.40
codegen_flags: <defaults>
</compile_context>

<pallas_src>
import functools

import jax
import jax.numpy as jnp
from jax.experimental import pallas as pl
from jax.experimental.pallas import tpu as pltpu

ACT_DTYPE = jnp.bfloat16
VMEM_LIMIT = 32 * 1024 * 1024   # safe on v5e/v6e/v7x (worst per-step working set << 4 MiB)

ENC_CFG = [(2, 1)] * 4                               # (stride, pad) encoder convs 1-4
DEC_CFG = [(1, 0), (2, 1), (2, 1), (2, 1), (2, 1)]   # (stride, pad) ConvTranspose layers


# ---------------------------------------------------------------------------
# Pallas kernels
# ---------------------------------------------------------------------------
def _mm_bias_kernel(x_ref, w_ref, b_ref, o_ref, *, relu):
    acc = jnp.dot(x_ref[...], w_ref[...], preferred_element_type=jnp.float32)
    acc = acc + b_ref[...]
    if relu:
        acc = jnp.maximum(acc, 0.0)
    o_ref[...] = acc.astype(o_ref.dtype)


def _mm_kernel(x_ref, w_ref, o_ref, *, relu):
    acc = jnp.dot(x_ref[...], w_ref[...], preferred_element_type=jnp.float32)
    if relu:
        acc = jnp.maximum(acc, 0.0)
    o_ref[...] = acc.astype(o_ref.dtype)


def _head_kernel(p5_ref, w5_ref, b5_ref, wmu_ref, bmu_ref, wlv_ref, blv_ref,
                 eps_ref, wd0_ref, bd0_ref, mu_ref, lv_ref, z_ref, g_ref):
    # encoder conv5 (4x4 valid conv == matmul on (B, 1024)) + ReLU
    h = jnp.dot(p5_ref[...], w5_ref[...], preferred_element_type=jnp.float32)
    h = jnp.maximum(h + b5_ref[...], 0.0).astype(ACT_DTYPE)
    # encoder conv6 (1x1): mu / logvar heads (weight pre-split at init)
    mu = jnp.dot(h, wmu_ref[...], preferred_element_type=jnp.float32) + bmu_ref[...]
    lv = jnp.dot(h, wlv_ref[...], preferred_element_type=jnp.float32) + blv_ref[...]
    mu_ref[...] = mu
    lv_ref[...] = lv
    # reparametrize: z = mu + eps * exp(0.5 * logvar)
    z = mu + eps_ref[...] * jnp.exp(0.5 * lv)
    z_ref[...] = z
    # decoder conv0 (1x1) + ReLU
    g = jnp.dot(z.astype(ACT_DTYPE), wd0_ref[...],
                preferred_element_type=jnp.float32) + bd0_ref[...]
    g_ref[...] = jnp.maximum(g, 0.0).astype(g_ref.dtype)


# ---------------------------------------------------------------------------
# Pallas wrappers
# ---------------------------------------------------------------------------
def _round_up(x, m):
    return (x + m - 1) // m * m


def _pick_tm(M):
    if M > 512:
        return 512                  # big-M layers: large tiles, multi-step parallel grid
    if M >= 256 and M % 16 == 0:
        return M // 2               # still >= 2 grid steps so both v7x cores get work
    return M                        # single full-extent block (no padding needed)


def pallas_matmul(x, w, b=None, *, relu=False, out_dtype=ACT_DTYPE):
    """x(M,K) @ w(K,N) [+ b(1,N)] [+ ReLU], f32 accumulation on the MXU."""
    M, K = x.shape
    N = w.shape[1]
    TM = _pick_tm(M)
    Mp = _round_up(M, TM)
    if Mp != M:
        x = jnp.pad(x, ((0, Mp - M), (0, 0)))

    in_specs = [pl.BlockSpec((TM, K), lambda i: (i, 0)),
                pl.BlockSpec((K, N), lambda i: (0, 0))]
    args = [x, w]
    if b is not None:
        in_specs.append(pl.BlockSpec((1, N), lambda i: (0, 0)))
        args.append(b)
        kernel = functools.partial(_mm_bias_kernel, relu=relu)
    else:
        kernel = functools.partial(_mm_kernel, relu=relu)

    out = pl.pallas_call(
        kernel,
        out_shape=jax.ShapeDtypeStruct((Mp, N), out_dtype),
        grid=(Mp // TM,),
        in_specs=in_specs,
        out_specs=pl.BlockSpec((TM, N), lambda i: (i, 0)),
        compiler_params=pltpu.CompilerParams(
            dimension_semantics=("parallel",),
            vmem_limit_bytes=VMEM_LIMIT),
    )(*args)
    return out if Mp == M else out[:M]


def pallas_head(p5, head, eps, z_dim):
    """Fused: encoder conv5+ReLU, conv6 (mu/logvar), reparametrize, decoder conv0+ReLU."""
    B = p5.shape[0]
    args = (p5, head["w5"], head["b5"], head["wmu"], head["bmu"],
            head["wlv"], head["blv"], eps, head["wd0"], head["bd0"])
    out_shapes = (jax.ShapeDtypeStruct((B, z_dim), jnp.float32),   # mu
                  jax.ShapeDtypeStruct((B, z_dim), jnp.float32),   # logvar
                  jax.ShapeDtypeStruct((B, z_dim), jnp.float32),   # z
                  jax.ShapeDtypeStruct((B, 128), ACT_DTYPE))       # g (decoder input)
    return pl.pallas_call(
        _head_kernel,
        out_shape=out_shapes,
        grid=(1,),
        in_specs=[pl.BlockSpec(a.shape, lambda i: (0, 0)) for a in args],
        out_specs=tuple(pl.BlockSpec(s.shape, lambda i: (0, 0)) for s in out_shapes),
        compiler_params=pltpu.CompilerParams(
            dimension_semantics=("arbitrary",),
            vmem_limit_bytes=VMEM_LIMIT),
    )(*args)


# ---------------------------------------------------------------------------
# Conv lowering glue (plain JAX; small at these shapes)
# ---------------------------------------------------------------------------
def _im2col(x, kh, kw, stride, pad):
    """x NHWC -> patches (B*OH*OW, kh*kw*C), tap ordering (ky, kx, ci)."""
    # TODO(synk): encoder im2col still stages patches through HBM; decoder no longer
    # uses im2col at all (ConvT is matmul+col2im), so remaining traffic is < 1 MiB/layer.
    if pad > 0:
        x = jnp.pad(x, ((0, 0), (pad, pad), (pad, pad), (0, 0)))
    B, H, W, C = x.shape
    OH = (H - kh) // stride + 1
    OW = (W - kw) // stride + 1
    cols = []
    for ky in range(kh):
        for kx in range(kw):
            cols.append(x[:, ky:ky + stride * OH:stride,
                          kx:kx + stride * OW:stride, :])
    patches = jnp.stack(cols, axis=3)                 # (B, OH, OW, kh*kw, C)
    return patches.reshape(B * OH * OW, kh * kw * C), (B, OH, OW)


def conv2d(x, wmat, b, kh, kw, stride, pad, relu):
    """Conv2d via im2col + fused Pallas matmul.  wmat: (kh*kw*Cin, Cout) bf16."""
    patches, (B, OH, OW) = _im2col(x, kh, kw, stride, pad)
    out = pallas_matmul(patches, wmat, b, relu=relu, out_dtype=ACT_DTYPE)
    return out.reshape(B, OH, OW, wmat.shape[1])


def conv_transpose2d(x, wmat, b, kh, kw, stride, pad, relu, out_dtype):
    """ConvTranspose2d as X(B*H*W,Cin) @ W(Cin,kh*kw*Cout) + col2im overlap-add."""
    B, H, W, Cin = x.shape
    cout = wmat.shape[1] // (kh * kw)
    cols = pallas_matmul(x.reshape(B * H * W, Cin), wmat, None,
                         relu=False, out_dtype=jnp.float32)
    cols = cols.reshape(B, H, W, kh, kw, cout)
    ch = (H - 1) * stride + kh
    cw = (W - 1) * stride + kw
    canvas = jnp.zeros((B, ch, cw, cout), jnp.float32)
    for ky in range(kh):
        for kx in range(kw):
            canvas = canvas.at[:, ky:ky + stride * H:stride,
                               kx:kx + stride * W:stride, :].add(cols[:, :, :, ky, kx, :])
    oh = (H - 1) * stride - 2 * pad + kh
    ow = (W - 1) * stride - 2 * pad + kw
    out = canvas[:, pad:pad + oh, pad:pad + ow, :] + b.reshape(1, 1, 1, cout)
    if relu:
        out = jnp.maximum(out, 0.0)
    return out.astype(out_dtype)


# ---------------------------------------------------------------------------
# Parameters (normal_init: W ~ N(0, 0.02), b = 0), pre-converted to matmul layout.
# ---------------------------------------------------------------------------
def _conv_w_to_mat(w):   # PyTorch Conv2d (Cout, Cin, kh, kw) -> (kh*kw*Cin, Cout)
    cout, cin, kh, kw = w.shape
    return jnp.transpose(w, (2, 3, 1, 0)).reshape(kh * kw * cin, cout)


def _convt_w_to_mat(w):  # PyTorch ConvTranspose2d (Cin, Cout, kh, kw) -> (Cin, kh*kw*Cout)
    cin, cout, kh, kw = w.shape
    return jnp.transpose(w, (0, 2, 3, 1)).reshape(cin, kh * kw * cout)


def init_params(key, z_dim=10):
    enc_shapes = [(32, 1, 4, 4), (32, 32, 4, 4), (64, 32, 4, 4), (64, 64, 4, 4),
                  (128, 64, 4, 4), (2 * z_dim, 128, 1, 1)]
    dec_shapes = [(128, z_dim, 1, 1),                              # Conv2d
                  (128, 64, 4, 4), (64, 64, 4, 4), (64, 32, 4, 4), # ConvTranspose2d
                  (32, 32, 4, 4), (32, 1, 4, 4)]
    keys = jax.random.split(key, len(enc_shapes) + len(dec_shapes))
    raw_enc = [0.02 * jax.random.normal(keys[i], s, jnp.float32)
               for i, s in enumerate(enc_shapes)]
    raw_dec = [0.02 * jax.random.normal(keys[len(enc_shapes) + j], s, jnp.float32)
               for j, s in enumerate(dec_shapes)]

    enc = []
    for w in raw_enc[:4]:
        wmat = _conv_w_to_mat(w).astype(ACT_DTYPE)
        enc.append((wmat, jnp.zeros((1, wmat.shape[1]), jnp.float32)))

    w6 = _conv_w_to_mat(raw_enc[5])                    # (128, 2*z_dim)
    head = {
        "w5": _conv_w_to_mat(raw_enc[4]).astype(ACT_DTYPE),        # (1024, 128)
        "b5": jnp.zeros((1, 128), jnp.float32),
        "wmu": w6[:, :z_dim].astype(ACT_DTYPE),
        "bmu": jnp.zeros((1, z_dim), jnp.float32),
        "wlv": w6[:, z_dim:].astype(ACT_DTYPE),
        "blv": jnp.zeros((1, z_dim), jnp.float32),
        "wd0": _conv_w_to_mat(raw_dec[0]).astype(ACT_DTYPE),       # (z_dim, 128)
        "bd0": jnp.zeros((1, 128), jnp.float32),
    }

    dect = []
    for w in raw_dec[1:]:
        wmat = _convt_w_to_mat(w).astype(ACT_DTYPE)
        dect.append((wmat, jnp.zeros((w.shape[1],), jnp.float32)))

    return {"enc": enc, "head": head, "dect": dect}


# ---------------------------------------------------------------------------
# Forward pass (matches FactorVAE1.forward semantics)
# ---------------------------------------------------------------------------
def factor_vae1_forward(x_nchw, params, eps, z_dim=10, no_dec=False):
    x = jnp.transpose(x_nchw, (0, 2, 3, 1)).astype(ACT_DTYPE)     # NCHW -> NHWC, bf16
    B = x.shape[0]

    # ---- encoder convs 1-4 (4x4, stride 2, pad 1) + ReLU ----
    h = x
    for (wmat, b), (s, p) in zip(params["enc"], ENC_CFG):
        h = conv2d(h, wmat, b, 4, 4, s, p, relu=True)

    # ---- fused head: conv5(4x4 valid)+ReLU, conv6(1x1), reparametrize, dec conv0+ReLU
    p5, _ = _im2col(h, 4, 4, 1, 0)                                # (B, 1024)
    mu, logvar, z, g = pallas_head(p5, params["head"], eps, z_dim)
    if no_dec:
        return z                                                   # == z.squeeze()

    # ---- decoder ConvTranspose layers ----
    g = g.reshape(B, 1, 1, 128)
    n_dec = len(params["dect"])
    for j, ((wmat, b), (s, p)) in enumerate(zip(params["dect"], DEC_CFG)):
        last = j == n_dec - 1
        g = conv_transpose2d(g, wmat, b, 4, 4, s, p, relu=not last,
                             out_dtype=jnp.float32 if last else ACT_DTYPE)

    x_recon = jnp.transpose(g, (0, 3, 1, 2)).reshape(x_nchw.shape)  # .view(x.size())
    return x_recon, mu.reshape(B, z_dim, 1, 1), logvar.reshape(B, z_dim, 1, 1), z


if __name__ == "__main__":
    z_dim = 10
    B = 2
    key = jax.random.PRNGKey(0)
    k_params, k_x, k_eps = jax.random.split(key, 3)

    # 2D-Shapes-style input: the encoder architecture implies 64x64, 1 channel.
    x = jax.random.normal(k_x, (B, 1, 64, 64), jnp.float32)
    eps = jax.random.normal(k_eps, (B, z_dim), jnp.float32)        # reparam noise
    params = init_params(k_params, z_dim)

    fwd = jax.jit(functools.partial(factor_vae1_forward, z_dim=z_dim))
    x_recon, mu, logvar, z = fwd(x, params, eps)
    jax.block_until_ready((x_recon, mu, logvar, z))

    assert x_recon.shape == x.shape
    assert mu.shape == (B, z_dim, 1, 1)
    assert logvar.shape == (B, z_dim, 1, 1)
    assert z.shape == (B, z_dim)
    print("KERNEL_OK")
</pallas_src>

<mosaic_0001>
module attributes {stable_mosaic.version = 11 : i64} {
  func.func @_mm_bias_kernel(%arg0: i32, %arg1: memref<512x16xbf16, #tpu.memory_space<vmem>>, %arg2: memref<16x32xbf16, #tpu.memory_space<vmem>>, %arg3: memref<1x32xf32, #tpu.memory_space<vmem>>, %arg4: memref<512x32xbf16, #tpu.memory_space<vmem>>) attributes {dimension_semantics = [#tpu.dimension_semantics<parallel>], iteration_bounds = array<i64: 4>, scalar_prefetch = 0 : i64, scratch_operands = 0 : i64, tpu.core_type = #tpu.core_type<tc>, window_params = [{transform_indices = @transform_0, window_bounds = array<i64: 512, 16>}, {pipeline_mode = #tpu.pipeline_mode<synchronous>, transform_indices = @transform_1, window_bounds = array<i64: 16, 32>}, {pipeline_mode = #tpu.pipeline_mode<synchronous>, transform_indices = @transform_2, window_bounds = array<i64: 1, 32>}, {transform_indices = @transform_3, window_bounds = array<i64: 512, 32>}]} {
    %c0 = arith.constant 0 : index
    %c0_0 = arith.constant 0 : index
    %0 = vector.load %arg1[%c0, %c0_0] : memref<512x16xbf16, #tpu.memory_space<vmem>>, vector<512x16xbf16>
    %c0_1 = arith.constant 0 : index
    %c0_2 = arith.constant 0 : index
    %1 = vector.load %arg2[%c0_1, %c0_2] : memref<16x32xbf16, #tpu.memory_space<vmem>>, vector<16x32xbf16>
    %cst = arith.constant dense<0.000000e+00> : vector<512x32xf32>
    %2 = tpu.matmul %0, %1, %cst {dimension_numbers = #tpu.dot_dimension_numbers<[1], [0], [0], [1], [0, 0, 1, 1], [], []>} : vector<512x16xbf16>, vector<16x32xbf16>, vector<512x32xf32> -> vector<512x32xf32>
    %c0_3 = arith.constant 0 : index
    %c0_4 = arith.constant 0 : index
    %3 = vector.load %arg3[%c0_3, %c0_4] : memref<1x32xf32, #tpu.memory_space<vmem>>, vector<1x32xf32>
    %4 = vector.broadcast %3 : vector<1x32xf32> to vector<512x32xf32>
    %5 = arith.addf %2, %4 : vector<512x32xf32>
    %cst_5 = arith.constant 0.000000e+00 : f32
    %6 = vector.broadcast %cst_5 : f32 to vector<512x32xf32>
    %7 = arith.maximumf %5, %6 : vector<512x32xf32>
    %8 = arith.truncf %7 : vector<512x32xf32> to vector<512x32xbf16>
    %c0_6 = arith.constant 0 : index
    %c0_7 = arith.constant 0 : index
    %9 = vector.load %arg4[%c0_6, %c0_7] : memref<512x32xbf16, #tpu.memory_space<vmem>>, vector<512x32xbf16>
    tpu.vector_store %arg4[%c0_6, %c0_7], %8 {strides = array<i32>} : memref<512x32xbf16, #tpu.memory_space<vmem>>, vector<512x32xbf16>,
    return
  }
  func.func @transform_0(%arg0: i32) -> (i32, i32) {
    %c0_i32 = arith.constant 0 : i32
    %c0_i32_0 = arith.constant 0 : i32
    return %arg0, %c0_i32 : i32, i32
  }
  func.func @transform_1(%arg0: i32) -> (i32, i32) {
    %c0_i32 = arith.constant 0 : i32
    %c0_i32_0 = arith.constant 0 : i32
    %c0_i32_1 = arith.constant 0 : i32
    return %c0_i32, %c0_i32_0 : i32, i32
  }
  func.func @transform_2(%arg0: i32) -> (i32, i32) {
    %c0_i32 = arith.constant 0 : i32
    %c0_i32_0 = arith.constant 0 : i32
    %c0_i32_1 = arith.constant 0 : i32
    return %c0_i32, %c0_i32_0 : i32, i32
  }
  func.func @transform_3(%arg0: i32) -> (i32, i32) {
    %c0_i32 = arith.constant 0 : i32
    %c0_i32_0 = arith.constant 0 : i32
    return %arg0, %c0_i32 : i32, i32
  }
}

module attributes {stable_mosaic.version = 11 : i64} {
  func.func @_mm_bias_kernel(%arg0: i32, %arg1: memref<256x512xbf16, #tpu.memory_space<vmem>>, %arg2: memref<512x32xbf16, #tpu.memory_space<vmem>>, %arg3: memref<1x32xf32, #tpu.memory_space<vmem>>, %arg4: memref<256x32xbf16, #tpu.memory_space<vmem>>) attributes {dimension_semantics = [#tpu.dimension_semantics<parallel>], iteration_bounds = array<i64: 2>, scalar_prefetch = 0 : i64, scratch_operands = 0 : i64, tpu.core_type = #tpu.core_type<tc>, window_params = [{transform_indices = @transform_0, window_bounds = array<i64: 256, 512>}, {pipeline_mode = #tpu.pipeline_mode<synchronous>, transform_indices = @transform_1, window_bounds = array<i64: 512, 32>}, {pipeline_mode = #tpu.pipeline_mode<synchronous>, transform_indices = @transform_2, window_bounds = array<i64: 1, 32>}, {transform_indices = @transform_3, window_bounds = array<i64: 256, 32>}]} {
    %c0 = arith.constant 0 : index
    %c0_0 = arith.constant 0 : index
    %0 = vector.load %arg1[%c0, %c0_0] : memref<256x512xbf16, #tpu.memory_space<vmem>>, vector<256x512xbf16>
    %c0_1 = arith.constant 0 : index
    %c0_2 = arith.constant 0 : index
    %1 = vector.load %arg2[%c0_1, %c0_2] : memref<512x32xbf16, #tpu.memory_space<vmem>>, vector<512x32xbf16>
    %cst = arith.constant dense<0.000000e+00> : vector<256x32xf32>
    %2 = tpu.matmul %0, %1, %cst {dimension_numbers = #tpu.dot_dimension_numbers<[1], [0], [0], [1], [0, 0, 1, 1], [], []>} : vector<256x512xbf16>, vector<512x32xbf16>, vector<256x32xf32> -> vector<256x32xf32>
    %c0_3 = arith.constant 0 : index
    %c0_4 = arith.constant 0 : index
    %3 = vector.load %arg3[%c0_3, %c0_4] : memref<1x32xf32, #tpu.memory_space<vmem>>, vector<1x32xf32>
    %4 = vector.broadcast %3 : vector<1x32xf32> to vector<256x32xf32>
    %5 = arith.addf %2, %4 : vector<256x32xf32>
    %cst_5 = arith.constant 0.000000e+00 : f32
    %6 = vector.broadcast %cst_5 : f32 to vector<256x32xf32>
    %7 = arith.maximumf %5, %6 : vector<256x32xf32>
    %8 = arith.truncf %7 : vector<256x32xf32> to vector<256x32xbf16>
    %c0_6 = arith.constant 0 : index
    %c0_7 = arith.constant 0 : index
    %9 = vector.load %arg4[%c0_6, %c0_7] : memref<256x32xbf16, #tpu.memory_space<vmem>>, vector<256x32xbf16>
    tpu.vector_store %arg4[%c0_6, %c0_7], %8 {strides = array<i32>} : memref<256x32xbf16, #tpu.memory_space<vmem>>, vector<256x32xbf16>,
    return
  }
  func.func @transform_0(%arg0: i32) -> (i32, i32) {
    %c0_i32 = arith.constant 0 : i32
    %c0_i32_0 = arith.constant 0 : i32
    return %arg0, %c0_i32 : i32, i32
  }
  func.func @transform_1(%arg0: i32) -> (i32, i32) {
    %c0_i32 = arith.constant 0 : i32
    %c0_i32_0 = arith.constant 0 : i32
    %c0_i32_1 = arith.constant 0 : i32
    return %c0_i32, %c0_i32_0 : i32, i32
  }
  func.func @transform_2(%arg0: i32) -> (i32, i32) {
    %c0_i32 = arith.constant 0 : i32
    %c0_i32_0 = arith.constant 0 : i32
    %c0_i32_1 = arith.constant 0 : i32
    return %c0_i32, %c0_i32_0 : i32, i32
  }
  func.func @transform_3(%arg0: i32) -> (i32, i32) {
    %c0_i32 = arith.constant 0 : i32
    %c0_i32_0 = arith.constant 0 : i32
    return %arg0, %c0_i32 : i32, i32
  }
}

module attributes {stable_mosaic.version = 11 : i64} {
  func.func @_mm_bias_kernel(%arg0: i32, %arg1: memref<128x512xbf16, #tpu.memory_space<vmem>>, %arg2: memref<512x64xbf16, #tpu.memory_space<vmem>>, %arg3: memref<1x64xf32, #tpu.memory_space<vmem>>, %arg4: memref<128x64xbf16, #tpu.memory_space<vmem>>) attributes {dimension_semantics = [#tpu.dimension_semantics<parallel>], iteration_bounds = array<i64: 1>, scalar_prefetch = 0 : i64, scratch_operands = 0 : i64, tpu.core_type = #tpu.core_type<tc>, window_params = [{transform_indices = @transform_0, window_bounds = array<i64: 128, 512>}, {pipeline_mode = #tpu.pipeline_mode<synchronous>, transform_indices = @transform_1, window_bounds = array<i64: 512, 64>}, {pipeline_mode = #tpu.pipeline_mode<synchronous>, transform_indices = @transform_2, window_bounds = array<i64: 1, 64>}, {transform_indices = @transform_3, window_bounds = array<i64: 128, 64>}]} {
    %c0 = arith.constant 0 : index
    %c0_0 = arith.constant 0 : index
    %0 = vector.load %arg1[%c0, %c0_0] : memref<128x512xbf16, #tpu.memory_space<vmem>>, vector<128x512xbf16>
    %c0_1 = arith.constant 0 : index
    %c0_2 = arith.constant 0 : index
    %1 = vector.load %arg2[%c0_1, %c0_2] : memref<512x64xbf16, #tpu.memory_space<vmem>>, vector<512x64xbf16>
    %cst = arith.constant dense<0.000000e+00> : vector<128x64xf32>
    %2 = tpu.matmul %0, %1, %cst {dimension_numbers = #tpu.dot_dimension_numbers<[1], [0], [0], [1], [0, 0, 1, 1], [], []>} : vector<128x512xbf16>, vector<512x64xbf16>, vector<128x64xf32> -> vector<128x64xf32>
    %c0_3 = arith.constant 0 : index
    %c0_4 = arith.constant 0 : index
    %3 = vector.load %arg3[%c0_3, %c0_4] : memref<1x64xf32, #tpu.memory_space<vmem>>, vector<1x64xf32>
    %4 = vector.broadcast %3 : vector<1x64xf32> to vector<128x64xf32>
    %5 = arith.addf %2, %4 : vector<128x64xf32>
    %cst_5 = arith.constant 0.000000e+00 : f32
    %6 = vector.broadcast %cst_5 : f32 to vector<128x64xf32>
    %7 = arith.maximumf %5, %6 : vector<128x64xf32>
    %8 = arith.truncf %7 : vector<128x64xf32> to vector<128x64xbf16>
    %c0_6 = arith.constant 0 : index
    %c0_7 = arith.constant 0 : index
    %9 = vector.load %arg4[%c0_6, %c0_7] : memref<128x64xbf16, #tpu.memory_space<vmem>>, vector<128x64xbf16>
    tpu.vector_store %arg4[%c0_6, %c0_7], %8 {strides = array<i32>} : memref<128x64xbf16, #tpu.memory_space<vmem>>, vector<128x64xbf16>,
    return
  }
  func.func @transform_0(%arg0: i32) -> (i32, i32) {
    %c0_i32 = arith.constant 0 : i32
    %c0_i32_0 = arith.constant 0 : i32
    return %arg0, %c0_i32 : i32, i32
  }
  func.func @transform_1(%arg0: i32) -> (i32, i32) {
    %c0_i32 = arith.constant 0 : i32
    %c0_i32_0 = arith.constant 0 : i32
    %c0_i32_1 = arith.constant 0 : i32
    return %c0_i32, %c0_i32_0 : i32, i32
  }
  func.func @transform_2(%arg0: i32) -> (i32, i32) {
    %c0_i32 = arith.constant 0 : i32
    %c0_i32_0 = arith.constant 0 : i32
    %c0_i32_1 = arith.constant 0 : i32
    return %c0_i32, %c0_i32_0 : i32, i32
  }
  func.func @transform_3(%arg0: i32) -> (i32, i32) {
    %c0_i32 = arith.constant 0 : i32
    %c0_i32_0 = arith.constant 0 : i32
    return %arg0, %c0_i32 : i32, i32
  }
}

module attributes {stable_mosaic.version = 11 : i64} {
  func.func @_mm_bias_kernel(%arg0: i32, %arg1: memref<32x1024xbf16, #tpu.memory_space<vmem>>, %arg2: memref<1024x64xbf16, #tpu.memory_space<vmem>>, %arg3: memref<1x64xf32, #tpu.memory_space<vmem>>, %arg4: memref<32x64xbf16, #tpu.memory_space<vmem>>) attributes {dimension_semantics = [#tpu.dimension_semantics<parallel>], iteration_bounds = array<i64: 1>, scalar_prefetch = 0 : i64, scratch_operands = 0 : i64, tpu.core_type = #tpu.core_type<tc>, window_params = [{transform_indices = @transform_0, window_bounds = array<i64: 32, 1024>}, {pipeline_mode = #tpu.pipeline_mode<synchronous>, transform_indices = @transform_1, window_bounds = array<i64: 1024, 64>}, {pipeline_mode = #tpu.pipeline_mode<synchronous>, transform_indices = @transform_2, window_bounds = array<i64: 1, 64>}, {transform_indices = @transform_3, window_bounds = array<i64: 32, 64>}]} {
    %c0 = arith.constant 0 : index
    %c0_0 = arith.constant 0 : index
    %0 = vector.load %arg1[%c0, %c0_0] : memref<32x1024xbf16, #tpu.memory_space<vmem>>, vector<32x1024xbf16>
    %c0_1 = arith.constant 0 : index
    %c0_2 = arith.constant 0 : index
    %1 = vector.load %arg2[%c0_1, %c0_2] : memref<1024x64xbf16, #tpu.memory_space<vmem>>, vector<1024x64xbf16>
    %cst = arith.constant dense<0.000000e+00> : vector<32x64xf32>
    %2 = tpu.matmul %0, %1, %cst {dimension_numbers = #tpu.dot_dimension_numbers<[1], [0], [0], [1], [0, 0, 1, 1], [], []>} : vector<32x1024xbf16>, vector<1024x64xbf16>, vector<32x64xf32> -> vector<32x64xf32>
    %c0_3 = arith.constant 0 : index
    %c0_4 = arith.constant 0 : index
    %3 = vector.load %arg3[%c0_3, %c0_4] : memref<1x64xf32, #tpu.memory_space<vmem>>, vector<1x64xf32>
    %4 = vector.broadcast %3 : vector<1x64xf32> to vector<32x64xf32>
    %5 = arith.addf %2, %4 : vector<32x64xf32>
    %cst_5 = arith.constant 0.000000e+00 : f32
    %6 = vector.broadcast %cst_5 : f32 to vector<32x64xf32>
    %7 = arith.maximumf %5, %6 : vector<32x64xf32>
    %8 = arith.truncf %7 : vector<32x64xf32> to vector<32x64xbf16>
    %c0_6 = arith.constant 0 : index
    %c0_7 = arith.constant 0 : index
    %9 = vector.load %arg4[%c0_6, %c0_7] : memref<32x64xbf16, #tpu.memory_space<vmem>>, vector<32x64xbf16>
    tpu.vector_store %arg4[%c0_6, %c0_7], %8 {strides = array<i32>} : memref<32x64xbf16, #tpu.memory_space<vmem>>, vector<32x64xbf16>,
    return
  }
  func.func @transform_0(%arg0: i32) -> (i32, i32) {
    %c0_i32 = arith.constant 0 : i32
    %c0_i32_0 = arith.constant 0 : i32
    return %arg0, %c0_i32 : i32, i32
  }
  func.func @transform_1(%arg0: i32) -> (i32, i32) {
    %c0_i32 = arith.constant 0 : i32
    %c0_i32_0 = arith.constant 0 : i32
    %c0_i32_1 = arith.constant 0 : i32
    return %c0_i32, %c0_i32_0 : i32, i32
  }
  func.func @transform_2(%arg0: i32) -> (i32, i32) {
    %c0_i32 = arith.constant 0 : i32
    %c0_i32_0 = arith.constant 0 : i32
    %c0_i32_1 = arith.constant 0 : i32
    return %c0_i32, %c0_i32_0 : i32, i32
  }
  func.func @transform_3(%arg0: i32) -> (i32, i32) {
    %c0_i32 = arith.constant 0 : i32
    %c0_i32_0 = arith.constant 0 : i32
    return %arg0, %c0_i32 : i32, i32
  }
}

module attributes {stable_mosaic.version = 11 : i64} {
  func.func @_head_kernel(%arg0: i32, %arg1: memref<2x1024xbf16, #tpu.memory_space<vmem>>, %arg2: memref<1024x128xbf16, #tpu.memory_space<vmem>>, %arg3: memref<1x128xf32, #tpu.memory_space<vmem>>, %arg4: memref<128x10xbf16, #tpu.memory_space<vmem>>, %arg5: memref<1x10xf32, #tpu.memory_space<vmem>>, %arg6: memref<128x10xbf16, #tpu.memory_space<vmem>>, %arg7: memref<1x10xf32, #tpu.memory_space<vmem>>, %arg8: memref<2x10xf32, #tpu.memory_space<vmem>>, %arg9: memref<10x128xbf16, #tpu.memory_space<vmem>>, %arg10: memref<1x128xf32, #tpu.memory_space<vmem>>, %arg11: memref<2x10xf32, #tpu.memory_space<vmem>>, %arg12: memref<2x10xf32, #tpu.memory_space<vmem>>, %arg13: memref<2x10xf32, #tpu.memory_space<vmem>>, %arg14: memref<2x128xbf16, #tpu.memory_space<vmem>>) attributes {dimension_semantics = [#tpu.dimension_semantics<arbitrary>], iteration_bounds = array<i64: 1>, scalar_prefetch = 0 : i64, scratch_operands = 0 : i64, tpu.core_type = #tpu.core_type<tc>, window_params = [{pipeline_mode = #tpu.pipeline_mode<synchronous>, transform_indices = @transform_0, window_bounds = array<i64: 2, 1024>}, {pipeline_mode = #tpu.pipeline_mode<synchronous>, transform_indices = @transform_1, window_bounds = array<i64: 1024, 128>}, {pipeline_mode = #tpu.pipeline_mode<synchronous>, transform_indices = @transform_2, window_bounds = array<i64: 1, 128>}, {pipeline_mode = #tpu.pipeline_mode<synchronous>, transform_indices = @transform_3, window_bounds = array<i64: 128, 10>}, {pipeline_mode = #tpu.pipeline_mode<synchronous>, transform_indices = @transform_4, window_bounds = array<i64: 1, 10>}, {pipeline_mode = #tpu.pipeline_mode<synchronous>, transform_indices = @transform_5, window_bounds = array<i64: 128, 10>}, {pipeline_mode = #tpu.pipeline_mode<synchronous>, transform_indices = @transform_6, window_bounds = array<i64: 1, 10>}, {pipeline_mode = #tpu.pipeline_mode<synchronous>, transform_indices = @transform_7, window_bounds = array<i64: 2, 10>}, {pipeline_mode = #tpu.pipeline_mode<synchronous>, transform_indices = @transform_8, window_bounds = array<i64: 10, 128>}, {pipeline_mode = #tpu.pipeline_mode<synchronous>, transform_indices = @transform_9, window_bounds = array<i64: 1, 128>}, {pipeline_mode = #tpu.pipeline_mode<synchronous>, transform_indices = @transform_10, window_bounds = array<i64: 2, 10>}, {pipeline_mode = #tpu.pipeline_mode<synchronous>, transform_indices = @transform_11, window_bounds = array<i64: 2, 10>}, {pipeline_mode = #tpu.pipeline_mode<synchronous>, transform_indices = @transform_12, window_bounds = array<i64: 2, 10>}, {pipeline_mode = #tpu.pipeline_mode<synchronous>, transform_indices = @transform_13, window_bounds = array<i64: 2, 128>}]} {
    %c0 = arith.constant 0 : index
    %c0_0 = arith.constant 0 : index
    %0 = vector.load %arg1[%c0, %c0_0] : memref<2x1024xbf16, #tpu.memory_space<vmem>>, vector<2x1024xbf16>
    %c0_1 = arith.constant 0 : index
    %c0_2 = arith.constant 0 : index
    %1 = vector.load %arg2[%c0_1, %c0_2] : memref<1024x128xbf16, #tpu.memory_space<vmem>>, vector<1024x128xbf16>
    %cst = arith.constant dense<0.000000e+00> : vector<2x128xf32>
    %2 = tpu.matmul %0, %1, %cst {dimension_numbers = #tpu.dot_dimension_numbers<[1], [0], [0], [1], [0, 0, 1, 1], [], []>} : vector<2x1024xbf16>, vector<1024x128xbf16>, vector<2x128xf32> -> vector<2x128xf32>
    %c0_3 = arith.constant 0 : index
    %c0_4 = arith.constant 0 : index
    %3 = vector.load %arg3[%c0_3, %c0_4] : memref<1x128xf32, #tpu.memory_space<vmem>>, vector<1x128xf32>
    %4 = vector.broadcast %3 : vector<1x128xf32> to vector<2x128xf32>
    %5 = arith.addf %2, %4 : vector<2x128xf32>
    %cst_5 = arith.constant 0.000000e+00 : f32
    %6 = vector.broadcast %cst_5 : f32 to vector<2x128xf32>
    %7 = arith.maximumf %5, %6 : vector<2x128xf32>
    %8 = arith.truncf %7 : vector<2x128xf32> to vector<2x128xbf16>
    %c0_6 = arith.constant 0 : index
    %c0_7 = arith.constant 0 : index
    %9 = vector.load %arg4[%c0_6, %c0_7] : memref<128x10xbf16, #tpu.memory_space<vmem>>, vector<128x10xbf16>
    %cst_8 = arith.constant dense<0.000000e+00> : vector<2x10xf32>
    %10 = tpu.matmul %8, %9, %cst_8 {dimension_numbers = #tpu.dot_dimension_numbers<[1], [0], [0], [1], [0, 0, 1, 1], [], []>} : vector<2x128xbf16>, vector<128x10xbf16>, vector<2x10xf32> -> vector<2x10xf32>
    %c0_9 = arith.constant 0 : index
    %c0_10 = arith.constant 0 : index
    %11 = vector.load %arg5[%c0_9, %c0_10] : memref<1x10xf32, #tpu.memory_space<vmem>>, vector<1x10xf32>
    %12 = vector.broadcast %11 : vector<1x10xf32> to vector<2x10xf32>
    %13 = arith.addf %10, %12 : vector<2x10xf32>
    %c0_11 = arith.constant 0 : index
    %c0_12 = arith.constant 0 : index
    %14 = vector.load %arg6[%c0_11, %c0_12] : memref<128x10xbf16, #tpu.memory_space<vmem>>, vector<128x10xbf16>
    %cst_13 = arith.constant dense<0.000000e+00> : vector<2x10xf32>
    %15 = tpu.matmul %8, %14, %cst_13 {dimension_numbers = #tpu.dot_dimension_numbers<[1], [0], [0], [1], [0, 0, 1, 1], [], []>} : vector<2x128xbf16>, vector<128x10xbf16>, vector<2x10xf32> -> vector<2x10xf32>
    %c0_14 = arith.constant 0 : index
    %c0_15 = arith.constant 0 : index
    %16 = vector.load %arg7[%c0_14, %c0_15] : memref<1x10xf32, #tpu.memory_space<vmem>>, vector<1x10xf32>
    %17 = vector.broadcast %16 : vector<1x10xf32> to vector<2x10xf32>
    %18 = arith.addf %15, %17 : vector<2x10xf32>
    %c0_16 = arith.constant 0 : index
    %c0_17 = arith.constant 0 : index
    %19 = vector.load %arg11[%c0_16, %c0_17] : memref<2x10xf32, #tpu.memory_space<vmem>>, vector<2x10xf32>
    tpu.vector_store %arg11[%c0_16, %c0_17], %13 {strides = array<i32>} : memref<2x10xf32, #tpu.memory_space<vmem>>, vector<2x10xf32>,
    %c0_18 = arith.constant 0 : index
    %c0_19 = arith.constant 0 : index
    %20 = vector.load %arg12[%c0_18, %c0_19] : memref<2x10xf32, #tpu.memory_space<vmem>>, vector<2x10xf32>
    tpu.vector_store %arg12[%c0_18, %c0_19], %18 {strides = array<i32>} : memref<2x10xf32, #tpu.memory_space<vmem>>, vector<2x10xf32>,
    %c0_20 = arith.constant 0 : index
    %c0_21 = arith.constant 0 : index
    %21 = vector.load %arg8[%c0_20, %c0_21] : memref<2x10xf32, #tpu.memory_space<vmem>>, vector<2x10xf32>
    %cst_22 = arith.constant 5.000000e-01 : f32
    %22 = vector.broadcast %cst_22 : f32 to vector<2x10xf32>
    %23 = arith.mulf %22, %18 : vector<2x10xf32>
    %24 = math.exp %23 : vector<2x10xf32>
    %25 = arith.mulf %21, %24 : vector<2x10xf32>
    %26 = arith.addf %13, %25 : vector<2x10xf32>
    %c0_23 = arith.constant 0 : index
    %c0_24 = arith.constant 0 : index
    %27 = vector.load %arg13[%c0_23, %c0_24] : memref<2x10xf32, #tpu.memory_space<vmem>>, vector<2x10xf32>
    tpu.vector_store %arg13[%c0_23, %c0_24], %26 {strides = array<i32>} : memref<2x10xf32, #tpu.memory_space<vmem>>, vector<2x10xf32>,
    %28 = arith.truncf %26 : vector<2x10xf32> to vector<2x10xbf16>
    %c0_25 = arith.constant 0 : index
    %c0_26 = arith.constant 0 : index
    %29 = vector.load %arg9[%c0_25, %c0_26] : memref<10x128xbf16, #tpu.memory_space<vmem>>, vector<10x128xbf16>
    %cst_27 = arith.constant dense<0.000000e+00> : vector<2x128xf32>
    %30 = tpu.matmul %28, %29, %cst_27 {dimension_numbers = #tpu.dot_dimension_numbers<[1], [0], [0], [1], [0, 0, 1, 1], [], []>} : vector<2x10xbf16>, vector<10x128xbf16>, vector<2x128xf32> -> vector<2x128xf32>
    %c0_28 = arith.constant 0 : index
    %c0_29 = arith.constant 0 : index
    %31 = vector.load %arg10[%c0_28, %c0_29] : memref<1x128xf32, #tpu.memory_space<vmem>>, vector<1x128xf32>
    %32 = vector.broadcast %31 : vector<1x128xf32> to vector<2x128xf32>
    %33 = arith.addf %30, %32 : vector<2x128xf32>
    %cst_30 = arith.constant 0.000000e+00 : f32
    %34 = vector.broadcast %cst_30 : f32 to vector<2x128xf32>
    %35 = arith.maximumf %33, %34 : vector<2x128xf32>
    %36 = arith.truncf %35 : vector<2x128xf32> to vector<2x128xbf16>
    %c0_31 = arith.constant 0 : index
    %c0_32 = arith.constant 0 : index
    %37 = vector.load %arg14[%c0_31, %c0_32] : memref<2x128xbf16, #tpu.memory_space<vmem>>, vector<2x128xbf16>
    tpu.vector_store %arg14[%c0_31, %c0_32], %36 {strides = array<i32>} : memref<2x128xbf16, #tpu.memory_space<vmem>>, vector<2x128xbf16>,
    return
  }
  func.func @transform_0(%arg0: i32) -> (i32, i32) {
    %c0_i32 = arith.constant 0 : i32
    %c0_i32_0 = arith.constant 0 : i32
    %c0_i32_1 = arith.constant 0 : i32
    return %c0_i32, %c0_i32_0 : i32, i32
  }
  func.func @transform_1(%arg0: i32) -> (i32, i32) {
    %c0_i32 = arith.constant 0 : i32
    %c0_i32_0 = arith.constant 0 : i32
    %c0_i32_1 = arith.constant 0 : i32
    return %c0_i32, %c0_i32_0 : i32, i32
  }
  func.func @transform_2(%arg0: i32) -> (i32, i32) {
    %c0_i32 = arith.constant 0 : i32
    %c0_i32_0 = arith.constant 0 : i32
    %c0_i32_1 = arith.constant 0 : i32
    return %c0_i32, %c0_i32_0 : i32, i32
  }
  func.func @transform_3(%arg0: i32) -> (i32, i32) {
    %c0_i32 = arith.constant 0 : i32
    %c0_i32_0 = arith.constant 0 : i32
    %c0_i32_1 = arith.constant 0 : i32
    return %c0_i32, %c0_i32_0 : i32, i32
  }
  func.func @transform_4(%arg0: i32) -> (i32, i32) {
    %c0_i32 = arith.constant 0 : i32
    %c0_i32_0 = arith.constant 0 : i32
    %c0_i32_1 = arith.constant 0 : i32
    return %c0_i32, %c0_i32_0 : i32, i32
  }
  func.func @transform_5(%arg0: i32) -> (i32, i32) {
    %c0_i32 = arith.constant 0 : i32
    %c0_i32_0 = arith.constant 0 : i32
    %c0_i32_1 = arith.constant 0 : i32
    return %c0_i32, %c0_i32_0 : i32, i32
  }
  func.func @transform_6(%arg0: i32) -> (i32, i32) {
    %c0_i32 = arith.constant 0 : i32
    %c0_i32_0 = arith.constant 0 : i32
    %c0_i32_1 = arith.constant 0 : i32
    return %c0_i32, %c0_i32_0 : i32, i32
  }
  func.func @transform_7(%arg0: i32) -> (i32, i32) {
    %c0_i32 = arith.constant 0 : i32
    %c0_i32_0 = arith.constant 0 : i32
    %c0_i32_1 = arith.constant 0 : i32
    return %c0_i32, %c0_i32_0 : i32, i32
  }
  func.func @transform_8(%arg0: i32) -> (i32, i32) {
    %c0_i32 = arith.constant 0 : i32
    %c0_i32_0 = arith.constant 0 : i32
    %c0_i32_1 = arith.constant 0 : i32
    return %c0_i32, %c0_i32_0 : i32, i32
  }
  func.func @transform_9(%arg0: i32) -> (i32, i32) {
    %c0_i32 = arith.constant 0 : i32
    %c0_i32_0 = arith.constant 0 : i32
    %c0_i32_1 = arith.constant 0 : i32
    return %c0_i32, %c0_i32_0 : i32, i32
  }
  func.func @transform_10(%arg0: i32) -> (i32, i32) {
    %c0_i32 = arith.constant 0 : i32
    %c0_i32_0 = arith.constant 0 : i32
    %c0_i32_1 = arith.constant 0 : i32
    return %c0_i32, %c0_i32_0 : i32, i32
  }
  func.func @transform_11(%arg0: i32) -> (i32, i32) {
    %c0_i32 = arith.constant 0 : i32
    %c0_i32_0 = arith.constant 0 : i32
    %c0_i32_1 = arith.constant 0 : i32
    return %c0_i32, %c0_i32_0 : i32, i32
  }
  func.func @transform_12(%arg0: i32) -> (i32, i32) {
    %c0_i32 = arith.constant 0 : i32
    %c0_i32_0 = arith.constant 0 : i32
    %c0_i32_1 = arith.constant 0 : i32
    return %c0_i32, %c0_i32_0 : i32, i32
  }
  func.func @transform_13(%arg0: i32) -> (i32, i32) {
    %c0_i32 = arith.constant 0 : i32
    %c0_i32_0 = arith.constant 0 : i32
    %c0_i32_1 = arith.constant 0 : i32
    return %c0_i32, %c0_i32_0 : i32, i32
  }
}

module attributes {stable_mosaic.version = 11 : i64} {
  func.func @_mm_kernel(%arg0: i32, %arg1: memref<2x128xbf16, #tpu.memory_space<vmem>>, %arg2: memref<128x1024xbf16, #tpu.memory_space<vmem>>, %arg3: memref<2x1024xf32, #tpu.memory_space<vmem>>) attributes {dimension_semantics = [#tpu.dimension_semantics<parallel>], iteration_bounds = array<i64: 1>, scalar_prefetch = 0 : i64, scratch_operands = 0 : i64, tpu.core_type = #tpu.core_type<tc>, window_params = [{transform_indices = @transform_0, window_bounds = array<i64: 2, 128>}, {pipeline_mode = #tpu.pipeline_mode<synchronous>, transform_indices = @transform_1, window_bounds = array<i64: 128, 1024>}, {transform_indices = @transform_2, window_bounds = array<i64: 2, 1024>}]} {
    %c0 = arith.constant 0 : index
    %c0_0 = arith.constant 0 : index
    %0 = vector.load %arg1[%c0, %c0_0] : memref<2x128xbf16, #tpu.memory_space<vmem>>, vector<2x128xbf16>
    %c0_1 = arith.constant 0 : index
    %c0_2 = arith.constant 0 : index
    %1 = vector.load %arg2[%c0_1, %c0_2] : memref<128x1024xbf16, #tpu.memory_space<vmem>>, vector<128x1024xbf16>
    %cst = arith.constant dense<0.000000e+00> : vector<2x1024xf32>
    %2 = tpu.matmul %0, %1, %cst {dimension_numbers = #tpu.dot_dimension_numbers<[1], [0], [0], [1], [0, 0, 1, 1], [], []>} : vector<2x128xbf16>, vector<128x1024xbf16>, vector<2x1024xf32> -> vector<2x1024xf32>
    %c0_3 = arith.constant 0 : index
    %c0_4 = arith.constant 0 : index
    %3 = vector.load %arg3[%c0_3, %c0_4] : memref<2x1024xf32, #tpu.memory_space<vmem>>, vector<2x1024xf32>
    tpu.vector_store %arg3[%c0_3, %c0_4], %2 {strides = array<i32>} : memref<2x1024xf32, #tpu.memory_space<vmem>>, vector<2x1024xf32>,
    return
  }
  func.func @transform_0(%arg0: i32) -> (i32, i32) {
    %c0_i32 = arith.constant 0 : i32
    %c0_i32_0 = arith.constant 0 : i32
    return %arg0, %c0_i32 : i32, i32
  }
  func.func @transform_1(%arg0: i32) -> (i32, i32) {
    %c0_i32 = arith.constant 0 : i32
    %c0_i32_0 = arith.constant 0 : i32
    %c0_i32_1 = arith.constant 0 : i32
    return %c0_i32, %c0_i32_0 : i32, i32
  }
  func.func @transform_2(%arg0: i32) -> (i32, i32) {
    %c0_i32 = arith.constant 0 : i32
    %c0_i32_0 = arith.constant 0 : i32
    return %arg0, %c0_i32 : i32, i32
  }
}

module attributes {stable_mosaic.version = 11 : i64} {
  func.func @_mm_kernel(%arg0: i32, %arg1: memref<32x64xbf16, #tpu.memory_space<vmem>>, %arg2: memref<64x1024xbf16, #tpu.memory_space<vmem>>, %arg3: memref<32x1024xf32, #tpu.memory_space<vmem>>) attributes {dimension_semantics = [#tpu.dimension_semantics<parallel>], iteration_bounds = array<i64: 1>, scalar_prefetch = 0 : i64, scratch_operands = 0 : i64, tpu.core_type = #tpu.core_type<tc>, window_params = [{transform_indices = @transform_0, window_bounds = array<i64: 32, 64>}, {pipeline_mode = #tpu.pipeline_mode<synchronous>, transform_indices = @transform_1, window_bounds = array<i64: 64, 1024>}, {transform_indices = @transform_2, window_bounds = array<i64: 32, 1024>}]} {
    %c0 = arith.constant 0 : index
    %c0_0 = arith.constant 0 : index
    %0 = vector.load %arg1[%c0, %c0_0] : memref<32x64xbf16, #tpu.memory_space<vmem>>, vector<32x64xbf16>
    %c0_1 = arith.constant 0 : index
    %c0_2 = arith.constant 0 : index
    %1 = vector.load %arg2[%c0_1, %c0_2] : memref<64x1024xbf16, #tpu.memory_space<vmem>>, vector<64x1024xbf16>
    %cst = arith.constant dense<0.000000e+00> : vector<32x1024xf32>
    %2 = tpu.matmul %0, %1, %cst {dimension_numbers = #tpu.dot_dimension_numbers<[1], [0], [0], [1], [0, 0, 1, 1], [], []>} : vector<32x64xbf16>, vector<64x1024xbf16>, vector<32x1024xf32> -> vector<32x1024xf32>
    %c0_3 = arith.constant 0 : index
    %c0_4 = arith.constant 0 : index
    %3 = vector.load %arg3[%c0_3, %c0_4] : memref<32x1024xf32, #tpu.memory_space<vmem>>, vector<32x1024xf32>
    tpu.vector_store %arg3[%c0_3, %c0_4], %2 {strides = array<i32>} : memref<32x1024xf32, #tpu.memory_space<vmem>>, vector<32x1024xf32>,
    return
  }
  func.func @transform_0(%arg0: i32) -> (i32, i32) {
    %c0_i32 = arith.constant 0 : i32
    %c0_i32_0 = arith.constant 0 : i32
    return %arg0, %c0_i32 : i32, i32
  }
  func.func @transform_1(%arg0: i32) -> (i32, i32) {
    %c0_i32 = arith.constant 0 : i32
    %c0_i32_0 = arith.constant 0 : i32
    %c0_i32_1 = arith.constant 0 : i32
    return %c0_i32, %c0_i32_0 : i32, i32
  }
  func.func @transform_2(%arg0: i32) -> (i32, i32) {
    %c0_i32 = arith.constant 0 : i32
    %c0_i32_0 = arith.constant 0 : i32
    return %arg0, %c0_i32 : i32, i32
  }
}

module attributes {stable_mosaic.version = 11 : i64} {
  func.func @_mm_kernel(%arg0: i32, %arg1: memref<128x64xbf16, #tpu.memory_space<vmem>>, %arg2: memref<64x512xbf16, #tpu.memory_space<vmem>>, %arg3: memref<128x512xf32, #tpu.memory_space<vmem>>) attributes {dimension_semantics = [#tpu.dimension_semantics<parallel>], iteration_bounds = array<i64: 1>, scalar_prefetch = 0 : i64, scratch_operands = 0 : i64, tpu.core_type = #tpu.core_type<tc>, window_params = [{transform_indices = @transform_0, window_bounds = array<i64: 128, 64>}, {pipeline_mode = #tpu.pipeline_mode<synchronous>, transform_indices = @transform_1, window_bounds = array<i64: 64, 512>}, {transform_indices = @transform_2, window_bounds = array<i64: 128, 512>}]} {
    %c0 = arith.constant 0 : index
    %c0_0 = arith.constant 0 : index
    %0 = vector.load %arg1[%c0, %c0_0] : memref<128x64xbf16, #tpu.memory_space<vmem>>, vector<128x64xbf16>
    %c0_1 = arith.constant 0 : index
    %c0_2 = arith.constant 0 : index
    %1 = vector.load %arg2[%c0_1, %c0_2] : memref<64x512xbf16, #tpu.memory_space<vmem>>, vector<64x512xbf16>
    %cst = arith.constant dense<0.000000e+00> : vector<128x512xf32>
    %2 = tpu.matmul %0, %1, %cst {dimension_numbers = #tpu.dot_dimension_numbers<[1], [0], [0], [1], [0, 0, 1, 1], [], []>} : vector<128x64xbf16>, vector<64x512xbf16>, vector<128x512xf32> -> vector<128x512xf32>
    %c0_3 = arith.constant 0 : index
    %c0_4 = arith.constant 0 : index
    %3 = vector.load %arg3[%c0_3, %c0_4] : memref<128x512xf32, #tpu.memory_space<vmem>>, vector<128x512xf32>
    tpu.vector_store %arg3[%c0_3, %c0_4], %2 {strides = array<i32>} : memref<128x512xf32, #tpu.memory_space<vmem>>, vector<128x512xf32>,
    return
  }
  func.func @transform_0(%arg0: i32) -> (i32, i32) {
    %c0_i32 = arith.constant 0 : i32
    %c0_i32_0 = arith.constant 0 : i32
    return %arg0, %c0_i32 : i32, i32
  }
  func.func @transform_1(%arg0: i32) -> (i32, i32) {
    %c0_i32 = arith.constant 0 : i32
    %c0_i32_0 = arith.constant 0 : i32
    %c0_i32_1 = arith.constant 0 : i32
    return %c0_i32, %c0_i32_0 : i32, i32
  }
  func.func @transform_2(%arg0: i32) -> (i32, i32) {
    %c0_i32 = arith.constant 0 : i32
    %c0_i32_0 = arith.constant 0 : i32
    return %arg0, %c0_i32 : i32, i32
  }
}

module attributes {stable_mosaic.version = 11 : i64} {
  func.func @_mm_kernel(%arg0: i32, %arg1: memref<256x32xbf16, #tpu.memory_space<vmem>>, %arg2: memref<32x512xbf16, #tpu.memory_space<vmem>>, %arg3: memref<256x512xf32, #tpu.memory_space<vmem>>) attributes {dimension_semantics = [#tpu.dimension_semantics<parallel>], iteration_bounds = array<i64: 2>, scalar_prefetch = 0 : i64, scratch_operands = 0 : i64, tpu.core_type = #tpu.core_type<tc>, window_params = [{transform_indices = @transform_0, window_bounds = array<i64: 256, 32>}, {pipeline_mode = #tpu.pipeline_mode<synchronous>, transform_indices = @transform_1, window_bounds = array<i64: 32, 512>}, {transform_indices = @transform_2, window_bounds = array<i64: 256, 512>}]} {
    %c0 = arith.constant 0 : index
    %c0_0 = arith.constant 0 : index
    %0 = vector.load %arg1[%c0, %c0_0] : memref<256x32xbf16, #tpu.memory_space<vmem>>, vector<256x32xbf16>
    %c0_1 = arith.constant 0 : index
    %c0_2 = arith.constant 0 : index
    %1 = vector.load %arg2[%c0_1, %c0_2] : memref<32x512xbf16, #tpu.memory_space<vmem>>, vector<32x512xbf16>
    %cst = arith.constant dense<0.000000e+00> : vector<256x512xf32>
    %2 = tpu.matmul %0, %1, %cst {dimension_numbers = #tpu.dot_dimension_numbers<[1], [0], [0], [1], [0, 0, 1, 1], [], []>} : vector<256x32xbf16>, vector<32x512xbf16>, vector<256x512xf32> -> vector<256x512xf32>
    %c0_3 = arith.constant 0 : index
    %c0_4 = arith.constant 0 : index
    %3 = vector.load %arg3[%c0_3, %c0_4] : memref<256x512xf32, #tpu.memory_space<vmem>>, vector<256x512xf32>
    tpu.vector_store %arg3[%c0_3, %c0_4], %2 {strides = array<i32>} : memref<256x512xf32, #tpu.memory_space<vmem>>, vector<256x512xf32>,
    return
  }
  func.func @transform_0(%arg0: i32) -> (i32, i32) {
    %c0_i32 = arith.constant 0 : i32
    %c0_i32_0 = arith.constant 0 : i32
    return %arg0, %c0_i32 : i32, i32
  }
  func.func @transform_1(%arg0: i32) -> (i32, i32) {
    %c0_i32 = arith.constant 0 : i32
    %c0_i32_0 = arith.constant 0 : i32
    %c0_i32_1 = arith.constant 0 : i32
    return %c0_i32, %c0_i32_0 : i32, i32
  }
  func.func @transform_2(%arg0: i32) -> (i32, i32) {
    %c0_i32 = arith.constant 0 : i32
    %c0_i32_0 = arith.constant 0 : i32
    return %arg0, %c0_i32 : i32, i32
  }
}

module attributes {stable_mosaic.version = 11 : i64} {
  func.func @_mm_kernel(%arg0: i32, %arg1: memref<512x32xbf16, #tpu.memory_space<vmem>>, %arg2: memref<32x16xbf16, #tpu.memory_space<vmem>>, %arg3: memref<512x16xf32, #tpu.memory_space<vmem>>) attributes {dimension_semantics = [#tpu.dimension_semantics<parallel>], iteration_bounds = array<i64: 4>, scalar_prefetch = 0 : i64, scratch_operands = 0 : i64, tpu.core_type = #tpu.core_type<tc>, window_params = [{transform_indices = @transform_0, window_bounds = array<i64: 512, 32>}, {pipeline_mode = #tpu.pipeline_mode<synchronous>, transform_indices = @transform_1, window_bounds = array<i64: 32, 16>}, {transform_indices = @transform_2, window_bounds = array<i64: 512, 16>}]} {
    %c0 = arith.constant 0 : index
    %c0_0 = arith.constant 0 : index
    %0 = vector.load %arg1[%c0, %c0_0] : memref<512x32xbf16, #tpu.memory_space<vmem>>, vector<512x32xbf16>
    %c0_1 = arith.constant 0 : index
    %c0_2 = arith.constant 0 : index
    %1 = vector.load %arg2[%c0_1, %c0_2] : memref<32x16xbf16, #tpu.memory_space<vmem>>, vector<32x16xbf16>
    %cst = arith.constant dense<0.000000e+00> : vector<512x16xf32>
    %2 = tpu.matmul %0, %1, %cst {dimension_numbers = #tpu.dot_dimension_numbers<[1], [0], [0], [1], [0, 0, 1, 1], [], []>} : vector<512x32xbf16>, vector<32x16xbf16>, vector<512x16xf32> -> vector<512x16xf32>
    %c0_3 = arith.constant 0 : index
    %c0_4 = arith.constant 0 : index
    %3 = vector.load %arg3[%c0_3, %c0_4] : memref<512x16xf32, #tpu.memory_space<vmem>>, vector<512x16xf32>
    tpu.vector_store %arg3[%c0_3, %c0_4], %2 {strides = array<i32>} : memref<512x16xf32, #tpu.memory_space<vmem>>, vector<512x16xf32>,
    return
  }
  func.func @transform_0(%arg0: i32) -> (i32, i32) {
    %c0_i32 = arith.constant 0 : i32
    %c0_i32_0 = arith.constant 0 : i32
    return %arg0, %c0_i32 : i32, i32
  }
  func.func @transform_1(%arg0: i32) -> (i32, i32) {
    %c0_i32 = arith.constant 0 : i32
    %c0_i32_0 = arith.constant 0 : i32
    %c0_i32_1 = arith.constant 0 : i32
    return %c0_i32, %c0_i32_0 : i32, i32
  }
  func.func @transform_2(%arg0: i32) -> (i32, i32) {
    %c0_i32 = arith.constant 0 : i32
    %c0_i32_0 = arith.constant 0 : i32
    return %arg0, %c0_i32 : i32, i32
  }
}

</mosaic_0001>

<llo_original>
// kernel: factor_vae1_forward.10
$region0: #{factor_vae1_forward.10}
  #allocation0 [shape = 'u32[]', space=smem, size = 0x4, offset = 0x4, fixed_abs, tag = 'smem constant byte address 0x4 - core index']
  #allocation1 [shape = 'u32[72,128]{1,0:T(1,128)}', space=vmem, size = 0x9000, scoped, tag = 'internal scratch']
  %s0 = inlined_call_operand.vmem [shape: bf16[2048,16], index: 0, kind: input, shape index: {}]
  %s1 = inlined_call_operand.hbm [shape: bf16[16,32], index: 1, kind: input, shape index: {}]
  %s2 = inlined_call_operand.hbm [shape: f32[1,32], index: 2, kind: input, shape index: {}]
  %s3 = inlined_call_operand.vmem [shape: bf16[2048,32], index: 3, kind: output, shape index: {}]
  %s4 = sld [smem:[#allocation0]]
  $region53: #{factor_vae1_forward.10} parent=0
    _
  %s6 = ssub.s32 1, %s4
  %s7 = scalar_select 0, %s6, %s4
  $region1: #{factor_vae1_forward.10} parent=0
    #allocation2 [shape = 'u8[4096]{0}', space=vmem, size = 0x1000, scoped, tag = 'input window, operand 1, single buffered']
    #allocation3 [shape = 's32[2]{0}', space=sflag, size = 0x8, scoped, tag = 'scoped memory for factor_vae1_forward.10']
    #allocation4 [shape = 'u8[512]{0}', space=vmem, size = 0x400, scoped, tag = 'input window, operand 2, single buffered']
    #allocation5 [shape = 's32[1]{0}', space=sflag, size = 0x4, scoped, tag = 'scoped memory for factor_vae1_forward.10']
    %8 = vsyncpa [#allocation3], 0
    %9 = vsyncpa [#allocation5], 0
    loop: start=0, step=1, limit=6
    $region2: #{factor_vae1_forward.10} parent=1 // loop_pre_header
      _
    $region3: #{factor_vae1_forward.10} parent=1 // loop_header
      %s11 = sphi 0, %s15
      %p12 = scmp.ge.s32.totalorder %s11, 6
      %s21 = sphi 0, %s23
      %s24 = sphi 0, %s21
      %s25 = sphi 0, %s24
      %s41 = sphi 0, %s25
      %s45 = sphi 0, %s45
      %s47 = sphi 0, %s45
      %s48 = sphi 0, %s47
      %s62 = sphi 0, %s48
      %s66 = sphi 0, %s66
      %s68 = sphi 0, %s66
      %s69 = sphi 0, %s68
      %s83 = sphi 0, %s69
      %s89 = sphi 0, %s91
      %s92 = sphi 0, %s89
      %s93 = sphi 0, %s92
      %s109 = sphi 0, %s93
    $region4: #{factor_vae1_forward.10} parent=1 // loop_header_branch
      %14 = sbr.rel (%p12) target = $region8
    $region5: #{factor_vae1_forward.10} parent=1 // loop_body
      %s16 = ssub.s32 %s11, 1
      %s17 = ssub.s32 %s11, 2
      %s18 = sadd.s32 %s11, 1
      %s19 = ssub.s32 %s11, %s18
      %p20 = scmp.eq.s32.totalorder %s19, 0
      %s22 = sadd.s32 %s21, 1
      %s23 = scalar_select %p20, %s21, %s22
      %p26 = pneg %p20
      %p27 = scmp.eq.s32.totalorder %s11, 3
      %p28 = por %p26, %p27
      %p29 = scmp.ne.s32.totalorder %s21, %s24
      %p30 = scmp.eq.s32.totalorder %s11, 0
      %p31 = por %p29, %p30
      %p32 = scmp.ne.s32.totalorder %s21, %s24
      %p33 = scmp.eq.s32.totalorder %s16, 3
      %p34 = por %p32, %p33
      %p35 = scmp.ne.s32.totalorder %s24, %s25
      %p36 = scmp.eq.s32.totalorder %s16, 0
      %p37 = por %p35, %p36
      %p38 = scmp.ne.s32.totalorder %s24, %s25
      %p39 = scmp.eq.s32.totalorder %s17, 3
      %p40 = por %p38, %p39
      %p42 = scmp.ne.s32.totalorder %s25, %s41
      %p43 = scmp.eq.s32.totalorder %s17, 0
      %p44 = por %p42, %p43
      %s46 = sadd.s32 %s45, 1
      %p49 = scmp.eq.s32.totalorder %s11, 3
      %p50 = scmp.ne.s32.totalorder %s45, %s47
      %p51 = scmp.eq.s32.totalorder %s11, 0
      %p52 = por %p50, %p51
      %p53 = scmp.ne.s32.totalorder %s45, %s47
      %p54 = scmp.eq.s32.totalorder %s16, 3
      %p55 = por %p53, %p54
      %p56 = scmp.ne.s32.totalorder %s47, %s48
      %p57 = scmp.eq.s32.totalorder %s16, 0
      %p58 = por %p56, %p57
      %p59 = scmp.ne.s32.totalorder %s47, %s48
      %p60 = scmp.eq.s32.totalorder %s17, 3
      %p61 = por %p59, %p60
      %p63 = scmp.ne.s32.totalorder %s48, %s62
      %p64 = scmp.eq.s32.totalorder %s17, 0
      %p65 = por %p63, %p64
      %s67 = sadd.s32 %s66, 1
      %p70 = scmp.eq.s32.totalorder %s11, 3
      %p71 = scmp.ne.s32.totalorder %s66, %s68
      %p72 = scmp.eq.s32.totalorder %s11, 0
      %p73 = por %p71, %p72
      %p74 = scmp.ne.s32.totalorder %s66, %s68
      %p75 = scmp.eq.s32.totalorder %s16, 3
      %p76 = por %p74, %p75
      %p77 = scmp.ne.s32.totalorder %s68, %s69
      %p78 = scmp.eq.s32.totalorder %s16, 0
      %p79 = por %p77, %p78
      %p80 = scmp.ne.s32.totalorder %s68, %s69
      %p81 = scmp.eq.s32.totalorder %s17, 3
      %p82 = por %p80, %p81
      %p84 = scmp.ne.s32.totalorder %s69, %s83
      %p85 = scmp.eq.s32.totalorder %s17, 0
      %p86 = por %p84, %p85
      %s87 = ssub.s32 %s11, %s18
      %p88 = scmp.eq.s32.totalorder %s87, 0
      %s90 = sadd.s32 %s89, 1
      %s91 = scalar_select %p88, %s89, %s90
      %p94 = pneg %p88
      %p95 = scmp.eq.s32.totalorder %s11, 3
      %p96 = por %p94, %p95
      %p97 = scmp.ne.s32.totalorder %s89, %s92
      %p98 = scmp.eq.s32.totalorder %s11, 0
      %p99 = por %p97, %p98
      %p100 = scmp.ne.s32.totalorder %s89, %s92
      %p101 = scmp.eq.s32.totalorder %s16, 3
      %p102 = por %p100, %p101
      %p103 = scmp.ne.s32.totalorder %s92, %s93
      %p104 = scmp.eq.s32.totalorder %s16, 0
      %p105 = por %p103, %p104
      %p106 = scmp.ne.s32.totalorder %s92, %s93
      %p107 = scmp.eq.s32.totalorder %s17, 3
      %p108 = por %p106, %p107
      %p110 = scmp.ne.s32.totalorder %s93, %s109
      %p111 = scmp.eq.s32.totalorder %s17, 0
      %p112 = por %p110, %p111
      %p113 = scmp.le.s32.totalorder 1, %s11
      %p114 = scmp.lt.s32.totalorder %s11, 5
      %p115 = pnand %p113, %p114
      %p116 = pneg %p115
      // Predicated region
      $region9: #{factor_vae1_forward.10} parent=5 // pred_check
        _
      $region10: #{factor_vae1_forward.10} parent=5 // pred_check_branch
        %118 = sbr.rel (%p115) target = $region12
      $region11: #{factor_vae1_forward.10} parent=5 // pred_region
        %s119 = ssub.s32 %s11, 1
        // Predicated region
        $region13: #{factor_vae1_forward.10} parent=11 // pred_check
          %p120 = pneg %p58
        $region14: #{factor_vae1_forward.10} parent=11 // pred_check_branch
          %122 = sbr.rel (%p120) target = $region16
        $region15: #{factor_vae1_forward.10} parent=11 // pred_region
          %124 = vsyncadd [#allocation3], 0
          %s125 = sshll.u32 %s1, 4
          %s126 = int_to_ptr.hbm [resolvable:$true] %s125
          %s127 = sshll.u32 [#allocation2], 4
          %s128 = int_to_ptr.vmem [resolvable:$true] %s127
          %133 = dma.hbm_to_vmem [thread:$0]  %s126, 128, %s128, [#allocation3], 64, 64, 4
        $region16: #{factor_vae1_forward.10} parent=11 // pred_fallthru
          _
        // Predicated region
        $region17: #{factor_vae1_forward.10} parent=11 // pred_check
          %p134 = pneg %p79
        $region18: #{factor_vae1_forward.10} parent=11 // pred_check_branch
          %136 = sbr.rel (%p134) target = $region20
        $region19: #{factor_vae1_forward.10} parent=11 // pred_region
          %138 = vsyncadd [#allocation5], 0
          %s140 = sshll.u32 %s2, 4
          %s141 = int_to_ptr.hbm [resolvable:$true] %s140
          %s142 = sshll.u32 [#allocation4], 4
          %s143 = int_to_ptr.vmem [resolvable:$true] %s142
          %145 = dma.hbm_to_vmem [thread:$0]  %s141, 16, %s143, [#allocation5]
        $region20: #{factor_vae1_forward.10} parent=11 // pred_fallthru
          _
      $region12: #{factor_vae1_forward.10} parent=5 // pred_fallthru
        _
      %p146 = scmp.lt.s32.totalorder %s11, 4
      // Predicated region
      $region21: #{factor_vae1_forward.10} parent=5 // pred_check
        %p147 = pneg %p146
      $region22: #{factor_vae1_forward.10} parent=5 // pred_check_branch
        %149 = sbr.rel (%p147) target = $region24
      $region23: #{factor_vae1_forward.10} parent=5 // pred_region
        // Predicated region
        $region25: #{factor_vae1_forward.10} parent=23 // pred_check
          %p150 = pneg %p31
        $region26: #{factor_vae1_forward.10} parent=23 // pred_check_branch
          %152 = sbr.rel (%p150) target = $region28
        $region27: #{factor_vae1_forward.10} parent=23 // pred_region
          %s153 = smul.u32 64, %s11
          %p154 = scmp.lt.s32.totalorder %s153, 255
          %s155 = scalar_select %p154, %s153, 255
          %s156 = smul.addr %s155, 4
          %s157 = scalar_lea.vmem %s0, %s156
          %s158 = smul.u32 64, %s11
        $region28: #{factor_vae1_forward.10} parent=23 // pred_fallthru
          _
      $region24: #{factor_vae1_forward.10} parent=5 // pred_fallthru
        _
      %p159 = scmp.le.s32.totalorder 1, %s11
      %p160 = scmp.lt.s32.totalorder %s11, 5
      %p161 = pnand %p159, %p160
      %p162 = pneg %p161
      // Predicated region
      $region29: #{factor_vae1_forward.10} parent=5 // pred_check
        _
      $region30: #{factor_vae1_forward.10} parent=5 // pred_check_branch
        %164 = sbr.rel (%p161) target = $region32
      $region31: #{factor_vae1_forward.10} parent=5 // pred_region
        %s165 = ssub.s32 %s11, 1
        // Predicated region
        $region33: #{factor_vae1_forward.10} parent=31 // pred_check
          %p166 = pneg %p58
        $region34: #{factor_vae1_forward.10} parent=31 // pred_check_branch
          %168 = sbr.rel (%p166) target = $region36
        $region35: #{factor_vae1_forward.10} parent=31 // pred_region
          %170 = dma.done [#allocation3], 128
        $region36: #{factor_vae1_forward.10} parent=31 // pred_fallthru
          _
        // Predicated region
        $region37: #{factor_vae1_forward.10} parent=31 // pred_check
          %p171 = pneg %p79
        $region38: #{factor_vae1_forward.10} parent=31 // pred_check_branch
          %173 = sbr.rel (%p171) target = $region40
        $region39: #{factor_vae1_forward.10} parent=31 // pred_region
          %175 = dma.done [#allocation5], 16
        $region40: #{factor_vae1_forward.10} parent=31 // pred_fallthru
          _
        %s176 = smul.u32 64, %s16
        %p177 = scmp.lt.s32.totalorder %s176, 255
        %s178 = scalar_select %p177, %s176, 255
        %s179 = smul.addr %s178, 4
        %s180 = scalar_lea.vmem %s0, %s179
        %p181 = pneg %p37
        %p182 = pneg %p34
        %p183 = pneg %p58
        %p184 = pneg %p55
        %p185 = pneg %p79
        %p186 = pneg %p76
        %p187 = pneg %p105
        %p188 = pneg %p102
        %s189 = smul.u32 64, %s16
        %p190 = scmp.lt.s32.totalorder %s189, 255
        %s191 = scalar_select %p190, %s189, 255
        %s192 = smul.addr %s191, 4
        %s193 = scalar_lea.vmem %s3, %s192
        %s194 = smul.u32 64, %s16
        %p195 = scmp.lt.s32.totalorder %s194, 255
        %s196 = scalar_select %p195, %s194, 255
        %s197 = smul.addr %s196, 4
        %s198 = scalar_lea.vmem %s0, %s197
        %s199 = smul.u32 64, %s16
        %s200 = smul.u32 64, %s16
        %p201 = scmp.lt.s32.totalorder %s200, 255
        %s202 = scalar_select %p201, %s200, 255
        %s203 = smul.addr %s202, 4
        %s204 = scalar_lea.vmem %s3, %s203
        %s205 = smul.u32 64, %s16
        %v207 = vld [vmem:[%s198] sm:$0xf]
        %v208 = vld [vmem:[%s198 + $0x4] sm:$0xf]
        %v209 = vld [vmem:[%s198 + $0x8] sm:$0xf]
        %v210 = vld [vmem:[%s198 + $0xc] sm:$0xf]
        %v211 = vld [vmem:[%s198 + $0x10] sm:$0xf]
        %v212 = vld [vmem:[%s198 + $0x14] sm:$0xf]
        %v213 = vld [vmem:[%s198 + $0x18] sm:$0xf]
        %v214 = vld [vmem:[%s198 + $0x1c] sm:$0xf]
        %v215 = vld [vmem:[%s198 + $0x20] sm:$0xf]
        %v216 = vld [vmem:[%s198 + $0x24] sm:$0xf]
        %v217 = vld [vmem:[%s198 + $0x28] sm:$0xf]
        %v218 = vld [vmem:[%s198 + $0x2c] sm:$0xf]
        %v219 = vld [vmem:[%s198 + $0x30] sm:$0xf]
        %v220 = vld [vmem:[%s198 + $0x34] sm:$0xf]
        %v221 = vld [vmem:[%s198 + $0x38] sm:$0xf]
        %v222 = vld [vmem:[%s198 + $0x3c] sm:$0xf]
        %v223 = vld [vmem:[%s198 + $0x40] sm:$0xf]
        %v224 = vld [vmem:[%s198 + $0x44] sm:$0xf]
        %v225 = vld [vmem:[%s198 + $0x48] sm:$0xf]
        %v226 = vld [vmem:[%s198 + $0x4c] sm:$0xf]
        %v227 = vld [vmem:[%s198 + $0x50] sm:$0xf]
        %v228 = vld [vmem:[%s198 + $0x54] sm:$0xf]
        %v229 = vld [vmem:[%s198 + $0x58] sm:$0xf]
        %v230 = vld [vmem:[%s198 + $0x5c] sm:$0xf]
        %v231 = vld [vmem:[%s198 + $0x60] sm:$0xf]
        %v232 = vld [vmem:[%s198 + $0x64] sm:$0xf]
        %v233 = vld [vmem:[%s198 + $0x68] sm:$0xf]
        %v234 = vld [vmem:[%s198 + $0x6c] sm:$0xf]
        %v235 = vld [vmem:[%s198 + $0x70] sm:$0xf]
        %v236 = vld [vmem:[%s198 + $0x74] sm:$0xf]
        %v237 = vld [vmem:[%s198 + $0x78] sm:$0xf]
        %v238 = vld [vmem:[%s198 + $0x7c] sm:$0xf]
        %v239 = vld [vmem:[%s198 + $0x80] sm:$0xf]
        %v240 = vld [vmem:[%s198 + $0x84] sm:$0xf]
        %v241 = vld [vmem:[%s198 + $0x88] sm:$0xf]
        %v242 = vld [vmem:[%s198 + $0x8c] sm:$0xf]
        %v243 = vld [vmem:[%s198 + $0x90] sm:$0xf]
        %v244 = vld [vmem:[%s198 + $0x94] sm:$0xf]
        %v245 = vld [vmem:[%s198 + $0x98] sm:$0xf]
        %v246 = vld [vmem:[%s198 + $0x9c] sm:$0xf]
        %v247 = vld [vmem:[%s198 + $0xa0] sm:$0xf]
        %v248 = vld [vmem:[%s198 + $0xa4] sm:$0xf]
        %v249 = vld [vmem:[%s198 + $0xa8] sm:$0xf]
        %v250 = vld [vmem:[%s198 + $0xac] sm:$0xf]
        %v251 = vld [vmem:[%s198 + $0xb0] sm:$0xf]
        %v252 = vld [vmem:[%s198 + $0xb4] sm:$0xf]
        %v253 = vld [vmem:[%s198 + $0xb8] sm:$0xf]
        %v254 = vld [vmem:[%s198 + $0xbc] sm:$0xf]
        %v255 = vld [vmem:[%s198 + $0xc0] sm:$0xf]
        %v256 = vld [vmem:[%s198 + $0xc4] sm:$0xf]
        %v257 = vld [vmem:[%s198 + $0xc8] sm:$0xf]
        %v258 = vld [vmem:[%s198 + $0xcc] sm:$0xf]
        %v259 = vld [vmem:[%s198 + $0xd0] sm:$0xf]
        %v260 = vld [vmem:[%s198 + $0xd4] sm:$0xf]
        %v261 = vld [vmem:[%s198 + $0xd8] sm:$0xf]
        %v262 = vld [vmem:[%s198 + $0xdc] sm:$0xf]
        %v263 = vld [vmem:[%s198 + $0xe0] sm:$0xf]
        %v264 = vld [vmem:[%s198 + $0xe4] sm:$0xf]
        %v265 = vld [vmem:[%s198 + $0xe8] sm:$0xf]
        %v266 = vld [vmem:[%s198 + $0xec] sm:$0xf]
        %v267 = vld [vmem:[%s198 + $0xf0] sm:$0xf]
        %v268 = vld [vmem:[%s198 + $0xf4] sm:$0xf]
        %v269 = vld [vmem:[%s198 + $0xf8] sm:$0xf]
        %v270 = vld [vmem:[%s198 + $0xfc] sm:$0xf]
        %v271 = vld [vmem:[#allocation2] sm:$0xf]
        %v272 = vld [vmem:[#allocation2 + $0x4] sm:$0xf]
        %v273 = vld [vmem:[#allocation4] sm:$0x1]
        %v275 = vperm.slane %v273, 0
        %v341 = vunpack.c.l.b16 %v207
        %v342 = vunpack.c.l.b16 %v208
        %v343 = vunpack.c.l.b16 %v209
        %v344 = vunpack.c.l.b16 %v210
        %v345 = vunpack.c.l.b16 %v211
        %v346 = vunpack.c.l.b16 %v212
        %v347 = vunpack.c.l.b16 %v213
        %v348 = vunpack.c.l.b16 %v214
        %v349 = vunpack.c.l.b16 %v215
        %v350 = vunpack.c.l.b16 %v216
        %v351 = vunpack.c.l.b16 %v217
        %v352 = vunpack.c.l.b16 %v218
        %v353 = vunpack.c.l.b16 %v219
        %v354 = vunpack.c.l.b16 %v220
        %v355 = vunpack.c.l.b16 %v221
        %v356 = vunpack.c.l.b16 %v222
        %v357 = vunpack.c.l.b16 %v223
        %v358 = vunpack.c.l.b16 %v224
        %v359 = vunpack.c.l.b16 %v225
        %v360 = vunpack.c.l.b16 %v226
        %v361 = vunpack.c.l.b16 %v227
        %v362 = vunpack.c.l.b16 %v228
        %v363 = vunpack.c.l.b16 %v229
        %v364 = vunpack.c.l.b16 %v230
        %v365 = vunpack.c.l.b16 %v231
        %v366 = vunpack.c.l.b16 %v232
        %v367 = vunpack.c.l.b16 %v233
        %v368 = vunpack.c.l.b16 %v234
        %v369 = vunpack.c.l.b16 %v235
        %v370 = vunpack.c.l.b16 %v236
        %v371 = vunpack.c.l.b16 %v237
        %v372 = vunpack.c.l.b16 %v238
        %v373 = vunpack.c.l.b16 %v239
        %v374 = vunpack.c.l.b16 %v240
        %v375 = vunpack.c.l.b16 %v241
        %v376 = vunpack.c.l.b16 %v242
        %v377 = vunpack.c.l.b16 %v243
        %v378 = vunpack.c.l.b16 %v244
        %v379 = vunpack.c.l.b16 %v245
        %v380 = vunpack.c.l.b16 %v246
        %v381 = vunpack.c.l.b16 %v247
        %v382 = vunpack.c.l.b16 %v248
        %v383 = vunpack.c.l.b16 %v249
        %v384 = vunpack.c.l.b16 %v250
        %v385 = vunpack.c.l.b16 %v251
        %v386 = vunpack.c.l.b16 %v252
        %v387 = vunpack.c.l.b16 %v253
        %v388 = vunpack.c.l.b16 %v254
        %v389 = vunpack.c.l.b16 %v255
        %v390 = vunpack.c.l.b16 %v256
        %v391 = vunpack.c.l.b16 %v257
        %v392 = vunpack.c.l.b16 %v258
        %v393 = vunpack.c.l.b16 %v259
        %v394 = vunpack.c.l.b16 %v260
        %v395 = vunpack.c.l.b16 %v261
        %v396 = vunpack.c.l.b16 %v262
        %v397 = vunpack.c.l.b16 %v263
        %v398 = vunpack.c.l.b16 %v264
        %v399 = vunpack.c.l.b16 %v265
        %v400 = vunpack.c.l.b16 %v266
        %v401 = vunpack.c.l.b16 %v267
        %v402 = vunpack.c.l.b16 %v268
        %v403 = vunpack.c.l.b16 %v269
        %v404 = vunpack.c.l.b16 %v270
        %v405 = vpack.c.b16 %v342, %v341
        %v406 = vpack.c.b16 %v344, %v343
        %v407 = vpack.c.b16 %v346, %v345
        %v408 = vpack.c.b16 %v348, %v347
        %v409 = vpack.c.b16 %v350, %v349
        %v410 = vpack.c.b16 %v352, %v351
        %v411 = vpack.c.b16 %v354, %v353
        %v412 = vpack.c.b16 %v356, %v355
        %v413 = vpack.c.b16 %v358, %v357
        %v414 = vpack.c.b16 %v360, %v359
        %v415 = vpack.c.b16 %v362, %v361
        %v416 = vpack.c.b16 %v364, %v363
        %v417 = vpack.c.b16 %v366, %v365
        %v418 = vpack.c.b16 %v368, %v367
        %v419 = vpack.c.b16 %v370, %v369
        %v420 = vpack.c.b16 %v372, %v371
        %v421 = vpack.c.b16 %v374, %v373
        %v422 = vpack.c.b16 %v376, %v375
        %v423 = vpack.c.b16 %v378, %v377
        %v424 = vpack.c.b16 %v380, %v379
        %v425 = vpack.c.b16 %v382, %v381
        %v426 = vpack.c.b16 %v384, %v383
        %v427 = vpack.c.b16 %v386, %v385
        %v428 = vpack.c.b16 %v388, %v387
        %v429 = vpack.c.b16 %v390, %v389
        %v430 = vpack.c.b16 %v392, %v391
        %v431 = vpack.c.b16 %v394, %v393
        %v432 = vpack.c.b16 %v396, %v395
        %v433 = vpack.c.b16 %v398, %v397
        %v434 = vpack.c.b16 %v400, %v399
        %v435 = vpack.c.b16 %v402, %v401
        %v436 = vpack.c.b16 %v404, %v403
        %v439 = vunpack.c.l.b16 %v271
        %v440 = vunpack.c.l.b16 %v272
        %v441 = vpack.c.b16 %v440, %v439
        %vm443 = vcmask 130048
        %v445 = vsel %vm443, %v405, 0
        %v448 = vsel %vm443, %v406, 0
        %v451 = vsel %vm443, %v407, 0
        %v454 = vsel %vm443, %v408, 0
        %v457 = vsel %vm443, %v409, 0
        %v460 = vsel %vm443, %v410, 0
        %v463 = vsel %vm443, %v411, 0
        %v466 = vsel %vm443, %v412, 0
        %v469 = vsel %vm443, %v413, 0
        %v472 = vsel %vm443, %v414, 0
        %v475 = vsel %vm443, %v415, 0
        %v478 = vsel %vm443, %v416, 0
        %v481 = vsel %vm443, %v417, 0
        %v484 = vsel %vm443, %v418, 0
        %v487 = vsel %vm443, %v419, 0
        %v490 = vsel %vm443, %v420, 0
        %v493 = vsel %vm443, %v421, 0
        %v496 = vsel %vm443, %v422, 0
        %v499 = vsel %vm443, %v423, 0
        %v502 = vsel %vm443, %v424, 0
        %v505 = vsel %vm443, %v425, 0
        %v508 = vsel %vm443, %v426, 0
        %v511 = vsel %vm443, %v427, 0
        %v514 = vsel %vm443, %v428, 0
        %v517 = vsel %vm443, %v429, 0
        %v520 = vsel %vm443, %v430, 0
        %v523 = vsel %vm443, %v431, 0
        %v526 = vsel %vm443, %v432, 0
        %v529 = vsel %vm443, %v433, 0
        %v532 = vsel %vm443, %v434, 0
        %v535 = vsel %vm443, %v435, 0
        %v538 = vsel %vm443, %v436, 0
        %540 = vmatpush.bf16.msra.mxu0 0
        %541 = vmatpush.bf16.msra.mxu0 0
        %542 = vmatpush.bf16.msra.mxu0 0
        %543 = vmatpush.bf16.msra.mxu0 0
        %544 = vmatpush.bf16.msra.mxu0 0
        %545 = vmatpush.bf16.msra.mxu0 0
        %546 = vmatpush.bf16.msra.mxu0 0
        %547 = vmatpush.bf16.msra.mxu0 %v441
        %548 = vmatmul.bf16.gmra.mxu0 %v445
        %v549 = vpop.f32.mrf.mxu0
        %v550 = vadd.f32 %v275, %v549
        %v551 = vpop.f32.mrf.mxu0
        %v552 = vadd.f32 %v275, %v551
        %553 = vmatmul.bf16.gmra.mxu0 %v448
        %v554 = vpop.f32.mrf.mxu0
        %v555 = vadd.f32 %v275, %v554
        %v556 = vpop.f32.mrf.mxu0
        %v557 = vadd.f32 %v275, %v556
        %558 = vmatmul.bf16.gmra.mxu0 %v451
        %v559 = vpop.f32.mrf.mxu0
        %v560 = vadd.f32 %v275, %v559
        %v561 = vpop.f32.mrf.mxu0
        %v562 = vadd.f32 %v275, %v561
        %563 = vmatmul.bf16.gmra.mxu0 %v454
        %v564 = vpop.f32.mrf.mxu0
        %v565 = vadd.f32 %v275, %v564
        %v566 = vpop.f32.mrf.mxu0
        %v567 = vadd.f32 %v275, %v566
        %568 = vmatmul.bf16.gmra.mxu0 %v457
        %v569 = vpop.f32.mrf.mxu0
        %v570 = vadd.f32 %v275, %v569
        %v571 = vpop.f32.mrf.mxu0
        %v572 = vadd.f32 %v275, %v571
        %573 = vmatmul.bf16.gmra.mxu0 %v460
        %v574 = vpop.f32.mrf.mxu0
        %v575 = vadd.f32 %v275, %v574
        %v576 = vpop.f32.mrf.mxu0
        %v577 = vadd.f32 %v275, %v576
        %578 = vmatmul.bf16.gmra.mxu0 %v463
        %v579 = vpop.f32.mrf.mxu0
        %v580 = vadd.f32 %v275, %v579
        %v581 = vpop.f32.mrf.mxu0
        %v582 = vadd.f32 %v275, %v581
        %583 = vmatmul.bf16.gmra.mxu0 %v466
        %v584 = vpop.f32.mrf.mxu0
        %v585 = vadd.f32 %v275, %v584
        %v586 = vpop.f32.mrf.mxu0
        %v587 = vadd.f32 %v275, %v586
        %588 = vmatmul.bf16.gmra.mxu0 %v469
        %v589 = vpop.f32.mrf.mxu0
        %v590 = vadd.f32 %v275, %v589
        %v591 = vpop.f32.mrf.mxu0
        %v592 = vadd.f32 %v275, %v591
        %593 = vmatmul.bf16.gmra.mxu0 %v472
        %v594 = vpop.f32.mrf.mxu0
        %v595 = vadd.f32 %v275, %v594
        %v596 = vpop.f32.mrf.mxu0
        %v597 = vadd.f32 %v275, %v596
        %598 = vmatmul.bf16.gmra.mxu0 %v475
        %v599 = vpop.f32.mrf.mxu0
        %v600 = vadd.f32 %v275, %v599
        %v601 = vpop.f32.mrf.mxu0
        %v602 = vadd.f32 %v275, %v601
        %603 = vmatmul.bf16.gmra.mxu0 %v478
        %v604 = vpop.f32.mrf.mxu0
        %v605 = vadd.f32 %v275, %v604
        %v606 = vpop.f32.mrf.mxu0
        %v607 = vadd.f32 %v275, %v606
        %608 = vmatmul.bf16.gmra.mxu0 %v481
        %v609 = vpop.f32.mrf.mxu0
        %v610 = vadd.f32 %v275, %v609
        %v611 = vpop.f32.mrf.mxu0
        %v612 = vadd.f32 %v275, %v611
        %613 = vmatmul.bf16.gmra.mxu0 %v484
        %v614 = vpop.f32.mrf.mxu0
        %v615 = vadd.f32 %v275, %v614
        %v616 = vpop.f32.mrf.mxu0
        %v617 = vadd.f32 %v275, %v616
        %618 = vmatmul.bf16.gmra.mxu0 %v487
        %v619 = vpop.f32.mrf.mxu0
        %v620 = vadd.f32 %v275, %v619
        %v621 = vpop.f32.mrf.mxu0
        %v622 = vadd.f32 %v275, %v621
        %623 = vmatmul.bf16.gmra.mxu0 %v490
        %v624 = vpop.f32.mrf.mxu0
        %v625 = vadd.f32 %v275, %v624
        %v626 = vpop.f32.mrf.mxu0
        %v627 = vadd.f32 %v275, %v626
        %628 = vmatmul.bf16.gmra.mxu0 %v493
        %v629 = vpop.f32.mrf.mxu0
        %v630 = vadd.f32 %v275, %v629
        %v631 = vpop.f32.mrf.mxu0
        %v632 = vadd.f32 %v275, %v631
        %633 = vmatmul.bf16.gmra.mxu0 %v496
        %v634 = vpop.f32.mrf.mxu0
        %v635 = vadd.f32 %v275, %v634
        %v636 = vpop.f32.mrf.mxu0
        %v637 = vadd.f32 %v275, %v636
        %638 = vmatmul.bf16.gmra.mxu0 %v499
        %v639 = vpop.f32.mrf.mxu0
        %v640 = vadd.f32 %v275, %v639
        %v641 = vpop.f32.mrf.mxu0
        %v642 = vadd.f32 %v275, %v641
        %643 = vmatmul.bf16.gmra.mxu0 %v502
        %v644 = vpop.f32.mrf.mxu0
        %v645 = vadd.f32 %v275, %v644
        %v646 = vpop.f32.mrf.mxu0
        %v647 = vadd.f32 %v275, %v646
        %648 = vmatmul.bf16.gmra.mxu0 %v505
        %v649 = vpop.f32.mrf.mxu0
        %v650 = vadd.f32 %v275, %v649
        %v651 = vpop.f32.mrf.mxu0
        %v652 = vadd.f32 %v275, %v651
        %653 = vmatmul.bf16.gmra.mxu0 %v508
        %v654 = vpop.f32.mrf.mxu0
        %v655 = vadd.f32 %v275, %v654
        %v656 = vpop.f32.mrf.mxu0
        %v657 = vadd.f32 %v275, %v656
        %658 = vmatmul.bf16.gmra.mxu0 %v511
        %v659 = vpop.f32.mrf.mxu0
        %v660 = vadd.f32 %v275, %v659
        %v661 = vpop.f32.mrf.mxu0
        %v662 = vadd.f32 %v275, %v661
        %663 = vmatmul.bf16.gmra.mxu0 %v514
        %v664 = vpop.f32.mrf.mxu0
        %v665 = vadd.f32 %v275, %v664
        %v666 = vpop.f32.mrf.mxu0
        %v667 = vadd.f32 %v275, %v666
        %668 = vmatmul.bf16.gmra.mxu0 %v517
        %v669 = vpop.f32.mrf.mxu0
        %v670 = vadd.f32 %v275, %v669
        %v671 = vpop.f32.mrf.mxu0
        %v672 = vadd.f32 %v275, %v671
        %673 = vmatmul.bf16.gmra.mxu0 %v520
        %v674 = vpop.f32.mrf.mxu0
        %v675 = vadd.f32 %v275, %v674
        %v676 = vpop.f32.mrf.mxu0
        %v677 = vadd.f32 %v275, %v676
        %678 = vmatmul.bf16.gmra.mxu0 %v523
        %v679 = vpop.f32.mrf.mxu0
        %v680 = vadd.f32 %v275, %v679
        %v681 = vpop.f32.mrf.mxu0
        %v682 = vadd.f32 %v275, %v681
        %683 = vmatmul.bf16.gmra.mxu0 %v526
        %v684 = vpop.f32.mrf.mxu0
        %v685 = vadd.f32 %v275, %v684
        %v686 = vpop.f32.mrf.mxu0
        %v687 = vadd.f32 %v275, %v686
        %688 = vmatmul.bf16.gmra.mxu0 %v529
        %v689 = vpop.f32.mrf.mxu0
        %v690 = vadd.f32 %v275, %v689
        %v691 = vpop.f32.mrf.mxu0
        %v692 = vadd.f32 %v275, %v691
        %693 = vmatmul.bf16.gmra.mxu0 %v532
        %v694 = vpop.f32.mrf.mxu0
        %v695 = vadd.f32 %v275, %v694
        %v696 = vpop.f32.mrf.mxu0
        %v697 = vadd.f32 %v275, %v696
        %698 = vmatmul.bf16.gmra.mxu0 %v535
        %v699 = vpop.f32.mrf.mxu0
        %v700 = vadd.f32 %v275, %v699
        %v701 = vpop.f32.mrf.mxu0
        %v702 = vadd.f32 %v275, %v701
        %703 = vmatmul.bf16.gmra.mxu0 %v538
        %v704 = vpop.f32.mrf.mxu0
        %v705 = vadd.f32 %v275, %v704
        %v706 = vpop.f32.mrf.mxu0
        %v707 = vadd.f32 %v275, %v706
        %708 = vdwg.mxu0
        %v709 = vmax.f32 %v550, 0.0
        %v710 = vmax.f32 %v552, 0.0
        %v711 = vmax.f32 %v555, 0.0
        %v712 = vmax.f32 %v557, 0.0
        %v713 = vmax.f32 %v560, 0.0
        %v714 = vmax.f32 %v562, 0.0
        %v715 = vmax.f32 %v565, 0.0
        %v716 = vmax.f32 %v567, 0.0
        %v717 = vmax.f32 %v570, 0.0
        %v718 = vmax.f32 %v572, 0.0
        %v719 = vmax.f32 %v575, 0.0
        %v720 = vmax.f32 %v577, 0.0
        %v721 = vmax.f32 %v580, 0.0
        %v722 = vmax.f32 %v582, 0.0
        %v723 = vmax.f32 %v585, 0.0
        %v724 = vmax.f32 %v587, 0.0
        %v725 = vmax.f32 %v590, 0.0
        %v726 = vmax.f32 %v592, 0.0
        %v727 = vmax.f32 %v595, 0.0
        %v728 = vmax.f32 %v597, 0.0
        %v729 = vmax.f32 %v600, 0.0
        %v730 = vmax.f32 %v602, 0.0
        %v731 = vmax.f32 %v605, 0.0
        %v732 = vmax.f32 %v607, 0.0
        %v733 = vmax.f32 %v610, 0.0
        %v734 = vmax.f32 %v612, 0.0
        %v735 = vmax.f32 %v615, 0.0
        %v736 = vmax.f32 %v617, 0.0
        %v737 = vmax.f32 %v620, 0.0
        %v738 = vmax.f32 %v622, 0.0
        %v739 = vmax.f32 %v625, 0.0
        %v740 = vmax.f32 %v627, 0.0
        %v741 = vmax.f32 %v630, 0.0
        %v742 = vmax.f32 %v632, 0.0
        %v743 = vmax.f32 %v635, 0.0
        %v744 = vmax.f32 %v637, 0.0
        %v745 = vmax.f32 %v640, 0.0
        %v746 = vmax.f32 %v642, 0.0
        %v747 = vmax.f32 %v645, 0.0
        %v748 = vmax.f32 %v647, 0.0
        %v749 = vmax.f32 %v650, 0.0
        %v750 = vmax.f32 %v652, 0.0
        %v751 = vmax.f32 %v655, 0.0
        %v752 = vmax.f32 %v657, 0.0
        %v753 = vmax.f32 %v660, 0.0
        %v754 = vmax.f32 %v662, 0.0
        %v755 = vmax.f32 %v665, 0.0
        %v756 = vmax.f32 %v667, 0.0
        %v757 = vmax.f32 %v670, 0.0
        %v758 = vmax.f32 %v672, 0.0
        %v759 = vmax.f32 %v675, 0.0
        %v760 = vmax.f32 %v677, 0.0
        %v761 = vmax.f32 %v680, 0.0
        %v762 = vmax.f32 %v682, 0.0
        %v763 = vmax.f32 %v685, 0.0
        %v764 = vmax.f32 %v687, 0.0
        %v765 = vmax.f32 %v690, 0.0
        %v766 = vmax.f32 %v692, 0.0
        %v767 = vmax.f32 %v695, 0.0
        %v768 = vmax.f32 %v697, 0.0
        %v769 = vmax.f32 %v700, 0.0
        %v770 = vmax.f32 %v702, 0.0
        %v771 = vmax.f32 %v705, 0.0
        %v772 = vmax.f32 %v707, 0.0
        %v773 = vpack.c.bf16 %v709, %v709
        %v774 = vpack.c.bf16 %v710, %v710
        %v775 = vpack.c.bf16 %v711, %v711
        %v776 = vpack.c.bf16 %v712, %v712
        %v777 = vpack.c.bf16 %v713, %v713
        %v778 = vpack.c.bf16 %v714, %v714
        %v779 = vpack.c.bf16 %v715, %v715
        %v780 = vpack.c.bf16 %v716, %v716
        %v781 = vpack.c.bf16 %v717, %v717
        %v782 = vpack.c.bf16 %v718, %v718
        %v783 = vpack.c.bf16 %v719, %v719
        %v784 = vpack.c.bf16 %v720, %v720
        %v785 = vpack.c.bf16 %v721, %v721
        %v786 = vpack.c.bf16 %v722, %v722
        %v787 = vpack.c.bf16 %v723, %v723
        %v788 = vpack.c.bf16 %v724, %v724
        %v789 = vpack.c.bf16 %v725, %v725
        %v790 = vpack.c.bf16 %v726, %v726
        %v791 = vpack.c.bf16 %v727, %v727
        %v792 = vpack.c.bf16 %v728, %v728
        %v793 = vpack.c.bf16 %v729, %v729
        %v794 = vpack.c.bf16 %v730, %v730
        %v795 = vpack.c.bf16 %v731, %v731
        %v796 = vpack.c.bf16 %v732, %v732
        %v797 = vpack.c.bf16 %v733, %v733
        %v798 = vpack.c.bf16 %v734, %v734
        %v799 = vpack.c.bf16 %v735, %v735
        %v800 = vpack.c.bf16 %v736, %v736
        %v801 = vpack.c.bf16 %v737, %v737
        %v802 = vpack.c.bf16 %v738, %v738
        %v803 = vpack.c.bf16 %v739, %v739
        %v804 = vpack.c.bf16 %v740, %v740
        %v805 = vpack.c.bf16 %v741, %v741
        %v806 = vpack.c.bf16 %v742, %v742
        %v807 = vpack.c.bf16 %v743, %v743
        %v808 = vpack.c.bf16 %v744, %v744
        %v809 = vpack.c.bf16 %v745, %v745
        %v810 = vpack.c.bf16 %v746, %v746
        %v811 = vpack.c.bf16 %v747, %v747
        %v812 = vpack.c.bf16 %v748, %v748
        %v813 = vpack.c.bf16 %v749, %v749
        %v814 = vpack.c.bf16 %v750, %v750
        %v815 = vpack.c.bf16 %v751, %v751
        %v816 = vpack.c.bf16 %v752, %v752
        %v817 = vpack.c.bf16 %v753, %v753
        %v818 = vpack.c.bf16 %v754, %v754
        %v819 = vpack.c.bf16 %v755, %v755
        %v820 = vpack.c.bf16 %v756, %v756
        %v821 = vpack.c.bf16 %v757, %v757
        %v822 = vpack.c.bf16 %v758, %v758
        %v823 = vpack.c.bf16 %v759, %v759
        %v824 = vpack.c.bf16 %v760, %v760
        %v825 = vpack.c.bf16 %v761, %v761
        %v826 = vpack.c.bf16 %v762, %v762
        %v827 = vpack.c.bf16 %v763, %v763
        %v828 = vpack.c.bf16 %v764, %v764
        %v829 = vpack.c.bf16 %v765, %v765
        %v830 = vpack.c.bf16 %v766, %v766
        %v831 = vpack.c.bf16 %v767, %v767
        %v832 = vpack.c.bf16 %v768, %v768
        %v833 = vpack.c.bf16 %v769, %v769
        %v834 = vpack.c.bf16 %v770, %v770
        %v835 = vpack.c.bf16 %v771, %v771
        %v836 = vpack.c.bf16 %v772, %v772
        %vm837 = vcmask 257024
        %838 = vst.msk [vmem:[%s204] sm:$0xf] %vm837, %v773
        %839 = vst.msk [vmem:[%s204 + $0x4] sm:$0xf] %vm837, %v774
        %840 = vst.msk [vmem:[%s204 + $0x8] sm:$0xf] %vm837, %v775
        %841 = vst.msk [vmem:[%s204 + $0xc] sm:$0xf] %vm837, %v776
        %842 = vst.msk [vmem:[%s204 + $0x10] sm:$0xf] %vm837, %v777
        %843 = vst.msk [vmem:[%s204 + $0x14] sm:$0xf] %vm837, %v778
        %844 = vst.msk [vmem:[%s204 + $0x18] sm:$0xf] %vm837, %v779
        %845 = vst.msk [vmem:[%s204 + $0x1c] sm:$0xf] %vm837, %v780
        %846 = vst.msk [vmem:[%s204 + $0x20] sm:$0xf] %vm837, %v781
        %847 = vst.msk [vmem:[%s204 + $0x24] sm:$0xf] %vm837, %v782
        %848 = vst.msk [vmem:[%s204 + $0x28] sm:$0xf] %vm837, %v783
        %849 = vst.msk [vmem:[%s204 + $0x2c] sm:$0xf] %vm837, %v784
        %850 = vst.msk [vmem:[%s204 + $0x30] sm:$0xf] %vm837, %v785
        %851 = vst.msk [vmem:[%s204 + $0x34] sm:$0xf] %vm837, %v786
        %852 = vst.msk [vmem:[%s204 + $0x38] sm:$0xf] %vm837, %v787
        %853 = vst.msk [vmem:[%s204 + $0x3c] sm:$0xf] %vm837, %v788
        %854 = vst.msk [vmem:[%s204 + $0x40] sm:$0xf] %vm837, %v789
        %855 = vst.msk [vmem:[%s204 + $0x44] sm:$0xf] %vm837, %v790
        %856 = vst.msk [vmem:[%s204 + $0x48] sm:$0xf] %vm837, %v791
        %857 = vst.msk [vmem:[%s204 + $0x4c] sm:$0xf] %vm837, %v792
        %858 = vst.msk [vmem:[%s204 + $0x50] sm:$0xf] %vm837, %v793
        %859 = vst.msk [vmem:[%s204 + $0x54] sm:$0xf] %vm837, %v794
        %860 = vst.msk [vmem:[%s204 + $0x58] sm:$0xf] %vm837, %v795
        %861 = vst.msk [vmem:[%s204 + $0x5c] sm:$0xf] %vm837, %v796
        %862 = vst.msk [vmem:[%s204 + $0x60] sm:$0xf] %vm837, %v797
        %863 = vst.msk [vmem:[%s204 + $0x64] sm:$0xf] %vm837, %v798
        %864 = vst.msk [vmem:[%s204 + $0x68] sm:$0xf] %vm837, %v799
        %865 = vst.msk [vmem:[%s204 + $0x6c] sm:$0xf] %vm837, %v800
        %866 = vst.msk [vmem:[%s204 + $0x70] sm:$0xf] %vm837, %v801
        %867 = vst.msk [vmem:[%s204 + $0x74] sm:$0xf] %vm837, %v802
        %868 = vst.msk [vmem:[%s204 + $0x78] sm:$0xf] %vm837, %v803
        %869 = vst.msk [vmem:[%s204 + $0x7c] sm:$0xf] %vm837, %v804
        %870 = vst.msk [vmem:[%s204 + $0x80] sm:$0xf] %vm837, %v805
        %871 = vst.msk [vmem:[%s204 + $0x84] sm:$0xf] %vm837, %v806
        %872 = vst.msk [vmem:[%s204 + $0x88] sm:$0xf] %vm837, %v807
        %873 = vst.msk [vmem:[%s204 + $0x8c] sm:$0xf] %vm837, %v808
        %874 = vst.msk [vmem:[%s204 + $0x90] sm:$0xf] %vm837, %v809
        %875 = vst.msk [vmem:[%s204 + $0x94] sm:$0xf] %vm837, %v810
        %876 = vst.msk [vmem:[%s204 + $0x98] sm:$0xf] %vm837, %v811
        %877 = vst.msk [vmem:[%s204 + $0x9c] sm:$0xf] %vm837, %v812
        %878 = vst.msk [vmem:[%s204 + $0xa0] sm:$0xf] %vm837, %v813
        %879 = vst.msk [vmem:[%s204 + $0xa4] sm:$0xf] %vm837, %v814
        %880 = vst.msk [vmem:[%s204 + $0xa8] sm:$0xf] %vm837, %v815
        %881 = vst.msk [vmem:[%s204 + $0xac] sm:$0xf] %vm837, %v816
        %882 = vst.msk [vmem:[%s204 + $0xb0] sm:$0xf] %vm837, %v817
        %883 = vst.msk [vmem:[%s204 + $0xb4] sm:$0xf] %vm837, %v818
        %884 = vst.msk [vmem:[%s204 + $0xb8] sm:$0xf] %vm837, %v819
        %885 = vst.msk [vmem:[%s204 + $0xbc] sm:$0xf] %vm837, %v820
        %886 = vst.msk [vmem:[%s204 + $0xc0] sm:$0xf] %vm837, %v821
        %887 = vst.msk [vmem:[%s204 + $0xc4] sm:$0xf] %vm837, %v822
        %888 = vst.msk [vmem:[%s204 + $0xc8] sm:$0xf] %vm837, %v823
        %889 = vst.msk [vmem:[%s204 + $0xcc] sm:$0xf] %vm837, %v824
        %890 = vst.msk [vmem:[%s204 + $0xd0] sm:$0xf] %vm837, %v825
        %891 = vst.msk [vmem:[%s204 + $0xd4] sm:$0xf] %vm837, %v826
        %892 = vst.msk [vmem:[%s204 + $0xd8] sm:$0xf] %vm837, %v827
        %893 = vst.msk [vmem:[%s204 + $0xdc] sm:$0xf] %vm837, %v828
        %894 = vst.msk [vmem:[%s204 + $0xe0] sm:$0xf] %vm837, %v829
        %895 = vst.msk [vmem:[%s204 + $0xe4] sm:$0xf] %vm837, %v830
        %896 = vst.msk [vmem:[%s204 + $0xe8] sm:$0xf] %vm837, %v831
        %897 = vst.msk [vmem:[%s204 + $0xec] sm:$0xf] %vm837, %v832
        %898 = vst.msk [vmem:[%s204 + $0xf0] sm:$0xf] %vm837, %v833
        %899 = vst.msk [vmem:[%s204 + $0xf4] sm:$0xf] %vm837, %v834
        %900 = vst.msk [vmem:[%s204 + $0xf8] sm:$0xf] %vm837, %v835
        %901 = vst.msk [vmem:[%s204 + $0xfc] sm:$0xf] %vm837, %v836
        %s902 = smul.u32 64, %s16
        %p903 = scmp.lt.s32.totalorder %s902, 255
        %s904 = scalar_select %p903, %s902, 255
        %s905 = smul.addr %s904, 4
        %s906 = scalar_lea.vmem %s3, %s905
        // Predicated region
        $region41: #{factor_vae1_forward.10} parent=31 // pred_check
          %p907 = pneg %p102
        $region42: #{factor_vae1_forward.10} parent=31 // pred_check_branch
          %909 = sbr.rel (%p907) target = $region44
        $region43: #{factor_vae1_forward.10} parent=31 // pred_region
          %s910 = smul.u32 64, %s16
        $region44: #{factor_vae1_forward.10} parent=31 // pred_fallthru
          _
      $region32: #{factor_vae1_forward.10} parent=5 // pred_fallthru
        _
      %p911 = scmp.le.s32.totalorder 2, %s11
      // Predicated region
      $region45: #{factor_vae1_forward.10} parent=5 // pred_check
        %p912 = pneg %p911
      $region46: #{factor_vae1_forward.10} parent=5 // pred_check_branch
        %914 = sbr.rel (%p912) target = $region48
      $region47: #{factor_vae1_forward.10} parent=5 // pred_region
        %s915 = ssub.s32 %s11, 2
        // Predicated region
        $region49: #{factor_vae1_forward.10} parent=47 // pred_check
          %p916 = pneg %p108
        $region50: #{factor_vae1_forward.10} parent=47 // pred_check_branch
          %918 = sbr.rel (%p916) target = $region52
        $region51: #{factor_vae1_forward.10} parent=47 // pred_region
          %s919 = smul.u32 64, %s17
          %p920 = scmp.lt.s32.totalorder %s919, 255
          %s921 = scalar_select %p920, %s919, 255
          %s922 = smul.addr %s921, 4
          %s923 = scalar_lea.vmem %s3, %s922
        $region52: #{factor_vae1_forward.10} parent=47 // pred_fallthru
          _
      $region48: #{factor_vae1_forward.10} parent=5 // pred_fallthru
        _
    $region6: #{factor_vae1_forward.10} parent=1 // loop_footer
      %s15 = sadd.s32 1, %s11
    $region7: #{factor_vae1_forward.10} parent=1 // loop_footer_branch
      %10 = sbr.rel target = $region3
    $region8: #{factor_vae1_forward.10} parent=1 // loop_exit
      _
    %924 = vsyncpa [#allocation3], 1
    %s925 = scalar_lea.sflag [#allocation3], 1
    %926 = vsyncpa %s925, 1
    %927 = vsyncpa [#allocation5], 1

// kernel: factor_vae1_forward.11
$region0: #{factor_vae1_forward.11}
  #allocation0 [shape = 'u32[]', space=smem, size = 0x4, offset = 0x4, fixed_abs, tag = 'smem constant byte address 0x4 - core index']
  #allocation1 [shape = 'u32[72,128]{1,0:T(1,128)}', space=vmem, size = 0x9000, scoped, tag = 'internal scratch']
  %s0 = inlined_call_operand.vmem [shape: bf16[512,512], index: 0, kind: input, shape index: {}]
  %s1 = inlined_call_operand.vmem [shape: bf16[512,32], index: 1, kind: input, shape index: {}]
  %s2 = inlined_call_operand.vmem [shape: f32[1,32], index: 2, kind: input, shape index: {}]
  %s3 = inlined_call_operand.vmem [shape: bf16[512,32], index: 3, kind: output, shape index: {}]
  %s4 = sld [smem:[#allocation0]]
  $region45: #{factor_vae1_forward.11} parent=0
    _
  %s6 = ssub.s32 1, %s4
  %s7 = scalar_select 0, %s6, %s4
  loop: start=0, step=1, limit=4
  $region2: #{factor_vae1_forward.11} parent=0 // loop_pre_header
    _
  $region3: #{factor_vae1_forward.11} parent=0 // loop_header
    %s9 = sphi 0, %s13
    %p10 = scmp.ge.s32.totalorder %s9, 4
    %s19 = sphi 0, %s21
    %s22 = sphi 0, %s19
    %s23 = sphi 0, %s22
    %s39 = sphi 0, %s23
    %s43 = sphi 0, %s43
    %s45 = sphi 0, %s43
    %s46 = sphi 0, %s45
    %s60 = sphi 0, %s46
    %s64 = sphi 0, %s64
    %s66 = sphi 0, %s64
    %s67 = sphi 0, %s66
    %s81 = sphi 0, %s67
    %s87 = sphi 0, %s89
    %s90 = sphi 0, %s87
    %s91 = sphi 0, %s90
    %s107 = sphi 0, %s91
  $region4: #{factor_vae1_forward.11} parent=0 // loop_header_branch
    %12 = sbr.rel (%p10) target = $region8
  $region5: #{factor_vae1_forward.11} parent=0 // loop_body
    %s14 = ssub.s32 %s9, 1
    %s15 = ssub.s32 %s9, 2
    %s16 = sadd.s32 %s9, 1
    %s17 = ssub.s32 %s9, %s16
    %p18 = scmp.eq.s32.totalorder %s17, 0
    %s20 = sadd.s32 %s19, 1
    %s21 = scalar_select %p18, %s19, %s20
    %p24 = pneg %p18
    %p25 = scmp.eq.s32.totalorder %s9, 1
    %p26 = por %p24, %p25
    %p27 = scmp.ne.s32.totalorder %s19, %s22
    %p28 = scmp.eq.s32.totalorder %s9, 0
    %p29 = por %p27, %p28
    %p30 = scmp.ne.s32.totalorder %s19, %s22
    %p31 = scmp.eq.s32.totalorder %s14, 1
    %p32 = por %p30, %p31
    %p33 = scmp.ne.s32.totalorder %s22, %s23
    %p34 = scmp.eq.s32.totalorder %s14, 0
    %p35 = por %p33, %p34
    %p36 = scmp.ne.s32.totalorder %s22, %s23
    %p37 = scmp.eq.s32.totalorder %s15, 1
    %p38 = por %p36, %p37
    %p40 = scmp.ne.s32.totalorder %s23, %s39
    %p41 = scmp.eq.s32.totalorder %s15, 0
    %p42 = por %p40, %p41
    %s44 = sadd.s32 %s43, 1
    %p47 = scmp.eq.s32.totalorder %s9, 1
    %p48 = scmp.ne.s32.totalorder %s43, %s45
    %p49 = scmp.eq.s32.totalorder %s9, 0
    %p50 = por %p48, %p49
    %p51 = scmp.ne.s32.totalorder %s43, %s45
    %p52 = scmp.eq.s32.totalorder %s14, 1
    %p53 = por %p51, %p52
    %p54 = scmp.ne.s32.totalorder %s45, %s46
    %p55 = scmp.eq.s32.totalorder %s14, 0
    %p56 = por %p54, %p55
    %p57 = scmp.ne.s32.totalorder %s45, %s46
    %p58 = scmp.eq.s32.totalorder %s15, 1
    %p59 = por %p57, %p58
    %p61 = scmp.ne.s32.totalorder %s46, %s60
    %p62 = scmp.eq.s32.totalorder %s15, 0
    %p63 = por %p61, %p62
    %s65 = sadd.s32 %s64, 1
    %p68 = scmp.eq.s32.totalorder %s9, 1
    %p69 = scmp.ne.s32.totalorder %s64, %s66
    %p70 = scmp.eq.s32.totalorder %s9, 0
    %p71 = por %p69, %p70
    %p72 = scmp.ne.s32.totalorder %s64, %s66
    %p73 = scmp.eq.s32.totalorder %s14, 1
    %p74 = por %p72, %p73
    %p75 = scmp.ne.s32.totalorder %s66, %s67
    %p76 = scmp.eq.s32.totalorder %s14, 0
    %p77 = por %p75, %p76
    %p78 = scmp.ne.s32.totalorder %s66, %s67
    %p79 = scmp.eq.s32.totalorder %s15, 1
    %p80 = por %p78, %p79
    %p82 = scmp.ne.s32.totalorder %s67, %s81
    %p83 = scmp.eq.s32.totalorder %s15, 0
    %p84 = por %p82, %p83
    %s85 = ssub.s32 %s9, %s16
    %p86 = scmp.eq.s32.totalorder %s85, 0
    %s88 = sadd.s32 %s87, 1
    %s89 = scalar_select %p86, %s87, %s88
    %p92 = pneg %p86
    %p93 = scmp.eq.s32.totalorder %s9, 1
    %p94 = por %p92, %p93
    %p95 = scmp.ne.s32.totalorder %s87, %s90
    %p96 = scmp.eq.s32.totalorder %s9, 0
    %p97 = por %p95, %p96
    %p98 = scmp.ne.s32.totalorder %s87, %s90
    %p99 = scmp.eq.s32.totalorder %s14, 1
    %p100 = por %p98, %p99
    %p101 = scmp.ne.s32.totalorder %s90, %s91
    %p102 = scmp.eq.s32.totalorder %s14, 0
    %p103 = por %p101, %p102
    %p104 = scmp.ne.s32.totalorder %s90, %s91
    %p105 = scmp.eq.s32.totalorder %s15, 1
    %p106 = por %p104, %p105
    %p108 = scmp.ne.s32.totalorder %s91, %s107
    %p109 = scmp.eq.s32.totalorder %s15, 0
    %p110 = por %p108, %p109
    %p111 = scmp.le.s32.totalorder 1, %s9
    %p112 = scmp.lt.s32.totalorder %s9, 3
    %p113 = pnand %p111, %p112
    %p114 = pneg %p113
    // Predicated region
    $region9: #{factor_vae1_forward.11} parent=5 // pred_check
      _
    $region10: #{factor_vae1_forward.11} parent=5 // pred_check_branch
      %116 = sbr.rel (%p113) target = $region12
    $region11: #{factor_vae1_forward.11} parent=5 // pred_region
      %s117 = ssub.s32 %s9, 1
      // Predicated region
      $region13: #{factor_vae1_forward.11} parent=11 // pred_check
        %p118 = pneg %p56
      $region14: #{factor_vae1_forward.11} parent=11 // pred_check_branch
        %120 = sbr.rel (%p118) target = $region16
      $region15: #{factor_vae1_forward.11} parent=11 // pred_region
        _
      $region16: #{factor_vae1_forward.11} parent=11 // pred_fallthru
        _
      // Predicated region
      $region17: #{factor_vae1_forward.11} parent=11 // pred_check
        %p121 = pneg %p77
      $region18: #{factor_vae1_forward.11} parent=11 // pred_check_branch
        %123 = sbr.rel (%p121) target = $region20
      $region19: #{factor_vae1_forward.11} parent=11 // pred_region
        _
      $region20: #{factor_vae1_forward.11} parent=11 // pred_fallthru
        _
    $region12: #{factor_vae1_forward.11} parent=5 // pred_fallthru
      _
    %p124 = scmp.lt.s32.totalorder %s9, 2
    // Predicated region
    $region21: #{factor_vae1_forward.11} parent=5 // pred_check
      %p125 = pneg %p124
    $region22: #{factor_vae1_forward.11} parent=5 // pred_check_branch
      %127 = sbr.rel (%p125) target = $region24
    $region23: #{factor_vae1_forward.11} parent=5 // pred_region
      // Predicated region
      $region25: #{factor_vae1_forward.11} parent=23 // pred_check
        %p128 = pneg %p29
      $region26: #{factor_vae1_forward.11} parent=23 // pred_check_branch
        %130 = sbr.rel (%p128) target = $region28
      $region27: #{factor_vae1_forward.11} parent=23 // pred_region
        %s131 = smul.u32 32, %s9
        %p132 = scmp.lt.s32.totalorder %s131, 63
        %s133 = scalar_select %p132, %s131, 63
        %s134 = smul.addr %s133, 4
        %s135 = smul.addr %s134, 4
        %s136 = scalar_lea.vmem %s0, %s135
        %s137 = smul.u32 32, %s9
      $region28: #{factor_vae1_forward.11} parent=23 // pred_fallthru
        _
    $region24: #{factor_vae1_forward.11} parent=5 // pred_fallthru
      _
    %p138 = scmp.le.s32.totalorder 1, %s9
    %p139 = scmp.lt.s32.totalorder %s9, 3
    %p140 = pnand %p138, %p139
    %p141 = pneg %p140
    // Predicated region
    $region29: #{factor_vae1_forward.11} parent=5 // pred_check
      _
    $region30: #{factor_vae1_forward.11} parent=5 // pred_check_branch
      %143 = sbr.rel (%p140) target = $region32
    $region31: #{factor_vae1_forward.11} parent=5 // pred_region
      %s144 = ssub.s32 %s9, 1
      %s145 = smul.u32 32, %s14
      %p146 = scmp.lt.s32.totalorder %s145, 63
      %s147 = scalar_select %p146, %s145, 63
      %s148 = smul.addr %s147, 4
      %s149 = smul.addr %s148, 4
      %s150 = scalar_lea.vmem %s0, %s149
      %p151 = pneg %p35
      %p152 = pneg %p32
      %p153 = pneg %p56
      %p154 = pneg %p53
      %p155 = pneg %p77
      %p156 = pneg %p74
      %p157 = pneg %p103
      %p158 = pneg %p100
      %s159 = smul.u32 32, %s14
      %p160 = scmp.lt.s32.totalorder %s159, 63
      %s161 = scalar_select %p160, %s159, 63
      %s162 = smul.addr %s161, 4
      %s163 = scalar_lea.vmem %s3, %s162
      %s164 = smul.u32 32, %s14
      %p165 = scmp.lt.s32.totalorder %s164, 63
      %s166 = scalar_select %p165, %s164, 63
      %s167 = smul.addr %s166, 4
      %s168 = smul.addr %s167, 4
      %s169 = scalar_lea.vmem %s0, %s168
      %s170 = smul.u32 32, %s14
      %s171 = smul.u32 32, %s14
      %p172 = scmp.lt.s32.totalorder %s171, 63
      %s173 = scalar_select %p172, %s171, 63
      %s174 = smul.addr %s173, 4
      %s175 = scalar_lea.vmem %s3, %s174
      %s176 = smul.u32 32, %s14
      %v177 = vld [vmem:[%s169] sm:$0xff]
      %v178 = vld [vmem:[%s169 + $0x8] sm:$0xff]
      %v179 = vld [vmem:[%s169 + $0x10] sm:$0xff]
      %v180 = vld [vmem:[%s169 + $0x18] sm:$0xff]
      %v181 = vld [vmem:[%s169 + $0x20] sm:$0xff]
      %v182 = vld [vmem:[%s169 + $0x28] sm:$0xff]
      %v183 = vld [vmem:[%s169 + $0x30] sm:$0xff]
      %v184 = vld [vmem:[%s169 + $0x38] sm:$0xff]
      %v185 = vld [vmem:[%s169 + $0x40] sm:$0xff]
      %v186 = vld [vmem:[%s169 + $0x48] sm:$0xff]
      %v187 = vld [vmem:[%s169 + $0x50] sm:$0xff]
      %v188 = vld [vmem:[%s169 + $0x58] sm:$0xff]
      %v189 = vld [vmem:[%s169 + $0x60] sm:$0xff]
      %v190 = vld [vmem:[%s169 + $0x68] sm:$0xff]
      %v191 = vld [vmem:[%s169 + $0x70] sm:$0xff]
      %v192 = vld [vmem:[%s169 + $0x78] sm:$0xff]
      %v193 = vld [vmem:[%s169 + $0x80] sm:$0xff]
      %v194 = vld [vmem:[%s169 + $0x88] sm:$0xff]
      %v195 = vld [vmem:[%s169 + $0x90] sm:$0xff]
      %v196 = vld [vmem:[%s169 + $0x98] sm:$0xff]
      %v197 = vld [vmem:[%s169 + $0xa0] sm:$0xff]
      %v198 = vld [vmem:[%s169 + $0xa8] sm:$0xff]
      %v199 = vld [vmem:[%s169 + $0xb0] sm:$0xff]
      %v200 = vld [vmem:[%s169 + $0xb8] sm:$0xff]
      %v201 = vld [vmem:[%s169 + $0xc0] sm:$0xff]
      %v202 = vld [vmem:[%s169 + $0xc8] sm:$0xff]
      %v203 = vld [vmem:[%s169 + $0xd0] sm:$0xff]
      %v204 = vld [vmem:[%s169 + $0xd8] sm:$0xff]
      %v205 = vld [vmem:[%s169 + $0xe0] sm:$0xff]
      %v206 = vld [vmem:[%s169 + $0xe8] sm:$0xff]
      %v207 = vld [vmem:[%s169 + $0xf0] sm:$0xff]
      %v208 = vld [vmem:[%s169 + $0xf8] sm:$0xff]
      %v209 = vld [vmem:[%s169 + $0x100] sm:$0xff]
      %v210 = vld [vmem:[%s169 + $0x108] sm:$0xff]
      %v211 = vld [vmem:[%s169 + $0x110] sm:$0xff]
      %v212 = vld [vmem:[%s169 + $0x118] sm:$0xff]
      %v213 = vld [vmem:[%s169 + $0x120] sm:$0xff]
      %v214 = vld [vmem:[%s169 + $0x128] sm:$0xff]
      %v215 = vld [vmem:[%s169 + $0x130] sm:$0xff]
      %v216 = vld [vmem:[%s169 + $0x138] sm:$0xff]
      %v217 = vld [vmem:[%s169 + $0x140] sm:$0xff]
      %v218 = vld [vmem:[%s169 + $0x148] sm:$0xff]
      %v219 = vld [vmem:[%s169 + $0x150] sm:$0xff]
      %v220 = vld [vmem:[%s169 + $0x158] sm:$0xff]
      %v221 = vld [vmem:[%s169 + $0x160] sm:$0xff]
      %v222 = vld [vmem:[%s169 + $0x168] sm:$0xff]
      %v223 = vld [vmem:[%s169 + $0x170] sm:$0xff]
      %v224 = vld [vmem:[%s169 + $0x178] sm:$0xff]
      %v225 = vld [vmem:[%s169 + $0x180] sm:$0xff]
      %v226 = vld [vmem:[%s169 + $0x188] sm:$0xff]
      %v227 = vld [vmem:[%s169 + $0x190] sm:$0xff]
      %v228 = vld [vmem:[%s169 + $0x198] sm:$0xff]
      %v229 = vld [vmem:[%s169 + $0x1a0] sm:$0xff]
      %v230 = vld [vmem:[%s169 + $0x1a8] sm:$0xff]
      %v231 = vld [vmem:[%s169 + $0x1b0] sm:$0xff]
      %v232 = vld [vmem:[%s169 + $0x1b8] sm:$0xff]
      %v233 = vld [vmem:[%s169 + $0x1c0] sm:$0xff]
      %v234 = vld [vmem:[%s169 + $0x1c8] sm:$0xff]
      %v235 = vld [vmem:[%s169 + $0x1d0] sm:$0xff]
      %v236 = vld [vmem:[%s169 + $0x1d8] sm:$0xff]
      %v237 = vld [vmem:[%s169 + $0x1e0] sm:$0xff]
      %v238 = vld [vmem:[%s169 + $0x1e8] sm:$0xff]
      %v239 = vld [vmem:[%s169 + $0x1f0] sm:$0xff]
      %v240 = vld [vmem:[%s169 + $0x1f8] sm:$0xff]
      %v241 = vld [vmem:[%s1] sm:$0xf]
      %v242 = vld [vmem:[%s1 + $0x4] sm:$0xf]
      %v243 = vld [vmem:[%s1 + $0x8] sm:$0xf]
      %v244 = vld [vmem:[%s1 + $0xc] sm:$0xf]
      %v245 = vld [vmem:[%s1 + $0x10] sm:$0xf]
      %v246 = vld [vmem:[%s1 + $0x14] sm:$0xf]
      %v247 = vld [vmem:[%s1 + $0x18] sm:$0xf]
      %v248 = vld [vmem:[%s1 + $0x1c] sm:$0xf]
      %v249 = vld [vmem:[%s1 + $0x20] sm:$0xf]
      %v250 = vld [vmem:[%s1 + $0x24] sm:$0xf]
      %v251 = vld [vmem:[%s1 + $0x28] sm:$0xf]
      %v252 = vld [vmem:[%s1 + $0x2c] sm:$0xf]
      %v253 = vld [vmem:[%s1 + $0x30] sm:$0xf]
      %v254 = vld [vmem:[%s1 + $0x34] sm:$0xf]
      %v255 = vld [vmem:[%s1 + $0x38] sm:$0xf]
      %v256 = vld [vmem:[%s1 + $0x3c] sm:$0xf]
      %v257 = vld [vmem:[%s1 + $0x40] sm:$0xf]
      %v258 = vld [vmem:[%s1 + $0x44] sm:$0xf]
      %v259 = vld [vmem:[%s1 + $0x48] sm:$0xf]
      %v260 = vld [vmem:[%s1 + $0x4c] sm:$0xf]
      %v261 = vld [vmem:[%s1 + $0x50] sm:$0xf]
      %v262 = vld [vmem:[%s1 + $0x54] sm:$0xf]
      %v263 = vld [vmem:[%s1 + $0x58] sm:$0xf]
      %v264 = vld [vmem:[%s1 + $0x5c] sm:$0xf]
      %v265 = vld [vmem:[%s1 + $0x60] sm:$0xf]
      %v266 = vld [vmem:[%s1 + $0x64] sm:$0xf]
      %v267 = vld [vmem:[%s1 + $0x68] sm:$0xf]
      %v268 = vld [vmem:[%s1 + $0x6c] sm:$0xf]
      %v269 = vld [vmem:[%s1 + $0x70] sm:$0xf]
      %v270 = vld [vmem:[%s1 + $0x74] sm:$0xf]
      %v271 = vld [vmem:[%s1 + $0x78] sm:$0xf]
      %v272 = vld [vmem:[%s1 + $0x7c] sm:$0xf]
      %v273 = vld [vmem:[%s1 + $0x80] sm:$0xf]
      %v274 = vld [vmem:[%s1 + $0x84] sm:$0xf]
      %v275 = vld [vmem:[%s1 + $0x88] sm:$0xf]
      %v276 = vld [vmem:[%s1 + $0x8c] sm:$0xf]
      %v277 = vld [vmem:[%s1 + $0x90] sm:$0xf]
      %v278 = vld [vmem:[%s1 + $0x94] sm:$0xf]
      %v279 = vld [vmem:[%s1 + $0x98] sm:$0xf]
      %v280 = vld [vmem:[%s1 + $0x9c] sm:$0xf]
      %v281 = vld [vmem:[%s1 + $0xa0] sm:$0xf]
      %v282 = vld [vmem:[%s1 + $0xa4] sm:$0xf]
      %v283 = vld [vmem:[%s1 + $0xa8] sm:$0xf]
      %v284 = vld [vmem:[%s1 + $0xac] sm:$0xf]
      %v285 = vld [vmem:[%s1 + $0xb0] sm:$0xf]
      %v286 = vld [vmem:[%s1 + $0xb4] sm:$0xf]
      %v287 = vld [vmem:[%s1 + $0xb8] sm:$0xf]
      %v288 = vld [vmem:[%s1 + $0xbc] sm:$0xf]
      %v289 = vld [vmem:[%s1 + $0xc0] sm:$0xf]
      %v290 = vld [vmem:[%s1 + $0xc4] sm:$0xf]
      %v291 = vld [vmem:[%s1 + $0xc8] sm:$0xf]
      %v292 = vld [vmem:[%s1 + $0xcc] sm:$0xf]
      %v293 = vld [vmem:[%s1 + $0xd0] sm:$0xf]
      %v294 = vld [vmem:[%s1 + $0xd4] sm:$0xf]
      %v295 = vld [vmem:[%s1 + $0xd8] sm:$0xf]
      %v296 = vld [vmem:[%s1 + $0xdc] sm:$0xf]
      %v297 = vld [vmem:[%s1 + $0xe0] sm:$0xf]
      %v298 = vld [vmem:[%s1 + $0xe4] sm:$0xf]
      %v299 = vld [vmem:[%s1 + $0xe8] sm:$0xf]
      %v300 = vld [vmem:[%s1 + $0xec] sm:$0xf]
      %v301 = vld [vmem:[%s1 + $0xf0] sm:$0xf]
      %v302 = vld [vmem:[%s1 + $0xf4] sm:$0xf]
      %v303 = vld [vmem:[%s1 + $0xf8] sm:$0xf]
      %v304 = vld [vmem:[%s1 + $0xfc] sm:$0xf]
      %v305 = vld [vmem:[%s2] sm:$0x1]
      %v307 = vperm.slane %v305, 0
      %v373 = vunpack.c.l.b16 %v177
      %v374 = vunpack.c.h.b16 %v177
      %v375 = vunpack.c.l.b16 %v178
      %v376 = vunpack.c.h.b16 %v178
      %v377 = vunpack.c.l.b16 %v179
      %v378 = vunpack.c.h.b16 %v179
      %v379 = vunpack.c.l.b16 %v180
      %v380 = vunpack.c.h.b16 %v180
      %v381 = vunpack.c.l.b16 %v181
      %v382 = vunpack.c.h.b16 %v181
      %v383 = vunpack.c.l.b16 %v182
      %v384 = vunpack.c.h.b16 %v182
      %v385 = vunpack.c.l.b16 %v183
      %v386 = vunpack.c.h.b16 %v183
      %v387 = vunpack.c.l.b16 %v184
      %v388 = vunpack.c.h.b16 %v184
      %v389 = vunpack.c.l.b16 %v185
      %v390 = vunpack.c.h.b16 %v185
      %v391 = vunpack.c.l.b16 %v186
      %v392 = vunpack.c.h.b16 %v186
      %v393 = vunpack.c.l.b16 %v187
      %v394 = vunpack.c.h.b16 %v187
      %v395 = vunpack.c.l.b16 %v188
      %v396 = vunpack.c.h.b16 %v188
      %v397 = vunpack.c.l.b16 %v189
      %v398 = vunpack.c.h.b16 %v189
      %v399 = vunpack.c.l.b16 %v190
      %v400 = vunpack.c.h.b16 %v190
      %v401 = vunpack.c.l.b16 %v191
      %v402 = vunpack.c.h.b16 %v191
      %v403 = vunpack.c.l.b16 %v192
      %v404 = vunpack.c.h.b16 %v192
      %v405 = vunpack.c.l.b16 %v193
      %v406 = vunpack.c.h.b16 %v193
      %v407 = vunpack.c.l.b16 %v194
      %v408 = vunpack.c.h.b16 %v194
      %v409 = vunpack.c.l.b16 %v195
      %v410 = vunpack.c.h.b16 %v195
      %v411 = vunpack.c.l.b16 %v196
      %v412 = vunpack.c.h.b16 %v196
      %v413 = vunpack.c.l.b16 %v197
      %v414 = vunpack.c.h.b16 %v197
      %v415 = vunpack.c.l.b16 %v198
      %v416 = vunpack.c.h.b16 %v198
      %v417 = vunpack.c.l.b16 %v199
      %v418 = vunpack.c.h.b16 %v199
      %v419 = vunpack.c.l.b16 %v200
      %v420 = vunpack.c.h.b16 %v200
      %v421 = vunpack.c.l.b16 %v201
      %v422 = vunpack.c.h.b16 %v201
      %v423 = vunpack.c.l.b16 %v202
      %v424 = vunpack.c.h.b16 %v202
      %v425 = vunpack.c.l.b16 %v203
      %v426 = vunpack.c.h.b16 %v203
      %v427 = vunpack.c.l.b16 %v204
      %v428 = vunpack.c.h.b16 %v204
      %v429 = vunpack.c.l.b16 %v205
      %v430 = vunpack.c.h.b16 %v205
      %v431 = vunpack.c.l.b16 %v206
      %v432 = vunpack.c.h.b16 %v206
      %v433 = vunpack.c.l.b16 %v207
      %v434 = vunpack.c.h.b16 %v207
      %v435 = vunpack.c.l.b16 %v208
      %v436 = vunpack.c.h.b16 %v208
      %v437 = vunpack.c.l.b16 %v209
      %v438 = vunpack.c.h.b16 %v209
      %v439 = vunpack.c.l.b16 %v210
      %v440 = vunpack.c.h.b16 %v210
      %v441 = vunpack.c.l.b16 %v211
      %v442 = vunpack.c.h.b16 %v211
      %v443 = vunpack.c.l.b16 %v212
      %v444 = vunpack.c.h.b16 %v212
      %v445 = vunpack.c.l.b16 %v213
      %v446 = vunpack.c.h.b16 %v213
      %v447 = vunpack.c.l.b16 %v214
      %v448 = vunpack.c.h.b16 %v214
      %v449 = vunpack.c.l.b16 %v215
      %v450 = vunpack.c.h.b16 %v215
      %v451 = vunpack.c.l.b16 %v216
      %v452 = vunpack.c.h.b16 %v216
      %v453 = vunpack.c.l.b16 %v217
      %v454 = vunpack.c.h.b16 %v217
      %v455 = vunpack.c.l.b16 %v218
      %v456 = vunpack.c.h.b16 %v218
      %v457 = vunpack.c.l.b16 %v219
      %v458 = vunpack.c.h.b16 %v219
      %v459 = vunpack.c.l.b16 %v220
      %v460 = vunpack.c.h.b16 %v220
      %v461 = vunpack.c.l.b16 %v221
      %v462 = vunpack.c.h.b16 %v221
      %v463 = vunpack.c.l.b16 %v222
      %v464 = vunpack.c.h.b16 %v222
      %v465 = vunpack.c.l.b16 %v223
      %v466 = vunpack.c.h.b16 %v223
      %v467 = vunpack.c.l.b16 %v224
      %v468 = vunpack.c.h.b16 %v224
      %v469 = vunpack.c.l.b16 %v225
      %v470 = vunpack.c.h.b16 %v225
      %v471 = vunpack.c.l.b16 %v226
      %v472 = vunpack.c.h.b16 %v226
      %v473 = vunpack.c.l.b16 %v227
      %v474 = vunpack.c.h.b16 %v227
      %v475 = vunpack.c.l.b16 %v228
      %v476 = vunpack.c.h.b16 %v228
      %v477 = vunpack.c.l.b16 %v229
      %v478 = vunpack.c.h.b16 %v229
      %v479 = vunpack.c.l.b16 %v230
      %v480 = vunpack.c.h.b16 %v230
      %v481 = vunpack.c.l.b16 %v231
      %v482 = vunpack.c.h.b16 %v231
      %v483 = vunpack.c.l.b16 %v232
      %v484 = vunpack.c.h.b16 %v232
      %v485 = vunpack.c.l.b16 %v233
      %v486 = vunpack.c.h.b16 %v233
      %v487 = vunpack.c.l.b16 %v234
      %v488 = vunpack.c.h.b16 %v234
      %v489 = vunpack.c.l.b16 %v235
      %v490 = vunpack.c.h.b16 %v235
      %v491 = vunpack.c.l.b16 %v236
      %v492 = vunpack.c.h.b16 %v236
      %v493 = vunpack.c.l.b16 %v237
      %v494 = vunpack.c.h.b16 %v237
      %v495 = vunpack.c.l.b16 %v238
      %v496 = vunpack.c.h.b16 %v238
      %v497 = vunpack.c.l.b16 %v239
      %v498 = vunpack.c.h.b16 %v239
      %v499 = vunpack.c.l.b16 %v240
      %v500 = vunpack.c.h.b16 %v240
      %v501 = vpack.c.b16 %v377, %v373
      %v502 = vpack.c.b16 %v378, %v374
      %v503 = vpack.c.b16 %v379, %v375
      %v504 = vpack.c.b16 %v380, %v376
      %v505 = vpack.c.b16 %v385, %v381
      %v506 = vpack.c.b16 %v386, %v382
      %v507 = vpack.c.b16 %v387, %v383
      %v508 = vpack.c.b16 %v388, %v384
      %v509 = vpack.c.b16 %v393, %v389
      %v510 = vpack.c.b16 %v394, %v390
      %v511 = vpack.c.b16 %v395, %v391
      %v512 = vpack.c.b16 %v396, %v392
      %v513 = vpack.c.b16 %v401, %v397
      %v514 = vpack.c.b16 %v402, %v398
      %v515 = vpack.c.b16 %v403, %v399
      %v516 = vpack.c.b16 %v404, %v400
      %v517 = vpack.c.b16 %v409, %v405
      %v518 = vpack.c.b16 %v410, %v406
      %v519 = vpack.c.b16 %v411, %v407
      %v520 = vpack.c.b16 %v412, %v408
      %v521 = vpack.c.b16 %v417, %v413
      %v522 = vpack.c.b16 %v418, %v414
      %v523 = vpack.c.b16 %v419, %v415
      %v524 = vpack.c.b16 %v420, %v416
      %v525 = vpack.c.b16 %v425, %v421
      %v526 = vpack.c.b16 %v426, %v422
      %v527 = vpack.c.b16 %v427, %v423
      %v528 = vpack.c.b16 %v428, %v424
      %v529 = vpack.c.b16 %v433, %v429
      %v530 = vpack.c.b16 %v434, %v430
      %v531 = vpack.c.b16 %v435, %v431
      %v532 = vpack.c.b16 %v436, %v432
      %v533 = vpack.c.b16 %v441, %v437
      %v534 = vpack.c.b16 %v442, %v438
      %v535 = vpack.c.b16 %v443, %v439
      %v536 = vpack.c.b16 %v444, %v440
      %v537 = vpack.c.b16 %v449, %v445
      %v538 = vpack.c.b16 %v450, %v446
      %v539 = vpack.c.b16 %v451, %v447
      %v540 = vpack.c.b16 %v452, %v448
      %v541 = vpack.c.b16 %v457, %v453
      %v542 = vpack.c.b16 %v458, %v454
      %v543 = vpack.c.b16 %v459, %v455
      %v544 = vpack.c.b16 %v460, %v456
      %v545 = vpack.c.b16 %v465, %v461
      %v546 = vpack.c.b16 %v466, %v462
      %v547 = vpack.c.b16 %v467, %v463
      %v548 = vpack.c.b16 %v468, %v464
      %v549 = vpack.c.b16 %v473, %v469
      %v550 = vpack.c.b16 %v474, %v470
      %v551 = vpack.c.b16 %v475, %v471
      %v552 = vpack.c.b16 %v476, %v472
      %v553 = vpack.c.b16 %v481, %v477
      %v554 = vpack.c.b16 %v482, %v478
      %v555 = vpack.c.b16 %v483, %v479
      %v556 = vpack.c.b16 %v484, %v480
      %v557 = vpack.c.b16 %v489, %v485
      %v558 = vpack.c.b16 %v490, %v486
      %v559 = vpack.c.b16 %v491, %v487
      %v560 = vpack.c.b16 %v492, %v488
      %v561 = vpack.c.b16 %v497, %v493
      %v562 = vpack.c.b16 %v498, %v494
      %v563 = vpack.c.b16 %v499, %v495
      %v564 = vpack.c.b16 %v500, %v496
      %v693 = vunpack.c.l.b16 %v241
      %v694 = vunpack.c.l.b16 %v242
      %v695 = vunpack.c.l.b16 %v243
      %v696 = vunpack.c.l.b16 %v244
      %v697 = vunpack.c.l.b16 %v245
      %v698 = vunpack.c.l.b16 %v246
      %v699 = vunpack.c.l.b16 %v247
      %v700 = vunpack.c.l.b16 %v248
      %v701 = vunpack.c.l.b16 %v249
      %v702 = vunpack.c.l.b16 %v250
      %v703 = vunpack.c.l.b16 %v251
      %v704 = vunpack.c.l.b16 %v252
      %v705 = vunpack.c.l.b16 %v253
      %v706 = vunpack.c.l.b16 %v254
      %v707 = vunpack.c.l.b16 %v255
      %v708 = vunpack.c.l.b16 %v256
      %v709 = vunpack.c.l.b16 %v257
      %v710 = vunpack.c.l.b16 %v258
      %v711 = vunpack.c.l.b16 %v259
      %v712 = vunpack.c.l.b16 %v260
      %v713 = vunpack.c.l.b16 %v261
      %v714 = vunpack.c.l.b16 %v262
      %v715 = vunpack.c.l.b16 %v263
      %v716 = vunpack.c.l.b16 %v264
      %v717 = vunpack.c.l.b16 %v265
      %v718 = vunpack.c.l.b16 %v266
      %v719 = vunpack.c.l.b16 %v267
      %v720 = vunpack.c.l.b16 %v268
      %v721 = vunpack.c.l.b16 %v269
      %v722 = vunpack.c.l.b16 %v270
      %v723 = vunpack.c.l.b16 %v271
      %v724 = vunpack.c.l.b16 %v272
      %v725 = vunpack.c.l.b16 %v273
      %v726 = vunpack.c.l.b16 %v274
      %v727 = vunpack.c.l.b16 %v275
      %v728 = vunpack.c.l.b16 %v276
      %v729 = vunpack.c.l.b16 %v277
      %v730 = vunpack.c.l.b16 %v278
      %v731 = vunpack.c.l.b16 %v279
      %v732 = vunpack.c.l.b16 %v280
      %v733 = vunpack.c.l.b16 %v281
      %v734 = vunpack.c.l.b16 %v282
      %v735 = vunpack.c.l.b16 %v283
      %v736 = vunpack.c.l.b16 %v284
      %v737 = vunpack.c.l.b16 %v285
      %v738 = vunpack.c.l.b16 %v286
      %v739 = vunpack.c.l.b16 %v287
      %v740 = vunpack.c.l.b16 %v288
      %v741 = vunpack.c.l.b16 %v289
      %v742 = vunpack.c.l.b16 %v290
      %v743 = vunpack.c.l.b16 %v291
      %v744 = vunpack.c.l.b16 %v292
      %v745 = vunpack.c.l.b16 %v293
      %v746 = vunpack.c.l.b16 %v294
      %v747 = vunpack.c.l.b16 %v295
      %v748 = vunpack.c.l.b16 %v296
      %v749 = vunpack.c.l.b16 %v297
      %v750 = vunpack.c.l.b16 %v298
      %v751 = vunpack.c.l.b16 %v299
      %v752 = vunpack.c.l.b16 %v300
      %v753 = vunpack.c.l.b16 %v301
      %v754 = vunpack.c.l.b16 %v302
      %v755 = vunpack.c.l.b16 %v303
      %v756 = vunpack.c.l.b16 %v304
      %v757 = vpack.c.b16 %v694, %v693
      %v758 = vpack.c.b16 %v696, %v695
      %v759 = vpack.c.b16 %v698, %v697
      %v760 = vpack.c.b16 %v700, %v699
      %v761 = vpack.c.b16 %v702, %v701
      %v762 = vpack.c.b16 %v704, %v703
      %v763 = vpack.c.b16 %v706, %v705
      %v764 = vpack.c.b16 %v708, %v707
      %v765 = vpack.c.b16 %v710, %v709
      %v766 = vpack.c.b16 %v712, %v711
      %v767 = vpack.c.b16 %v714, %v713
      %v768 = vpack.c.b16 %v716, %v715
      %v769 = vpack.c.b16 %v718, %v717
      %v770 = vpack.c.b16 %v720, %v719
      %v771 = vpack.c.b16 %v722, %v721
      %v772 = vpack.c.b16 %v724, %v723
      %v773 = vpack.c.b16 %v726, %v725
      %v774 = vpack.c.b16 %v728, %v727
      %v775 = vpack.c.b16 %v730, %v729
      %v776 = vpack.c.b16 %v732, %v731
      %v777 = vpack.c.b16 %v734, %v733
      %v778 = vpack.c.b16 %v736, %v735
      %v779 = vpack.c.b16 %v738, %v737
      %v780 = vpack.c.b16 %v740, %v739
      %v781 = vpack.c.b16 %v742, %v741
      %v782 = vpack.c.b16 %v744, %v743
      %v783 = vpack.c.b16 %v746, %v745
      %v784 = vpack.c.b16 %v748, %v747
      %v785 = vpack.c.b16 %v750, %v749
      %v786 = vpack.c.b16 %v752, %v751
      %v787 = vpack.c.b16 %v754, %v753
      %v788 = vpack.c.b16 %v756, %v755
      %821 = vmatpush.bf16.msra.mxu0 %v764
      %822 = vmatpush.bf16.msra.mxu0 %v763
      %823 = vmatpush.bf16.msra.mxu0 %v762
      %824 = vmatpush.bf16.msra.mxu0 %v761
      %825 = vmatpush.bf16.msra.mxu0 %v760
      %826 = vmatpush.bf16.msra.mxu0 %v759
      %827 = vmatpush.bf16.msra.mxu0 %v758
      %828 = vmatpush.bf16.msra.mxu0 %v757
      %829 = vmatmul.bf16.gmra.mxu0 %v501
      %v830 = vpop.f32.mrf.mxu0
      %v831 = vadd.f32 %v307, %v830
      %v832 = vpop.f32.mrf.mxu0
      %v833 = vadd.f32 %v307, %v832
      %834 = vmatmul.bf16.gmra.mxu0 %v505
      %v835 = vpop.f32.mrf.mxu0
      %v836 = vadd.f32 %v307, %v835
      %v837 = vpop.f32.mrf.mxu0
      %v838 = vadd.f32 %v307, %v837
      %839 = vmatmul.bf16.gmra.mxu0 %v509
      %v840 = vpop.f32.mrf.mxu0
      %v841 = vadd.f32 %v307, %v840
      %v842 = vpop.f32.mrf.mxu0
      %v843 = vadd.f32 %v307, %v842
      %844 = vmatmul.bf16.gmra.mxu0 %v513
      %v845 = vpop.f32.mrf.mxu0
      %v846 = vadd.f32 %v307, %v845
      %v847 = vpop.f32.mrf.mxu0
      %v848 = vadd.f32 %v307, %v847
      %849 = vmatmul.bf16.gmra.mxu0 %v517
      %v850 = vpop.f32.mrf.mxu0
      %v851 = vadd.f32 %v307, %v850
      %v852 = vpop.f32.mrf.mxu0
      %v853 = vadd.f32 %v307, %v852
      %854 = vmatmul.bf16.gmra.mxu0 %v521
      %v855 = vpop.f32.mrf.mxu0
      %v856 = vadd.f32 %v307, %v855
      %v857 = vpop.f32.mrf.mxu0
      %v858 = vadd.f32 %v307, %v857
      %859 = vmatmul.bf16.gmra.mxu0 %v525
      %v860 = vpop.f32.mrf.mxu0
      %v861 = vadd.f32 %v307, %v860
      %v862 = vpop.f32.mrf.mxu0
      %v863 = vadd.f32 %v307, %v862
      %864 = vmatmul.bf16.gmra.mxu0 %v529
      %v865 = vpop.f32.mrf.mxu0
      %v866 = vadd.f32 %v307, %v865
      %v867 = vpop.f32.mrf.mxu0
      %v868 = vadd.f32 %v307, %v867
      %869 = vmatmul.bf16.gmra.mxu0 %v533
      %v870 = vpop.f32.mrf.mxu0
      %v871 = vadd.f32 %v307, %v870
      %v872 = vpop.f32.mrf.mxu0
      %v873 = vadd.f32 %v307, %v872
      %874 = vmatmul.bf16.gmra.mxu0 %v537
      %v875 = vpop.f32.mrf.mxu0
      %v876 = vadd.f32 %v307, %v875
      %v877 = vpop.f32.mrf.mxu0
      %v878 = vadd.f32 %v307, %v877
      %879 = vmatmul.bf16.gmra.mxu0 %v541
      %v880 = vpop.f32.mrf.mxu0
      %v881 = vadd.f32 %v307, %v880
      %v882 = vpop.f32.mrf.mxu0
      %v883 = vadd.f32 %v307, %v882
      %884 = vmatmul.bf16.gmra.mxu0 %v545
      %v885 = vpop.f32.mrf.mxu0
      %v886 = vadd.f32 %v307, %v885
      %v887 = vpop.f32.mrf.mxu0
      %v888 = vadd.f32 %v307, %v887
      %889 = vmatmul.bf16.gmra.mxu0 %v549
      %v890 = vpop.f32.mrf.mxu0
      %v891 = vadd.f32 %v307, %v890
      %v892 = vpop.f32.mrf.mxu0
      %v893 = vadd.f32 %v307, %v892
      %894 = vmatmul.bf16.gmra.mxu0 %v553
      %v895 = vpop.f32.mrf.mxu0
      %v896 = vadd.f32 %v307, %v895
      %v897 = vpop.f32.mrf.mxu0
      %v898 = vadd.f32 %v307, %v897
      %899 = vmatmul.bf16.gmra.mxu0 %v557
      %v900 = vpop.f32.mrf.mxu0
      %v901 = vadd.f32 %v307, %v900
      %v902 = vpop.f32.mrf.mxu0
      %v903 = vadd.f32 %v307, %v902
      %904 = vmatmul.bf16.gmra.mxu0 %v561
      %v905 = vpop.f32.mrf.mxu0
      %v906 = vadd.f32 %v307, %v905
      %v907 = vpop.f32.mrf.mxu0
      %v908 = vadd.f32 %v307, %v907
      %909 = vdwg.mxu0
      %910 = vmatpush.bf16.msra.mxu0 %v772
      %911 = vmatpush.bf16.msra.mxu0 %v771
      %912 = vmatpush.bf16.msra.mxu0 %v770
      %913 = vmatpush.bf16.msra.mxu0 %v769
      %914 = vmatpush.bf16.msra.mxu0 %v768
      %915 = vmatpush.bf16.msra.mxu0 %v767
      %916 = vmatpush.bf16.msra.mxu0 %v766
      %917 = vmatpush.bf16.msra.mxu0 %v765
      %918 = vmatmul.bf16.gmra.mxu0 %v502
      %v919 = vpop.f32.mrf.mxu0
      %v920 = vadd.f32 %v831, %v919
      %v921 = vpop.f32.mrf.mxu0
      %v922 = vadd.f32 %v833, %v921
      %923 = vmatmul.bf16.gmra.mxu0 %v506
      %v924 = vpop.f32.mrf.mxu0
      %v925 = vadd.f32 %v836, %v924
      %v926 = vpop.f32.mrf.mxu0
      %v927 = vadd.f32 %v838, %v926
      %928 = vmatmul.bf16.gmra.mxu0 %v510
      %v929 = vpop.f32.mrf.mxu0
      %v930 = vadd.f32 %v841, %v929
      %v931 = vpop.f32.mrf.mxu0
      %v932 = vadd.f32 %v843, %v931
      %933 = vmatmul.bf16.gmra.mxu0 %v514
      %v934 = vpop.f32.mrf.mxu0
      %v935 = vadd.f32 %v846, %v934
      %v936 = vpop.f32.mrf.mxu0
      %v937 = vadd.f32 %v848, %v936
      %938 = vmatmul.bf16.gmra.mxu0 %v518
      %v939 = vpop.f32.mrf.mxu0
      %v940 = vadd.f32 %v851, %v939
      %v941 = vpop.f32.mrf.mxu0
      %v942 = vadd.f32 %v853, %v941
      %943 = vmatmul.bf16.gmra.mxu0 %v522
      %v944 = vpop.f32.mrf.mxu0
      %v945 = vadd.f32 %v856, %v944
      %v946 = vpop.f32.mrf.mxu0
      %v947 = vadd.f32 %v858, %v946
      %948 = vmatmul.bf16.gmra.mxu0 %v526
      %v949 = vpop.f32.mrf.mxu0
      %v950 = vadd.f32 %v861, %v949
      %v951 = vpop.f32.mrf.mxu0
      %v952 = vadd.f32 %v863, %v951
      %953 = vmatmul.bf16.gmra.mxu0 %v530
      %v954 = vpop.f32.mrf.mxu0
      %v955 = vadd.f32 %v866, %v954
      %v956 = vpop.f32.mrf.mxu0
      %v957 = vadd.f32 %v868, %v956
      %958 = vmatmul.bf16.gmra.mxu0 %v534
      %v959 = vpop.f32.mrf.mxu0
      %v960 = vadd.f32 %v871, %v959
      %v961 = vpop.f32.mrf.mxu0
      %v962 = vadd.f32 %v873, %v961
      %963 = vmatmul.bf16.gmra.mxu0 %v538
      %v964 = vpop.f32.mrf.mxu0
      %v965 = vadd.f32 %v876, %v964
      %v966 = vpop.f32.mrf.mxu0
      %v967 = vadd.f32 %v878, %v966
      %968 = vmatmul.bf16.gmra.mxu0 %v542
      %v969 = vpop.f32.mrf.mxu0
      %v970 = vadd.f32 %v881, %v969
      %v971 = vpop.f32.mrf.mxu0
      %v972 = vadd.f32 %v883, %v971
      %973 = vmatmul.bf16.gmra.mxu0 %v546
      %v974 = vpop.f32.mrf.mxu0
      %v975 = vadd.f32 %v886, %v974
      %v976 = vpop.f32.mrf.mxu0
      %v977 = vadd.f32 %v888, %v976
      %978 = vmatmul.bf16.gmra.mxu0 %v550
      %v979 = vpop.f32.mrf.mxu0
      %v980 = vadd.f32 %v891, %v979
      %v981 = vpop.f32.mrf.mxu0
      %v982 = vadd.f32 %v893, %v981
      %983 = vmatmul.bf16.gmra.mxu0 %v554
      %v984 = vpop.f32.mrf.mxu0
      %v985 = vadd.f32 %v896, %v984
      %v986 = vpop.f32.mrf.mxu0
      %v987 = vadd.f32 %v898, %v986
      %988 = vmatmul.bf16.gmra.mxu0 %v558
      %v989 = vpop.f32.mrf.mxu0
      %v990 = vadd.f32 %v901, %v989
      %v991 = vpop.f32.mrf.mxu0
      %v992 = vadd.f32 %v903, %v991
      %993 = vmatmul.bf16.gmra.mxu0 %v562
      %v994 = vpop.f32.mrf.mxu0
      %v995 = vadd.f32 %v906, %v994
      %v996 = vpop.f32.mrf.mxu0
      %v997 = vadd.f32 %v908, %v996
      %998 = vdwg.mxu0
      %999 = vmatpush.bf16.msra.mxu0 %v780
      %1000 = vmatpush.bf16.msra.mxu0 %v779
      %1001 = vmatpush.bf16.msra.mxu0 %v778
      %1002 = vmatpush.bf16.msra.mxu0 %v777
      %1003 = vmatpush.bf16.msra.mxu0 %v776
      %1004 = vmatpush.bf16.msra.mxu0 %v775
      %1005 = vmatpush.bf16.msra.mxu0 %v774
      %1006 = vmatpush.bf16.msra.mxu0 %v773
      %1007 = vmatmul.bf16.gmra.mxu0 %v503
      %v1008 = vpop.f32.mrf.mxu0
      %v1009 = vadd.f32 %v920, %v1008
      %v1010 = vpop.f32.mrf.mxu0
      %v1011 = vadd.f32 %v922, %v1010
      %1012 = vmatmul.bf16.gmra.mxu0 %v507
      %v1013 = vpop.f32.mrf.mxu0
      %v1014 = vadd.f32 %v925, %v1013
      %v1015 = vpop.f32.mrf.mxu0
      %v1016 = vadd.f32 %v927, %v1015
      %1017 = vmatmul.bf16.gmra.mxu0 %v511
      %v1018 = vpop.f32.mrf.mxu0
      %v1019 = vadd.f32 %v930, %v1018
      %v1020 = vpop.f32.mrf.mxu0
      %v1021 = vadd.f32 %v932, %v1020
      %1022 = vmatmul.bf16.gmra.mxu0 %v515
      %v1023 = vpop.f32.mrf.mxu0
      %v1024 = vadd.f32 %v935, %v1023
      %v1025 = vpop.f32.mrf.mxu0
      %v1026 = vadd.f32 %v937, %v1025
      %1027 = vmatmul.bf16.gmra.mxu0 %v519
      %v1028 = vpop.f32.mrf.mxu0
      %v1029 = vadd.f32 %v940, %v1028
      %v1030 = vpop.f32.mrf.mxu0
      %v1031 = vadd.f32 %v942, %v1030
      %1032 = vmatmul.bf16.gmra.mxu0 %v523
      %v1033 = vpop.f32.mrf.mxu0
      %v1034 = vadd.f32 %v945, %v1033
      %v1035 = vpop.f32.mrf.mxu0
      %v1036 = vadd.f32 %v947, %v1035
      %1037 = vmatmul.bf16.gmra.mxu0 %v527
      %v1038 = vpop.f32.mrf.mxu0
      %v1039 = vadd.f32 %v950, %v1038
      %v1040 = vpop.f32.mrf.mxu0
      %v1041 = vadd.f32 %v952, %v1040
      %1042 = vmatmul.bf16.gmra.mxu0 %v531
      %v1043 = vpop.f32.mrf.mxu0
      %v1044 = vadd.f32 %v955, %v1043
      %v1045 = vpop.f32.mrf.mxu0
      %v1046 = vadd.f32 %v957, %v1045
      %1047 = vmatmul.bf16.gmra.mxu0 %v535
      %v1048 = vpop.f32.mrf.mxu0
      %v1049 = vadd.f32 %v960, %v1048
      %v1050 = vpop.f32.mrf.mxu0
      %v1051 = vadd.f32 %v962, %v1050
      %1052 = vmatmul.bf16.gmra.mxu0 %v539
      %v1053 = vpop.f32.mrf.mxu0
      %v1054 = vadd.f32 %v965, %v1053
      %v1055 = vpop.f32.mrf.mxu0
      %v1056 = vadd.f32 %v967, %v1055
      %1057 = vmatmul.bf16.gmra.mxu0 %v543
      %v1058 = vpop.f32.mrf.mxu0
      %v1059 = vadd.f32 %v970, %v1058
      %v1060 = vpop.f32.mrf.mxu0
      %v1061 = vadd.f32 %v972, %v1060
      %1062 = vmatmul.bf16.gmra.mxu0 %v547
      %v1063 = vpop.f32.mrf.mxu0
      %v1064 = vadd.f32 %v975, %v1063
      %v1065 = vpop.f32.mrf.mxu0
      %v1066 = vadd.f32 %v977, %v1065
      %1067 = vmatmul.bf16.gmra.mxu0 %v551
      %v1068 = vpop.f32.mrf.mxu0
      %v1069 = vadd.f32 %v980, %v1068
      %v1070 = vpop.f32.mrf.mxu0
      %v1071 = vadd.f32 %v982, %v1070
      %1072 = vmatmul.bf16.gmra.mxu0 %v555
      %v1073 = vpop.f32.mrf.mxu0
      %v1074 = vadd.f32 %v985, %v1073
      %v1075 = vpop.f32.mrf.mxu0
      %v1076 = vadd.f32 %v987, %v1075
      %1077 = vmatmul.bf16.gmra.mxu0 %v559
      %v1078 = vpop.f32.mrf.mxu0
      %v1079 = vadd.f32 %v990, %v1078
      %v1080 = vpop.f32.mrf.mxu0
      %v1081 = vadd.f32 %v992, %v1080
      %1082 = vmatmul.bf16.gmra.mxu0 %v563
      %v1083 = vpop.f32.mrf.mxu0
      %v1084 = vadd.f32 %v995, %v1083
      %v1085 = vpop.f32.mrf.mxu0
      %v1086 = vadd.f32 %v997, %v1085
      %1087 = vdwg.mxu0
      %1088 = vmatpush.bf16.msra.mxu0 %v788
      %1089 = vmatpush.bf16.msra.mxu0 %v787
      %1090 = vmatpush.bf16.msra.mxu0 %v786
      %1091 = vmatpush.bf16.msra.mxu0 %v785
      %1092 = vmatpush.bf16.msra.mxu0 %v784
      %1093 = vmatpush.bf16.msra.mxu0 %v783
      %1094 = vmatpush.bf16.msra.mxu0 %v782
      %1095 = vmatpush.bf16.msra.mxu0 %v781
      %1096 = vmatmul.bf16.gmra.mxu0 %v504
      %v1097 = vpop.f32.mrf.mxu0
      %v1098 = vadd.f32 %v1009, %v1097
      %v1099 = vpop.f32.mrf.mxu0
      %v1100 = vadd.f32 %v1011, %v1099
      %1101 = vmatmul.bf16.gmra.mxu0 %v508
      %v1102 = vpop.f32.mrf.mxu0
      %v1103 = vadd.f32 %v1014, %v1102
      %v1104 = vpop.f32.mrf.mxu0
      %v1105 = vadd.f32 %v1016, %v1104
      %1106 = vmatmul.bf16.gmra.mxu0 %v512
      %v1107 = vpop.f32.mrf.mxu0
      %v1108 = vadd.f32 %v1019, %v1107
      %v1109 = vpop.f32.mrf.mxu0
      %v1110 = vadd.f32 %v1021, %v1109
      %1111 = vmatmul.bf16.gmra.mxu0 %v516
      %v1112 = vpop.f32.mrf.mxu0
      %v1113 = vadd.f32 %v1024, %v1112
      %v1114 = vpop.f32.mrf.mxu0
      %v1115 = vadd.f32 %v1026, %v1114
      %1116 = vmatmul.bf16.gmra.mxu0 %v520
      %v1117 = vpop.f32.mrf.mxu0
      %v1118 = vadd.f32 %v1029, %v1117
      %v1119 = vpop.f32.mrf.mxu0
      %v1120 = vadd.f32 %v1031, %v1119
      %1121 = vmatmul.bf16.gmra.mxu0 %v524
      %v1122 = vpop.f32.mrf.mxu0
      %v1123 = vadd.f32 %v1034, %v1122
      %v1124 = vpop.f32.mrf.mxu0
      %v1125 = vadd.f32 %v1036, %v1124
      %1126 = vmatmul.bf16.gmra.mxu0 %v528
      %v1127 = vpop.f32.mrf.mxu0
      %v1128 = vadd.f32 %v1039, %v1127
      %v1129 = vpop.f32.mrf.mxu0
      %v1130 = vadd.f32 %v1041, %v1129
      %1131 = vmatmul.bf16.gmra.mxu0 %v532
      %v1132 = vpop.f32.mrf.mxu0
      %v1133 = vadd.f32 %v1044, %v1132
      %v1134 = vpop.f32.mrf.mxu0
      %v1135 = vadd.f32 %v1046, %v1134
      %1136 = vmatmul.bf16.gmra.mxu0 %v536
      %v1137 = vpop.f32.mrf.mxu0
      %v1138 = vadd.f32 %v1049, %v1137
      %v1139 = vpop.f32.mrf.mxu0
      %v1140 = vadd.f32 %v1051, %v1139
      %1141 = vmatmul.bf16.gmra.mxu0 %v540
      %v1142 = vpop.f32.mrf.mxu0
      %v1143 = vadd.f32 %v1054, %v1142
      %v1144 = vpop.f32.mrf.mxu0
      %v1145 = vadd.f32 %v1056, %v1144
      %1146 = vmatmul.bf16.gmra.mxu0 %v544
      %v1147 = vpop.f32.mrf.mxu0
      %v1148 = vadd.f32 %v1059, %v1147
      %v1149 = vpop.f32.mrf.mxu0
      %v1150 = vadd.f32 %v1061, %v1149
      %1151 = vmatmul.bf16.gmra.mxu0 %v548
      %v1152 = vpop.f32.mrf.mxu0
      %v1153 = vadd.f32 %v1064, %v1152
      %v1154 = vpop.f32.mrf.mxu0
      %v1155 = vadd.f32 %v1066, %v1154
      %1156 = vmatmul.bf16.gmra.mxu0 %v552
      %v1157 = vpop.f32.mrf.mxu0
      %v1158 = vadd.f32 %v1069, %v1157
      %v1159 = vpop.f32.mrf.mxu0
      %v1160 = vadd.f32 %v1071, %v1159
      %1161 = vmatmul.bf16.gmra.mxu0 %v556
      %v1162 = vpop.f32.mrf.mxu0
      %v1163 = vadd.f32 %v1074, %v1162
      %v1164 = vpop.f32.mrf.mxu0
      %v1165 = vadd.f32 %v1076, %v1164
      %1166 = vmatmul.bf16.gmra.mxu0 %v560
      %v1167 = vpop.f32.mrf.mxu0
      %v1168 = vadd.f32 %v1079, %v1167
      %v1169 = vpop.f32.mrf.mxu0
      %v1170 = vadd.f32 %v1081, %v1169
      %1171 = vmatmul.bf16.gmra.mxu0 %v564
      %v1172 = vpop.f32.mrf.mxu0
      %v1173 = vadd.f32 %v1084, %v1172
      %v1174 = vpop.f32.mrf.mxu0
      %v1175 = vadd.f32 %v1086, %v1174
      %1176 = vdwg.mxu0
      %v1177 = vmax.f32 %v1098, 0.0
      %v1178 = vmax.f32 %v1100, 0.0
      %v1179 = vmax.f32 %v1103, 0.0
      %v1180 = vmax.f32 %v1105, 0.0
      %v1181 = vmax.f32 %v1108, 0.0
      %v1182 = vmax.f32 %v1110, 0.0
      %v1183 = vmax.f32 %v1113, 0.0
      %v1184 = vmax.f32 %v1115, 0.0
      %v1185 = vmax.f32 %v1118, 0.0
      %v1186 = vmax.f32 %v1120, 0.0
      %v1187 = vmax.f32 %v1123, 0.0
      %v1188 = vmax.f32 %v1125, 0.0
      %v1189 = vmax.f32 %v1128, 0.0
      %v1190 = vmax.f32 %v1130, 0.0
      %v1191 = vmax.f32 %v1133, 0.0
      %v1192 = vmax.f32 %v1135, 0.0
      %v1193 = vmax.f32 %v1138, 0.0
      %v1194 = vmax.f32 %v1140, 0.0
      %v1195 = vmax.f32 %v1143, 0.0
      %v1196 = vmax.f32 %v1145, 0.0
      %v1197 = vmax.f32 %v1148, 0.0
      %v1198 = vmax.f32 %v1150, 0.0
      %v1199 = vmax.f32 %v1153, 0.0
      %v1200 = vmax.f32 %v1155, 0.0
      %v1201 = vmax.f32 %v1158, 0.0
      %v1202 = vmax.f32 %v1160, 0.0
      %v1203 = vmax.f32 %v1163, 0.0
      %v1204 = vmax.f32 %v1165, 0.0
      %v1205 = vmax.f32 %v1168, 0.0
      %v1206 = vmax.f32 %v1170, 0.0
      %v1207 = vmax.f32 %v1173, 0.0
      %v1208 = vmax.f32 %v1175, 0.0
      %v1209 = vpack.c.bf16 %v1177, %v1177
      %v1210 = vpack.c.bf16 %v1178, %v1178
      %v1211 = vpack.c.bf16 %v1179, %v1179
      %v1212 = vpack.c.bf16 %v1180, %v1180
      %v1213 = vpack.c.bf16 %v1181, %v1181
      %v1214 = vpack.c.bf16 %v1182, %v1182
      %v1215 = vpack.c.bf16 %v1183, %v1183
      %v1216 = vpack.c.bf16 %v1184, %v1184
      %v1217 = vpack.c.bf16 %v1185, %v1185
      %v1218 = vpack.c.bf16 %v1186, %v1186
      %v1219 = vpack.c.bf16 %v1187, %v1187
      %v1220 = vpack.c.bf16 %v1188, %v1188
      %v1221 = vpack.c.bf16 %v1189, %v1189
      %v1222 = vpack.c.bf16 %v1190, %v1190
      %v1223 = vpack.c.bf16 %v1191, %v1191
      %v1224 = vpack.c.bf16 %v1192, %v1192
      %v1225 = vpack.c.bf16 %v1193, %v1193
      %v1226 = vpack.c.bf16 %v1194, %v1194
      %v1227 = vpack.c.bf16 %v1195, %v1195
      %v1228 = vpack.c.bf16 %v1196, %v1196
      %v1229 = vpack.c.bf16 %v1197, %v1197
      %v1230 = vpack.c.bf16 %v1198, %v1198
      %v1231 = vpack.c.bf16 %v1199, %v1199
      %v1232 = vpack.c.bf16 %v1200, %v1200
      %v1233 = vpack.c.bf16 %v1201, %v1201
      %v1234 = vpack.c.bf16 %v1202, %v1202
      %v1235 = vpack.c.bf16 %v1203, %v1203
      %v1236 = vpack.c.bf16 %v1204, %v1204
      %v1237 = vpack.c.bf16 %v1205, %v1205
      %v1238 = vpack.c.bf16 %v1206, %v1206
      %v1239 = vpack.c.bf16 %v1207, %v1207
      %v1240 = vpack.c.bf16 %v1208, %v1208
      %vm1241 = vcmask 257024
      %1242 = vst.msk [vmem:[%s175] sm:$0xf] %vm1241, %v1209
      %1243 = vst.msk [vmem:[%s175 + $0x4] sm:$0xf] %vm1241, %v1210
      %1244 = vst.msk [vmem:[%s175 + $0x8] sm:$0xf] %vm1241, %v1211
      %1245 = vst.msk [vmem:[%s175 + $0xc] sm:$0xf] %vm1241, %v1212
      %1246 = vst.msk [vmem:[%s175 + $0x10] sm:$0xf] %vm1241, %v1213
      %1247 = vst.msk [vmem:[%s175 + $0x14] sm:$0xf] %vm1241, %v1214
      %1248 = vst.msk [vmem:[%s175 + $0x18] sm:$0xf] %vm1241, %v1215
      %1249 = vst.msk [vmem:[%s175 + $0x1c] sm:$0xf] %vm1241, %v1216
      %1250 = vst.msk [vmem:[%s175 + $0x20] sm:$0xf] %vm1241, %v1217
      %1251 = vst.msk [vmem:[%s175 + $0x24] sm:$0xf] %vm1241, %v1218
      %1252 = vst.msk [vmem:[%s175 + $0x28] sm:$0xf] %vm1241, %v1219
      %1253 = vst.msk [vmem:[%s175 + $0x2c] sm:$0xf] %vm1241, %v1220
      %1254 = vst.msk [vmem:[%s175 + $0x30] sm:$0xf] %vm1241, %v1221
      %1255 = vst.msk [vmem:[%s175 + $0x34] sm:$0xf] %vm1241, %v1222
      %1256 = vst.msk [vmem:[%s175 + $0x38] sm:$0xf] %vm1241, %v1223
      %1257 = vst.msk [vmem:[%s175 + $0x3c] sm:$0xf] %vm1241, %v1224
      %1258 = vst.msk [vmem:[%s175 + $0x40] sm:$0xf] %vm1241, %v1225
      %1259 = vst.msk [vmem:[%s175 + $0x44] sm:$0xf] %vm1241, %v1226
      %1260 = vst.msk [vmem:[%s175 + $0x48] sm:$0xf] %vm1241, %v1227
      %1261 = vst.msk [vmem:[%s175 + $0x4c] sm:$0xf] %vm1241, %v1228
      %1262 = vst.msk [vmem:[%s175 + $0x50] sm:$0xf] %vm1241, %v1229
      %1263 = vst.msk [vmem:[%s175 + $0x54] sm:$0xf] %vm1241, %v1230
      %1264 = vst.msk [vmem:[%s175 + $0x58] sm:$0xf] %vm1241, %v1231
      %1265 = vst.msk [vmem:[%s175 + $0x5c] sm:$0xf] %vm1241, %v1232
      %1266 = vst.msk [vmem:[%s175 + $0x60] sm:$0xf] %vm1241, %v1233
      %1267 = vst.msk [vmem:[%s175 + $0x64] sm:$0xf] %vm1241, %v1234
      %1268 = vst.msk [vmem:[%s175 + $0x68] sm:$0xf] %vm1241, %v1235
      %1269 = vst.msk [vmem:[%s175 + $0x6c] sm:$0xf] %vm1241, %v1236
      %1270 = vst.msk [vmem:[%s175 + $0x70] sm:$0xf] %vm1241, %v1237
      %1271 = vst.msk [vmem:[%s175 + $0x74] sm:$0xf] %vm1241, %v1238
      %1272 = vst.msk [vmem:[%s175 + $0x78] sm:$0xf] %vm1241, %v1239
      %1273 = vst.msk [vmem:[%s175 + $0x7c] sm:$0xf] %vm1241, %v1240
      %s1274 = smul.u32 32, %s14
      %p1275 = scmp.lt.s32.totalorder %s1274, 63
      %s1276 = scalar_select %p1275, %s1274, 63
      %s1277 = smul.addr %s1276, 4
      %s1278 = scalar_lea.vmem %s3, %s1277
      // Predicated region
      $region33: #{factor_vae1_forward.11} parent=31 // pred_check
        %p1279 = pneg %p100
      $region34: #{factor_vae1_forward.11} parent=31 // pred_check_branch
        %1281 = sbr.rel (%p1279) target = $region36
      $region35: #{factor_vae1_forward.11} parent=31 // pred_region
        %s1282 = smul.u32 32, %s14
      $region36: #{factor_vae1_forward.11} parent=31 // pred_fallthru
        _
    $region32: #{factor_vae1_forward.11} parent=5 // pred_fallthru
      _
    %p1283 = scmp.le.s32.totalorder 2, %s9
    // Predicated region
    $region37: #{factor_vae1_forward.11} parent=5 // pred_check
      %p1284 = pneg %p1283
    $region38: #{factor_vae1_forward.11} parent=5 // pred_check_branch
      %1286 = sbr.rel (%p1284) target = $region40
    $region39: #{factor_vae1_forward.11} parent=5 // pred_region
      %s1287 = ssub.s32 %s9, 2
      // Predicated region
      $region41: #{factor_vae1_forward.11} parent=39 // pred_check
        %p1288 = pneg %p106
      $region42: #{factor_vae1_forward.11} parent=39 // pred_check_branch
        %1290 = sbr.rel (%p1288) target = $region44
      $region43: #{factor_vae1_forward.11} parent=39 // pred_region
        %s1291 = smul.u32 32, %s15
        %p1292 = scmp.lt.s32.totalorder %s1291, 63
        %s1293 = scalar_select %p1292, %s1291, 63
        %s1294 = smul.addr %s1293, 4
        %s1295 = scalar_lea.vmem %s3, %s1294
      $region44: #{factor_vae1_forward.11} parent=39 // pred_fallthru
        _
    $region40: #{factor_vae1_forward.11} parent=5 // pred_fallthru
      _
  $region6: #{factor_vae1_forward.11} parent=0 // loop_footer
    %s13 = sadd.s32 1, %s9
  $region7: #{factor_vae1_forward.11} parent=0 // loop_footer_branch
    %8 = sbr.rel target = $region3
  $region8: #{factor_vae1_forward.11} parent=0 // loop_exit
    _

// kernel: factor_vae1_forward.12
$region0: #{factor_vae1_forward.12}
  #allocation0 [shape = 'u32[]', space=smem, size = 0x4, offset = 0x4, fixed_abs, tag = 'smem constant byte address 0x4 - core index']
  #allocation1 [shape = 'u32[72,128]{1,0:T(1,128)}', space=vmem, size = 0x9000, scoped, tag = 'internal scratch']
  %s0 = inlined_call_operand.vmem [shape: bf16[128,512], index: 0, kind: input, shape index: {}]
  %s1 = inlined_call_operand.vmem [shape: bf16[512,64], index: 1, kind: input, shape index: {}]
  %s2 = inlined_call_operand.vmem [shape: f32[1,64], index: 2, kind: input, shape index: {}]
  %s3 = inlined_call_operand.vmem [shape: bf16[128,64], index: 3, kind: output, shape index: {}]
  %s4 = sld [smem:[#allocation0]]
  $region22: #{factor_vae1_forward.12} parent=0
    _
  %s6 = ssub.s32 1, %s4
  %s7 = scalar_select 0, %s6, %s4
  // Predicated region
  $region2: #{factor_vae1_forward.12} parent=0 // pred_check
    _
  $region3: #{factor_vae1_forward.12} parent=0 // pred_check_branch
    %9 = sbr.rel (0) target = $region5
  $region4: #{factor_vae1_forward.12} parent=0 // pred_region
    _
  $region5: #{factor_vae1_forward.12} parent=0 // pred_fallthru
    _
  // Predicated region
  $region6: #{factor_vae1_forward.12} parent=0 // pred_check
    _
  $region7: #{factor_vae1_forward.12} parent=0 // pred_check_branch
    %11 = sbr.rel (0) target = $region9
  $region8: #{factor_vae1_forward.12} parent=0 // pred_region
    _
  $region9: #{factor_vae1_forward.12} parent=0 // pred_fallthru
    _
  // Predicated region
  $region10: #{factor_vae1_forward.12} parent=0 // pred_check
    _
  $region11: #{factor_vae1_forward.12} parent=0 // pred_check_branch
    %13 = sbr.rel (0) target = $region13
  $region12: #{factor_vae1_forward.12} parent=0 // pred_region
    _
  $region13: #{factor_vae1_forward.12} parent=0 // pred_fallthru
    _
  %v14 = vld [vmem:[%s0] sm:$0xff]
  %v15 = vld [vmem:[%s0 + $0x8] sm:$0xff]
  %v16 = vld [vmem:[%s0 + $0x10] sm:$0xff]
  %v17 = vld [vmem:[%s0 + $0x18] sm:$0xff]
  %v18 = vld [vmem:[%s0 + $0x20] sm:$0xff]
  %v19 = vld [vmem:[%s0 + $0x28] sm:$0xff]
  %v20 = vld [vmem:[%s0 + $0x30] sm:$0xff]
  %v21 = vld [vmem:[%s0 + $0x38] sm:$0xff]
  %v22 = vld [vmem:[%s0 + $0x40] sm:$0xff]
  %v23 = vld [vmem:[%s0 + $0x48] sm:$0xff]
  %v24 = vld [vmem:[%s0 + $0x50] sm:$0xff]
  %v25 = vld [vmem:[%s0 + $0x58] sm:$0xff]
  %v26 = vld [vmem:[%s0 + $0x60] sm:$0xff]
  %v27 = vld [vmem:[%s0 + $0x68] sm:$0xff]
  %v28 = vld [vmem:[%s0 + $0x70] sm:$0xff]
  %v29 = vld [vmem:[%s0 + $0x78] sm:$0xff]
  %v30 = vld [vmem:[%s0 + $0x80] sm:$0xff]
  %v31 = vld [vmem:[%s0 + $0x88] sm:$0xff]
  %v32 = vld [vmem:[%s0 + $0x90] sm:$0xff]
  %v33 = vld [vmem:[%s0 + $0x98] sm:$0xff]
  %v34 = vld [vmem:[%s0 + $0xa0] sm:$0xff]
  %v35 = vld [vmem:[%s0 + $0xa8] sm:$0xff]
  %v36 = vld [vmem:[%s0 + $0xb0] sm:$0xff]
  %v37 = vld [vmem:[%s0 + $0xb8] sm:$0xff]
  %v38 = vld [vmem:[%s0 + $0xc0] sm:$0xff]
  %v39 = vld [vmem:[%s0 + $0xc8] sm:$0xff]
  %v40 = vld [vmem:[%s0 + $0xd0] sm:$0xff]
  %v41 = vld [vmem:[%s0 + $0xd8] sm:$0xff]
  %v42 = vld [vmem:[%s0 + $0xe0] sm:$0xff]
  %v43 = vld [vmem:[%s0 + $0xe8] sm:$0xff]
  %v44 = vld [vmem:[%s0 + $0xf0] sm:$0xff]
  %v45 = vld [vmem:[%s0 + $0xf8] sm:$0xff]
  %v46 = vld [vmem:[%s1] sm:$0xf]
  %v47 = vld [vmem:[%s1 + $0x4] sm:$0xf]
  %v48 = vld [vmem:[%s1 + $0x8] sm:$0xf]
  %v49 = vld [vmem:[%s1 + $0xc] sm:$0xf]
  %v50 = vld [vmem:[%s1 + $0x10] sm:$0xf]
  %v51 = vld [vmem:[%s1 + $0x14] sm:$0xf]
  %v52 = vld [vmem:[%s1 + $0x18] sm:$0xf]
  %v53 = vld [vmem:[%s1 + $0x1c] sm:$0xf]
  %v54 = vld [vmem:[%s1 + $0x20] sm:$0xf]
  %v55 = vld [vmem:[%s1 + $0x24] sm:$0xf]
  %v56 = vld [vmem:[%s1 + $0x28] sm:$0xf]
  %v57 = vld [vmem:[%s1 + $0x2c] sm:$0xf]
  %v58 = vld [vmem:[%s1 + $0x30] sm:$0xf]
  %v59 = vld [vmem:[%s1 + $0x34] sm:$0xf]
  %v60 = vld [vmem:[%s1 + $0x38] sm:$0xf]
  %v61 = vld [vmem:[%s1 + $0x3c] sm:$0xf]
  %v62 = vld [vmem:[%s1 + $0x40] sm:$0xf]
  %v63 = vld [vmem:[%s1 + $0x44] sm:$0xf]
  %v64 = vld [vmem:[%s1 + $0x48] sm:$0xf]
  %v65 = vld [vmem:[%s1 + $0x4c] sm:$0xf]
  %v66 = vld [vmem:[%s1 + $0x50] sm:$0xf]
  %v67 = vld [vmem:[%s1 + $0x54] sm:$0xf]
  %v68 = vld [vmem:[%s1 + $0x58] sm:$0xf]
  %v69 = vld [vmem:[%s1 + $0x5c] sm:$0xf]
  %v70 = vld [vmem:[%s1 + $0x60] sm:$0xf]
  %v71 = vld [vmem:[%s1 + $0x64] sm:$0xf]
  %v72 = vld [vmem:[%s1 + $0x68] sm:$0xf]
  %v73 = vld [vmem:[%s1 + $0x6c] sm:$0xf]
  %v74 = vld [vmem:[%s1 + $0x70] sm:$0xf]
  %v75 = vld [vmem:[%s1 + $0x74] sm:$0xf]
  %v76 = vld [vmem:[%s1 + $0x78] sm:$0xf]
  %v77 = vld [vmem:[%s1 + $0x7c] sm:$0xf]
  %v78 = vld [vmem:[%s1 + $0x80] sm:$0xf]
  %v79 = vld [vmem:[%s1 + $0x84] sm:$0xf]
  %v80 = vld [vmem:[%s1 + $0x88] sm:$0xf]
  %v81 = vld [vmem:[%s1 + $0x8c] sm:$0xf]
  %v82 = vld [vmem:[%s1 + $0x90] sm:$0xf]
  %v83 = vld [vmem:[%s1 + $0x94] sm:$0xf]
  %v84 = vld [vmem:[%s1 + $0x98] sm:$0xf]
  %v85 = vld [vmem:[%s1 + $0x9c] sm:$0xf]
  %v86 = vld [vmem:[%s1 + $0xa0] sm:$0xf]
  %v87 = vld [vmem:[%s1 + $0xa4] sm:$0xf]
  %v88 = vld [vmem:[%s1 + $0xa8] sm:$0xf]
  %v89 = vld [vmem:[%s1 + $0xac] sm:$0xf]
  %v90 = vld [vmem:[%s1 + $0xb0] sm:$0xf]
  %v91 = vld [vmem:[%s1 + $0xb4] sm:$0xf]
  %v92 = vld [vmem:[%s1 + $0xb8] sm:$0xf]
  %v93 = vld [vmem:[%s1 + $0xbc] sm:$0xf]
  %v94 = vld [vmem:[%s1 + $0xc0] sm:$0xf]
  %v95 = vld [vmem:[%s1 + $0xc4] sm:$0xf]
  %v96 = vld [vmem:[%s1 + $0xc8] sm:$0xf]
  %v97 = vld [vmem:[%s1 + $0xcc] sm:$0xf]
  %v98 = vld [vmem:[%s1 + $0xd0] sm:$0xf]
  %v99 = vld [vmem:[%s1 + $0xd4] sm:$0xf]
  %v100 = vld [vmem:[%s1 + $0xd8] sm:$0xf]
  %v101 = vld [vmem:[%s1 + $0xdc] sm:$0xf]
  %v102 = vld [vmem:[%s1 + $0xe0] sm:$0xf]
  %v103 = vld [vmem:[%s1 + $0xe4] sm:$0xf]
  %v104 = vld [vmem:[%s1 + $0xe8] sm:$0xf]
  %v105 = vld [vmem:[%s1 + $0xec] sm:$0xf]
  %v106 = vld [vmem:[%s1 + $0xf0] sm:$0xf]
  %v107 = vld [vmem:[%s1 + $0xf4] sm:$0xf]
  %v108 = vld [vmem:[%s1 + $0xf8] sm:$0xf]
  %v109 = vld [vmem:[%s1 + $0xfc] sm:$0xf]
  %v110 = vld [vmem:[%s2] sm:$0x1]
  %v112 = vperm.slane %v110, 0
  %v146 = vunpack.c.l.b16 %v14
  %v147 = vunpack.c.h.b16 %v14
  %v148 = vunpack.c.l.b16 %v15
  %v149 = vunpack.c.h.b16 %v15
  %v150 = vunpack.c.l.b16 %v16
  %v151 = vunpack.c.h.b16 %v16
  %v152 = vunpack.c.l.b16 %v17
  %v153 = vunpack.c.h.b16 %v17
  %v154 = vunpack.c.l.b16 %v18
  %v155 = vunpack.c.h.b16 %v18
  %v156 = vunpack.c.l.b16 %v19
  %v157 = vunpack.c.h.b16 %v19
  %v158 = vunpack.c.l.b16 %v20
  %v159 = vunpack.c.h.b16 %v20
  %v160 = vunpack.c.l.b16 %v21
  %v161 = vunpack.c.h.b16 %v21
  %v162 = vunpack.c.l.b16 %v22
  %v163 = vunpack.c.h.b16 %v22
  %v164 = vunpack.c.l.b16 %v23
  %v165 = vunpack.c.h.b16 %v23
  %v166 = vunpack.c.l.b16 %v24
  %v167 = vunpack.c.h.b16 %v24
  %v168 = vunpack.c.l.b16 %v25
  %v169 = vunpack.c.h.b16 %v25
  %v170 = vunpack.c.l.b16 %v26
  %v171 = vunpack.c.h.b16 %v26
  %v172 = vunpack.c.l.b16 %v27
  %v173 = vunpack.c.h.b16 %v27
  %v174 = vunpack.c.l.b16 %v28
  %v175 = vunpack.c.h.b16 %v28
  %v176 = vunpack.c.l.b16 %v29
  %v177 = vunpack.c.h.b16 %v29
  %v178 = vunpack.c.l.b16 %v30
  %v179 = vunpack.c.h.b16 %v30
  %v180 = vunpack.c.l.b16 %v31
  %v181 = vunpack.c.h.b16 %v31
  %v182 = vunpack.c.l.b16 %v32
  %v183 = vunpack.c.h.b16 %v32
  %v184 = vunpack.c.l.b16 %v33
  %v185 = vunpack.c.h.b16 %v33
  %v186 = vunpack.c.l.b16 %v34
  %v187 = vunpack.c.h.b16 %v34
  %v188 = vunpack.c.l.b16 %v35
  %v189 = vunpack.c.h.b16 %v35
  %v190 = vunpack.c.l.b16 %v36
  %v191 = vunpack.c.h.b16 %v36
  %v192 = vunpack.c.l.b16 %v37
  %v193 = vunpack.c.h.b16 %v37
  %v194 = vunpack.c.l.b16 %v38
  %v195 = vunpack.c.h.b16 %v38
  %v196 = vunpack.c.l.b16 %v39
  %v197 = vunpack.c.h.b16 %v39
  %v198 = vunpack.c.l.b16 %v40
  %v199 = vunpack.c.h.b16 %v40
  %v200 = vunpack.c.l.b16 %v41
  %v201 = vunpack.c.h.b16 %v41
  %v202 = vunpack.c.l.b16 %v42
  %v203 = vunpack.c.h.b16 %v42
  %v204 = vunpack.c.l.b16 %v43
  %v205 = vunpack.c.h.b16 %v43
  %v206 = vunpack.c.l.b16 %v44
  %v207 = vunpack.c.h.b16 %v44
  %v208 = vunpack.c.l.b16 %v45
  %v209 = vunpack.c.h.b16 %v45
  %v210 = vpack.c.b16 %v150, %v146
  %v211 = vpack.c.b16 %v151, %v147
  %v212 = vpack.c.b16 %v152, %v148
  %v213 = vpack.c.b16 %v153, %v149
  %v214 = vpack.c.b16 %v158, %v154
  %v215 = vpack.c.b16 %v159, %v155
  %v216 = vpack.c.b16 %v160, %v156
  %v217 = vpack.c.b16 %v161, %v157
  %v218 = vpack.c.b16 %v166, %v162
  %v219 = vpack.c.b16 %v167, %v163
  %v220 = vpack.c.b16 %v168, %v164
  %v221 = vpack.c.b16 %v169, %v165
  %v222 = vpack.c.b16 %v174, %v170
  %v223 = vpack.c.b16 %v175, %v171
  %v224 = vpack.c.b16 %v176, %v172
  %v225 = vpack.c.b16 %v177, %v173
  %v226 = vpack.c.b16 %v182, %v178
  %v227 = vpack.c.b16 %v183, %v179
  %v228 = vpack.c.b16 %v184, %v180
  %v229 = vpack.c.b16 %v185, %v181
  %v230 = vpack.c.b16 %v190, %v186
  %v231 = vpack.c.b16 %v191, %v187
  %v232 = vpack.c.b16 %v192, %v188
  %v233 = vpack.c.b16 %v193, %v189
  %v234 = vpack.c.b16 %v198, %v194
  %v235 = vpack.c.b16 %v199, %v195
  %v236 = vpack.c.b16 %v200, %v196
  %v237 = vpack.c.b16 %v201, %v197
  %v238 = vpack.c.b16 %v206, %v202
  %v239 = vpack.c.b16 %v207, %v203
  %v240 = vpack.c.b16 %v208, %v204
  %v241 = vpack.c.b16 %v209, %v205
  %v338 = vunpack.c.l.b16 %v46
  %v339 = vunpack.c.l.b16 %v47
  %v340 = vunpack.c.l.b16 %v48
  %v341 = vunpack.c.l.b16 %v49
  %v342 = vunpack.c.l.b16 %v50
  %v343 = vunpack.c.l.b16 %v51
  %v344 = vunpack.c.l.b16 %v52
  %v345 = vunpack.c.l.b16 %v53
  %v346 = vunpack.c.l.b16 %v54
  %v347 = vunpack.c.l.b16 %v55
  %v348 = vunpack.c.l.b16 %v56
  %v349 = vunpack.c.l.b16 %v57
  %v350 = vunpack.c.l.b16 %v58
  %v351 = vunpack.c.l.b16 %v59
  %v352 = vunpack.c.l.b16 %v60
  %v353 = vunpack.c.l.b16 %v61
  %v354 = vunpack.c.l.b16 %v62
  %v355 = vunpack.c.l.b16 %v63
  %v356 = vunpack.c.l.b16 %v64
  %v357 = vunpack.c.l.b16 %v65
  %v358 = vunpack.c.l.b16 %v66
  %v359 = vunpack.c.l.b16 %v67
  %v360 = vunpack.c.l.b16 %v68
  %v361 = vunpack.c.l.b16 %v69
  %v362 = vunpack.c.l.b16 %v70
  %v363 = vunpack.c.l.b16 %v71
  %v364 = vunpack.c.l.b16 %v72
  %v365 = vunpack.c.l.b16 %v73
  %v366 = vunpack.c.l.b16 %v74
  %v367 = vunpack.c.l.b16 %v75
  %v368 = vunpack.c.l.b16 %v76
  %v369 = vunpack.c.l.b16 %v77
  %v370 = vunpack.c.l.b16 %v78
  %v371 = vunpack.c.l.b16 %v79
  %v372 = vunpack.c.l.b16 %v80
  %v373 = vunpack.c.l.b16 %v81
  %v374 = vunpack.c.l.b16 %v82
  %v375 = vunpack.c.l.b16 %v83
  %v376 = vunpack.c.l.b16 %v84
  %v377 = vunpack.c.l.b16 %v85
  %v378 = vunpack.c.l.b16 %v86
  %v379 = vunpack.c.l.b16 %v87
  %v380 = vunpack.c.l.b16 %v88
  %v381 = vunpack.c.l.b16 %v89
  %v382 = vunpack.c.l.b16 %v90
  %v383 = vunpack.c.l.b16 %v91
  %v384 = vunpack.c.l.b16 %v92
  %v385 = vunpack.c.l.b16 %v93
  %v386 = vunpack.c.l.b16 %v94
  %v387 = vunpack.c.l.b16 %v95
  %v388 = vunpack.c.l.b16 %v96
  %v389 = vunpack.c.l.b16 %v97
  %v390 = vunpack.c.l.b16 %v98
  %v391 = vunpack.c.l.b16 %v99
  %v392 = vunpack.c.l.b16 %v100
  %v393 = vunpack.c.l.b16 %v101
  %v394 = vunpack.c.l.b16 %v102
  %v395 = vunpack.c.l.b16 %v103
  %v396 = vunpack.c.l.b16 %v104
  %v397 = vunpack.c.l.b16 %v105
  %v398 = vunpack.c.l.b16 %v106
  %v399 = vunpack.c.l.b16 %v107
  %v400 = vunpack.c.l.b16 %v108
  %v401 = vunpack.c.l.b16 %v109
  %v402 = vpack.c.b16 %v339, %v338
  %v403 = vpack.c.b16 %v341, %v340
  %v404 = vpack.c.b16 %v343, %v342
  %v405 = vpack.c.b16 %v345, %v344
  %v406 = vpack.c.b16 %v347, %v346
  %v407 = vpack.c.b16 %v349, %v348
  %v408 = vpack.c.b16 %v351, %v350
  %v409 = vpack.c.b16 %v353, %v352
  %v410 = vpack.c.b16 %v355, %v354
  %v411 = vpack.c.b16 %v357, %v356
  %v412 = vpack.c.b16 %v359, %v358
  %v413 = vpack.c.b16 %v361, %v360
  %v414 = vpack.c.b16 %v363, %v362
  %v415 = vpack.c.b16 %v365, %v364
  %v416 = vpack.c.b16 %v367, %v366
  %v417 = vpack.c.b16 %v369, %v368
  %v418 = vpack.c.b16 %v371, %v370
  %v419 = vpack.c.b16 %v373, %v372
  %v420 = vpack.c.b16 %v375, %v374
  %v421 = vpack.c.b16 %v377, %v376
  %v422 = vpack.c.b16 %v379, %v378
  %v423 = vpack.c.b16 %v381, %v380
  %v424 = vpack.c.b16 %v383, %v382
  %v425 = vpack.c.b16 %v385, %v384
  %v426 = vpack.c.b16 %v387, %v386
  %v427 = vpack.c.b16 %v389, %v388
  %v428 = vpack.c.b16 %v391, %v390
  %v429 = vpack.c.b16 %v393, %v392
  %v430 = vpack.c.b16 %v395, %v394
  %v431 = vpack.c.b16 %v397, %v396
  %v432 = vpack.c.b16 %v399, %v398
  %v433 = vpack.c.b16 %v401, %v400
  %466 = vmatpush.bf16.msra.mxu0 %v409
  %467 = vmatpush.bf16.msra.mxu0 %v408
  %468 = vmatpush.bf16.msra.mxu0 %v407
  %469 = vmatpush.bf16.msra.mxu0 %v406
  %470 = vmatpush.bf16.msra.mxu0 %v405
  %471 = vmatpush.bf16.msra.mxu0 %v404
  %472 = vmatpush.bf16.msra.mxu0 %v403
  %473 = vmatpush.bf16.msra.mxu0 %v402
  %474 = vmatmul.bf16.gmra.mxu0 %v210
  %v475 = vpop.f32.mrf.mxu0
  %v476 = vadd.f32 %v112, %v475
  %v477 = vpop.f32.mrf.mxu0
  %v478 = vadd.f32 %v112, %v477
  %479 = vmatmul.bf16.gmra.mxu0 %v214
  %v480 = vpop.f32.mrf.mxu0
  %v481 = vadd.f32 %v112, %v480
  %v482 = vpop.f32.mrf.mxu0
  %v483 = vadd.f32 %v112, %v482
  %484 = vmatmul.bf16.gmra.mxu0 %v218
  %v485 = vpop.f32.mrf.mxu0
  %v486 = vadd.f32 %v112, %v485
  %v487 = vpop.f32.mrf.mxu0
  %v488 = vadd.f32 %v112, %v487
  %489 = vmatmul.bf16.gmra.mxu0 %v222
  %v490 = vpop.f32.mrf.mxu0
  %v491 = vadd.f32 %v112, %v490
  %v492 = vpop.f32.mrf.mxu0
  %v493 = vadd.f32 %v112, %v492
  %494 = vmatmul.bf16.gmra.mxu0 %v226
  %v495 = vpop.f32.mrf.mxu0
  %v496 = vadd.f32 %v112, %v495
  %v497 = vpop.f32.mrf.mxu0
  %v498 = vadd.f32 %v112, %v497
  %499 = vmatmul.bf16.gmra.mxu0 %v230
  %v500 = vpop.f32.mrf.mxu0
  %v501 = vadd.f32 %v112, %v500
  %v502 = vpop.f32.mrf.mxu0
  %v503 = vadd.f32 %v112, %v502
  %504 = vmatmul.bf16.gmra.mxu0 %v234
  %v505 = vpop.f32.mrf.mxu0
  %v506 = vadd.f32 %v112, %v505
  %v507 = vpop.f32.mrf.mxu0
  %v508 = vadd.f32 %v112, %v507
  %509 = vmatmul.bf16.gmra.mxu0 %v238
  %v510 = vpop.f32.mrf.mxu0
  %v511 = vadd.f32 %v112, %v510
  %v512 = vpop.f32.mrf.mxu0
  %v513 = vadd.f32 %v112, %v512
  %514 = vdwg.mxu0
  %515 = vmatpush.bf16.msra.mxu0 %v417
  %516 = vmatpush.bf16.msra.mxu0 %v416
  %517 = vmatpush.bf16.msra.mxu0 %v415
  %518 = vmatpush.bf16.msra.mxu0 %v414
  %519 = vmatpush.bf16.msra.mxu0 %v413
  %520 = vmatpush.bf16.msra.mxu0 %v412
  %521 = vmatpush.bf16.msra.mxu0 %v411
  %522 = vmatpush.bf16.msra.mxu0 %v410
  %523 = vmatmul.bf16.gmra.mxu0 %v211
  %v524 = vpop.f32.mrf.mxu0
  %v525 = vadd.f32 %v476, %v524
  %v526 = vpop.f32.mrf.mxu0
  %v527 = vadd.f32 %v478, %v526
  %528 = vmatmul.bf16.gmra.mxu0 %v215
  %v529 = vpop.f32.mrf.mxu0
  %v530 = vadd.f32 %v481, %v529
  %v531 = vpop.f32.mrf.mxu0
  %v532 = vadd.f32 %v483, %v531
  %533 = vmatmul.bf16.gmra.mxu0 %v219
  %v534 = vpop.f32.mrf.mxu0
  %v535 = vadd.f32 %v486, %v534
  %v536 = vpop.f32.mrf.mxu0
  %v537 = vadd.f32 %v488, %v536
  %538 = vmatmul.bf16.gmra.mxu0 %v223
  %v539 = vpop.f32.mrf.mxu0
  %v540 = vadd.f32 %v491, %v539
  %v541 = vpop.f32.mrf.mxu0
  %v542 = vadd.f32 %v493, %v541
  %543 = vmatmul.bf16.gmra.mxu0 %v227
  %v544 = vpop.f32.mrf.mxu0
  %v545 = vadd.f32 %v496, %v544
  %v546 = vpop.f32.mrf.mxu0
  %v547 = vadd.f32 %v498, %v546
  %548 = vmatmul.bf16.gmra.mxu0 %v231
  %v549 = vpop.f32.mrf.mxu0
  %v550 = vadd.f32 %v501, %v549
  %v551 = vpop.f32.mrf.mxu0
  %v552 = vadd.f32 %v503, %v551
  %553 = vmatmul.bf16.gmra.mxu0 %v235
  %v554 = vpop.f32.mrf.mxu0
  %v555 = vadd.f32 %v506, %v554
  %v556 = vpop.f32.mrf.mxu0
  %v557 = vadd.f32 %v508, %v556
  %558 = vmatmul.bf16.gmra.mxu0 %v239
  %v559 = vpop.f32.mrf.mxu0
  %v560 = vadd.f32 %v511, %v559
  %v561 = vpop.f32.mrf.mxu0
  %v562 = vadd.f32 %v513, %v561
  %563 = vdwg.mxu0
  %564 = vmatpush.bf16.msra.mxu0 %v425
  %565 = vmatpush.bf16.msra.mxu0 %v424
  %566 = vmatpush.bf16.msra.mxu0 %v423
  %567 = vmatpush.bf16.msra.mxu0 %v422
  %568 = vmatpush.bf16.msra.mxu0 %v421
  %569 = vmatpush.bf16.msra.mxu0 %v420
  %570 = vmatpush.bf16.msra.mxu0 %v419
  %571 = vmatpush.bf16.msra.mxu0 %v418
  %572 = vmatmul.bf16.gmra.mxu0 %v212
  %v573 = vpop.f32.mrf.mxu0
  %v574 = vadd.f32 %v525, %v573
  %v575 = vpop.f32.mrf.mxu0
  %v576 = vadd.f32 %v527, %v575
  %577 = vmatmul.bf16.gmra.mxu0 %v216
  %v578 = vpop.f32.mrf.mxu0
  %v579 = vadd.f32 %v530, %v578
  %v580 = vpop.f32.mrf.mxu0
  %v581 = vadd.f32 %v532, %v580
  %582 = vmatmul.bf16.gmra.mxu0 %v220
  %v583 = vpop.f32.mrf.mxu0
  %v584 = vadd.f32 %v535, %v583
  %v585 = vpop.f32.mrf.mxu0
  %v586 = vadd.f32 %v537, %v585
  %587 = vmatmul.bf16.gmra.mxu0 %v224
  %v588 = vpop.f32.mrf.mxu0
  %v589 = vadd.f32 %v540, %v588
  %v590 = vpop.f32.mrf.mxu0
  %v591 = vadd.f32 %v542, %v590
  %592 = vmatmul.bf16.gmra.mxu0 %v228
  %v593 = vpop.f32.mrf.mxu0
  %v594 = vadd.f32 %v545, %v593
  %v595 = vpop.f32.mrf.mxu0
  %v596 = vadd.f32 %v547, %v595
  %597 = vmatmul.bf16.gmra.mxu0 %v232
  %v598 = vpop.f32.mrf.mxu0
  %v599 = vadd.f32 %v550, %v598
  %v600 = vpop.f32.mrf.mxu0
  %v601 = vadd.f32 %v552, %v600
  %602 = vmatmul.bf16.gmra.mxu0 %v236
  %v603 = vpop.f32.mrf.mxu0
  %v604 = vadd.f32 %v555, %v603
  %v605 = vpop.f32.mrf.mxu0
  %v606 = vadd.f32 %v557, %v605
  %607 = vmatmul.bf16.gmra.mxu0 %v240
  %v608 = vpop.f32.mrf.mxu0
  %v609 = vadd.f32 %v560, %v608
  %v610 = vpop.f32.mrf.mxu0
  %v611 = vadd.f32 %v562, %v610
  %612 = vdwg.mxu0
  %613 = vmatpush.bf16.msra.mxu0 %v433
  %614 = vmatpush.bf16.msra.mxu0 %v432
  %615 = vmatpush.bf16.msra.mxu0 %v431
  %616 = vmatpush.bf16.msra.mxu0 %v430
  %617 = vmatpush.bf16.msra.mxu0 %v429
  %618 = vmatpush.bf16.msra.mxu0 %v428
  %619 = vmatpush.bf16.msra.mxu0 %v427
  %620 = vmatpush.bf16.msra.mxu0 %v426
  %621 = vmatmul.bf16.gmra.mxu0 %v213
  %v622 = vpop.f32.mrf.mxu0
  %v623 = vadd.f32 %v574, %v622
  %v624 = vpop.f32.mrf.mxu0
  %v625 = vadd.f32 %v576, %v624
  %626 = vmatmul.bf16.gmra.mxu0 %v217
  %v627 = vpop.f32.mrf.mxu0
  %v628 = vadd.f32 %v579, %v627
  %v629 = vpop.f32.mrf.mxu0
  %v630 = vadd.f32 %v581, %v629
  %631 = vmatmul.bf16.gmra.mxu0 %v221
  %v632 = vpop.f32.mrf.mxu0
  %v633 = vadd.f32 %v584, %v632
  %v634 = vpop.f32.mrf.mxu0
  %v635 = vadd.f32 %v586, %v634
  %636 = vmatmul.bf16.gmra.mxu0 %v225
  %v637 = vpop.f32.mrf.mxu0
  %v638 = vadd.f32 %v589, %v637
  %v639 = vpop.f32.mrf.mxu0
  %v640 = vadd.f32 %v591, %v639
  %641 = vmatmul.bf16.gmra.mxu0 %v229
  %v642 = vpop.f32.mrf.mxu0
  %v643 = vadd.f32 %v594, %v642
  %v644 = vpop.f32.mrf.mxu0
  %v645 = vadd.f32 %v596, %v644
  %646 = vmatmul.bf16.gmra.mxu0 %v233
  %v647 = vpop.f32.mrf.mxu0
  %v648 = vadd.f32 %v599, %v647
  %v649 = vpop.f32.mrf.mxu0
  %v650 = vadd.f32 %v601, %v649
  %651 = vmatmul.bf16.gmra.mxu0 %v237
  %v652 = vpop.f32.mrf.mxu0
  %v653 = vadd.f32 %v604, %v652
  %v654 = vpop.f32.mrf.mxu0
  %v655 = vadd.f32 %v606, %v654
  %656 = vmatmul.bf16.gmra.mxu0 %v241
  %v657 = vpop.f32.mrf.mxu0
  %v658 = vadd.f32 %v609, %v657
  %v659 = vpop.f32.mrf.mxu0
  %v660 = vadd.f32 %v611, %v659
  %661 = vdwg.mxu0
  %v662 = vmax.f32 %v623, 0.0
  %v663 = vmax.f32 %v625, 0.0
  %v664 = vmax.f32 %v628, 0.0
  %v665 = vmax.f32 %v630, 0.0
  %v666 = vmax.f32 %v633, 0.0
  %v667 = vmax.f32 %v635, 0.0
  %v668 = vmax.f32 %v638, 0.0
  %v669 = vmax.f32 %v640, 0.0
  %v670 = vmax.f32 %v643, 0.0
  %v671 = vmax.f32 %v645, 0.0
  %v672 = vmax.f32 %v648, 0.0
  %v673 = vmax.f32 %v650, 0.0
  %v674 = vmax.f32 %v653, 0.0
  %v675 = vmax.f32 %v655, 0.0
  %v676 = vmax.f32 %v658, 0.0
  %v677 = vmax.f32 %v660, 0.0
  %v678 = vpack.c.bf16 %v662, %v662
  %v679 = vpack.c.bf16 %v663, %v663
  %v680 = vpack.c.bf16 %v664, %v664
  %v681 = vpack.c.bf16 %v665, %v665
  %v682 = vpack.c.bf16 %v666, %v666
  %v683 = vpack.c.bf16 %v667, %v667
  %v684 = vpack.c.bf16 %v668, %v668
  %v685 = vpack.c.bf16 %v669, %v669
  %v686 = vpack.c.bf16 %v670, %v670
  %v687 = vpack.c.bf16 %v671, %v671
  %v688 = vpack.c.bf16 %v672, %v672
  %v689 = vpack.c.bf16 %v673, %v673
  %v690 = vpack.c.bf16 %v674, %v674
  %v691 = vpack.c.bf16 %v675, %v675
  %v692 = vpack.c.bf16 %v676, %v676
  %v693 = vpack.c.bf16 %v677, %v677
  %vm694 = vcmask 519168
  %695 = vst.msk [vmem:[%s3] sm:$0xf] %vm694, %v678
  %696 = vst.msk [vmem:[%s3 + $0x4] sm:$0xf] %vm694, %v679
  %697 = vst.msk [vmem:[%s3 + $0x8] sm:$0xf] %vm694, %v680
  %698 = vst.msk [vmem:[%s3 + $0xc] sm:$0xf] %vm694, %v681
  %699 = vst.msk [vmem:[%s3 + $0x10] sm:$0xf] %vm694, %v682
  %700 = vst.msk [vmem:[%s3 + $0x14] sm:$0xf] %vm694, %v683
  %701 = vst.msk [vmem:[%s3 + $0x18] sm:$0xf] %vm694, %v684
  %702 = vst.msk [vmem:[%s3 + $0x1c] sm:$0xf] %vm694, %v685
  %703 = vst.msk [vmem:[%s3 + $0x20] sm:$0xf] %vm694, %v686
  %704 = vst.msk [vmem:[%s3 + $0x24] sm:$0xf] %vm694, %v687
  %705 = vst.msk [vmem:[%s3 + $0x28] sm:$0xf] %vm694, %v688
  %706 = vst.msk [vmem:[%s3 + $0x2c] sm:$0xf] %vm694, %v689
  %707 = vst.msk [vmem:[%s3 + $0x30] sm:$0xf] %vm694, %v690
  %708 = vst.msk [vmem:[%s3 + $0x34] sm:$0xf] %vm694, %v691
  %709 = vst.msk [vmem:[%s3 + $0x38] sm:$0xf] %vm694, %v692
  %710 = vst.msk [vmem:[%s3 + $0x3c] sm:$0xf] %vm694, %v693
  // Predicated region
  $region14: #{factor_vae1_forward.12} parent=0 // pred_check
    _
  $region15: #{factor_vae1_forward.12} parent=0 // pred_check_branch
    %712 = sbr.rel (0) target = $region17
  $region16: #{factor_vae1_forward.12} parent=0 // pred_region
    _
  $region17: #{factor_vae1_forward.12} parent=0 // pred_fallthru
    _
  // Predicated region
  $region18: #{factor_vae1_forward.12} parent=0 // pred_check
    _
  $region19: #{factor_vae1_forward.12} parent=0 // pred_check_branch
    %714 = sbr.rel (0) target = $region21
  $region20: #{factor_vae1_forward.12} parent=0 // pred_region
    _
  $region21: #{factor_vae1_forward.12} parent=0 // pred_fallthru
    _

// kernel: factor_vae1_forward.13
$region0: #{factor_vae1_forward.13}
  #allocation0 [shape = 'u32[]', space=smem, size = 0x4, offset = 0x4, fixed_abs, tag = 'smem constant byte address 0x4 - core index']
  #allocation1 [shape = 'u32[72,128]{1,0:T(1,128)}', space=vmem, size = 0x9000, scoped, tag = 'internal scratch']
  %s0 = inlined_call_operand.vmem [shape: bf16[32,1024], index: 0, kind: input, shape index: {}]
  %s1 = inlined_call_operand.vmem [shape: bf16[1024,64], index: 1, kind: input, shape index: {}]
  %s2 = inlined_call_operand.vmem [shape: f32[1,64], index: 2, kind: input, shape index: {}]
  %s3 = inlined_call_operand.vmem [shape: bf16[32,64], index: 3, kind: output, shape index: {}]
  %s4 = sld [smem:[#allocation0]]
  $region22: #{factor_vae1_forward.13} parent=0
    _
  %s6 = ssub.s32 1, %s4
  %s7 = scalar_select 0, %s6, %s4
  // Predicated region
  $region2: #{factor_vae1_forward.13} parent=0 // pred_check
    _
  $region3: #{factor_vae1_forward.13} parent=0 // pred_check_branch
    %9 = sbr.rel (0) target = $region5
  $region4: #{factor_vae1_forward.13} parent=0 // pred_region
    _
  $region5: #{factor_vae1_forward.13} parent=0 // pred_fallthru
    _
  // Predicated region
  $region6: #{factor_vae1_forward.13} parent=0 // pred_check
    _
  $region7: #{factor_vae1_forward.13} parent=0 // pred_check_branch
    %11 = sbr.rel (0) target = $region9
  $region8: #{factor_vae1_forward.13} parent=0 // pred_region
    _
  $region9: #{factor_vae1_forward.13} parent=0 // pred_fallthru
    _
  // Predicated region
  $region10: #{factor_vae1_forward.13} parent=0 // pred_check
    _
  $region11: #{factor_vae1_forward.13} parent=0 // pred_check_branch
    %13 = sbr.rel (0) target = $region13
  $region12: #{factor_vae1_forward.13} parent=0 // pred_region
    _
  $region13: #{factor_vae1_forward.13} parent=0 // pred_fallthru
    _
  %v14 = vld [vmem:[%s0] sm:$0xff]
  %v15 = vld [vmem:[%s0 + $0x8] sm:$0xff]
  %v16 = vld [vmem:[%s0 + $0x10] sm:$0xff]
  %v17 = vld [vmem:[%s0 + $0x18] sm:$0xff]
  %v18 = vld [vmem:[%s0 + $0x20] sm:$0xff]
  %v19 = vld [vmem:[%s0 + $0x28] sm:$0xff]
  %v20 = vld [vmem:[%s0 + $0x30] sm:$0xff]
  %v21 = vld [vmem:[%s0 + $0x38] sm:$0xff]
  %v22 = vld [vmem:[%s0 + $0x40] sm:$0xff]
  %v23 = vld [vmem:[%s0 + $0x48] sm:$0xff]
  %v24 = vld [vmem:[%s0 + $0x50] sm:$0xff]
  %v25 = vld [vmem:[%s0 + $0x58] sm:$0xff]
  %v26 = vld [vmem:[%s0 + $0x60] sm:$0xff]
  %v27 = vld [vmem:[%s0 + $0x68] sm:$0xff]
  %v28 = vld [vmem:[%s0 + $0x70] sm:$0xff]
  %v29 = vld [vmem:[%s0 + $0x78] sm:$0xff]
  %v30 = vld [vmem:[%s1] sm:$0xf]
  %v31 = vld [vmem:[%s1 + $0x4] sm:$0xf]
  %v32 = vld [vmem:[%s1 + $0x8] sm:$0xf]
  %v33 = vld [vmem:[%s1 + $0xc] sm:$0xf]
  %v34 = vld [vmem:[%s1 + $0x10] sm:$0xf]
  %v35 = vld [vmem:[%s1 + $0x14] sm:$0xf]
  %v36 = vld [vmem:[%s1 + $0x18] sm:$0xf]
  %v37 = vld [vmem:[%s1 + $0x1c] sm:$0xf]
  %v38 = vld [vmem:[%s1 + $0x20] sm:$0xf]
  %v39 = vld [vmem:[%s1 + $0x24] sm:$0xf]
  %v40 = vld [vmem:[%s1 + $0x28] sm:$0xf]
  %v41 = vld [vmem:[%s1 + $0x2c] sm:$0xf]
  %v42 = vld [vmem:[%s1 + $0x30] sm:$0xf]
  %v43 = vld [vmem:[%s1 + $0x34] sm:$0xf]
  %v44 = vld [vmem:[%s1 + $0x38] sm:$0xf]
  %v45 = vld [vmem:[%s1 + $0x3c] sm:$0xf]
  %v46 = vld [vmem:[%s1 + $0x40] sm:$0xf]
  %v47 = vld [vmem:[%s1 + $0x44] sm:$0xf]
  %v48 = vld [vmem:[%s1 + $0x48] sm:$0xf]
  %v49 = vld [vmem:[%s1 + $0x4c] sm:$0xf]
  %v50 = vld [vmem:[%s1 + $0x50] sm:$0xf]
  %v51 = vld [vmem:[%s1 + $0x54] sm:$0xf]
  %v52 = vld [vmem:[%s1 + $0x58] sm:$0xf]
  %v53 = vld [vmem:[%s1 + $0x5c] sm:$0xf]
  %v54 = vld [vmem:[%s1 + $0x60] sm:$0xf]
  %v55 = vld [vmem:[%s1 + $0x64] sm:$0xf]
  %v56 = vld [vmem:[%s1 + $0x68] sm:$0xf]
  %v57 = vld [vmem:[%s1 + $0x6c] sm:$0xf]
  %v58 = vld [vmem:[%s1 + $0x70] sm:$0xf]
  %v59 = vld [vmem:[%s1 + $0x74] sm:$0xf]
  %v60 = vld [vmem:[%s1 + $0x78] sm:$0xf]
  %v61 = vld [vmem:[%s1 + $0x7c] sm:$0xf]
  %v62 = vld [vmem:[%s1 + $0x80] sm:$0xf]
  %v63 = vld [vmem:[%s1 + $0x84] sm:$0xf]
  %v64 = vld [vmem:[%s1 + $0x88] sm:$0xf]
  %v65 = vld [vmem:[%s1 + $0x8c] sm:$0xf]
  %v66 = vld [vmem:[%s1 + $0x90] sm:$0xf]
  %v67 = vld [vmem:[%s1 + $0x94] sm:$0xf]
  %v68 = vld [vmem:[%s1 + $0x98] sm:$0xf]
  %v69 = vld [vmem:[%s1 + $0x9c] sm:$0xf]
  %v70 = vld [vmem:[%s1 + $0xa0] sm:$0xf]
  %v71 = vld [vmem:[%s1 + $0xa4] sm:$0xf]
  %v72 = vld [vmem:[%s1 + $0xa8] sm:$0xf]
  %v73 = vld [vmem:[%s1 + $0xac] sm:$0xf]
  %v74 = vld [vmem:[%s1 + $0xb0] sm:$0xf]
  %v75 = vld [vmem:[%s1 + $0xb4] sm:$0xf]
  %v76 = vld [vmem:[%s1 + $0xb8] sm:$0xf]
  %v77 = vld [vmem:[%s1 + $0xbc] sm:$0xf]
  %v78 = vld [vmem:[%s1 + $0xc0] sm:$0xf]
  %v79 = vld [vmem:[%s1 + $0xc4] sm:$0xf]
  %v80 = vld [vmem:[%s1 + $0xc8] sm:$0xf]
  %v81 = vld [vmem:[%s1 + $0xcc] sm:$0xf]
  %v82 = vld [vmem:[%s1 + $0xd0] sm:$0xf]
  %v83 = vld [vmem:[%s1 + $0xd4] sm:$0xf]
  %v84 = vld [vmem:[%s1 + $0xd8] sm:$0xf]
  %v85 = vld [vmem:[%s1 + $0xdc] sm:$0xf]
  %v86 = vld [vmem:[%s1 + $0xe0] sm:$0xf]
  %v87 = vld [vmem:[%s1 + $0xe4] sm:$0xf]
  %v88 = vld [vmem:[%s1 + $0xe8] sm:$0xf]
  %v89 = vld [vmem:[%s1 + $0xec] sm:$0xf]
  %v90 = vld [vmem:[%s1 + $0xf0] sm:$0xf]
  %v91 = vld [vmem:[%s1 + $0xf4] sm:$0xf]
  %v92 = vld [vmem:[%s1 + $0xf8] sm:$0xf]
  %v93 = vld [vmem:[%s1 + $0xfc] sm:$0xf]
  %v94 = vld [vmem:[%s1 + $0x100] sm:$0xf]
  %v95 = vld [vmem:[%s1 + $0x104] sm:$0xf]
  %v96 = vld [vmem:[%s1 + $0x108] sm:$0xf]
  %v97 = vld [vmem:[%s1 + $0x10c] sm:$0xf]
  %v98 = vld [vmem:[%s1 + $0x110] sm:$0xf]
  %v99 = vld [vmem:[%s1 + $0x114] sm:$0xf]
  %v100 = vld [vmem:[%s1 + $0x118] sm:$0xf]
  %v101 = vld [vmem:[%s1 + $0x11c] sm:$0xf]
  %v102 = vld [vmem:[%s1 + $0x120] sm:$0xf]
  %v103 = vld [vmem:[%s1 + $0x124] sm:$0xf]
  %v104 = vld [vmem:[%s1 + $0x128] sm:$0xf]
  %v105 = vld [vmem:[%s1 + $0x12c] sm:$0xf]
  %v106 = vld [vmem:[%s1 + $0x130] sm:$0xf]
  %v107 = vld [vmem:[%s1 + $0x134] sm:$0xf]
  %v108 = vld [vmem:[%s1 + $0x138] sm:$0xf]
  %v109 = vld [vmem:[%s1 + $0x13c] sm:$0xf]
  %v110 = vld [vmem:[%s1 + $0x140] sm:$0xf]
  %v111 = vld [vmem:[%s1 + $0x144] sm:$0xf]
  %v112 = vld [vmem:[%s1 + $0x148] sm:$0xf]
  %v113 = vld [vmem:[%s1 + $0x14c] sm:$0xf]
  %v114 = vld [vmem:[%s1 + $0x150] sm:$0xf]
  %v115 = vld [vmem:[%s1 + $0x154] sm:$0xf]
  %v116 = vld [vmem:[%s1 + $0x158] sm:$0xf]
  %v117 = vld [vmem:[%s1 + $0x15c] sm:$0xf]
  %v118 = vld [vmem:[%s1 + $0x160] sm:$0xf]
  %v119 = vld [vmem:[%s1 + $0x164] sm:$0xf]
  %v120 = vld [vmem:[%s1 + $0x168] sm:$0xf]
  %v121 = vld [vmem:[%s1 + $0x16c] sm:$0xf]
  %v122 = vld [vmem:[%s1 + $0x170] sm:$0xf]
  %v123 = vld [vmem:[%s1 + $0x174] sm:$0xf]
  %v124 = vld [vmem:[%s1 + $0x178] sm:$0xf]
  %v125 = vld [vmem:[%s1 + $0x17c] sm:$0xf]
  %v126 = vld [vmem:[%s1 + $0x180] sm:$0xf]
  %v127 = vld [vmem:[%s1 + $0x184] sm:$0xf]
  %v128 = vld [vmem:[%s1 + $0x188] sm:$0xf]
  %v129 = vld [vmem:[%s1 + $0x18c] sm:$0xf]
  %v130 = vld [vmem:[%s1 + $0x190] sm:$0xf]
  %v131 = vld [vmem:[%s1 + $0x194] sm:$0xf]
  %v132 = vld [vmem:[%s1 + $0x198] sm:$0xf]
  %v133 = vld [vmem:[%s1 + $0x19c] sm:$0xf]
  %v134 = vld [vmem:[%s1 + $0x1a0] sm:$0xf]
  %v135 = vld [vmem:[%s1 + $0x1a4] sm:$0xf]
  %v136 = vld [vmem:[%s1 + $0x1a8] sm:$0xf]
  %v137 = vld [vmem:[%s1 + $0x1ac] sm:$0xf]
  %v138 = vld [vmem:[%s1 + $0x1b0] sm:$0xf]
  %v139 = vld [vmem:[%s1 + $0x1b4] sm:$0xf]
  %v140 = vld [vmem:[%s1 + $0x1b8] sm:$0xf]
  %v141 = vld [vmem:[%s1 + $0x1bc] sm:$0xf]
  %v142 = vld [vmem:[%s1 + $0x1c0] sm:$0xf]
  %v143 = vld [vmem:[%s1 + $0x1c4] sm:$0xf]
  %v144 = vld [vmem:[%s1 + $0x1c8] sm:$0xf]
  %v145 = vld [vmem:[%s1 + $0x1cc] sm:$0xf]
  %v146 = vld [vmem:[%s1 + $0x1d0] sm:$0xf]
  %v147 = vld [vmem:[%s1 + $0x1d4] sm:$0xf]
  %v148 = vld [vmem:[%s1 + $0x1d8] sm:$0xf]
  %v149 = vld [vmem:[%s1 + $0x1dc] sm:$0xf]
  %v150 = vld [vmem:[%s1 + $0x1e0] sm:$0xf]
  %v151 = vld [vmem:[%s1 + $0x1e4] sm:$0xf]
  %v152 = vld [vmem:[%s1 + $0x1e8] sm:$0xf]
  %v153 = vld [vmem:[%s1 + $0x1ec] sm:$0xf]
  %v154 = vld [vmem:[%s1 + $0x1f0] sm:$0xf]
  %v155 = vld [vmem:[%s1 + $0x1f4] sm:$0xf]
  %v156 = vld [vmem:[%s1 + $0x1f8] sm:$0xf]
  %v157 = vld [vmem:[%s1 + $0x1fc] sm:$0xf]
  %v158 = vld [vmem:[%s2] sm:$0x1]
  %v160 = vperm.slane %v158, 0
  %v178 = vunpack.c.l.b16 %v14
  %v179 = vunpack.c.h.b16 %v14
  %v180 = vunpack.c.l.b16 %v15
  %v181 = vunpack.c.h.b16 %v15
  %v182 = vunpack.c.l.b16 %v16
  %v183 = vunpack.c.h.b16 %v16
  %v184 = vunpack.c.l.b16 %v17
  %v185 = vunpack.c.h.b16 %v17
  %v186 = vunpack.c.l.b16 %v18
  %v187 = vunpack.c.h.b16 %v18
  %v188 = vunpack.c.l.b16 %v19
  %v189 = vunpack.c.h.b16 %v19
  %v190 = vunpack.c.l.b16 %v20
  %v191 = vunpack.c.h.b16 %v20
  %v192 = vunpack.c.l.b16 %v21
  %v193 = vunpack.c.h.b16 %v21
  %v194 = vunpack.c.l.b16 %v22
  %v195 = vunpack.c.h.b16 %v22
  %v196 = vunpack.c.l.b16 %v23
  %v197 = vunpack.c.h.b16 %v23
  %v198 = vunpack.c.l.b16 %v24
  %v199 = vunpack.c.h.b16 %v24
  %v200 = vunpack.c.l.b16 %v25
  %v201 = vunpack.c.h.b16 %v25
  %v202 = vunpack.c.l.b16 %v26
  %v203 = vunpack.c.h.b16 %v26
  %v204 = vunpack.c.l.b16 %v27
  %v205 = vunpack.c.h.b16 %v27
  %v206 = vunpack.c.l.b16 %v28
  %v207 = vunpack.c.h.b16 %v28
  %v208 = vunpack.c.l.b16 %v29
  %v209 = vunpack.c.h.b16 %v29
  %v210 = vpack.c.b16 %v186, %v178
  %v211 = vpack.c.b16 %v187, %v179
  %v212 = vpack.c.b16 %v188, %v180
  %v213 = vpack.c.b16 %v189, %v181
  %v214 = vpack.c.b16 %v190, %v182
  %v215 = vpack.c.b16 %v191, %v183
  %v216 = vpack.c.b16 %v192, %v184
  %v217 = vpack.c.b16 %v193, %v185
  %v218 = vpack.c.b16 %v202, %v194
  %v219 = vpack.c.b16 %v203, %v195
  %v220 = vpack.c.b16 %v204, %v196
  %v221 = vpack.c.b16 %v205, %v197
  %v222 = vpack.c.b16 %v206, %v198
  %v223 = vpack.c.b16 %v207, %v199
  %v224 = vpack.c.b16 %v208, %v200
  %v225 = vpack.c.b16 %v209, %v201
  %v370 = vunpack.c.l.b16 %v30
  %v371 = vunpack.c.l.b16 %v31
  %v372 = vunpack.c.l.b16 %v32
  %v373 = vunpack.c.l.b16 %v33
  %v374 = vunpack.c.l.b16 %v34
  %v375 = vunpack.c.l.b16 %v35
  %v376 = vunpack.c.l.b16 %v36
  %v377 = vunpack.c.l.b16 %v37
  %v378 = vunpack.c.l.b16 %v38
  %v379 = vunpack.c.l.b16 %v39
  %v380 = vunpack.c.l.b16 %v40
  %v381 = vunpack.c.l.b16 %v41
  %v382 = vunpack.c.l.b16 %v42
  %v383 = vunpack.c.l.b16 %v43
  %v384 = vunpack.c.l.b16 %v44
  %v385 = vunpack.c.l.b16 %v45
  %v386 = vunpack.c.l.b16 %v46
  %v387 = vunpack.c.l.b16 %v47
  %v388 = vunpack.c.l.b16 %v48
  %v389 = vunpack.c.l.b16 %v49
  %v390 = vunpack.c.l.b16 %v50
  %v391 = vunpack.c.l.b16 %v51
  %v392 = vunpack.c.l.b16 %v52
  %v393 = vunpack.c.l.b16 %v53
  %v394 = vunpack.c.l.b16 %v54
  %v395 = vunpack.c.l.b16 %v55
  %v396 = vunpack.c.l.b16 %v56
  %v397 = vunpack.c.l.b16 %v57
  %v398 = vunpack.c.l.b16 %v58
  %v399 = vunpack.c.l.b16 %v59
  %v400 = vunpack.c.l.b16 %v60
  %v401 = vunpack.c.l.b16 %v61
  %v402 = vunpack.c.l.b16 %v62
  %v403 = vunpack.c.l.b16 %v63
  %v404 = vunpack.c.l.b16 %v64
  %v405 = vunpack.c.l.b16 %v65
  %v406 = vunpack.c.l.b16 %v66
  %v407 = vunpack.c.l.b16 %v67
  %v408 = vunpack.c.l.b16 %v68
  %v409 = vunpack.c.l.b16 %v69
  %v410 = vunpack.c.l.b16 %v70
  %v411 = vunpack.c.l.b16 %v71
  %v412 = vunpack.c.l.b16 %v72
  %v413 = vunpack.c.l.b16 %v73
  %v414 = vunpack.c.l.b16 %v74
  %v415 = vunpack.c.l.b16 %v75
  %v416 = vunpack.c.l.b16 %v76
  %v417 = vunpack.c.l.b16 %v77
  %v418 = vunpack.c.l.b16 %v78
  %v419 = vunpack.c.l.b16 %v79
  %v420 = vunpack.c.l.b16 %v80
  %v421 = vunpack.c.l.b16 %v81
  %v422 = vunpack.c.l.b16 %v82
  %v423 = vunpack.c.l.b16 %v83
  %v424 = vunpack.c.l.b16 %v84
  %v425 = vunpack.c.l.b16 %v85
  %v426 = vunpack.c.l.b16 %v86
  %v427 = vunpack.c.l.b16 %v87
  %v428 = vunpack.c.l.b16 %v88
  %v429 = vunpack.c.l.b16 %v89
  %v430 = vunpack.c.l.b16 %v90
  %v431 = vunpack.c.l.b16 %v91
  %v432 = vunpack.c.l.b16 %v92
  %v433 = vunpack.c.l.b16 %v93
  %v434 = vunpack.c.l.b16 %v94
  %v435 = vunpack.c.l.b16 %v95
  %v436 = vunpack.c.l.b16 %v96
  %v437 = vunpack.c.l.b16 %v97
  %v438 = vunpack.c.l.b16 %v98
  %v439 = vunpack.c.l.b16 %v99
  %v440 = vunpack.c.l.b16 %v100
  %v441 = vunpack.c.l.b16 %v101
  %v442 = vunpack.c.l.b16 %v102
  %v443 = vunpack.c.l.b16 %v103
  %v444 = vunpack.c.l.b16 %v104
  %v445 = vunpack.c.l.b16 %v105
  %v446 = vunpack.c.l.b16 %v106
  %v447 = vunpack.c.l.b16 %v107
  %v448 = vunpack.c.l.b16 %v108
  %v449 = vunpack.c.l.b16 %v109
  %v450 = vunpack.c.l.b16 %v110
  %v451 = vunpack.c.l.b16 %v111
  %v452 = vunpack.c.l.b16 %v112
  %v453 = vunpack.c.l.b16 %v113
  %v454 = vunpack.c.l.b16 %v114
  %v455 = vunpack.c.l.b16 %v115
  %v456 = vunpack.c.l.b16 %v116
  %v457 = vunpack.c.l.b16 %v117
  %v458 = vunpack.c.l.b16 %v118
  %v459 = vunpack.c.l.b16 %v119
  %v460 = vunpack.c.l.b16 %v120
  %v461 = vunpack.c.l.b16 %v121
  %v462 = vunpack.c.l.b16 %v122
  %v463 = vunpack.c.l.b16 %v123
  %v464 = vunpack.c.l.b16 %v124
  %v465 = vunpack.c.l.b16 %v125
  %v466 = vunpack.c.l.b16 %v126
  %v467 = vunpack.c.l.b16 %v127
  %v468 = vunpack.c.l.b16 %v128
  %v469 = vunpack.c.l.b16 %v129
  %v470 = vunpack.c.l.b16 %v130
  %v471 = vunpack.c.l.b16 %v131
  %v472 = vunpack.c.l.b16 %v132
  %v473 = vunpack.c.l.b16 %v133
  %v474 = vunpack.c.l.b16 %v134
  %v475 = vunpack.c.l.b16 %v135
  %v476 = vunpack.c.l.b16 %v136
  %v477 = vunpack.c.l.b16 %v137
  %v478 = vunpack.c.l.b16 %v138
  %v479 = vunpack.c.l.b16 %v139
  %v480 = vunpack.c.l.b16 %v140
  %v481 = vunpack.c.l.b16 %v141
  %v482 = vunpack.c.l.b16 %v142
  %v483 = vunpack.c.l.b16 %v143
  %v484 = vunpack.c.l.b16 %v144
  %v485 = vunpack.c.l.b16 %v145
  %v486 = vunpack.c.l.b16 %v146
  %v487 = vunpack.c.l.b16 %v147
  %v488 = vunpack.c.l.b16 %v148
  %v489 = vunpack.c.l.b16 %v149
  %v490 = vunpack.c.l.b16 %v150
  %v491 = vunpack.c.l.b16 %v151
  %v492 = vunpack.c.l.b16 %v152
  %v493 = vunpack.c.l.b16 %v153
  %v494 = vunpack.c.l.b16 %v154
  %v495 = vunpack.c.l.b16 %v155
  %v496 = vunpack.c.l.b16 %v156
  %v497 = vunpack.c.l.b16 %v157
  %v498 = vpack.c.b16 %v371, %v370
  %v499 = vpack.c.b16 %v373, %v372
  %v500 = vpack.c.b16 %v375, %v374
  %v501 = vpack.c.b16 %v377, %v376
  %v502 = vpack.c.b16 %v379, %v378
  %v503 = vpack.c.b16 %v381, %v380
  %v504 = vpack.c.b16 %v383, %v382
  %v505 = vpack.c.b16 %v385, %v384
  %v506 = vpack.c.b16 %v387, %v386
  %v507 = vpack.c.b16 %v389, %v388
  %v508 = vpack.c.b16 %v391, %v390
  %v509 = vpack.c.b16 %v393, %v392
  %v510 = vpack.c.b16 %v395, %v394
  %v511 = vpack.c.b16 %v397, %v396
  %v512 = vpack.c.b16 %v399, %v398
  %v513 = vpack.c.b16 %v401, %v400
  %v514 = vpack.c.b16 %v403, %v402
  %v515 = vpack.c.b16 %v405, %v404
  %v516 = vpack.c.b16 %v407, %v406
  %v517 = vpack.c.b16 %v409, %v408
  %v518 = vpack.c.b16 %v411, %v410
  %v519 = vpack.c.b16 %v413, %v412
  %v520 = vpack.c.b16 %v415, %v414
  %v521 = vpack.c.b16 %v417, %v416
  %v522 = vpack.c.b16 %v419, %v418
  %v523 = vpack.c.b16 %v421, %v420
  %v524 = vpack.c.b16 %v423, %v422
  %v525 = vpack.c.b16 %v425, %v424
  %v526 = vpack.c.b16 %v427, %v426
  %v527 = vpack.c.b16 %v429, %v428
  %v528 = vpack.c.b16 %v431, %v430
  %v529 = vpack.c.b16 %v433, %v432
  %v530 = vpack.c.b16 %v435, %v434
  %v531 = vpack.c.b16 %v437, %v436
  %v532 = vpack.c.b16 %v439, %v438
  %v533 = vpack.c.b16 %v441, %v440
  %v534 = vpack.c.b16 %v443, %v442
  %v535 = vpack.c.b16 %v445, %v444
  %v536 = vpack.c.b16 %v447, %v446
  %v537 = vpack.c.b16 %v449, %v448
  %v538 = vpack.c.b16 %v451, %v450
  %v539 = vpack.c.b16 %v453, %v452
  %v540 = vpack.c.b16 %v455, %v454
  %v541 = vpack.c.b16 %v457, %v456
  %v542 = vpack.c.b16 %v459, %v458
  %v543 = vpack.c.b16 %v461, %v460
  %v544 = vpack.c.b16 %v463, %v462
  %v545 = vpack.c.b16 %v465, %v464
  %v546 = vpack.c.b16 %v467, %v466
  %v547 = vpack.c.b16 %v469, %v468
  %v548 = vpack.c.b16 %v471, %v470
  %v549 = vpack.c.b16 %v473, %v472
  %v550 = vpack.c.b16 %v475, %v474
  %v551 = vpack.c.b16 %v477, %v476
  %v552 = vpack.c.b16 %v479, %v478
  %v553 = vpack.c.b16 %v481, %v480
  %v554 = vpack.c.b16 %v483, %v482
  %v555 = vpack.c.b16 %v485, %v484
  %v556 = vpack.c.b16 %v487, %v486
  %v557 = vpack.c.b16 %v489, %v488
  %v558 = vpack.c.b16 %v491, %v490
  %v559 = vpack.c.b16 %v493, %v492
  %v560 = vpack.c.b16 %v495, %v494
  %v561 = vpack.c.b16 %v497, %v496
  %626 = vmatpush.bf16.msra.mxu0 %v505
  %627 = vmatpush.bf16.msra.mxu0 %v504
  %628 = vmatpush.bf16.msra.mxu0 %v503
  %629 = vmatpush.bf16.msra.mxu0 %v502
  %630 = vmatpush.bf16.msra.mxu0 %v501
  %631 = vmatpush.bf16.msra.mxu0 %v500
  %632 = vmatpush.bf16.msra.mxu0 %v499
  %633 = vmatpush.bf16.msra.mxu0 %v498
  %634 = vmatmul.bf16.gmra.mxu0 %v210
  %v635 = vpop.f32.mrf.mxu0
  %v636 = vadd.f32 %v160, %v635
  %v637 = vpop.f32.mrf.mxu0
  %v638 = vadd.f32 %v160, %v637
  %639 = vmatmul.bf16.gmra.mxu0 %v218
  %v640 = vpop.f32.mrf.mxu0
  %v641 = vadd.f32 %v160, %v640
  %v642 = vpop.f32.mrf.mxu0
  %v643 = vadd.f32 %v160, %v642
  %644 = vdwg.mxu0
  %645 = vmatpush.bf16.msra.mxu0 %v513
  %646 = vmatpush.bf16.msra.mxu0 %v512
  %647 = vmatpush.bf16.msra.mxu0 %v511
  %648 = vmatpush.bf16.msra.mxu0 %v510
  %649 = vmatpush.bf16.msra.mxu0 %v509
  %650 = vmatpush.bf16.msra.mxu0 %v508
  %651 = vmatpush.bf16.msra.mxu0 %v507
  %652 = vmatpush.bf16.msra.mxu0 %v506
  %653 = vmatmul.bf16.gmra.mxu0 %v211
  %v654 = vpop.f32.mrf.mxu0
  %v655 = vadd.f32 %v636, %v654
  %v656 = vpop.f32.mrf.mxu0
  %v657 = vadd.f32 %v638, %v656
  %658 = vmatmul.bf16.gmra.mxu0 %v219
  %v659 = vpop.f32.mrf.mxu0
  %v660 = vadd.f32 %v641, %v659
  %v661 = vpop.f32.mrf.mxu0
  %v662 = vadd.f32 %v643, %v661
  %663 = vdwg.mxu0
  %664 = vmatpush.bf16.msra.mxu0 %v521
  %665 = vmatpush.bf16.msra.mxu0 %v520
  %666 = vmatpush.bf16.msra.mxu0 %v519
  %667 = vmatpush.bf16.msra.mxu0 %v518
  %668 = vmatpush.bf16.msra.mxu0 %v517
  %669 = vmatpush.bf16.msra.mxu0 %v516
  %670 = vmatpush.bf16.msra.mxu0 %v515
  %671 = vmatpush.bf16.msra.mxu0 %v514
  %672 = vmatmul.bf16.gmra.mxu0 %v212
  %v673 = vpop.f32.mrf.mxu0
  %v674 = vadd.f32 %v655, %v673
  %v675 = vpop.f32.mrf.mxu0
  %v676 = vadd.f32 %v657, %v675
  %677 = vmatmul.bf16.gmra.mxu0 %v220
  %v678 = vpop.f32.mrf.mxu0
  %v679 = vadd.f32 %v660, %v678
  %v680 = vpop.f32.mrf.mxu0
  %v681 = vadd.f32 %v662, %v680
  %682 = vdwg.mxu0
  %683 = vmatpush.bf16.msra.mxu0 %v529
  %684 = vmatpush.bf16.msra.mxu0 %v528
  %685 = vmatpush.bf16.msra.mxu0 %v527
  %686 = vmatpush.bf16.msra.mxu0 %v526
  %687 = vmatpush.bf16.msra.mxu0 %v525
  %688 = vmatpush.bf16.msra.mxu0 %v524
  %689 = vmatpush.bf16.msra.mxu0 %v523
  %690 = vmatpush.bf16.msra.mxu0 %v522
  %691 = vmatmul.bf16.gmra.mxu0 %v213
  %v692 = vpop.f32.mrf.mxu0
  %v693 = vadd.f32 %v674, %v692
  %v694 = vpop.f32.mrf.mxu0
  %v695 = vadd.f32 %v676, %v694
  %696 = vmatmul.bf16.gmra.mxu0 %v221
  %v697 = vpop.f32.mrf.mxu0
  %v698 = vadd.f32 %v679, %v697
  %v699 = vpop.f32.mrf.mxu0
  %v700 = vadd.f32 %v681, %v699
  %701 = vdwg.mxu0
  %702 = vmatpush.bf16.msra.mxu0 %v537
  %703 = vmatpush.bf16.msra.mxu0 %v536
  %704 = vmatpush.bf16.msra.mxu0 %v535
  %705 = vmatpush.bf16.msra.mxu0 %v534
  %706 = vmatpush.bf16.msra.mxu0 %v533
  %707 = vmatpush.bf16.msra.mxu0 %v532
  %708 = vmatpush.bf16.msra.mxu0 %v531
  %709 = vmatpush.bf16.msra.mxu0 %v530
  %710 = vmatmul.bf16.gmra.mxu0 %v214
  %v711 = vpop.f32.mrf.mxu0
  %v712 = vadd.f32 %v693, %v711
  %v713 = vpop.f32.mrf.mxu0
  %v714 = vadd.f32 %v695, %v713
  %715 = vmatmul.bf16.gmra.mxu0 %v222
  %v716 = vpop.f32.mrf.mxu0
  %v717 = vadd.f32 %v698, %v716
  %v718 = vpop.f32.mrf.mxu0
  %v719 = vadd.f32 %v700, %v718
  %720 = vdwg.mxu0
  %721 = vmatpush.bf16.msra.mxu0 %v545
  %722 = vmatpush.bf16.msra.mxu0 %v544
  %723 = vmatpush.bf16.msra.mxu0 %v543
  %724 = vmatpush.bf16.msra.mxu0 %v542
  %725 = vmatpush.bf16.msra.mxu0 %v541
  %726 = vmatpush.bf16.msra.mxu0 %v540
  %727 = vmatpush.bf16.msra.mxu0 %v539
  %728 = vmatpush.bf16.msra.mxu0 %v538
  %729 = vmatmul.bf16.gmra.mxu0 %v215
  %v730 = vpop.f32.mrf.mxu0
  %v731 = vadd.f32 %v712, %v730
  %v732 = vpop.f32.mrf.mxu0
  %v733 = vadd.f32 %v714, %v732
  %734 = vmatmul.bf16.gmra.mxu0 %v223
  %v735 = vpop.f32.mrf.mxu0
  %v736 = vadd.f32 %v717, %v735
  %v737 = vpop.f32.mrf.mxu0
  %v738 = vadd.f32 %v719, %v737
  %739 = vdwg.mxu0
  %740 = vmatpush.bf16.msra.mxu0 %v553
  %741 = vmatpush.bf16.msra.mxu0 %v552
  %742 = vmatpush.bf16.msra.mxu0 %v551
  %743 = vmatpush.bf16.msra.mxu0 %v550
  %744 = vmatpush.bf16.msra.mxu0 %v549
  %745 = vmatpush.bf16.msra.mxu0 %v548
  %746 = vmatpush.bf16.msra.mxu0 %v547
  %747 = vmatpush.bf16.msra.mxu0 %v546
  %748 = vmatmul.bf16.gmra.mxu0 %v216
  %v749 = vpop.f32.mrf.mxu0
  %v750 = vadd.f32 %v731, %v749
  %v751 = vpop.f32.mrf.mxu0
  %v752 = vadd.f32 %v733, %v751
  %753 = vmatmul.bf16.gmra.mxu0 %v224
  %v754 = vpop.f32.mrf.mxu0
  %v755 = vadd.f32 %v736, %v754
  %v756 = vpop.f32.mrf.mxu0
  %v757 = vadd.f32 %v738, %v756
  %758 = vdwg.mxu0
  %759 = vmatpush.bf16.msra.mxu0 %v561
  %760 = vmatpush.bf16.msra.mxu0 %v560
  %761 = vmatpush.bf16.msra.mxu0 %v559
  %762 = vmatpush.bf16.msra.mxu0 %v558
  %763 = vmatpush.bf16.msra.mxu0 %v557
  %764 = vmatpush.bf16.msra.mxu0 %v556
  %765 = vmatpush.bf16.msra.mxu0 %v555
  %766 = vmatpush.bf16.msra.mxu0 %v554
  %767 = vmatmul.bf16.gmra.mxu0 %v217
  %v768 = vpop.f32.mrf.mxu0
  %v769 = vadd.f32 %v750, %v768
  %v770 = vpop.f32.mrf.mxu0
  %v771 = vadd.f32 %v752, %v770
  %772 = vmatmul.bf16.gmra.mxu0 %v225
  %v773 = vpop.f32.mrf.mxu0
  %v774 = vadd.f32 %v755, %v773
  %v775 = vpop.f32.mrf.mxu0
  %v776 = vadd.f32 %v757, %v775
  %777 = vdwg.mxu0
  %v778 = vmax.f32 %v769, 0.0
  %v779 = vmax.f32 %v771, 0.0
  %v780 = vmax.f32 %v774, 0.0
  %v781 = vmax.f32 %v776, 0.0
  %v782 = vpack.c.bf16 %v778, %v778
  %v783 = vpack.c.bf16 %v779, %v779
  %v784 = vpack.c.bf16 %v780, %v780
  %v785 = vpack.c.bf16 %v781, %v781
  %vm786 = vcmask 519168
  %787 = vst.msk [vmem:[%s3] sm:$0xf] %vm786, %v782
  %788 = vst.msk [vmem:[%s3 + $0x4] sm:$0xf] %vm786, %v783
  %789 = vst.msk [vmem:[%s3 + $0x8] sm:$0xf] %vm786, %v784
  %790 = vst.msk [vmem:[%s3 + $0xc] sm:$0xf] %vm786, %v785
  // Predicated region
  $region14: #{factor_vae1_forward.13} parent=0 // pred_check
    _
  $region15: #{factor_vae1_forward.13} parent=0 // pred_check_branch
    %792 = sbr.rel (0) target = $region17
  $region16: #{factor_vae1_forward.13} parent=0 // pred_region
    _
  $region17: #{factor_vae1_forward.13} parent=0 // pred_fallthru
    _
  // Predicated region
  $region18: #{factor_vae1_forward.13} parent=0 // pred_check
    _
  $region19: #{factor_vae1_forward.13} parent=0 // pred_check_branch
    %794 = sbr.rel (0) target = $region21
  $region20: #{factor_vae1_forward.13} parent=0 // pred_region
    _
  $region21: #{factor_vae1_forward.13} parent=0 // pred_fallthru
    _

// kernel: factor_vae1_forward.14
$region0: #{factor_vae1_forward.14}
  #allocation0 [shape = 'u32[]', space=smem, size = 0x4, offset = 0x4, fixed_abs, tag = 'smem constant byte address 0x4 - core index']
  #allocation1 [shape = 'u32[72,128]{1,0:T(1,128)}', space=vmem, size = 0x9000, scoped, tag = 'internal scratch']
  %s0 = inlined_call_operand.vmem [shape: bf16[2,1024], index: 0, kind: input, shape index: {}]
  %s1 = inlined_call_operand.vmem [shape: bf16[1024,128], index: 1, kind: input, shape index: {}]
  %s2 = inlined_call_operand.vmem [shape: f32[1,128], index: 2, kind: input, shape index: {}]
  %s3 = inlined_call_operand.vmem [shape: bf16[128,10], index: 3, kind: input, shape index: {}]
  %s4 = inlined_call_operand.vmem [shape: f32[1,10], index: 4, kind: input, shape index: {}]
  %s5 = inlined_call_operand.vmem [shape: bf16[128,10], index: 5, kind: input, shape index: {}]
  %s6 = inlined_call_operand.vmem [shape: f32[1,10], index: 6, kind: input, shape index: {}]
  %s7 = inlined_call_operand.vmem [shape: f32[2,10], index: 7, kind: input, shape index: {}]
  %s8 = inlined_call_operand.vmem [shape: bf16[10,128], index: 8, kind: input, shape index: {}]
  %s9 = inlined_call_operand.vmem [shape: f32[1,128], index: 9, kind: input, shape index: {}]
  %s10 = inlined_call_operand.hbm [shape: f32[2,10], index: 10, kind: output, shape index: {0}]
  %s11 = inlined_call_operand.hbm [shape: f32[2,10], index: 11, kind: output, shape index: {1}]
  %s12 = inlined_call_operand.hbm [shape: f32[2,10], index: 12, kind: output, shape index: {2}]
  %s13 = inlined_call_operand.vmem [shape: bf16[2,128], index: 13, kind: output, shape index: {3}]
  %14 = xla_tuple %s10, %s11, %s12, %s13
  %s15 = sld [smem:[#allocation0]]
  $region74: #{factor_vae1_forward.14} parent=0
    _
  %s17 = ssub.s32 1, %s15
  %s18 = scalar_select 0, %s17, %s15
  $region1: #{factor_vae1_forward.14} parent=0
    #allocation2 [shape = 'u8[1024]{0}', space=vmem, size = 0x400, scoped, tag = 'output window, operand 0, single buffered']
    #allocation3 [shape = 's32[1]{0}', space=sflag, size = 0x4, scoped, tag = 'scoped memory for factor_vae1_forward.14']
    #allocation4 [shape = 'u8[1024]{0}', space=vmem, size = 0x400, scoped, tag = 'output window, operand 1, single buffered']
    #allocation5 [shape = 's32[1]{0}', space=sflag, size = 0x4, scoped, tag = 'scoped memory for factor_vae1_forward.14']
    #allocation6 [shape = 'u8[1024]{0}', space=vmem, size = 0x400, scoped, tag = 'output window, operand 2, single buffered']
    %19 = vsyncpa [#allocation3], 0
    %20 = vsyncpa [#allocation5], 0
    // Predicated region
    $region2: #{factor_vae1_forward.14} parent=1 // pred_check
      _
    $region3: #{factor_vae1_forward.14} parent=1 // pred_check_branch
      %22 = sbr.rel (0) target = $region5
    $region4: #{factor_vae1_forward.14} parent=1 // pred_region
      _
    $region5: #{factor_vae1_forward.14} parent=1 // pred_fallthru
      _
    // Predicated region
    $region6: #{factor_vae1_forward.14} parent=1 // pred_check
      _
    $region7: #{factor_vae1_forward.14} parent=1 // pred_check_branch
      %24 = sbr.rel (0) target = $region9
    $region8: #{factor_vae1_forward.14} parent=1 // pred_region
      _
    $region9: #{factor_vae1_forward.14} parent=1 // pred_fallthru
      _
    // Predicated region
    $region10: #{factor_vae1_forward.14} parent=1 // pred_check
      _
    $region11: #{factor_vae1_forward.14} parent=1 // pred_check_branch
      %26 = sbr.rel (0) target = $region13
    $region12: #{factor_vae1_forward.14} parent=1 // pred_region
      _
    $region13: #{factor_vae1_forward.14} parent=1 // pred_fallthru
      _
    // Predicated region
    $region14: #{factor_vae1_forward.14} parent=1 // pred_check
      _
    $region15: #{factor_vae1_forward.14} parent=1 // pred_check_branch
      %28 = sbr.rel (0) target = $region17
    $region16: #{factor_vae1_forward.14} parent=1 // pred_region
      _
    $region17: #{factor_vae1_forward.14} parent=1 // pred_fallthru
      _
    // Predicated region
    $region18: #{factor_vae1_forward.14} parent=1 // pred_check
      _
    $region19: #{factor_vae1_forward.14} parent=1 // pred_check_branch
      %30 = sbr.rel (0) target = $region21
    $region20: #{factor_vae1_forward.14} parent=1 // pred_region
      _
    $region21: #{factor_vae1_forward.14} parent=1 // pred_fallthru
      _
    // Predicated region
    $region22: #{factor_vae1_forward.14} parent=1 // pred_check
      _
    $region23: #{factor_vae1_forward.14} parent=1 // pred_check_branch
      %32 = sbr.rel (0) target = $region25
    $region24: #{factor_vae1_forward.14} parent=1 // pred_region
      _
    $region25: #{factor_vae1_forward.14} parent=1 // pred_fallthru
      _
    // Predicated region
    $region26: #{factor_vae1_forward.14} parent=1 // pred_check
      _
    $region27: #{factor_vae1_forward.14} parent=1 // pred_check_branch
      %34 = sbr.rel (0) target = $region29
    $region28: #{factor_vae1_forward.14} parent=1 // pred_region
      _
    $region29: #{factor_vae1_forward.14} parent=1 // pred_fallthru
      _
    // Predicated region
    $region30: #{factor_vae1_forward.14} parent=1 // pred_check
      _
    $region31: #{factor_vae1_forward.14} parent=1 // pred_check_branch
      %36 = sbr.rel (0) target = $region33
    $region32: #{factor_vae1_forward.14} parent=1 // pred_region
      _
    $region33: #{factor_vae1_forward.14} parent=1 // pred_fallthru
      _
    // Predicated region
    $region34: #{factor_vae1_forward.14} parent=1 // pred_check
      _
    $region35: #{factor_vae1_forward.14} parent=1 // pred_check_branch
      %38 = sbr.rel (0) target = $region37
    $region36: #{factor_vae1_forward.14} parent=1 // pred_region
      _
    $region37: #{factor_vae1_forward.14} parent=1 // pred_fallthru
      _
    // Predicated region
    $region38: #{factor_vae1_forward.14} parent=1 // pred_check
      _
    $region39: #{factor_vae1_forward.14} parent=1 // pred_check_branch
      %40 = sbr.rel (0) target = $region41
    $region40: #{factor_vae1_forward.14} parent=1 // pred_region
      _
    $region41: #{factor_vae1_forward.14} parent=1 // pred_fallthru
      _
    %v42 = vld [vmem:[%s0] sm:$0xff]
    %v43 = vld [vmem:[%s1] sm:$0xf]
    %v44 = vld [vmem:[%s1 + $0x4] sm:$0xf]
    %v45 = vld [vmem:[%s1 + $0x8] sm:$0xf]
    %v46 = vld [vmem:[%s1 + $0xc] sm:$0xf]
    %v47 = vld [vmem:[%s1 + $0x10] sm:$0xf]
    %v48 = vld [vmem:[%s1 + $0x14] sm:$0xf]
    %v49 = vld [vmem:[%s1 + $0x18] sm:$0xf]
    %v50 = vld [vmem:[%s1 + $0x1c] sm:$0xf]
    %v51 = vld [vmem:[%s1 + $0x20] sm:$0xf]
    %v52 = vld [vmem:[%s1 + $0x24] sm:$0xf]
    %v53 = vld [vmem:[%s1 + $0x28] sm:$0xf]
    %v54 = vld [vmem:[%s1 + $0x2c] sm:$0xf]
    %v55 = vld [vmem:[%s1 + $0x30] sm:$0xf]
    %v56 = vld [vmem:[%s1 + $0x34] sm:$0xf]
    %v57 = vld [vmem:[%s1 + $0x38] sm:$0xf]
    %v58 = vld [vmem:[%s1 + $0x3c] sm:$0xf]
    %v59 = vld [vmem:[%s1 + $0x40] sm:$0xf]
    %v60 = vld [vmem:[%s1 + $0x44] sm:$0xf]
    %v61 = vld [vmem:[%s1 + $0x48] sm:$0xf]
    %v62 = vld [vmem:[%s1 + $0x4c] sm:$0xf]
    %v63 = vld [vmem:[%s1 + $0x50] sm:$0xf]
    %v64 = vld [vmem:[%s1 + $0x54] sm:$0xf]
    %v65 = vld [vmem:[%s1 + $0x58] sm:$0xf]
    %v66 = vld [vmem:[%s1 + $0x5c] sm:$0xf]
    %v67 = vld [vmem:[%s1 + $0x60] sm:$0xf]
    %v68 = vld [vmem:[%s1 + $0x64] sm:$0xf]
    %v69 = vld [vmem:[%s1 + $0x68] sm:$0xf]
    %v70 = vld [vmem:[%s1 + $0x6c] sm:$0xf]
    %v71 = vld [vmem:[%s1 + $0x70] sm:$0xf]
    %v72 = vld [vmem:[%s1 + $0x74] sm:$0xf]
    %v73 = vld [vmem:[%s1 + $0x78] sm:$0xf]
    %v74 = vld [vmem:[%s1 + $0x7c] sm:$0xf]
    %v75 = vld [vmem:[%s1 + $0x80] sm:$0xf]
    %v76 = vld [vmem:[%s1 + $0x84] sm:$0xf]
    %v77 = vld [vmem:[%s1 + $0x88] sm:$0xf]
    %v78 = vld [vmem:[%s1 + $0x8c] sm:$0xf]
    %v79 = vld [vmem:[%s1 + $0x90] sm:$0xf]
    %v80 = vld [vmem:[%s1 + $0x94] sm:$0xf]
    %v81 = vld [vmem:[%s1 + $0x98] sm:$0xf]
    %v82 = vld [vmem:[%s1 + $0x9c] sm:$0xf]
    %v83 = vld [vmem:[%s1 + $0xa0] sm:$0xf]
    %v84 = vld [vmem:[%s1 + $0xa4] sm:$0xf]
    %v85 = vld [vmem:[%s1 + $0xa8] sm:$0xf]
    %v86 = vld [vmem:[%s1 + $0xac] sm:$0xf]
    %v87 = vld [vmem:[%s1 + $0xb0] sm:$0xf]
    %v88 = vld [vmem:[%s1 + $0xb4] sm:$0xf]
    %v89 = vld [vmem:[%s1 + $0xb8] sm:$0xf]
    %v90 = vld [vmem:[%s1 + $0xbc] sm:$0xf]
    %v91 = vld [vmem:[%s1 + $0xc0] sm:$0xf]
    %v92 = vld [vmem:[%s1 + $0xc4] sm:$0xf]
    %v93 = vld [vmem:[%s1 + $0xc8] sm:$0xf]
    %v94 = vld [vmem:[%s1 + $0xcc] sm:$0xf]
    %v95 = vld [vmem:[%s1 + $0xd0] sm:$0xf]
    %v96 = vld [vmem:[%s1 + $0xd4] sm:$0xf]
    %v97 = vld [vmem:[%s1 + $0xd8] sm:$0xf]
    %v98 = vld [vmem:[%s1 + $0xdc] sm:$0xf]
    %v99 = vld [vmem:[%s1 + $0xe0] sm:$0xf]
    %v100 = vld [vmem:[%s1 + $0xe4] sm:$0xf]
    %v101 = vld [vmem:[%s1 + $0xe8] sm:$0xf]
    %v102 = vld [vmem:[%s1 + $0xec] sm:$0xf]
    %v103 = vld [vmem:[%s1 + $0xf0] sm:$0xf]
    %v104 = vld [vmem:[%s1 + $0xf4] sm:$0xf]
    %v105 = vld [vmem:[%s1 + $0xf8] sm:$0xf]
    %v106 = vld [vmem:[%s1 + $0xfc] sm:$0xf]
    %v107 = vld [vmem:[%s1 + $0x100] sm:$0xf]
    %v108 = vld [vmem:[%s1 + $0x104] sm:$0xf]
    %v109 = vld [vmem:[%s1 + $0x108] sm:$0xf]
    %v110 = vld [vmem:[%s1 + $0x10c] sm:$0xf]
    %v111 = vld [vmem:[%s1 + $0x110] sm:$0xf]
    %v112 = vld [vmem:[%s1 + $0x114] sm:$0xf]
    %v113 = vld [vmem:[%s1 + $0x118] sm:$0xf]
    %v114 = vld [vmem:[%s1 + $0x11c] sm:$0xf]
    %v115 = vld [vmem:[%s1 + $0x120] sm:$0xf]
    %v116 = vld [vmem:[%s1 + $0x124] sm:$0xf]
    %v117 = vld [vmem:[%s1 + $0x128] sm:$0xf]
    %v118 = vld [vmem:[%s1 + $0x12c] sm:$0xf]
    %v119 = vld [vmem:[%s1 + $0x130] sm:$0xf]
    %v120 = vld [vmem:[%s1 + $0x134] sm:$0xf]
    %v121 = vld [vmem:[%s1 + $0x138] sm:$0xf]
    %v122 = vld [vmem:[%s1 + $0x13c] sm:$0xf]
    %v123 = vld [vmem:[%s1 + $0x140] sm:$0xf]
    %v124 = vld [vmem:[%s1 + $0x144] sm:$0xf]
    %v125 = vld [vmem:[%s1 + $0x148] sm:$0xf]
    %v126 = vld [vmem:[%s1 + $0x14c] sm:$0xf]
    %v127 = vld [vmem:[%s1 + $0x150] sm:$0xf]
    %v128 = vld [vmem:[%s1 + $0x154] sm:$0xf]
    %v129 = vld [vmem:[%s1 + $0x158] sm:$0xf]
    %v130 = vld [vmem:[%s1 + $0x15c] sm:$0xf]
    %v131 = vld [vmem:[%s1 + $0x160] sm:$0xf]
    %v132 = vld [vmem:[%s1 + $0x164] sm:$0xf]
    %v133 = vld [vmem:[%s1 + $0x168] sm:$0xf]
    %v134 = vld [vmem:[%s1 + $0x16c] sm:$0xf]
    %v135 = vld [vmem:[%s1 + $0x170] sm:$0xf]
    %v136 = vld [vmem:[%s1 + $0x174] sm:$0xf]
    %v137 = vld [vmem:[%s1 + $0x178] sm:$0xf]
    %v138 = vld [vmem:[%s1 + $0x17c] sm:$0xf]
    %v139 = vld [vmem:[%s1 + $0x180] sm:$0xf]
    %v140 = vld [vmem:[%s1 + $0x184] sm:$0xf]
    %v141 = vld [vmem:[%s1 + $0x188] sm:$0xf]
    %v142 = vld [vmem:[%s1 + $0x18c] sm:$0xf]
    %v143 = vld [vmem:[%s1 + $0x190] sm:$0xf]
    %v144 = vld [vmem:[%s1 + $0x194] sm:$0xf]
    %v145 = vld [vmem:[%s1 + $0x198] sm:$0xf]
    %v146 = vld [vmem:[%s1 + $0x19c] sm:$0xf]
    %v147 = vld [vmem:[%s1 + $0x1a0] sm:$0xf]
    %v148 = vld [vmem:[%s1 + $0x1a4] sm:$0xf]
    %v149 = vld [vmem:[%s1 + $0x1a8] sm:$0xf]
    %v150 = vld [vmem:[%s1 + $0x1ac] sm:$0xf]
    %v151 = vld [vmem:[%s1 + $0x1b0] sm:$0xf]
    %v152 = vld [vmem:[%s1 + $0x1b4] sm:$0xf]
    %v153 = vld [vmem:[%s1 + $0x1b8] sm:$0xf]
    %v154 = vld [vmem:[%s1 + $0x1bc] sm:$0xf]
    %v155 = vld [vmem:[%s1 + $0x1c0] sm:$0xf]
    %v156 = vld [vmem:[%s1 + $0x1c4] sm:$0xf]
    %v157 = vld [vmem:[%s1 + $0x1c8] sm:$0xf]
    %v158 = vld [vmem:[%s1 + $0x1cc] sm:$0xf]
    %v159 = vld [vmem:[%s1 + $0x1d0] sm:$0xf]
    %v160 = vld [vmem:[%s1 + $0x1d4] sm:$0xf]
    %v161 = vld [vmem:[%s1 + $0x1d8] sm:$0xf]
    %v162 = vld [vmem:[%s1 + $0x1dc] sm:$0xf]
    %v163 = vld [vmem:[%s1 + $0x1e0] sm:$0xf]
    %v164 = vld [vmem:[%s1 + $0x1e4] sm:$0xf]
    %v165 = vld [vmem:[%s1 + $0x1e8] sm:$0xf]
    %v166 = vld [vmem:[%s1 + $0x1ec] sm:$0xf]
    %v167 = vld [vmem:[%s1 + $0x1f0] sm:$0xf]
    %v168 = vld [vmem:[%s1 + $0x1f4] sm:$0xf]
    %v169 = vld [vmem:[%s1 + $0x1f8] sm:$0xf]
    %v170 = vld [vmem:[%s1 + $0x1fc] sm:$0xf]
    %v171 = vld [vmem:[%s2] sm:$0x1]
    %v173 = vperm.slane %v171, 0
    %176 = vst [vmem:[#allocation1] ss:$9 sm:$0xff] %v42
    %v177 = vld [vmem:[#allocation1] sm:$0xff]
    %v178 = vld [vmem:[#allocation1 + $0x9] sm:$0xff]
    %v179 = vld [vmem:[#allocation1 + $0x12] sm:$0xff]
    %v180 = vld [vmem:[#allocation1 + $0x1b] sm:$0xff]
    %v181 = vld [vmem:[#allocation1 + $0x24] sm:$0xff]
    %v182 = vld [vmem:[#allocation1 + $0x2d] sm:$0xff]
    %v183 = vld [vmem:[#allocation1 + $0x36] sm:$0xff]
    %v184 = vld [vmem:[#allocation1 + $0x3f] sm:$0xff]
    %v321 = vunpack.c.l.b16 %v43
    %v322 = vunpack.c.l.b16 %v44
    %v323 = vunpack.c.l.b16 %v45
    %v324 = vunpack.c.l.b16 %v46
    %v325 = vunpack.c.l.b16 %v47
    %v326 = vunpack.c.l.b16 %v48
    %v327 = vunpack.c.l.b16 %v49
    %v328 = vunpack.c.l.b16 %v50
    %v329 = vunpack.c.l.b16 %v51
    %v330 = vunpack.c.l.b16 %v52
    %v331 = vunpack.c.l.b16 %v53
    %v332 = vunpack.c.l.b16 %v54
    %v333 = vunpack.c.l.b16 %v55
    %v334 = vunpack.c.l.b16 %v56
    %v335 = vunpack.c.l.b16 %v57
    %v336 = vunpack.c.l.b16 %v58
    %v337 = vunpack.c.l.b16 %v59
    %v338 = vunpack.c.l.b16 %v60
    %v339 = vunpack.c.l.b16 %v61
    %v340 = vunpack.c.l.b16 %v62
    %v341 = vunpack.c.l.b16 %v63
    %v342 = vunpack.c.l.b16 %v64
    %v343 = vunpack.c.l.b16 %v65
    %v344 = vunpack.c.l.b16 %v66
    %v345 = vunpack.c.l.b16 %v67
    %v346 = vunpack.c.l.b16 %v68
    %v347 = vunpack.c.l.b16 %v69
    %v348 = vunpack.c.l.b16 %v70
    %v349 = vunpack.c.l.b16 %v71
    %v350 = vunpack.c.l.b16 %v72
    %v351 = vunpack.c.l.b16 %v73
    %v352 = vunpack.c.l.b16 %v74
    %v353 = vunpack.c.l.b16 %v75
    %v354 = vunpack.c.l.b16 %v76
    %v355 = vunpack.c.l.b16 %v77
    %v356 = vunpack.c.l.b16 %v78
    %v357 = vunpack.c.l.b16 %v79
    %v358 = vunpack.c.l.b16 %v80
    %v359 = vunpack.c.l.b16 %v81
    %v360 = vunpack.c.l.b16 %v82
    %v361 = vunpack.c.l.b16 %v83
    %v362 = vunpack.c.l.b16 %v84
    %v363 = vunpack.c.l.b16 %v85
    %v364 = vunpack.c.l.b16 %v86
    %v365 = vunpack.c.l.b16 %v87
    %v366 = vunpack.c.l.b16 %v88
    %v367 = vunpack.c.l.b16 %v89
    %v368 = vunpack.c.l.b16 %v90
    %v369 = vunpack.c.l.b16 %v91
    %v370 = vunpack.c.l.b16 %v92
    %v371 = vunpack.c.l.b16 %v93
    %v372 = vunpack.c.l.b16 %v94
    %v373 = vunpack.c.l.b16 %v95
    %v374 = vunpack.c.l.b16 %v96
    %v375 = vunpack.c.l.b16 %v97
    %v376 = vunpack.c.l.b16 %v98
    %v377 = vunpack.c.l.b16 %v99
    %v378 = vunpack.c.l.b16 %v100
    %v379 = vunpack.c.l.b16 %v101
    %v380 = vunpack.c.l.b16 %v102
    %v381 = vunpack.c.l.b16 %v103
    %v382 = vunpack.c.l.b16 %v104
    %v383 = vunpack.c.l.b16 %v105
    %v384 = vunpack.c.l.b16 %v106
    %v385 = vunpack.c.l.b16 %v107
    %v386 = vunpack.c.l.b16 %v108
    %v387 = vunpack.c.l.b16 %v109
    %v388 = vunpack.c.l.b16 %v110
    %v389 = vunpack.c.l.b16 %v111
    %v390 = vunpack.c.l.b16 %v112
    %v391 = vunpack.c.l.b16 %v113
    %v392 = vunpack.c.l.b16 %v114
    %v393 = vunpack.c.l.b16 %v115
    %v394 = vunpack.c.l.b16 %v116
    %v395 = vunpack.c.l.b16 %v117
    %v396 = vunpack.c.l.b16 %v118
    %v397 = vunpack.c.l.b16 %v119
    %v398 = vunpack.c.l.b16 %v120
    %v399 = vunpack.c.l.b16 %v121
    %v400 = vunpack.c.l.b16 %v122
    %v401 = vunpack.c.l.b16 %v123
    %v402 = vunpack.c.l.b16 %v124
    %v403 = vunpack.c.l.b16 %v125
    %v404 = vunpack.c.l.b16 %v126
    %v405 = vunpack.c.l.b16 %v127
    %v406 = vunpack.c.l.b16 %v128
    %v407 = vunpack.c.l.b16 %v129
    %v408 = vunpack.c.l.b16 %v130
    %v409 = vunpack.c.l.b16 %v131
    %v410 = vunpack.c.l.b16 %v132
    %v411 = vunpack.c.l.b16 %v133
    %v412 = vunpack.c.l.b16 %v134
    %v413 = vunpack.c.l.b16 %v135
    %v414 = vunpack.c.l.b16 %v136
    %v415 = vunpack.c.l.b16 %v137
    %v416 = vunpack.c.l.b16 %v138
    %v417 = vunpack.c.l.b16 %v139
    %v418 = vunpack.c.l.b16 %v140
    %v419 = vunpack.c.l.b16 %v141
    %v420 = vunpack.c.l.b16 %v142
    %v421 = vunpack.c.l.b16 %v143
    %v422 = vunpack.c.l.b16 %v144
    %v423 = vunpack.c.l.b16 %v145
    %v424 = vunpack.c.l.b16 %v146
    %v425 = vunpack.c.l.b16 %v147
    %v426 = vunpack.c.l.b16 %v148
    %v427 = vunpack.c.l.b16 %v149
    %v428 = vunpack.c.l.b16 %v150
    %v429 = vunpack.c.l.b16 %v151
    %v430 = vunpack.c.l.b16 %v152
    %v431 = vunpack.c.l.b16 %v153
    %v432 = vunpack.c.l.b16 %v154
    %v433 = vunpack.c.l.b16 %v155
    %v434 = vunpack.c.l.b16 %v156
    %v435 = vunpack.c.l.b16 %v157
    %v436 = vunpack.c.l.b16 %v158
    %v437 = vunpack.c.l.b16 %v159
    %v438 = vunpack.c.l.b16 %v160
    %v439 = vunpack.c.l.b16 %v161
    %v440 = vunpack.c.l.b16 %v162
    %v441 = vunpack.c.l.b16 %v163
    %v442 = vunpack.c.l.b16 %v164
    %v443 = vunpack.c.l.b16 %v165
    %v444 = vunpack.c.l.b16 %v166
    %v445 = vunpack.c.l.b16 %v167
    %v446 = vunpack.c.l.b16 %v168
    %v447 = vunpack.c.l.b16 %v169
    %v448 = vunpack.c.l.b16 %v170
    %v449 = vpack.c.b16 %v322, %v321
    %v450 = vpack.c.b16 %v324, %v323
    %v451 = vpack.c.b16 %v326, %v325
    %v452 = vpack.c.b16 %v328, %v327
    %v453 = vpack.c.b16 %v330, %v329
    %v454 = vpack.c.b16 %v332, %v331
    %v455 = vpack.c.b16 %v334, %v333
    %v456 = vpack.c.b16 %v336, %v335
    %v457 = vpack.c.b16 %v338, %v337
    %v458 = vpack.c.b16 %v340, %v339
    %v459 = vpack.c.b16 %v342, %v341
    %v460 = vpack.c.b16 %v344, %v343
    %v461 = vpack.c.b16 %v346, %v345
    %v462 = vpack.c.b16 %v348, %v347
    %v463 = vpack.c.b16 %v350, %v349
    %v464 = vpack.c.b16 %v352, %v351
    %v465 = vpack.c.b16 %v354, %v353
    %v466 = vpack.c.b16 %v356, %v355
    %v467 = vpack.c.b16 %v358, %v357
    %v468 = vpack.c.b16 %v360, %v359
    %v469 = vpack.c.b16 %v362, %v361
    %v470 = vpack.c.b16 %v364, %v363
    %v471 = vpack.c.b16 %v366, %v365
    %v472 = vpack.c.b16 %v368, %v367
    %v473 = vpack.c.b16 %v370, %v369
    %v474 = vpack.c.b16 %v372, %v371
    %v475 = vpack.c.b16 %v374, %v373
    %v476 = vpack.c.b16 %v376, %v375
    %v477 = vpack.c.b16 %v378, %v377
    %v478 = vpack.c.b16 %v380, %v379
    %v479 = vpack.c.b16 %v382, %v381
    %v480 = vpack.c.b16 %v384, %v383
    %v481 = vpack.c.b16 %v386, %v385
    %v482 = vpack.c.b16 %v388, %v387
    %v483 = vpack.c.b16 %v390, %v389
    %v484 = vpack.c.b16 %v392, %v391
    %v485 = vpack.c.b16 %v394, %v393
    %v486 = vpack.c.b16 %v396, %v395
    %v487 = vpack.c.b16 %v398, %v397
    %v488 = vpack.c.b16 %v400, %v399
    %v489 = vpack.c.b16 %v402, %v401
    %v490 = vpack.c.b16 %v404, %v403
    %v491 = vpack.c.b16 %v406, %v405
    %v492 = vpack.c.b16 %v408, %v407
    %v493 = vpack.c.b16 %v410, %v409
    %v494 = vpack.c.b16 %v412, %v411
    %v495 = vpack.c.b16 %v414, %v413
    %v496 = vpack.c.b16 %v416, %v415
    %v497 = vpack.c.b16 %v418, %v417
    %v498 = vpack.c.b16 %v420, %v419
    %v499 = vpack.c.b16 %v422, %v421
    %v500 = vpack.c.b16 %v424, %v423
    %v501 = vpack.c.b16 %v426, %v425
    %v502 = vpack.c.b16 %v428, %v427
    %v503 = vpack.c.b16 %v430, %v429
    %v504 = vpack.c.b16 %v432, %v431
    %v505 = vpack.c.b16 %v434, %v433
    %v506 = vpack.c.b16 %v436, %v435
    %v507 = vpack.c.b16 %v438, %v437
    %v508 = vpack.c.b16 %v440, %v439
    %v509 = vpack.c.b16 %v442, %v441
    %v510 = vpack.c.b16 %v444, %v443
    %v511 = vpack.c.b16 %v446, %v445
    %v512 = vpack.c.b16 %v448, %v447
    %577 = vmatpush.bf16.msra.mxu0 %v456
    %578 = vmatpush.bf16.msra.mxu0 %v455
    %579 = vmatpush.bf16.msra.mxu0 %v454
    %580 = vmatpush.bf16.msra.mxu0 %v453
    %581 = vmatpush.bf16.msra.mxu0 %v452
    %582 = vmatpush.bf16.msra.mxu0 %v451
    %583 = vmatpush.bf16.msra.mxu0 %v450
    %584 = vmatpush.bf16.msra.mxu0 %v449
    %585 = vmatmul.bf16.gmra.mxu0 %v177
    %v586 = vpop.f32.mrf.mxu0
    %v587 = vadd.f32 %v173, %v586
    %v588 = vpop.f32.mrf.mxu0
    %589 = vdwg.mxu0
    %590 = vmatpush.bf16.msra.mxu0 %v464
    %591 = vmatpush.bf16.msra.mxu0 %v463
    %592 = vmatpush.bf16.msra.mxu0 %v462
    %593 = vmatpush.bf16.msra.mxu0 %v461
    %594 = vmatpush.bf16.msra.mxu0 %v460
    %595 = vmatpush.bf16.msra.mxu0 %v459
    %596 = vmatpush.bf16.msra.mxu0 %v458
    %597 = vmatpush.bf16.msra.mxu0 %v457
    %598 = vmatmul.bf16.gmra.mxu0 %v178
    %v599 = vpop.f32.mrf.mxu0
    %v600 = vadd.f32 %v587, %v599
    %v601 = vpop.f32.mrf.mxu0
    %602 = vdwg.mxu0
    %603 = vmatpush.bf16.msra.mxu0 %v472
    %604 = vmatpush.bf16.msra.mxu0 %v471
    %605 = vmatpush.bf16.msra.mxu0 %v470
    %606 = vmatpush.bf16.msra.mxu0 %v469
    %607 = vmatpush.bf16.msra.mxu0 %v468
    %608 = vmatpush.bf16.msra.mxu0 %v467
    %609 = vmatpush.bf16.msra.mxu0 %v466
    %610 = vmatpush.bf16.msra.mxu0 %v465
    %611 = vmatmul.bf16.gmra.mxu0 %v179
    %v612 = vpop.f32.mrf.mxu0
    %v613 = vadd.f32 %v600, %v612
    %v614 = vpop.f32.mrf.mxu0
    %615 = vdwg.mxu0
    %616 = vmatpush.bf16.msra.mxu0 %v480
    %617 = vmatpush.bf16.msra.mxu0 %v479
    %618 = vmatpush.bf16.msra.mxu0 %v478
    %619 = vmatpush.bf16.msra.mxu0 %v477
    %620 = vmatpush.bf16.msra.mxu0 %v476
    %621 = vmatpush.bf16.msra.mxu0 %v475
    %622 = vmatpush.bf16.msra.mxu0 %v474
    %623 = vmatpush.bf16.msra.mxu0 %v473
    %624 = vmatmul.bf16.gmra.mxu0 %v180
    %v625 = vpop.f32.mrf.mxu0
    %v626 = vadd.f32 %v613, %v625
    %v627 = vpop.f32.mrf.mxu0
    %628 = vdwg.mxu0
    %629 = vmatpush.bf16.msra.mxu0 %v488
    %630 = vmatpush.bf16.msra.mxu0 %v487
    %631 = vmatpush.bf16.msra.mxu0 %v486
    %632 = vmatpush.bf16.msra.mxu0 %v485
    %633 = vmatpush.bf16.msra.mxu0 %v484
    %634 = vmatpush.bf16.msra.mxu0 %v483
    %635 = vmatpush.bf16.msra.mxu0 %v482
    %636 = vmatpush.bf16.msra.mxu0 %v481
    %637 = vmatmul.bf16.gmra.mxu0 %v181
    %v638 = vpop.f32.mrf.mxu0
    %v639 = vadd.f32 %v626, %v638
    %v640 = vpop.f32.mrf.mxu0
    %641 = vdwg.mxu0
    %642 = vmatpush.bf16.msra.mxu0 %v496
    %643 = vmatpush.bf16.msra.mxu0 %v495
    %644 = vmatpush.bf16.msra.mxu0 %v494
    %645 = vmatpush.bf16.msra.mxu0 %v493
    %646 = vmatpush.bf16.msra.mxu0 %v492
    %647 = vmatpush.bf16.msra.mxu0 %v491
    %648 = vmatpush.bf16.msra.mxu0 %v490
    %649 = vmatpush.bf16.msra.mxu0 %v489
    %650 = vmatmul.bf16.gmra.mxu0 %v182
    %v651 = vpop.f32.mrf.mxu0
    %v652 = vadd.f32 %v639, %v651
    %v653 = vpop.f32.mrf.mxu0
    %654 = vdwg.mxu0
    %655 = vmatpush.bf16.msra.mxu0 %v504
    %656 = vmatpush.bf16.msra.mxu0 %v503
    %657 = vmatpush.bf16.msra.mxu0 %v502
    %658 = vmatpush.bf16.msra.mxu0 %v501
    %659 = vmatpush.bf16.msra.mxu0 %v500
    %660 = vmatpush.bf16.msra.mxu0 %v499
    %661 = vmatpush.bf16.msra.mxu0 %v498
    %662 = vmatpush.bf16.msra.mxu0 %v497
    %663 = vmatmul.bf16.gmra.mxu0 %v183
    %v664 = vpop.f32.mrf.mxu0
    %v665 = vadd.f32 %v652, %v664
    %v666 = vpop.f32.mrf.mxu0
    %667 = vdwg.mxu0
    %668 = vmatpush.bf16.msra.mxu0 %v512
    %669 = vmatpush.bf16.msra.mxu0 %v511
    %670 = vmatpush.bf16.msra.mxu0 %v510
    %671 = vmatpush.bf16.msra.mxu0 %v509
    %672 = vmatpush.bf16.msra.mxu0 %v508
    %673 = vmatpush.bf16.msra.mxu0 %v507
    %674 = vmatpush.bf16.msra.mxu0 %v506
    %675 = vmatpush.bf16.msra.mxu0 %v505
    %676 = vmatmul.bf16.gmra.mxu0 %v184
    %v677 = vpop.f32.mrf.mxu0
    %v678 = vadd.f32 %v665, %v677
    %v679 = vpop.f32.mrf.mxu0
    %680 = vdwg.mxu0
    %v681 = vmax.f32 %v678, 0.0
    %v682 = vpack.c.bf16 %v681, %v681
    %v683 = vld [vmem:[%s3] sm:$0xf]
    %v684 = vld [vmem:[%s3 + $0x4] sm:$0xf]
    %v685 = vld [vmem:[%s3 + $0x8] sm:$0xf]
    %v686 = vld [vmem:[%s3 + $0xc] sm:$0xf]
    %v687 = vld [vmem:[%s3 + $0x10] sm:$0xf]
    %v688 = vld [vmem:[%s3 + $0x14] sm:$0xf]
    %v689 = vld [vmem:[%s3 + $0x18] sm:$0xf]
    %v690 = vld [vmem:[%s3 + $0x1c] sm:$0xf]
    %v691 = vld [vmem:[%s3 + $0x20] sm:$0xf]
    %v692 = vld [vmem:[%s3 + $0x24] sm:$0xf]
    %v693 = vld [vmem:[%s3 + $0x28] sm:$0xf]
    %v694 = vld [vmem:[%s3 + $0x2c] sm:$0xf]
    %v695 = vld [vmem:[%s3 + $0x30] sm:$0xf]
    %v696 = vld [vmem:[%s3 + $0x34] sm:$0xf]
    %v697 = vld [vmem:[%s3 + $0x38] sm:$0xf]
    %v698 = vld [vmem:[%s3 + $0x3c] sm:$0xf]
    %v699 = vld [vmem:[%s4] sm:$0x1]
    %v701 = vperm.slane %v699, 0
    %v719 = vunpack.c.l.b16 %v683
    %v720 = vunpack.c.l.b16 %v684
    %v721 = vunpack.c.l.b16 %v685
    %v722 = vunpack.c.l.b16 %v686
    %v723 = vunpack.c.l.b16 %v687
    %v724 = vunpack.c.l.b16 %v688
    %v725 = vunpack.c.l.b16 %v689
    %v726 = vunpack.c.l.b16 %v690
    %v727 = vunpack.c.l.b16 %v691
    %v728 = vunpack.c.l.b16 %v692
    %v729 = vunpack.c.l.b16 %v693
    %v730 = vunpack.c.l.b16 %v694
    %v731 = vunpack.c.l.b16 %v695
    %v732 = vunpack.c.l.b16 %v696
    %v733 = vunpack.c.l.b16 %v697
    %v734 = vunpack.c.l.b16 %v698
    %v735 = vpack.c.b16 %v720, %v719
    %v736 = vpack.c.b16 %v722, %v721
    %v737 = vpack.c.b16 %v724, %v723
    %v738 = vpack.c.b16 %v726, %v725
    %v739 = vpack.c.b16 %v728, %v727
    %v740 = vpack.c.b16 %v730, %v729
    %v741 = vpack.c.b16 %v732, %v731
    %v742 = vpack.c.b16 %v734, %v733
    %751 = vmatpush.bf16.msra.mxu0 %v742
    %752 = vmatpush.bf16.msra.mxu0 %v741
    %753 = vmatpush.bf16.msra.mxu0 %v740
    %754 = vmatpush.bf16.msra.mxu0 %v739
    %755 = vmatpush.bf16.msra.mxu0 %v738
    %756 = vmatpush.bf16.msra.mxu0 %v737
    %757 = vmatpush.bf16.msra.mxu0 %v736
    %758 = vmatpush.bf16.msra.mxu0 %v735
    %759 = vmatmul.bf16.gmra.mxu0 %v682
    %v760 = vpop.f32.mrf.mxu0
    %v761 = vadd.f32 %v701, %v760
    %v762 = vpop.f32.mrf.mxu0
    %763 = vdwg.mxu0
    %v764 = vld [vmem:[%s5] sm:$0xf]
    %v765 = vld [vmem:[%s5 + $0x4] sm:$0xf]
    %v766 = vld [vmem:[%s5 + $0x8] sm:$0xf]
    %v767 = vld [vmem:[%s5 + $0xc] sm:$0xf]
    %v768 = vld [vmem:[%s5 + $0x10] sm:$0xf]
    %v769 = vld [vmem:[%s5 + $0x14] sm:$0xf]
    %v770 = vld [vmem:[%s5 + $0x18] sm:$0xf]
    %v771 = vld [vmem:[%s5 + $0x1c] sm:$0xf]
    %v772 = vld [vmem:[%s5 + $0x20] sm:$0xf]
    %v773 = vld [vmem:[%s5 + $0x24] sm:$0xf]
    %v774 = vld [vmem:[%s5 + $0x28] sm:$0xf]
    %v775 = vld [vmem:[%s5 + $0x2c] sm:$0xf]
    %v776 = vld [vmem:[%s5 + $0x30] sm:$0xf]
    %v777 = vld [vmem:[%s5 + $0x34] sm:$0xf]
    %v778 = vld [vmem:[%s5 + $0x38] sm:$0xf]
    %v779 = vld [vmem:[%s5 + $0x3c] sm:$0xf]
    %v780 = vld [vmem:[%s6] sm:$0x1]
    %v782 = vperm.slane %v780, 0
    %v800 = vunpack.c.l.b16 %v764
    %v801 = vunpack.c.l.b16 %v765
    %v802 = vunpack.c.l.b16 %v766
    %v803 = vunpack.c.l.b16 %v767
    %v804 = vunpack.c.l.b16 %v768
    %v805 = vunpack.c.l.b16 %v769
    %v806 = vunpack.c.l.b16 %v770
    %v807 = vunpack.c.l.b16 %v771
    %v808 = vunpack.c.l.b16 %v772
    %v809 = vunpack.c.l.b16 %v773
    %v810 = vunpack.c.l.b16 %v774
    %v811 = vunpack.c.l.b16 %v775
    %v812 = vunpack.c.l.b16 %v776
    %v813 = vunpack.c.l.b16 %v777
    %v814 = vunpack.c.l.b16 %v778
    %v815 = vunpack.c.l.b16 %v779
    %v816 = vpack.c.b16 %v801, %v800
    %v817 = vpack.c.b16 %v803, %v802
    %v818 = vpack.c.b16 %v805, %v804
    %v819 = vpack.c.b16 %v807, %v806
    %v820 = vpack.c.b16 %v809, %v808
    %v821 = vpack.c.b16 %v811, %v810
    %v822 = vpack.c.b16 %v813, %v812
    %v823 = vpack.c.b16 %v815, %v814
    %832 = vmatpush.bf16.msra.mxu0 %v823
    %833 = vmatpush.bf16.msra.mxu0 %v822
    %834 = vmatpush.bf16.msra.mxu0 %v821
    %835 = vmatpush.bf16.msra.mxu0 %v820
    %836 = vmatpush.bf16.msra.mxu0 %v819
    %837 = vmatpush.bf16.msra.mxu0 %v818
    %838 = vmatpush.bf16.msra.mxu0 %v817
    %839 = vmatpush.bf16.msra.mxu0 %v816
    %840 = vmatmul.bf16.gmra.mxu0 %v682
    %v841 = vpop.f32.mrf.mxu0
    %v842 = vadd.f32 %v782, %v841
    %v843 = vpop.f32.mrf.mxu0
    %844 = vdwg.mxu0
    %vm845 = vcmask 74752
    %846 = vst.msk [vmem:[#allocation2] sm:$0x3] %vm845, %v761
    %847 = vst.msk [vmem:[#allocation4] sm:$0x3] %vm845, %v842
    %v848 = vld [vmem:[%s7] sm:$0x3]
    %v849 = vmul.f32 %v842, 0.5
    %v850 = vmul.f32 %v849, 1.442695
    %v851 = vpow.pop %v850
    %v852 = vmul.f32 %v848, %v851
    %v853 = vadd.f32 %v761, %v852
    %854 = vst.msk [vmem:[#allocation6] sm:$0x3] %vm845, %v853
    %v855 = vpack.c.bf16 %v853, %v853
    %v856 = vld [vmem:[%s8] sm:$0xf]
    %v857 = vld [vmem:[%s8 + $0x4] sm:$0x1]
    %v858 = vld [vmem:[%s9] sm:$0x1]
    %v860 = vperm.slane %v858, 0
    %v864 = vunpack.c.l.b16 %v856
    %v865 = vunpack.c.l.b16 %v857
    %v866 = vpack.c.b16 %v865, %v864
    %vm867 = vcmask 80896
    %v869 = vsel %vm867, %v855, 0
    %vm871 = vcmask 1044480
    %v873 = vsel %vm871, %v866, 0
    %875 = vmatpush.bf16.msra.mxu0 0
    %876 = vmatpush.bf16.msra.mxu0 0
    %877 = vmatpush.bf16.msra.mxu0 0
    %878 = vmatpush.bf16.msra.mxu0 0
    %879 = vmatpush.bf16.msra.mxu0 0
    %880 = vmatpush.bf16.msra.mxu0 0
    %881 = vmatpush.bf16.msra.mxu0 0
    %882 = vmatpush.bf16.msra.mxu0 %v873
    %883 = vmatmul.bf16.gmra.mxu0 %v869
    %v884 = vpop.f32.mrf.mxu0
    %v885 = vadd.f32 %v860, %v884
    %v886 = vpop.f32.mrf.mxu0
    %887 = vdwg.mxu0
    %v888 = vmax.f32 %v885, 0.0
    %v889 = vpack.c.bf16 %v888, %v888
    %890 = vst [vmem:[%s13] sm:$0x1] %v889
    // Predicated region
    $region42: #{factor_vae1_forward.14} parent=1 // pred_check
      _
    $region43: #{factor_vae1_forward.14} parent=1 // pred_check_branch
      %892 = sbr.rel (0) target = $region45
    $region44: #{factor_vae1_forward.14} parent=1 // pred_region
      %894 = vsyncadd [#allocation3], 0
      %s896 = sshll.u32 [#allocation2], 4
      %s897 = int_to_ptr.vmem [resolvable:$true] %s896
      %s898 = sshll.u32 %s10, 4
      %s899 = int_to_ptr.hbm [resolvable:$true] %s898
      %901 = dma.vmem_to_hbm [thread:$0]  %s897, 32, %s899, [#allocation3]
    $region45: #{factor_vae1_forward.14} parent=1 // pred_fallthru
      _
    // Predicated region
    $region46: #{factor_vae1_forward.14} parent=1 // pred_check
      _
    $region47: #{factor_vae1_forward.14} parent=1 // pred_check_branch
      %903 = sbr.rel (0) target = $region49
    $region48: #{factor_vae1_forward.14} parent=1 // pred_region
      %905 = vsyncadd [#allocation5], 0
      %s907 = sshll.u32 [#allocation4], 4
      %s908 = int_to_ptr.vmem [resolvable:$true] %s907
      %s909 = sshll.u32 %s11, 4
      %s910 = int_to_ptr.hbm [resolvable:$true] %s909
      %912 = dma.vmem_to_hbm [thread:$0]  %s908, 32, %s910, [#allocation5]
    $region49: #{factor_vae1_forward.14} parent=1 // pred_fallthru
      _
    // Predicated region
    $region50: #{factor_vae1_forward.14} parent=1 // pred_check
      _
    $region51: #{factor_vae1_forward.14} parent=1 // pred_check_branch
      %914 = sbr.rel (0) target = $region53
    $region52: #{factor_vae1_forward.14} parent=1 // pred_region
      %916 = vsyncadd [#allocation5], 0
      %s918 = sshll.u32 [#allocation6], 4
      %s919 = int_to_ptr.vmem [resolvable:$true] %s918
      %s920 = sshll.u32 %s12, 4
      %s921 = int_to_ptr.hbm [resolvable:$true] %s920
      %923 = dma.vmem_to_hbm [thread:$0]  %s919, 32, %s921, [#allocation5]
    $region53: #{factor_vae1_forward.14} parent=1 // pred_fallthru
      _
    // Predicated region
    $region54: #{factor_vae1_forward.14} parent=1 // pred_check
      _
    $region55: #{factor_vae1_forward.14} parent=1 // pred_check_branch
      %925 = sbr.rel (0) target = $region57
    $region56: #{factor_vae1_forward.14} parent=1 // pred_region
      _
    $region57: #{factor_vae1_forward.14} parent=1 // pred_fallthru
      _
    // Predicated region
    $region58: #{factor_vae1_forward.14} parent=1 // pred_check
      _
    $region59: #{factor_vae1_forward.14} parent=1 // pred_check_branch
      %927 = sbr.rel (0) target = $region61
    $region60: #{factor_vae1_forward.14} parent=1 // pred_region
      %929 = dma.done [#allocation3], 32
    $region61: #{factor_vae1_forward.14} parent=1 // pred_fallthru
      _
    // Predicated region
    $region62: #{factor_vae1_forward.14} parent=1 // pred_check
      _
    $region63: #{factor_vae1_forward.14} parent=1 // pred_check_branch
      %931 = sbr.rel (0) target = $region65
    $region64: #{factor_vae1_forward.14} parent=1 // pred_region
      %933 = dma.done [#allocation5], 32
    $region65: #{factor_vae1_forward.14} parent=1 // pred_fallthru
      _
    // Predicated region
    $region66: #{factor_vae1_forward.14} parent=1 // pred_check
      _
    $region67: #{factor_vae1_forward.14} parent=1 // pred_check_branch
      %935 = sbr.rel (0) target = $region69
    $region68: #{factor_vae1_forward.14} parent=1 // pred_region
      %937 = dma.done [#allocation5], 32
    $region69: #{factor_vae1_forward.14} parent=1 // pred_fallthru
      _
    // Predicated region
    $region70: #{factor_vae1_forward.14} parent=1 // pred_check
      _
    $region71: #{factor_vae1_forward.14} parent=1 // pred_check_branch
      %939 = sbr.rel (0) target = $region73
    $region72: #{factor_vae1_forward.14} parent=1 // pred_region
      _
    $region73: #{factor_vae1_forward.14} parent=1 // pred_fallthru
      _
    %940 = vsyncpa [#allocation3], 1
    %941 = vsyncpa [#allocation5], 1

// kernel: factor_vae1_forward.15
$region0: #{factor_vae1_forward.15}
  #allocation0 [shape = 'u32[]', space=smem, size = 0x4, offset = 0x4, fixed_abs, tag = 'smem constant byte address 0x4 - core index']
  #allocation1 [shape = 'u32[72,128]{1,0:T(1,128)}', space=vmem, size = 0x9000, scoped, tag = 'internal scratch']
  %s0 = inlined_call_operand.vmem [shape: bf16[2,128], index: 0, kind: input, shape index: {}]
  %s1 = inlined_call_operand.vmem [shape: bf16[128,1024], index: 1, kind: input, shape index: {}]
  %s2 = inlined_call_operand.vmem [shape: f32[2,1024], index: 2, kind: output, shape index: {}]
  %s3 = sld [smem:[#allocation0]]
  $region18: #{factor_vae1_forward.15} parent=0
    _
  %s5 = ssub.s32 1, %s3
  %s6 = scalar_select 0, %s5, %s3
  // Predicated region
  $region2: #{factor_vae1_forward.15} parent=0 // pred_check
    _
  $region3: #{factor_vae1_forward.15} parent=0 // pred_check_branch
    %8 = sbr.rel (0) target = $region5
  $region4: #{factor_vae1_forward.15} parent=0 // pred_region
    _
  $region5: #{factor_vae1_forward.15} parent=0 // pred_fallthru
    _
  // Predicated region
  $region6: #{factor_vae1_forward.15} parent=0 // pred_check
    _
  $region7: #{factor_vae1_forward.15} parent=0 // pred_check_branch
    %10 = sbr.rel (0) target = $region9
  $region8: #{factor_vae1_forward.15} parent=0 // pred_region
    _
  $region9: #{factor_vae1_forward.15} parent=0 // pred_fallthru
    _
  %v11 = vld [vmem:[%s0] sm:$0x1]
  %v12 = vld [vmem:[%s1] sm:$0xff]
  %v13 = vld [vmem:[%s1 + $0x8] sm:$0xff]
  %v14 = vld [vmem:[%s1 + $0x10] sm:$0xff]
  %v15 = vld [vmem:[%s1 + $0x18] sm:$0xff]
  %v16 = vld [vmem:[%s1 + $0x20] sm:$0xff]
  %v17 = vld [vmem:[%s1 + $0x28] sm:$0xff]
  %v18 = vld [vmem:[%s1 + $0x30] sm:$0xff]
  %v19 = vld [vmem:[%s1 + $0x38] sm:$0xff]
  %v20 = vld [vmem:[%s1 + $0x40] sm:$0xff]
  %v21 = vld [vmem:[%s1 + $0x48] sm:$0xff]
  %v22 = vld [vmem:[%s1 + $0x50] sm:$0xff]
  %v23 = vld [vmem:[%s1 + $0x58] sm:$0xff]
  %v24 = vld [vmem:[%s1 + $0x60] sm:$0xff]
  %v25 = vld [vmem:[%s1 + $0x68] sm:$0xff]
  %v26 = vld [vmem:[%s1 + $0x70] sm:$0xff]
  %v27 = vld [vmem:[%s1 + $0x78] sm:$0xff]
  %v28 = vld [vmem:[%s1 + $0x80] sm:$0xff]
  %v29 = vld [vmem:[%s1 + $0x88] sm:$0xff]
  %v30 = vld [vmem:[%s1 + $0x90] sm:$0xff]
  %v31 = vld [vmem:[%s1 + $0x98] sm:$0xff]
  %v32 = vld [vmem:[%s1 + $0xa0] sm:$0xff]
  %v33 = vld [vmem:[%s1 + $0xa8] sm:$0xff]
  %v34 = vld [vmem:[%s1 + $0xb0] sm:$0xff]
  %v35 = vld [vmem:[%s1 + $0xb8] sm:$0xff]
  %v36 = vld [vmem:[%s1 + $0xc0] sm:$0xff]
  %v37 = vld [vmem:[%s1 + $0xc8] sm:$0xff]
  %v38 = vld [vmem:[%s1 + $0xd0] sm:$0xff]
  %v39 = vld [vmem:[%s1 + $0xd8] sm:$0xff]
  %v40 = vld [vmem:[%s1 + $0xe0] sm:$0xff]
  %v41 = vld [vmem:[%s1 + $0xe8] sm:$0xff]
  %v42 = vld [vmem:[%s1 + $0xf0] sm:$0xff]
  %v43 = vld [vmem:[%s1 + $0xf8] sm:$0xff]
  %v44 = vld [vmem:[%s1 + $0x100] sm:$0xff]
  %v45 = vld [vmem:[%s1 + $0x108] sm:$0xff]
  %v46 = vld [vmem:[%s1 + $0x110] sm:$0xff]
  %v47 = vld [vmem:[%s1 + $0x118] sm:$0xff]
  %v48 = vld [vmem:[%s1 + $0x120] sm:$0xff]
  %v49 = vld [vmem:[%s1 + $0x128] sm:$0xff]
  %v50 = vld [vmem:[%s1 + $0x130] sm:$0xff]
  %v51 = vld [vmem:[%s1 + $0x138] sm:$0xff]
  %v52 = vld [vmem:[%s1 + $0x140] sm:$0xff]
  %v53 = vld [vmem:[%s1 + $0x148] sm:$0xff]
  %v54 = vld [vmem:[%s1 + $0x150] sm:$0xff]
  %v55 = vld [vmem:[%s1 + $0x158] sm:$0xff]
  %v56 = vld [vmem:[%s1 + $0x160] sm:$0xff]
  %v57 = vld [vmem:[%s1 + $0x168] sm:$0xff]
  %v58 = vld [vmem:[%s1 + $0x170] sm:$0xff]
  %v59 = vld [vmem:[%s1 + $0x178] sm:$0xff]
  %v60 = vld [vmem:[%s1 + $0x180] sm:$0xff]
  %v61 = vld [vmem:[%s1 + $0x188] sm:$0xff]
  %v62 = vld [vmem:[%s1 + $0x190] sm:$0xff]
  %v63 = vld [vmem:[%s1 + $0x198] sm:$0xff]
  %v64 = vld [vmem:[%s1 + $0x1a0] sm:$0xff]
  %v65 = vld [vmem:[%s1 + $0x1a8] sm:$0xff]
  %v66 = vld [vmem:[%s1 + $0x1b0] sm:$0xff]
  %v67 = vld [vmem:[%s1 + $0x1b8] sm:$0xff]
  %v68 = vld [vmem:[%s1 + $0x1c0] sm:$0xff]
  %v69 = vld [vmem:[%s1 + $0x1c8] sm:$0xff]
  %v70 = vld [vmem:[%s1 + $0x1d0] sm:$0xff]
  %v71 = vld [vmem:[%s1 + $0x1d8] sm:$0xff]
  %v72 = vld [vmem:[%s1 + $0x1e0] sm:$0xff]
  %v73 = vld [vmem:[%s1 + $0x1e8] sm:$0xff]
  %v74 = vld [vmem:[%s1 + $0x1f0] sm:$0xff]
  %v75 = vld [vmem:[%s1 + $0x1f8] sm:$0xff]
  %v140 = vunpack.c.l.b16 %v12
  %v141 = vunpack.c.h.b16 %v12
  %v142 = vunpack.c.l.b16 %v13
  %v143 = vunpack.c.h.b16 %v13
  %v144 = vunpack.c.l.b16 %v14
  %v145 = vunpack.c.h.b16 %v14
  %v146 = vunpack.c.l.b16 %v15
  %v147 = vunpack.c.h.b16 %v15
  %v148 = vunpack.c.l.b16 %v16
  %v149 = vunpack.c.h.b16 %v16
  %v150 = vunpack.c.l.b16 %v17
  %v151 = vunpack.c.h.b16 %v17
  %v152 = vunpack.c.l.b16 %v18
  %v153 = vunpack.c.h.b16 %v18
  %v154 = vunpack.c.l.b16 %v19
  %v155 = vunpack.c.h.b16 %v19
  %v156 = vunpack.c.l.b16 %v20
  %v157 = vunpack.c.h.b16 %v20
  %v158 = vunpack.c.l.b16 %v21
  %v159 = vunpack.c.h.b16 %v21
  %v160 = vunpack.c.l.b16 %v22
  %v161 = vunpack.c.h.b16 %v22
  %v162 = vunpack.c.l.b16 %v23
  %v163 = vunpack.c.h.b16 %v23
  %v164 = vunpack.c.l.b16 %v24
  %v165 = vunpack.c.h.b16 %v24
  %v166 = vunpack.c.l.b16 %v25
  %v167 = vunpack.c.h.b16 %v25
  %v168 = vunpack.c.l.b16 %v26
  %v169 = vunpack.c.h.b16 %v26
  %v170 = vunpack.c.l.b16 %v27
  %v171 = vunpack.c.h.b16 %v27
  %v172 = vunpack.c.l.b16 %v28
  %v173 = vunpack.c.h.b16 %v28
  %v174 = vunpack.c.l.b16 %v29
  %v175 = vunpack.c.h.b16 %v29
  %v176 = vunpack.c.l.b16 %v30
  %v177 = vunpack.c.h.b16 %v30
  %v178 = vunpack.c.l.b16 %v31
  %v179 = vunpack.c.h.b16 %v31
  %v180 = vunpack.c.l.b16 %v32
  %v181 = vunpack.c.h.b16 %v32
  %v182 = vunpack.c.l.b16 %v33
  %v183 = vunpack.c.h.b16 %v33
  %v184 = vunpack.c.l.b16 %v34
  %v185 = vunpack.c.h.b16 %v34
  %v186 = vunpack.c.l.b16 %v35
  %v187 = vunpack.c.h.b16 %v35
  %v188 = vunpack.c.l.b16 %v36
  %v189 = vunpack.c.h.b16 %v36
  %v190 = vunpack.c.l.b16 %v37
  %v191 = vunpack.c.h.b16 %v37
  %v192 = vunpack.c.l.b16 %v38
  %v193 = vunpack.c.h.b16 %v38
  %v194 = vunpack.c.l.b16 %v39
  %v195 = vunpack.c.h.b16 %v39
  %v196 = vunpack.c.l.b16 %v40
  %v197 = vunpack.c.h.b16 %v40
  %v198 = vunpack.c.l.b16 %v41
  %v199 = vunpack.c.h.b16 %v41
  %v200 = vunpack.c.l.b16 %v42
  %v201 = vunpack.c.h.b16 %v42
  %v202 = vunpack.c.l.b16 %v43
  %v203 = vunpack.c.h.b16 %v43
  %v204 = vunpack.c.l.b16 %v44
  %v205 = vunpack.c.h.b16 %v44
  %v206 = vunpack.c.l.b16 %v45
  %v207 = vunpack.c.h.b16 %v45
  %v208 = vunpack.c.l.b16 %v46
  %v209 = vunpack.c.h.b16 %v46
  %v210 = vunpack.c.l.b16 %v47
  %v211 = vunpack.c.h.b16 %v47
  %v212 = vunpack.c.l.b16 %v48
  %v213 = vunpack.c.h.b16 %v48
  %v214 = vunpack.c.l.b16 %v49
  %v215 = vunpack.c.h.b16 %v49
  %v216 = vunpack.c.l.b16 %v50
  %v217 = vunpack.c.h.b16 %v50
  %v218 = vunpack.c.l.b16 %v51
  %v219 = vunpack.c.h.b16 %v51
  %v220 = vunpack.c.l.b16 %v52
  %v221 = vunpack.c.h.b16 %v52
  %v222 = vunpack.c.l.b16 %v53
  %v223 = vunpack.c.h.b16 %v53
  %v224 = vunpack.c.l.b16 %v54
  %v225 = vunpack.c.h.b16 %v54
  %v226 = vunpack.c.l.b16 %v55
  %v227 = vunpack.c.h.b16 %v55
  %v228 = vunpack.c.l.b16 %v56
  %v229 = vunpack.c.h.b16 %v56
  %v230 = vunpack.c.l.b16 %v57
  %v231 = vunpack.c.h.b16 %v57
  %v232 = vunpack.c.l.b16 %v58
  %v233 = vunpack.c.h.b16 %v58
  %v234 = vunpack.c.l.b16 %v59
  %v235 = vunpack.c.h.b16 %v59
  %v236 = vunpack.c.l.b16 %v60
  %v237 = vunpack.c.h.b16 %v60
  %v238 = vunpack.c.l.b16 %v61
  %v239 = vunpack.c.h.b16 %v61
  %v240 = vunpack.c.l.b16 %v62
  %v241 = vunpack.c.h.b16 %v62
  %v242 = vunpack.c.l.b16 %v63
  %v243 = vunpack.c.h.b16 %v63
  %v244 = vunpack.c.l.b16 %v64
  %v245 = vunpack.c.h.b16 %v64
  %v246 = vunpack.c.l.b16 %v65
  %v247 = vunpack.c.h.b16 %v65
  %v248 = vunpack.c.l.b16 %v66
  %v249 = vunpack.c.h.b16 %v66
  %v250 = vunpack.c.l.b16 %v67
  %v251 = vunpack.c.h.b16 %v67
  %v252 = vunpack.c.l.b16 %v68
  %v253 = vunpack.c.h.b16 %v68
  %v254 = vunpack.c.l.b16 %v69
  %v255 = vunpack.c.h.b16 %v69
  %v256 = vunpack.c.l.b16 %v70
  %v257 = vunpack.c.h.b16 %v70
  %v258 = vunpack.c.l.b16 %v71
  %v259 = vunpack.c.h.b16 %v71
  %v260 = vunpack.c.l.b16 %v72
  %v261 = vunpack.c.h.b16 %v72
  %v262 = vunpack.c.l.b16 %v73
  %v263 = vunpack.c.h.b16 %v73
  %v264 = vunpack.c.l.b16 %v74
  %v265 = vunpack.c.h.b16 %v74
  %v266 = vunpack.c.l.b16 %v75
  %v267 = vunpack.c.h.b16 %v75
  %v268 = vpack.c.b16 %v148, %v140
  %v269 = vpack.c.b16 %v149, %v141
  %v270 = vpack.c.b16 %v150, %v142
  %v271 = vpack.c.b16 %v151, %v143
  %v272 = vpack.c.b16 %v152, %v144
  %v273 = vpack.c.b16 %v153, %v145
  %v274 = vpack.c.b16 %v154, %v146
  %v275 = vpack.c.b16 %v155, %v147
  %v276 = vpack.c.b16 %v164, %v156
  %v277 = vpack.c.b16 %v165, %v157
  %v278 = vpack.c.b16 %v166, %v158
  %v279 = vpack.c.b16 %v167, %v159
  %v280 = vpack.c.b16 %v168, %v160
  %v281 = vpack.c.b16 %v169, %v161
  %v282 = vpack.c.b16 %v170, %v162
  %v283 = vpack.c.b16 %v171, %v163
  %v284 = vpack.c.b16 %v180, %v172
  %v285 = vpack.c.b16 %v181, %v173
  %v286 = vpack.c.b16 %v182, %v174
  %v287 = vpack.c.b16 %v183, %v175
  %v288 = vpack.c.b16 %v184, %v176
  %v289 = vpack.c.b16 %v185, %v177
  %v290 = vpack.c.b16 %v186, %v178
  %v291 = vpack.c.b16 %v187, %v179
  %v292 = vpack.c.b16 %v196, %v188
  %v293 = vpack.c.b16 %v197, %v189
  %v294 = vpack.c.b16 %v198, %v190
  %v295 = vpack.c.b16 %v199, %v191
  %v296 = vpack.c.b16 %v200, %v192
  %v297 = vpack.c.b16 %v201, %v193
  %v298 = vpack.c.b16 %v202, %v194
  %v299 = vpack.c.b16 %v203, %v195
  %v300 = vpack.c.b16 %v212, %v204
  %v301 = vpack.c.b16 %v213, %v205
  %v302 = vpack.c.b16 %v214, %v206
  %v303 = vpack.c.b16 %v215, %v207
  %v304 = vpack.c.b16 %v216, %v208
  %v305 = vpack.c.b16 %v217, %v209
  %v306 = vpack.c.b16 %v218, %v210
  %v307 = vpack.c.b16 %v219, %v211
  %v308 = vpack.c.b16 %v228, %v220
  %v309 = vpack.c.b16 %v229, %v221
  %v310 = vpack.c.b16 %v230, %v222
  %v311 = vpack.c.b16 %v231, %v223
  %v312 = vpack.c.b16 %v232, %v224
  %v313 = vpack.c.b16 %v233, %v225
  %v314 = vpack.c.b16 %v234, %v226
  %v315 = vpack.c.b16 %v235, %v227
  %v316 = vpack.c.b16 %v244, %v236
  %v317 = vpack.c.b16 %v245, %v237
  %v318 = vpack.c.b16 %v246, %v238
  %v319 = vpack.c.b16 %v247, %v239
  %v320 = vpack.c.b16 %v248, %v240
  %v321 = vpack.c.b16 %v249, %v241
  %v322 = vpack.c.b16 %v250, %v242
  %v323 = vpack.c.b16 %v251, %v243
  %v324 = vpack.c.b16 %v260, %v252
  %v325 = vpack.c.b16 %v261, %v253
  %v326 = vpack.c.b16 %v262, %v254
  %v327 = vpack.c.b16 %v263, %v255
  %v328 = vpack.c.b16 %v264, %v256
  %v329 = vpack.c.b16 %v265, %v257
  %v330 = vpack.c.b16 %v266, %v258
  %v331 = vpack.c.b16 %v267, %v259
  %396 = vmatpush.bf16.msra.mxu0 %v324
  %397 = vmatpush.bf16.msra.mxu0 %v316
  %398 = vmatpush.bf16.msra.mxu0 %v308
  %399 = vmatpush.bf16.msra.mxu0 %v300
  %400 = vmatpush.bf16.msra.mxu0 %v292
  %401 = vmatpush.bf16.msra.mxu0 %v284
  %402 = vmatpush.bf16.msra.mxu0 %v276
  %403 = vmatpush.bf16.msra.mxu0 %v268
  %404 = vmatmul.bf16.gmra.mxu0 %v11
  %v405 = vpop.f32.mrf.mxu0
  %v406 = vadd.f32 0.0, %v405
  %v407 = vpop.f32.mrf.mxu0
  %408 = vdwg.mxu0
  %409 = vmatpush.bf16.msra.mxu0 %v325
  %410 = vmatpush.bf16.msra.mxu0 %v317
  %411 = vmatpush.bf16.msra.mxu0 %v309
  %412 = vmatpush.bf16.msra.mxu0 %v301
  %413 = vmatpush.bf16.msra.mxu0 %v293
  %414 = vmatpush.bf16.msra.mxu0 %v285
  %415 = vmatpush.bf16.msra.mxu0 %v277
  %416 = vmatpush.bf16.msra.mxu0 %v269
  %417 = vmatmul.bf16.gmra.mxu0 %v11
  %v418 = vpop.f32.mrf.mxu0
  %v419 = vadd.f32 0.0, %v418
  %v420 = vpop.f32.mrf.mxu0
  %421 = vdwg.mxu0
  %422 = vmatpush.bf16.msra.mxu0 %v326
  %423 = vmatpush.bf16.msra.mxu0 %v318
  %424 = vmatpush.bf16.msra.mxu0 %v310
  %425 = vmatpush.bf16.msra.mxu0 %v302
  %426 = vmatpush.bf16.msra.mxu0 %v294
  %427 = vmatpush.bf16.msra.mxu0 %v286
  %428 = vmatpush.bf16.msra.mxu0 %v278
  %429 = vmatpush.bf16.msra.mxu0 %v270
  %430 = vmatmul.bf16.gmra.mxu0 %v11
  %v431 = vpop.f32.mrf.mxu0
  %v432 = vadd.f32 0.0, %v431
  %v433 = vpop.f32.mrf.mxu0
  %434 = vdwg.mxu0
  %435 = vmatpush.bf16.msra.mxu0 %v327
  %436 = vmatpush.bf16.msra.mxu0 %v319
  %437 = vmatpush.bf16.msra.mxu0 %v311
  %438 = vmatpush.bf16.msra.mxu0 %v303
  %439 = vmatpush.bf16.msra.mxu0 %v295
  %440 = vmatpush.bf16.msra.mxu0 %v287
  %441 = vmatpush.bf16.msra.mxu0 %v279
  %442 = vmatpush.bf16.msra.mxu0 %v271
  %443 = vmatmul.bf16.gmra.mxu0 %v11
  %v444 = vpop.f32.mrf.mxu0
  %v445 = vadd.f32 0.0, %v444
  %v446 = vpop.f32.mrf.mxu0
  %447 = vdwg.mxu0
  %448 = vmatpush.bf16.msra.mxu0 %v328
  %449 = vmatpush.bf16.msra.mxu0 %v320
  %450 = vmatpush.bf16.msra.mxu0 %v312
  %451 = vmatpush.bf16.msra.mxu0 %v304
  %452 = vmatpush.bf16.msra.mxu0 %v296
  %453 = vmatpush.bf16.msra.mxu0 %v288
  %454 = vmatpush.bf16.msra.mxu0 %v280
  %455 = vmatpush.bf16.msra.mxu0 %v272
  %456 = vmatmul.bf16.gmra.mxu0 %v11
  %v457 = vpop.f32.mrf.mxu0
  %v458 = vadd.f32 0.0, %v457
  %v459 = vpop.f32.mrf.mxu0
  %460 = vdwg.mxu0
  %461 = vmatpush.bf16.msra.mxu0 %v329
  %462 = vmatpush.bf16.msra.mxu0 %v321
  %463 = vmatpush.bf16.msra.mxu0 %v313
  %464 = vmatpush.bf16.msra.mxu0 %v305
  %465 = vmatpush.bf16.msra.mxu0 %v297
  %466 = vmatpush.bf16.msra.mxu0 %v289
  %467 = vmatpush.bf16.msra.mxu0 %v281
  %468 = vmatpush.bf16.msra.mxu0 %v273
  %469 = vmatmul.bf16.gmra.mxu0 %v11
  %v470 = vpop.f32.mrf.mxu0
  %v471 = vadd.f32 0.0, %v470
  %v472 = vpop.f32.mrf.mxu0
  %473 = vdwg.mxu0
  %474 = vmatpush.bf16.msra.mxu0 %v330
  %475 = vmatpush.bf16.msra.mxu0 %v322
  %476 = vmatpush.bf16.msra.mxu0 %v314
  %477 = vmatpush.bf16.msra.mxu0 %v306
  %478 = vmatpush.bf16.msra.mxu0 %v298
  %479 = vmatpush.bf16.msra.mxu0 %v290
  %480 = vmatpush.bf16.msra.mxu0 %v282
  %481 = vmatpush.bf16.msra.mxu0 %v274
  %482 = vmatmul.bf16.gmra.mxu0 %v11
  %v483 = vpop.f32.mrf.mxu0
  %v484 = vadd.f32 0.0, %v483
  %v485 = vpop.f32.mrf.mxu0
  %486 = vdwg.mxu0
  %487 = vmatpush.bf16.msra.mxu0 %v331
  %488 = vmatpush.bf16.msra.mxu0 %v323
  %489 = vmatpush.bf16.msra.mxu0 %v315
  %490 = vmatpush.bf16.msra.mxu0 %v307
  %491 = vmatpush.bf16.msra.mxu0 %v299
  %492 = vmatpush.bf16.msra.mxu0 %v291
  %493 = vmatpush.bf16.msra.mxu0 %v283
  %494 = vmatpush.bf16.msra.mxu0 %v275
  %495 = vmatmul.bf16.gmra.mxu0 %v11
  %v496 = vpop.f32.mrf.mxu0
  %v497 = vadd.f32 0.0, %v496
  %v498 = vpop.f32.mrf.mxu0
  %499 = vdwg.mxu0
  %v508 = vrot.slane %v419, 6
  %v509 = vrot.slane %v432, 4
  %v510 = vrot.slane %v445, 2
  %v511 = vrot.slane %v471, 6
  %v512 = vrot.slane %v484, 4
  %v513 = vrot.slane %v497, 2
  %vm514 = vcmask 1041408
  %v515 = vsel %vm514, %v406, %v508
  %vm516 = vcmask 1045508
  %v517 = vsel %vm516, %v509, %v510
  %vm518 = vcmask 1043456
  %v519 = vsel %vm518, %v515, %v517
  %v520 = vsel %vm514, %v458, %v511
  %v521 = vsel %vm516, %v512, %v513
  %v522 = vsel %vm518, %v520, %v521
  %525 = vst [vmem:[%s2] sm:$0xff] %v519
  %526 = vst [vmem:[%s2 + $0x8] sm:$0xff] %v522
  // Predicated region
  $region10: #{factor_vae1_forward.15} parent=0 // pred_check
    _
  $region11: #{factor_vae1_forward.15} parent=0 // pred_check_branch
    %528 = sbr.rel (0) target = $region13
  $region12: #{factor_vae1_forward.15} parent=0 // pred_region
    _
  $region13: #{factor_vae1_forward.15} parent=0 // pred_fallthru
    _
  // Predicated region
  $region14: #{factor_vae1_forward.15} parent=0 // pred_check
    _
  $region15: #{factor_vae1_forward.15} parent=0 // pred_check_branch
    %530 = sbr.rel (0) target = $region17
  $region16: #{factor_vae1_forward.15} parent=0 // pred_region
    _
  $region17: #{factor_vae1_forward.15} parent=0 // pred_fallthru
    _

// kernel: factor_vae1_forward.16
$region0: #{factor_vae1_forward.16}
  #allocation0 [shape = 'u32[]', space=smem, size = 0x4, offset = 0x4, fixed_abs, tag = 'smem constant byte address 0x4 - core index']
  #allocation1 [shape = 'u32[72,128]{1,0:T(1,128)}', space=vmem, size = 0x9000, scoped, tag = 'internal scratch']
  %s0 = inlined_call_operand.vmem [shape: bf16[32,64], index: 0, kind: input, shape index: {}]
  %s1 = inlined_call_operand.vmem [shape: bf16[64,1024], index: 1, kind: input, shape index: {}]
  %s2 = inlined_call_operand.vmem [shape: f32[32,1024], index: 2, kind: output, shape index: {}]
  %s3 = sld [smem:[#allocation0]]
  $region18: #{factor_vae1_forward.16} parent=0
    _
  %s5 = ssub.s32 1, %s3
  %s6 = scalar_select 0, %s5, %s3
  // Predicated region
  $region2: #{factor_vae1_forward.16} parent=0 // pred_check
    _
  $region3: #{factor_vae1_forward.16} parent=0 // pred_check_branch
    %8 = sbr.rel (0) target = $region5
  $region4: #{factor_vae1_forward.16} parent=0 // pred_region
    _
  $region5: #{factor_vae1_forward.16} parent=0 // pred_fallthru
    _
  // Predicated region
  $region6: #{factor_vae1_forward.16} parent=0 // pred_check
    _
  $region7: #{factor_vae1_forward.16} parent=0 // pred_check_branch
    %10 = sbr.rel (0) target = $region9
  $region8: #{factor_vae1_forward.16} parent=0 // pred_region
    _
  $region9: #{factor_vae1_forward.16} parent=0 // pred_fallthru
    _
  %v12 = vld [vmem:[%s0] sm:$0xf]
  %v13 = vld [vmem:[%s0 + $0x4] sm:$0xf]
  %v14 = vld [vmem:[%s0 + $0x8] sm:$0xf]
  %v15 = vld [vmem:[%s0 + $0xc] sm:$0xf]
  %v16 = vld [vmem:[%s1] sm:$0xff]
  %v17 = vld [vmem:[%s1 + $0x8] sm:$0xff]
  %v18 = vld [vmem:[%s1 + $0x10] sm:$0xff]
  %v19 = vld [vmem:[%s1 + $0x18] sm:$0xff]
  %v20 = vld [vmem:[%s1 + $0x20] sm:$0xff]
  %v21 = vld [vmem:[%s1 + $0x28] sm:$0xff]
  %v22 = vld [vmem:[%s1 + $0x30] sm:$0xff]
  %v23 = vld [vmem:[%s1 + $0x38] sm:$0xff]
  %v24 = vld [vmem:[%s1 + $0x40] sm:$0xff]
  %v25 = vld [vmem:[%s1 + $0x48] sm:$0xff]
  %v26 = vld [vmem:[%s1 + $0x50] sm:$0xff]
  %v27 = vld [vmem:[%s1 + $0x58] sm:$0xff]
  %v28 = vld [vmem:[%s1 + $0x60] sm:$0xff]
  %v29 = vld [vmem:[%s1 + $0x68] sm:$0xff]
  %v30 = vld [vmem:[%s1 + $0x70] sm:$0xff]
  %v31 = vld [vmem:[%s1 + $0x78] sm:$0xff]
  %v32 = vld [vmem:[%s1 + $0x80] sm:$0xff]
  %v33 = vld [vmem:[%s1 + $0x88] sm:$0xff]
  %v34 = vld [vmem:[%s1 + $0x90] sm:$0xff]
  %v35 = vld [vmem:[%s1 + $0x98] sm:$0xff]
  %v36 = vld [vmem:[%s1 + $0xa0] sm:$0xff]
  %v37 = vld [vmem:[%s1 + $0xa8] sm:$0xff]
  %v38 = vld [vmem:[%s1 + $0xb0] sm:$0xff]
  %v39 = vld [vmem:[%s1 + $0xb8] sm:$0xff]
  %v40 = vld [vmem:[%s1 + $0xc0] sm:$0xff]
  %v41 = vld [vmem:[%s1 + $0xc8] sm:$0xff]
  %v42 = vld [vmem:[%s1 + $0xd0] sm:$0xff]
  %v43 = vld [vmem:[%s1 + $0xd8] sm:$0xff]
  %v44 = vld [vmem:[%s1 + $0xe0] sm:$0xff]
  %v45 = vld [vmem:[%s1 + $0xe8] sm:$0xff]
  %v46 = vld [vmem:[%s1 + $0xf0] sm:$0xff]
  %v47 = vld [vmem:[%s1 + $0xf8] sm:$0xff]
  %v52 = vunpack.c.l.b16 %v12
  %v53 = vunpack.c.l.b16 %v13
  %v54 = vunpack.c.l.b16 %v14
  %v55 = vunpack.c.l.b16 %v15
  %v56 = vpack.c.b16 %v53, %v52
  %v57 = vpack.c.b16 %v55, %v54
  %v90 = vunpack.c.l.b16 %v16
  %v91 = vunpack.c.h.b16 %v16
  %v92 = vunpack.c.l.b16 %v17
  %v93 = vunpack.c.h.b16 %v17
  %v94 = vunpack.c.l.b16 %v18
  %v95 = vunpack.c.h.b16 %v18
  %v96 = vunpack.c.l.b16 %v19
  %v97 = vunpack.c.h.b16 %v19
  %v98 = vunpack.c.l.b16 %v20
  %v99 = vunpack.c.h.b16 %v20
  %v100 = vunpack.c.l.b16 %v21
  %v101 = vunpack.c.h.b16 %v21
  %v102 = vunpack.c.l.b16 %v22
  %v103 = vunpack.c.h.b16 %v22
  %v104 = vunpack.c.l.b16 %v23
  %v105 = vunpack.c.h.b16 %v23
  %v106 = vunpack.c.l.b16 %v24
  %v107 = vunpack.c.h.b16 %v24
  %v108 = vunpack.c.l.b16 %v25
  %v109 = vunpack.c.h.b16 %v25
  %v110 = vunpack.c.l.b16 %v26
  %v111 = vunpack.c.h.b16 %v26
  %v112 = vunpack.c.l.b16 %v27
  %v113 = vunpack.c.h.b16 %v27
  %v114 = vunpack.c.l.b16 %v28
  %v115 = vunpack.c.h.b16 %v28
  %v116 = vunpack.c.l.b16 %v29
  %v117 = vunpack.c.h.b16 %v29
  %v118 = vunpack.c.l.b16 %v30
  %v119 = vunpack.c.h.b16 %v30
  %v120 = vunpack.c.l.b16 %v31
  %v121 = vunpack.c.h.b16 %v31
  %v122 = vunpack.c.l.b16 %v32
  %v123 = vunpack.c.h.b16 %v32
  %v124 = vunpack.c.l.b16 %v33
  %v125 = vunpack.c.h.b16 %v33
  %v126 = vunpack.c.l.b16 %v34
  %v127 = vunpack.c.h.b16 %v34
  %v128 = vunpack.c.l.b16 %v35
  %v129 = vunpack.c.h.b16 %v35
  %v130 = vunpack.c.l.b16 %v36
  %v131 = vunpack.c.h.b16 %v36
  %v132 = vunpack.c.l.b16 %v37
  %v133 = vunpack.c.h.b16 %v37
  %v134 = vunpack.c.l.b16 %v38
  %v135 = vunpack.c.h.b16 %v38
  %v136 = vunpack.c.l.b16 %v39
  %v137 = vunpack.c.h.b16 %v39
  %v138 = vunpack.c.l.b16 %v40
  %v139 = vunpack.c.h.b16 %v40
  %v140 = vunpack.c.l.b16 %v41
  %v141 = vunpack.c.h.b16 %v41
  %v142 = vunpack.c.l.b16 %v42
  %v143 = vunpack.c.h.b16 %v42
  %v144 = vunpack.c.l.b16 %v43
  %v145 = vunpack.c.h.b16 %v43
  %v146 = vunpack.c.l.b16 %v44
  %v147 = vunpack.c.h.b16 %v44
  %v148 = vunpack.c.l.b16 %v45
  %v149 = vunpack.c.h.b16 %v45
  %v150 = vunpack.c.l.b16 %v46
  %v151 = vunpack.c.h.b16 %v46
  %v152 = vunpack.c.l.b16 %v47
  %v153 = vunpack.c.h.b16 %v47
  %v154 = vpack.c.b16 %v98, %v90
  %v155 = vpack.c.b16 %v99, %v91
  %v156 = vpack.c.b16 %v100, %v92
  %v157 = vpack.c.b16 %v101, %v93
  %v158 = vpack.c.b16 %v102, %v94
  %v159 = vpack.c.b16 %v103, %v95
  %v160 = vpack.c.b16 %v104, %v96
  %v161 = vpack.c.b16 %v105, %v97
  %v162 = vpack.c.b16 %v114, %v106
  %v163 = vpack.c.b16 %v115, %v107
  %v164 = vpack.c.b16 %v116, %v108
  %v165 = vpack.c.b16 %v117, %v109
  %v166 = vpack.c.b16 %v118, %v110
  %v167 = vpack.c.b16 %v119, %v111
  %v168 = vpack.c.b16 %v120, %v112
  %v169 = vpack.c.b16 %v121, %v113
  %v170 = vpack.c.b16 %v130, %v122
  %v171 = vpack.c.b16 %v131, %v123
  %v172 = vpack.c.b16 %v132, %v124
  %v173 = vpack.c.b16 %v133, %v125
  %v174 = vpack.c.b16 %v134, %v126
  %v175 = vpack.c.b16 %v135, %v127
  %v176 = vpack.c.b16 %v136, %v128
  %v177 = vpack.c.b16 %v137, %v129
  %v178 = vpack.c.b16 %v146, %v138
  %v179 = vpack.c.b16 %v147, %v139
  %v180 = vpack.c.b16 %v148, %v140
  %v181 = vpack.c.b16 %v149, %v141
  %v182 = vpack.c.b16 %v150, %v142
  %v183 = vpack.c.b16 %v151, %v143
  %v184 = vpack.c.b16 %v152, %v144
  %v185 = vpack.c.b16 %v153, %v145
  %vm218 = vcmask 523264
  %v220 = vsel %vm218, %v56, 0
  %v223 = vsel %vm218, %v57, 0
  %225 = vmatpush.bf16.msra.mxu0 0
  %226 = vmatpush.bf16.msra.mxu0 0
  %227 = vmatpush.bf16.msra.mxu0 0
  %228 = vmatpush.bf16.msra.mxu0 0
  %229 = vmatpush.bf16.msra.mxu0 %v178
  %230 = vmatpush.bf16.msra.mxu0 %v170
  %231 = vmatpush.bf16.msra.mxu0 %v162
  %232 = vmatpush.bf16.msra.mxu0 %v154
  %233 = vmatmul.bf16.gmra.mxu0 %v220
  %v234 = vpop.f32.mrf.mxu0
  %v235 = vadd.f32 0.0, %v234
  %v236 = vpop.f32.mrf.mxu0
  %v237 = vadd.f32 0.0, %v236
  %238 = vmatmul.bf16.gmra.mxu0 %v223
  %v239 = vpop.f32.mrf.mxu0
  %v240 = vadd.f32 0.0, %v239
  %v241 = vpop.f32.mrf.mxu0
  %v242 = vadd.f32 0.0, %v241
  %243 = vdwg.mxu0
  %244 = vmatpush.bf16.msra.mxu0 0
  %245 = vmatpush.bf16.msra.mxu0 0
  %246 = vmatpush.bf16.msra.mxu0 0
  %247 = vmatpush.bf16.msra.mxu0 0
  %248 = vmatpush.bf16.msra.mxu0 %v179
  %249 = vmatpush.bf16.msra.mxu0 %v171
  %250 = vmatpush.bf16.msra.mxu0 %v163
  %251 = vmatpush.bf16.msra.mxu0 %v155
  %252 = vmatmul.bf16.gmra.mxu0 %v220
  %v253 = vpop.f32.mrf.mxu0
  %v254 = vadd.f32 0.0, %v253
  %v255 = vpop.f32.mrf.mxu0
  %v256 = vadd.f32 0.0, %v255
  %257 = vmatmul.bf16.gmra.mxu0 %v223
  %v258 = vpop.f32.mrf.mxu0
  %v259 = vadd.f32 0.0, %v258
  %v260 = vpop.f32.mrf.mxu0
  %v261 = vadd.f32 0.0, %v260
  %262 = vdwg.mxu0
  %263 = vmatpush.bf16.msra.mxu0 0
  %264 = vmatpush.bf16.msra.mxu0 0
  %265 = vmatpush.bf16.msra.mxu0 0
  %266 = vmatpush.bf16.msra.mxu0 0
  %267 = vmatpush.bf16.msra.mxu0 %v180
  %268 = vmatpush.bf16.msra.mxu0 %v172
  %269 = vmatpush.bf16.msra.mxu0 %v164
  %270 = vmatpush.bf16.msra.mxu0 %v156
  %271 = vmatmul.bf16.gmra.mxu0 %v220
  %v272 = vpop.f32.mrf.mxu0
  %v273 = vadd.f32 0.0, %v272
  %v274 = vpop.f32.mrf.mxu0
  %v275 = vadd.f32 0.0, %v274
  %276 = vmatmul.bf16.gmra.mxu0 %v223
  %v277 = vpop.f32.mrf.mxu0
  %v278 = vadd.f32 0.0, %v277
  %v279 = vpop.f32.mrf.mxu0
  %v280 = vadd.f32 0.0, %v279
  %281 = vdwg.mxu0
  %282 = vmatpush.bf16.msra.mxu0 0
  %283 = vmatpush.bf16.msra.mxu0 0
  %284 = vmatpush.bf16.msra.mxu0 0
  %285 = vmatpush.bf16.msra.mxu0 0
  %286 = vmatpush.bf16.msra.mxu0 %v181
  %287 = vmatpush.bf16.msra.mxu0 %v173
  %288 = vmatpush.bf16.msra.mxu0 %v165
  %289 = vmatpush.bf16.msra.mxu0 %v157
  %290 = vmatmul.bf16.gmra.mxu0 %v220
  %v291 = vpop.f32.mrf.mxu0
  %v292 = vadd.f32 0.0, %v291
  %v293 = vpop.f32.mrf.mxu0
  %v294 = vadd.f32 0.0, %v293
  %295 = vmatmul.bf16.gmra.mxu0 %v223
  %v296 = vpop.f32.mrf.mxu0
  %v297 = vadd.f32 0.0, %v296
  %v298 = vpop.f32.mrf.mxu0
  %v299 = vadd.f32 0.0, %v298
  %300 = vdwg.mxu0
  %301 = vmatpush.bf16.msra.mxu0 0
  %302 = vmatpush.bf16.msra.mxu0 0
  %303 = vmatpush.bf16.msra.mxu0 0
  %304 = vmatpush.bf16.msra.mxu0 0
  %305 = vmatpush.bf16.msra.mxu0 %v182
  %306 = vmatpush.bf16.msra.mxu0 %v174
  %307 = vmatpush.bf16.msra.mxu0 %v166
  %308 = vmatpush.bf16.msra.mxu0 %v158
  %309 = vmatmul.bf16.gmra.mxu0 %v220
  %v310 = vpop.f32.mrf.mxu0
  %v311 = vadd.f32 0.0, %v310
  %v312 = vpop.f32.mrf.mxu0
  %v313 = vadd.f32 0.0, %v312
  %314 = vmatmul.bf16.gmra.mxu0 %v223
  %v315 = vpop.f32.mrf.mxu0
  %v316 = vadd.f32 0.0, %v315
  %v317 = vpop.f32.mrf.mxu0
  %v318 = vadd.f32 0.0, %v317
  %319 = vdwg.mxu0
  %320 = vmatpush.bf16.msra.mxu0 0
  %321 = vmatpush.bf16.msra.mxu0 0
  %322 = vmatpush.bf16.msra.mxu0 0
  %323 = vmatpush.bf16.msra.mxu0 0
  %324 = vmatpush.bf16.msra.mxu0 %v183
  %325 = vmatpush.bf16.msra.mxu0 %v175
  %326 = vmatpush.bf16.msra.mxu0 %v167
  %327 = vmatpush.bf16.msra.mxu0 %v159
  %328 = vmatmul.bf16.gmra.mxu0 %v220
  %v329 = vpop.f32.mrf.mxu0
  %v330 = vadd.f32 0.0, %v329
  %v331 = vpop.f32.mrf.mxu0
  %v332 = vadd.f32 0.0, %v331
  %333 = vmatmul.bf16.gmra.mxu0 %v223
  %v334 = vpop.f32.mrf.mxu0
  %v335 = vadd.f32 0.0, %v334
  %v336 = vpop.f32.mrf.mxu0
  %v337 = vadd.f32 0.0, %v336
  %338 = vdwg.mxu0
  %339 = vmatpush.bf16.msra.mxu0 0
  %340 = vmatpush.bf16.msra.mxu0 0
  %341 = vmatpush.bf16.msra.mxu0 0
  %342 = vmatpush.bf16.msra.mxu0 0
  %343 = vmatpush.bf16.msra.mxu0 %v184
  %344 = vmatpush.bf16.msra.mxu0 %v176
  %345 = vmatpush.bf16.msra.mxu0 %v168
  %346 = vmatpush.bf16.msra.mxu0 %v160
  %347 = vmatmul.bf16.gmra.mxu0 %v220
  %v348 = vpop.f32.mrf.mxu0
  %v349 = vadd.f32 0.0, %v348
  %v350 = vpop.f32.mrf.mxu0
  %v351 = vadd.f32 0.0, %v350
  %352 = vmatmul.bf16.gmra.mxu0 %v223
  %v353 = vpop.f32.mrf.mxu0
  %v354 = vadd.f32 0.0, %v353
  %v355 = vpop.f32.mrf.mxu0
  %v356 = vadd.f32 0.0, %v355
  %357 = vdwg.mxu0
  %358 = vmatpush.bf16.msra.mxu0 0
  %359 = vmatpush.bf16.msra.mxu0 0
  %360 = vmatpush.bf16.msra.mxu0 0
  %361 = vmatpush.bf16.msra.mxu0 0
  %362 = vmatpush.bf16.msra.mxu0 %v185
  %363 = vmatpush.bf16.msra.mxu0 %v177
  %364 = vmatpush.bf16.msra.mxu0 %v169
  %365 = vmatpush.bf16.msra.mxu0 %v161
  %366 = vmatmul.bf16.gmra.mxu0 %v220
  %v367 = vpop.f32.mrf.mxu0
  %v368 = vadd.f32 0.0, %v367
  %v369 = vpop.f32.mrf.mxu0
  %v370 = vadd.f32 0.0, %v369
  %371 = vmatmul.bf16.gmra.mxu0 %v223
  %v372 = vpop.f32.mrf.mxu0
  %v373 = vadd.f32 0.0, %v372
  %v374 = vpop.f32.mrf.mxu0
  %v375 = vadd.f32 0.0, %v374
  %376 = vdwg.mxu0
  %377 = vst [vmem:[%s2] sm:$0xff] %v235
  %378 = vst [vmem:[%s2 + $0x8] sm:$0xff] %v254
  %379 = vst [vmem:[%s2 + $0x10] sm:$0xff] %v273
  %380 = vst [vmem:[%s2 + $0x18] sm:$0xff] %v292
  %381 = vst [vmem:[%s2 + $0x20] sm:$0xff] %v311
  %382 = vst [vmem:[%s2 + $0x28] sm:$0xff] %v330
  %383 = vst [vmem:[%s2 + $0x30] sm:$0xff] %v349
  %384 = vst [vmem:[%s2 + $0x38] sm:$0xff] %v368
  %385 = vst [vmem:[%s2 + $0x40] sm:$0xff] %v237
  %386 = vst [vmem:[%s2 + $0x48] sm:$0xff] %v256
  %387 = vst [vmem:[%s2 + $0x50] sm:$0xff] %v275
  %388 = vst [vmem:[%s2 + $0x58] sm:$0xff] %v294
  %389 = vst [vmem:[%s2 + $0x60] sm:$0xff] %v313
  %390 = vst [vmem:[%s2 + $0x68] sm:$0xff] %v332
  %391 = vst [vmem:[%s2 + $0x70] sm:$0xff] %v351
  %392 = vst [vmem:[%s2 + $0x78] sm:$0xff] %v370
  %393 = vst [vmem:[%s2 + $0x80] sm:$0xff] %v240
  %394 = vst [vmem:[%s2 + $0x88] sm:$0xff] %v259
  %395 = vst [vmem:[%s2 + $0x90] sm:$0xff] %v278
  %396 = vst [vmem:[%s2 + $0x98] sm:$0xff] %v297
  %397 = vst [vmem:[%s2 + $0xa0] sm:$0xff] %v316
  %398 = vst [vmem:[%s2 + $0xa8] sm:$0xff] %v335
  %399 = vst [vmem:[%s2 + $0xb0] sm:$0xff] %v354
  %400 = vst [vmem:[%s2 + $0xb8] sm:$0xff] %v373
  %401 = vst [vmem:[%s2 + $0xc0] sm:$0xff] %v242
  %402 = vst [vmem:[%s2 + $0xc8] sm:$0xff] %v261
  %403 = vst [vmem:[%s2 + $0xd0] sm:$0xff] %v280
  %404 = vst [vmem:[%s2 + $0xd8] sm:$0xff] %v299
  %405 = vst [vmem:[%s2 + $0xe0] sm:$0xff] %v318
  %406 = vst [vmem:[%s2 + $0xe8] sm:$0xff] %v337
  %407 = vst [vmem:[%s2 + $0xf0] sm:$0xff] %v356
  %408 = vst [vmem:[%s2 + $0xf8] sm:$0xff] %v375
  // Predicated region
  $region10: #{factor_vae1_forward.16} parent=0 // pred_check
    _
  $region11: #{factor_vae1_forward.16} parent=0 // pred_check_branch
    %410 = sbr.rel (0) target = $region13
  $region12: #{factor_vae1_forward.16} parent=0 // pred_region
    _
  $region13: #{factor_vae1_forward.16} parent=0 // pred_fallthru
    _
  // Predicated region
  $region14: #{factor_vae1_forward.16} parent=0 // pred_check
    _
  $region15: #{factor_vae1_forward.16} parent=0 // pred_check_branch
    %412 = sbr.rel (0) target = $region17
  $region16: #{factor_vae1_forward.16} parent=0 // pred_region
    _
  $region17: #{factor_vae1_forward.16} parent=0 // pred_fallthru
    _

// kernel: factor_vae1_forward.17
$region0: #{factor_vae1_forward.17}
  #allocation0 [shape = 'u32[]', space=smem, size = 0x4, offset = 0x4, fixed_abs, tag = 'smem constant byte address 0x4 - core index']
  #allocation1 [shape = 'u32[72,128]{1,0:T(1,128)}', space=vmem, size = 0x9000, scoped, tag = 'internal scratch']
  %s0 = inlined_call_operand.vmem [shape: bf16[128,64], index: 0, kind: input, shape index: {}]
  %s1 = inlined_call_operand.vmem [shape: bf16[64,512], index: 1, kind: input, shape index: {}]
  %s2 = inlined_call_operand.vmem [shape: f32[128,512], index: 2, kind: output, shape index: {}]
  %s3 = sld [smem:[#allocation0]]
  $region18: #{factor_vae1_forward.17} parent=0
    _
  %s5 = ssub.s32 1, %s3
  %s6 = scalar_select 0, %s5, %s3
  // Predicated region
  $region2: #{factor_vae1_forward.17} parent=0 // pred_check
    _
  $region3: #{factor_vae1_forward.17} parent=0 // pred_check_branch
    %8 = sbr.rel (0) target = $region5
  $region4: #{factor_vae1_forward.17} parent=0 // pred_region
    _
  $region5: #{factor_vae1_forward.17} parent=0 // pred_fallthru
    _
  // Predicated region
  $region6: #{factor_vae1_forward.17} parent=0 // pred_check
    _
  $region7: #{factor_vae1_forward.17} parent=0 // pred_check_branch
    %10 = sbr.rel (0) target = $region9
  $region8: #{factor_vae1_forward.17} parent=0 // pred_region
    _
  $region9: #{factor_vae1_forward.17} parent=0 // pred_fallthru
    _
  %v12 = vld [vmem:[%s0] sm:$0xf]
  %v13 = vld [vmem:[%s0 + $0x4] sm:$0xf]
  %v14 = vld [vmem:[%s0 + $0x8] sm:$0xf]
  %v15 = vld [vmem:[%s0 + $0xc] sm:$0xf]
  %v16 = vld [vmem:[%s0 + $0x10] sm:$0xf]
  %v17 = vld [vmem:[%s0 + $0x14] sm:$0xf]
  %v18 = vld [vmem:[%s0 + $0x18] sm:$0xf]
  %v19 = vld [vmem:[%s0 + $0x1c] sm:$0xf]
  %v20 = vld [vmem:[%s0 + $0x20] sm:$0xf]
  %v21 = vld [vmem:[%s0 + $0x24] sm:$0xf]
  %v22 = vld [vmem:[%s0 + $0x28] sm:$0xf]
  %v23 = vld [vmem:[%s0 + $0x2c] sm:$0xf]
  %v24 = vld [vmem:[%s0 + $0x30] sm:$0xf]
  %v25 = vld [vmem:[%s0 + $0x34] sm:$0xf]
  %v26 = vld [vmem:[%s0 + $0x38] sm:$0xf]
  %v27 = vld [vmem:[%s0 + $0x3c] sm:$0xf]
  %v28 = vld [vmem:[%s1] sm:$0xff]
  %v29 = vld [vmem:[%s1 + $0x8] sm:$0xff]
  %v30 = vld [vmem:[%s1 + $0x10] sm:$0xff]
  %v31 = vld [vmem:[%s1 + $0x18] sm:$0xff]
  %v32 = vld [vmem:[%s1 + $0x20] sm:$0xff]
  %v33 = vld [vmem:[%s1 + $0x28] sm:$0xff]
  %v34 = vld [vmem:[%s1 + $0x30] sm:$0xff]
  %v35 = vld [vmem:[%s1 + $0x38] sm:$0xff]
  %v36 = vld [vmem:[%s1 + $0x40] sm:$0xff]
  %v37 = vld [vmem:[%s1 + $0x48] sm:$0xff]
  %v38 = vld [vmem:[%s1 + $0x50] sm:$0xff]
  %v39 = vld [vmem:[%s1 + $0x58] sm:$0xff]
  %v40 = vld [vmem:[%s1 + $0x60] sm:$0xff]
  %v41 = vld [vmem:[%s1 + $0x68] sm:$0xff]
  %v42 = vld [vmem:[%s1 + $0x70] sm:$0xff]
  %v43 = vld [vmem:[%s1 + $0x78] sm:$0xff]
  %v60 = vunpack.c.l.b16 %v12
  %v61 = vunpack.c.l.b16 %v13
  %v62 = vunpack.c.l.b16 %v14
  %v63 = vunpack.c.l.b16 %v15
  %v64 = vunpack.c.l.b16 %v16
  %v65 = vunpack.c.l.b16 %v17
  %v66 = vunpack.c.l.b16 %v18
  %v67 = vunpack.c.l.b16 %v19
  %v68 = vunpack.c.l.b16 %v20
  %v69 = vunpack.c.l.b16 %v21
  %v70 = vunpack.c.l.b16 %v22
  %v71 = vunpack.c.l.b16 %v23
  %v72 = vunpack.c.l.b16 %v24
  %v73 = vunpack.c.l.b16 %v25
  %v74 = vunpack.c.l.b16 %v26
  %v75 = vunpack.c.l.b16 %v27
  %v76 = vpack.c.b16 %v61, %v60
  %v77 = vpack.c.b16 %v63, %v62
  %v78 = vpack.c.b16 %v65, %v64
  %v79 = vpack.c.b16 %v67, %v66
  %v80 = vpack.c.b16 %v69, %v68
  %v81 = vpack.c.b16 %v71, %v70
  %v82 = vpack.c.b16 %v73, %v72
  %v83 = vpack.c.b16 %v75, %v74
  %v100 = vunpack.c.l.b16 %v28
  %v101 = vunpack.c.h.b16 %v28
  %v102 = vunpack.c.l.b16 %v29
  %v103 = vunpack.c.h.b16 %v29
  %v104 = vunpack.c.l.b16 %v30
  %v105 = vunpack.c.h.b16 %v30
  %v106 = vunpack.c.l.b16 %v31
  %v107 = vunpack.c.h.b16 %v31
  %v108 = vunpack.c.l.b16 %v32
  %v109 = vunpack.c.h.b16 %v32
  %v110 = vunpack.c.l.b16 %v33
  %v111 = vunpack.c.h.b16 %v33
  %v112 = vunpack.c.l.b16 %v34
  %v113 = vunpack.c.h.b16 %v34
  %v114 = vunpack.c.l.b16 %v35
  %v115 = vunpack.c.h.b16 %v35
  %v116 = vunpack.c.l.b16 %v36
  %v117 = vunpack.c.h.b16 %v36
  %v118 = vunpack.c.l.b16 %v37
  %v119 = vunpack.c.h.b16 %v37
  %v120 = vunpack.c.l.b16 %v38
  %v121 = vunpack.c.h.b16 %v38
  %v122 = vunpack.c.l.b16 %v39
  %v123 = vunpack.c.h.b16 %v39
  %v124 = vunpack.c.l.b16 %v40
  %v125 = vunpack.c.h.b16 %v40
  %v126 = vunpack.c.l.b16 %v41
  %v127 = vunpack.c.h.b16 %v41
  %v128 = vunpack.c.l.b16 %v42
  %v129 = vunpack.c.h.b16 %v42
  %v130 = vunpack.c.l.b16 %v43
  %v131 = vunpack.c.h.b16 %v43
  %v132 = vpack.c.b16 %v104, %v100
  %v133 = vpack.c.b16 %v105, %v101
  %v134 = vpack.c.b16 %v106, %v102
  %v135 = vpack.c.b16 %v107, %v103
  %v136 = vpack.c.b16 %v112, %v108
  %v137 = vpack.c.b16 %v113, %v109
  %v138 = vpack.c.b16 %v114, %v110
  %v139 = vpack.c.b16 %v115, %v111
  %v140 = vpack.c.b16 %v120, %v116
  %v141 = vpack.c.b16 %v121, %v117
  %v142 = vpack.c.b16 %v122, %v118
  %v143 = vpack.c.b16 %v123, %v119
  %v144 = vpack.c.b16 %v128, %v124
  %v145 = vpack.c.b16 %v129, %v125
  %v146 = vpack.c.b16 %v130, %v126
  %v147 = vpack.c.b16 %v131, %v127
  %vm164 = vcmask 523264
  %v166 = vsel %vm164, %v76, 0
  %v169 = vsel %vm164, %v77, 0
  %v172 = vsel %vm164, %v78, 0
  %v175 = vsel %vm164, %v79, 0
  %v178 = vsel %vm164, %v80, 0
  %v181 = vsel %vm164, %v81, 0
  %v184 = vsel %vm164, %v82, 0
  %v187 = vsel %vm164, %v83, 0
  %189 = vmatpush.bf16.msra.mxu0 0
  %190 = vmatpush.bf16.msra.mxu0 0
  %191 = vmatpush.bf16.msra.mxu0 0
  %192 = vmatpush.bf16.msra.mxu0 0
  %193 = vmatpush.bf16.msra.mxu0 %v144
  %194 = vmatpush.bf16.msra.mxu0 %v140
  %195 = vmatpush.bf16.msra.mxu0 %v136
  %196 = vmatpush.bf16.msra.mxu0 %v132
  %197 = vmatmul.bf16.gmra.mxu0 %v166
  %v198 = vpop.f32.mrf.mxu0
  %v199 = vadd.f32 0.0, %v198
  %v200 = vpop.f32.mrf.mxu0
  %v201 = vadd.f32 0.0, %v200
  %202 = vmatmul.bf16.gmra.mxu0 %v169
  %v203 = vpop.f32.mrf.mxu0
  %v204 = vadd.f32 0.0, %v203
  %v205 = vpop.f32.mrf.mxu0
  %v206 = vadd.f32 0.0, %v205
  %207 = vmatmul.bf16.gmra.mxu0 %v172
  %v208 = vpop.f32.mrf.mxu0
  %v209 = vadd.f32 0.0, %v208
  %v210 = vpop.f32.mrf.mxu0
  %v211 = vadd.f32 0.0, %v210
  %212 = vmatmul.bf16.gmra.mxu0 %v175
  %v213 = vpop.f32.mrf.mxu0
  %v214 = vadd.f32 0.0, %v213
  %v215 = vpop.f32.mrf.mxu0
  %v216 = vadd.f32 0.0, %v215
  %217 = vmatmul.bf16.gmra.mxu0 %v178
  %v218 = vpop.f32.mrf.mxu0
  %v219 = vadd.f32 0.0, %v218
  %v220 = vpop.f32.mrf.mxu0
  %v221 = vadd.f32 0.0, %v220
  %222 = vmatmul.bf16.gmra.mxu0 %v181
  %v223 = vpop.f32.mrf.mxu0
  %v224 = vadd.f32 0.0, %v223
  %v225 = vpop.f32.mrf.mxu0
  %v226 = vadd.f32 0.0, %v225
  %227 = vmatmul.bf16.gmra.mxu0 %v184
  %v228 = vpop.f32.mrf.mxu0
  %v229 = vadd.f32 0.0, %v228
  %v230 = vpop.f32.mrf.mxu0
  %v231 = vadd.f32 0.0, %v230
  %232 = vmatmul.bf16.gmra.mxu0 %v187
  %v233 = vpop.f32.mrf.mxu0
  %v234 = vadd.f32 0.0, %v233
  %v235 = vpop.f32.mrf.mxu0
  %v236 = vadd.f32 0.0, %v235
  %237 = vdwg.mxu0
  %238 = vmatpush.bf16.msra.mxu0 0
  %239 = vmatpush.bf16.msra.mxu0 0
  %240 = vmatpush.bf16.msra.mxu0 0
  %241 = vmatpush.bf16.msra.mxu0 0
  %242 = vmatpush.bf16.msra.mxu0 %v145
  %243 = vmatpush.bf16.msra.mxu0 %v141
  %244 = vmatpush.bf16.msra.mxu0 %v137
  %245 = vmatpush.bf16.msra.mxu0 %v133
  %246 = vmatmul.bf16.gmra.mxu0 %v166
  %v247 = vpop.f32.mrf.mxu0
  %v248 = vadd.f32 0.0, %v247
  %v249 = vpop.f32.mrf.mxu0
  %v250 = vadd.f32 0.0, %v249
  %251 = vmatmul.bf16.gmra.mxu0 %v169
  %v252 = vpop.f32.mrf.mxu0
  %v253 = vadd.f32 0.0, %v252
  %v254 = vpop.f32.mrf.mxu0
  %v255 = vadd.f32 0.0, %v254
  %256 = vmatmul.bf16.gmra.mxu0 %v172
  %v257 = vpop.f32.mrf.mxu0
  %v258 = vadd.f32 0.0, %v257
  %v259 = vpop.f32.mrf.mxu0
  %v260 = vadd.f32 0.0, %v259
  %261 = vmatmul.bf16.gmra.mxu0 %v175
  %v262 = vpop.f32.mrf.mxu0
  %v263 = vadd.f32 0.0, %v262
  %v264 = vpop.f32.mrf.mxu0
  %v265 = vadd.f32 0.0, %v264
  %266 = vmatmul.bf16.gmra.mxu0 %v178
  %v267 = vpop.f32.mrf.mxu0
  %v268 = vadd.f32 0.0, %v267
  %v269 = vpop.f32.mrf.mxu0
  %v270 = vadd.f32 0.0, %v269
  %271 = vmatmul.bf16.gmra.mxu0 %v181
  %v272 = vpop.f32.mrf.mxu0
  %v273 = vadd.f32 0.0, %v272
  %v274 = vpop.f32.mrf.mxu0
  %v275 = vadd.f32 0.0, %v274
  %276 = vmatmul.bf16.gmra.mxu0 %v184
  %v277 = vpop.f32.mrf.mxu0
  %v278 = vadd.f32 0.0, %v277
  %v279 = vpop.f32.mrf.mxu0
  %v280 = vadd.f32 0.0, %v279
  %281 = vmatmul.bf16.gmra.mxu0 %v187
  %v282 = vpop.f32.mrf.mxu0
  %v283 = vadd.f32 0.0, %v282
  %v284 = vpop.f32.mrf.mxu0
  %v285 = vadd.f32 0.0, %v284
  %286 = vdwg.mxu0
  %287 = vmatpush.bf16.msra.mxu0 0
  %288 = vmatpush.bf16.msra.mxu0 0
  %289 = vmatpush.bf16.msra.mxu0 0
  %290 = vmatpush.bf16.msra.mxu0 0
  %291 = vmatpush.bf16.msra.mxu0 %v146
  %292 = vmatpush.bf16.msra.mxu0 %v142
  %293 = vmatpush.bf16.msra.mxu0 %v138
  %294 = vmatpush.bf16.msra.mxu0 %v134
  %295 = vmatmul.bf16.gmra.mxu0 %v166
  %v296 = vpop.f32.mrf.mxu0
  %v297 = vadd.f32 0.0, %v296
  %v298 = vpop.f32.mrf.mxu0
  %v299 = vadd.f32 0.0, %v298
  %300 = vmatmul.bf16.gmra.mxu0 %v169
  %v301 = vpop.f32.mrf.mxu0
  %v302 = vadd.f32 0.0, %v301
  %v303 = vpop.f32.mrf.mxu0
  %v304 = vadd.f32 0.0, %v303
  %305 = vmatmul.bf16.gmra.mxu0 %v172
  %v306 = vpop.f32.mrf.mxu0
  %v307 = vadd.f32 0.0, %v306
  %v308 = vpop.f32.mrf.mxu0
  %v309 = vadd.f32 0.0, %v308
  %310 = vmatmul.bf16.gmra.mxu0 %v175
  %v311 = vpop.f32.mrf.mxu0
  %v312 = vadd.f32 0.0, %v311
  %v313 = vpop.f32.mrf.mxu0
  %v314 = vadd.f32 0.0, %v313
  %315 = vmatmul.bf16.gmra.mxu0 %v178
  %v316 = vpop.f32.mrf.mxu0
  %v317 = vadd.f32 0.0, %v316
  %v318 = vpop.f32.mrf.mxu0
  %v319 = vadd.f32 0.0, %v318
  %320 = vmatmul.bf16.gmra.mxu0 %v181
  %v321 = vpop.f32.mrf.mxu0
  %v322 = vadd.f32 0.0, %v321
  %v323 = vpop.f32.mrf.mxu0
  %v324 = vadd.f32 0.0, %v323
  %325 = vmatmul.bf16.gmra.mxu0 %v184
  %v326 = vpop.f32.mrf.mxu0
  %v327 = vadd.f32 0.0, %v326
  %v328 = vpop.f32.mrf.mxu0
  %v329 = vadd.f32 0.0, %v328
  %330 = vmatmul.bf16.gmra.mxu0 %v187
  %v331 = vpop.f32.mrf.mxu0
  %v332 = vadd.f32 0.0, %v331
  %v333 = vpop.f32.mrf.mxu0
  %v334 = vadd.f32 0.0, %v333
  %335 = vdwg.mxu0
  %336 = vmatpush.bf16.msra.mxu0 0
  %337 = vmatpush.bf16.msra.mxu0 0
  %338 = vmatpush.bf16.msra.mxu0 0
  %339 = vmatpush.bf16.msra.mxu0 0
  %340 = vmatpush.bf16.msra.mxu0 %v147
  %341 = vmatpush.bf16.msra.mxu0 %v143
  %342 = vmatpush.bf16.msra.mxu0 %v139
  %343 = vmatpush.bf16.msra.mxu0 %v135
  %344 = vmatmul.bf16.gmra.mxu0 %v166
  %v345 = vpop.f32.mrf.mxu0
  %v346 = vadd.f32 0.0, %v345
  %v347 = vpop.f32.mrf.mxu0
  %v348 = vadd.f32 0.0, %v347
  %349 = vmatmul.bf16.gmra.mxu0 %v169
  %v350 = vpop.f32.mrf.mxu0
  %v351 = vadd.f32 0.0, %v350
  %v352 = vpop.f32.mrf.mxu0
  %v353 = vadd.f32 0.0, %v352
  %354 = vmatmul.bf16.gmra.mxu0 %v172
  %v355 = vpop.f32.mrf.mxu0
  %v356 = vadd.f32 0.0, %v355
  %v357 = vpop.f32.mrf.mxu0
  %v358 = vadd.f32 0.0, %v357
  %359 = vmatmul.bf16.gmra.mxu0 %v175
  %v360 = vpop.f32.mrf.mxu0
  %v361 = vadd.f32 0.0, %v360
  %v362 = vpop.f32.mrf.mxu0
  %v363 = vadd.f32 0.0, %v362
  %364 = vmatmul.bf16.gmra.mxu0 %v178
  %v365 = vpop.f32.mrf.mxu0
  %v366 = vadd.f32 0.0, %v365
  %v367 = vpop.f32.mrf.mxu0
  %v368 = vadd.f32 0.0, %v367
  %369 = vmatmul.bf16.gmra.mxu0 %v181
  %v370 = vpop.f32.mrf.mxu0
  %v371 = vadd.f32 0.0, %v370
  %v372 = vpop.f32.mrf.mxu0
  %v373 = vadd.f32 0.0, %v372
  %374 = vmatmul.bf16.gmra.mxu0 %v184
  %v375 = vpop.f32.mrf.mxu0
  %v376 = vadd.f32 0.0, %v375
  %v377 = vpop.f32.mrf.mxu0
  %v378 = vadd.f32 0.0, %v377
  %379 = vmatmul.bf16.gmra.mxu0 %v187
  %v380 = vpop.f32.mrf.mxu0
  %v381 = vadd.f32 0.0, %v380
  %v382 = vpop.f32.mrf.mxu0
  %v383 = vadd.f32 0.0, %v382
  %384 = vdwg.mxu0
  %385 = vst [vmem:[%s2] sm:$0xff] %v199
  %386 = vst [vmem:[%s2 + $0x8] sm:$0xff] %v248
  %387 = vst [vmem:[%s2 + $0x10] sm:$0xff] %v297
  %388 = vst [vmem:[%s2 + $0x18] sm:$0xff] %v346
  %389 = vst [vmem:[%s2 + $0x20] sm:$0xff] %v201
  %390 = vst [vmem:[%s2 + $0x28] sm:$0xff] %v250
  %391 = vst [vmem:[%s2 + $0x30] sm:$0xff] %v299
  %392 = vst [vmem:[%s2 + $0x38] sm:$0xff] %v348
  %393 = vst [vmem:[%s2 + $0x40] sm:$0xff] %v204
  %394 = vst [vmem:[%s2 + $0x48] sm:$0xff] %v253
  %395 = vst [vmem:[%s2 + $0x50] sm:$0xff] %v302
  %396 = vst [vmem:[%s2 + $0x58] sm:$0xff] %v351
  %397 = vst [vmem:[%s2 + $0x60] sm:$0xff] %v206
  %398 = vst [vmem:[%s2 + $0x68] sm:$0xff] %v255
  %399 = vst [vmem:[%s2 + $0x70] sm:$0xff] %v304
  %400 = vst [vmem:[%s2 + $0x78] sm:$0xff] %v353
  %401 = vst [vmem:[%s2 + $0x80] sm:$0xff] %v209
  %402 = vst [vmem:[%s2 + $0x88] sm:$0xff] %v258
  %403 = vst [vmem:[%s2 + $0x90] sm:$0xff] %v307
  %404 = vst [vmem:[%s2 + $0x98] sm:$0xff] %v356
  %405 = vst [vmem:[%s2 + $0xa0] sm:$0xff] %v211
  %406 = vst [vmem:[%s2 + $0xa8] sm:$0xff] %v260
  %407 = vst [vmem:[%s2 + $0xb0] sm:$0xff] %v309
  %408 = vst [vmem:[%s2 + $0xb8] sm:$0xff] %v358
  %409 = vst [vmem:[%s2 + $0xc0] sm:$0xff] %v214
  %410 = vst [vmem:[%s2 + $0xc8] sm:$0xff] %v263
  %411 = vst [vmem:[%s2 + $0xd0] sm:$0xff] %v312
  %412 = vst [vmem:[%s2 + $0xd8] sm:$0xff] %v361
  %413 = vst [vmem:[%s2 + $0xe0] sm:$0xff] %v216
  %414 = vst [vmem:[%s2 + $0xe8] sm:$0xff] %v265
  %415 = vst [vmem:[%s2 + $0xf0] sm:$0xff] %v314
  %416 = vst [vmem:[%s2 + $0xf8] sm:$0xff] %v363
  %417 = vst [vmem:[%s2 + $0x100] sm:$0xff] %v219
  %418 = vst [vmem:[%s2 + $0x108] sm:$0xff] %v268
  %419 = vst [vmem:[%s2 + $0x110] sm:$0xff] %v317
  %420 = vst [vmem:[%s2 + $0x118] sm:$0xff] %v366
  %421 = vst [vmem:[%s2 + $0x120] sm:$0xff] %v221
  %422 = vst [vmem:[%s2 + $0x128] sm:$0xff] %v270
  %423 = vst [vmem:[%s2 + $0x130] sm:$0xff] %v319
  %424 = vst [vmem:[%s2 + $0x138] sm:$0xff] %v368
  %425 = vst [vmem:[%s2 + $0x140] sm:$0xff] %v224
  %426 = vst [vmem:[%s2 + $0x148] sm:$0xff] %v273
  %427 = vst [vmem:[%s2 + $0x150] sm:$0xff] %v322
  %428 = vst [vmem:[%s2 + $0x158] sm:$0xff] %v371
  %429 = vst [vmem:[%s2 + $0x160] sm:$0xff] %v226
  %430 = vst [vmem:[%s2 + $0x168] sm:$0xff] %v275
  %431 = vst [vmem:[%s2 + $0x170] sm:$0xff] %v324
  %432 = vst [vmem:[%s2 + $0x178] sm:$0xff] %v373
  %433 = vst [vmem:[%s2 + $0x180] sm:$0xff] %v229
  %434 = vst [vmem:[%s2 + $0x188] sm:$0xff] %v278
  %435 = vst [vmem:[%s2 + $0x190] sm:$0xff] %v327
  %436 = vst [vmem:[%s2 + $0x198] sm:$0xff] %v376
  %437 = vst [vmem:[%s2 + $0x1a0] sm:$0xff] %v231
  %438 = vst [vmem:[%s2 + $0x1a8] sm:$0xff] %v280
  %439 = vst [vmem:[%s2 + $0x1b0] sm:$0xff] %v329
  %440 = vst [vmem:[%s2 + $0x1b8] sm:$0xff] %v378
  %441 = vst [vmem:[%s2 + $0x1c0] sm:$0xff] %v234
  %442 = vst [vmem:[%s2 + $0x1c8] sm:$0xff] %v283
  %443 = vst [vmem:[%s2 + $0x1d0] sm:$0xff] %v332
  %444 = vst [vmem:[%s2 + $0x1d8] sm:$0xff] %v381
  %445 = vst [vmem:[%s2 + $0x1e0] sm:$0xff] %v236
  %446 = vst [vmem:[%s2 + $0x1e8] sm:$0xff] %v285
  %447 = vst [vmem:[%s2 + $0x1f0] sm:$0xff] %v334
  %448 = vst [vmem:[%s2 + $0x1f8] sm:$0xff] %v383
  // Predicated region
  $region10: #{factor_vae1_forward.17} parent=0 // pred_check
    _
  $region11: #{factor_vae1_forward.17} parent=0 // pred_check_branch
    %450 = sbr.rel (0) target = $region13
  $region12: #{factor_vae1_forward.17} parent=0 // pred_region
    _
  $region13: #{factor_vae1_forward.17} parent=0 // pred_fallthru
    _
  // Predicated region
  $region14: #{factor_vae1_forward.17} parent=0 // pred_check
    _
  $region15: #{factor_vae1_forward.17} parent=0 // pred_check_branch
    %452 = sbr.rel (0) target = $region17
  $region16: #{factor_vae1_forward.17} parent=0 // pred_region
    _
  $region17: #{factor_vae1_forward.17} parent=0 // pred_fallthru
    _

// kernel: factor_vae1_forward.18
$region0: #{factor_vae1_forward.18}
  #allocation0 [shape = 'u32[]', space=smem, size = 0x4, offset = 0x4, fixed_abs, tag = 'smem constant byte address 0x4 - core index']
  #allocation1 [shape = 'u32[72,128]{1,0:T(1,128)}', space=vmem, size = 0x9000, scoped, tag = 'internal scratch']
  %s0 = inlined_call_operand.vmem [shape: bf16[512,32], index: 0, kind: input, shape index: {}]
  %s1 = inlined_call_operand.vmem [shape: bf16[32,512], index: 1, kind: input, shape index: {}]
  %s2 = inlined_call_operand.vmem [shape: f32[512,512], index: 2, kind: output, shape index: {}]
  %s3 = sld [smem:[#allocation0]]
  $region41: #{factor_vae1_forward.18} parent=0
    _
  %s5 = ssub.s32 1, %s3
  %s6 = scalar_select 0, %s5, %s3
  loop: start=0, step=1, limit=4
  $region2: #{factor_vae1_forward.18} parent=0 // loop_pre_header
    _
  $region3: #{factor_vae1_forward.18} parent=0 // loop_header
    %s8 = sphi 0, %s12
    %p9 = scmp.ge.s32.totalorder %s8, 4
    %s18 = sphi 0, %s20
    %s21 = sphi 0, %s18
    %s22 = sphi 0, %s21
    %s38 = sphi 0, %s22
    %s42 = sphi 0, %s42
    %s44 = sphi 0, %s42
    %s45 = sphi 0, %s44
    %s59 = sphi 0, %s45
    %s65 = sphi 0, %s67
    %s68 = sphi 0, %s65
    %s69 = sphi 0, %s68
    %s85 = sphi 0, %s69
  $region4: #{factor_vae1_forward.18} parent=0 // loop_header_branch
    %11 = sbr.rel (%p9) target = $region8
  $region5: #{factor_vae1_forward.18} parent=0 // loop_body
    %s13 = ssub.s32 %s8, 1
    %s14 = ssub.s32 %s8, 2
    %s15 = sadd.s32 %s8, 1
    %s16 = ssub.s32 %s8, %s15
    %p17 = scmp.eq.s32.totalorder %s16, 0
    %s19 = sadd.s32 %s18, 1
    %s20 = scalar_select %p17, %s18, %s19
    %p23 = pneg %p17
    %p24 = scmp.eq.s32.totalorder %s8, 1
    %p25 = por %p23, %p24
    %p26 = scmp.ne.s32.totalorder %s18, %s21
    %p27 = scmp.eq.s32.totalorder %s8, 0
    %p28 = por %p26, %p27
    %p29 = scmp.ne.s32.totalorder %s18, %s21
    %p30 = scmp.eq.s32.totalorder %s13, 1
    %p31 = por %p29, %p30
    %p32 = scmp.ne.s32.totalorder %s21, %s22
    %p33 = scmp.eq.s32.totalorder %s13, 0
    %p34 = por %p32, %p33
    %p35 = scmp.ne.s32.totalorder %s21, %s22
    %p36 = scmp.eq.s32.totalorder %s14, 1
    %p37 = por %p35, %p36
    %p39 = scmp.ne.s32.totalorder %s22, %s38
    %p40 = scmp.eq.s32.totalorder %s14, 0
    %p41 = por %p39, %p40
    %s43 = sadd.s32 %s42, 1
    %p46 = scmp.eq.s32.totalorder %s8, 1
    %p47 = scmp.ne.s32.totalorder %s42, %s44
    %p48 = scmp.eq.s32.totalorder %s8, 0
    %p49 = por %p47, %p48
    %p50 = scmp.ne.s32.totalorder %s42, %s44
    %p51 = scmp.eq.s32.totalorder %s13, 1
    %p52 = por %p50, %p51
    %p53 = scmp.ne.s32.totalorder %s44, %s45
    %p54 = scmp.eq.s32.totalorder %s13, 0
    %p55 = por %p53, %p54
    %p56 = scmp.ne.s32.totalorder %s44, %s45
    %p57 = scmp.eq.s32.totalorder %s14, 1
    %p58 = por %p56, %p57
    %p60 = scmp.ne.s32.totalorder %s45, %s59
    %p61 = scmp.eq.s32.totalorder %s14, 0
    %p62 = por %p60, %p61
    %s63 = ssub.s32 %s8, %s15
    %p64 = scmp.eq.s32.totalorder %s63, 0
    %s66 = sadd.s32 %s65, 1
    %s67 = scalar_select %p64, %s65, %s66
    %p70 = pneg %p64
    %p71 = scmp.eq.s32.totalorder %s8, 1
    %p72 = por %p70, %p71
    %p73 = scmp.ne.s32.totalorder %s65, %s68
    %p74 = scmp.eq.s32.totalorder %s8, 0
    %p75 = por %p73, %p74
    %p76 = scmp.ne.s32.totalorder %s65, %s68
    %p77 = scmp.eq.s32.totalorder %s13, 1
    %p78 = por %p76, %p77
    %p79 = scmp.ne.s32.totalorder %s68, %s69
    %p80 = scmp.eq.s32.totalorder %s13, 0
    %p81 = por %p79, %p80
    %p82 = scmp.ne.s32.totalorder %s68, %s69
    %p83 = scmp.eq.s32.totalorder %s14, 1
    %p84 = por %p82, %p83
    %p86 = scmp.ne.s32.totalorder %s69, %s85
    %p87 = scmp.eq.s32.totalorder %s14, 0
    %p88 = por %p86, %p87
    %p89 = scmp.le.s32.totalorder 1, %s8
    %p90 = scmp.lt.s32.totalorder %s8, 3
    %p91 = pnand %p89, %p90
    %p92 = pneg %p91
    // Predicated region
    $region9: #{factor_vae1_forward.18} parent=5 // pred_check
      _
    $region10: #{factor_vae1_forward.18} parent=5 // pred_check_branch
      %94 = sbr.rel (%p91) target = $region12
    $region11: #{factor_vae1_forward.18} parent=5 // pred_region
      %s95 = ssub.s32 %s8, 1
      // Predicated region
      $region13: #{factor_vae1_forward.18} parent=11 // pred_check
        %p96 = pneg %p55
      $region14: #{factor_vae1_forward.18} parent=11 // pred_check_branch
        %98 = sbr.rel (%p96) target = $region16
      $region15: #{factor_vae1_forward.18} parent=11 // pred_region
        _
      $region16: #{factor_vae1_forward.18} parent=11 // pred_fallthru
        _
    $region12: #{factor_vae1_forward.18} parent=5 // pred_fallthru
      _
    %p99 = scmp.lt.s32.totalorder %s8, 2
    // Predicated region
    $region17: #{factor_vae1_forward.18} parent=5 // pred_check
      %p100 = pneg %p99
    $region18: #{factor_vae1_forward.18} parent=5 // pred_check_branch
      %102 = sbr.rel (%p100) target = $region20
    $region19: #{factor_vae1_forward.18} parent=5 // pred_region
      // Predicated region
      $region21: #{factor_vae1_forward.18} parent=19 // pred_check
        %p103 = pneg %p28
      $region22: #{factor_vae1_forward.18} parent=19 // pred_check_branch
        %105 = sbr.rel (%p103) target = $region24
      $region23: #{factor_vae1_forward.18} parent=19 // pred_region
        %s106 = smul.u32 32, %s8
        %p107 = scmp.lt.s32.totalorder %s106, 63
        %s108 = scalar_select %p107, %s106, 63
        %s109 = smul.addr %s108, 4
        %s110 = scalar_lea.vmem %s0, %s109
        %s111 = smul.u32 32, %s8
      $region24: #{factor_vae1_forward.18} parent=19 // pred_fallthru
        _
    $region20: #{factor_vae1_forward.18} parent=5 // pred_fallthru
      _
    %p112 = scmp.le.s32.totalorder 1, %s8
    %p113 = scmp.lt.s32.totalorder %s8, 3
    %p114 = pnand %p112, %p113
    %p115 = pneg %p114
    // Predicated region
    $region25: #{factor_vae1_forward.18} parent=5 // pred_check
      _
    $region26: #{factor_vae1_forward.18} parent=5 // pred_check_branch
      %117 = sbr.rel (%p114) target = $region28
    $region27: #{factor_vae1_forward.18} parent=5 // pred_region
      %s118 = ssub.s32 %s8, 1
      %s119 = smul.u32 32, %s13
      %p120 = scmp.lt.s32.totalorder %s119, 63
      %s121 = scalar_select %p120, %s119, 63
      %s122 = smul.addr %s121, 4
      %s123 = scalar_lea.vmem %s0, %s122
      %p124 = pneg %p34
      %p125 = pneg %p31
      %p126 = pneg %p55
      %p127 = pneg %p52
      %p128 = pneg %p81
      %p129 = pneg %p78
      %s130 = smul.u32 32, %s13
      %p131 = scmp.lt.s32.totalorder %s130, 63
      %s132 = scalar_select %p131, %s130, 63
      %s133 = smul.addr %s132, 4
      %s134 = smul.addr %s133, 8
      %s135 = scalar_lea.vmem %s2, %s134
      %s136 = smul.u32 32, %s13
      %p137 = scmp.lt.s32.totalorder %s136, 63
      %s138 = scalar_select %p137, %s136, 63
      %s139 = smul.addr %s138, 4
      %s140 = scalar_lea.vmem %s0, %s139
      %s141 = smul.u32 32, %s13
      %s142 = smul.u32 32, %s13
      %p143 = scmp.lt.s32.totalorder %s142, 63
      %s144 = scalar_select %p143, %s142, 63
      %s145 = smul.addr %s144, 4
      %s146 = smul.addr %s145, 8
      %s147 = scalar_lea.vmem %s2, %s146
      %s148 = smul.u32 32, %s13
      %v150 = vld [vmem:[%s140] sm:$0xf]
      %v151 = vld [vmem:[%s140 + $0x4] sm:$0xf]
      %v152 = vld [vmem:[%s140 + $0x8] sm:$0xf]
      %v153 = vld [vmem:[%s140 + $0xc] sm:$0xf]
      %v154 = vld [vmem:[%s140 + $0x10] sm:$0xf]
      %v155 = vld [vmem:[%s140 + $0x14] sm:$0xf]
      %v156 = vld [vmem:[%s140 + $0x18] sm:$0xf]
      %v157 = vld [vmem:[%s140 + $0x1c] sm:$0xf]
      %v158 = vld [vmem:[%s140 + $0x20] sm:$0xf]
      %v159 = vld [vmem:[%s140 + $0x24] sm:$0xf]
      %v160 = vld [vmem:[%s140 + $0x28] sm:$0xf]
      %v161 = vld [vmem:[%s140 + $0x2c] sm:$0xf]
      %v162 = vld [vmem:[%s140 + $0x30] sm:$0xf]
      %v163 = vld [vmem:[%s140 + $0x34] sm:$0xf]
      %v164 = vld [vmem:[%s140 + $0x38] sm:$0xf]
      %v165 = vld [vmem:[%s140 + $0x3c] sm:$0xf]
      %v166 = vld [vmem:[%s140 + $0x40] sm:$0xf]
      %v167 = vld [vmem:[%s140 + $0x44] sm:$0xf]
      %v168 = vld [vmem:[%s140 + $0x48] sm:$0xf]
      %v169 = vld [vmem:[%s140 + $0x4c] sm:$0xf]
      %v170 = vld [vmem:[%s140 + $0x50] sm:$0xf]
      %v171 = vld [vmem:[%s140 + $0x54] sm:$0xf]
      %v172 = vld [vmem:[%s140 + $0x58] sm:$0xf]
      %v173 = vld [vmem:[%s140 + $0x5c] sm:$0xf]
      %v174 = vld [vmem:[%s140 + $0x60] sm:$0xf]
      %v175 = vld [vmem:[%s140 + $0x64] sm:$0xf]
      %v176 = vld [vmem:[%s140 + $0x68] sm:$0xf]
      %v177 = vld [vmem:[%s140 + $0x6c] sm:$0xf]
      %v178 = vld [vmem:[%s140 + $0x70] sm:$0xf]
      %v179 = vld [vmem:[%s140 + $0x74] sm:$0xf]
      %v180 = vld [vmem:[%s140 + $0x78] sm:$0xf]
      %v181 = vld [vmem:[%s140 + $0x7c] sm:$0xf]
      %v182 = vld [vmem:[%s1] sm:$0xff]
      %v183 = vld [vmem:[%s1 + $0x8] sm:$0xff]
      %v184 = vld [vmem:[%s1 + $0x10] sm:$0xff]
      %v185 = vld [vmem:[%s1 + $0x18] sm:$0xff]
      %v186 = vld [vmem:[%s1 + $0x20] sm:$0xff]
      %v187 = vld [vmem:[%s1 + $0x28] sm:$0xff]
      %v188 = vld [vmem:[%s1 + $0x30] sm:$0xff]
      %v189 = vld [vmem:[%s1 + $0x38] sm:$0xff]
      %v222 = vunpack.c.l.b16 %v150
      %v223 = vunpack.c.l.b16 %v151
      %v224 = vunpack.c.l.b16 %v152
      %v225 = vunpack.c.l.b16 %v153
      %v226 = vunpack.c.l.b16 %v154
      %v227 = vunpack.c.l.b16 %v155
      %v228 = vunpack.c.l.b16 %v156
      %v229 = vunpack.c.l.b16 %v157
      %v230 = vunpack.c.l.b16 %v158
      %v231 = vunpack.c.l.b16 %v159
      %v232 = vunpack.c.l.b16 %v160
      %v233 = vunpack.c.l.b16 %v161
      %v234 = vunpack.c.l.b16 %v162
      %v235 = vunpack.c.l.b16 %v163
      %v236 = vunpack.c.l.b16 %v164
      %v237 = vunpack.c.l.b16 %v165
      %v238 = vunpack.c.l.b16 %v166
      %v239 = vunpack.c.l.b16 %v167
      %v240 = vunpack.c.l.b16 %v168
      %v241 = vunpack.c.l.b16 %v169
      %v242 = vunpack.c.l.b16 %v170
      %v243 = vunpack.c.l.b16 %v171
      %v244 = vunpack.c.l.b16 %v172
      %v245 = vunpack.c.l.b16 %v173
      %v246 = vunpack.c.l.b16 %v174
      %v247 = vunpack.c.l.b16 %v175
      %v248 = vunpack.c.l.b16 %v176
      %v249 = vunpack.c.l.b16 %v177
      %v250 = vunpack.c.l.b16 %v178
      %v251 = vunpack.c.l.b16 %v179
      %v252 = vunpack.c.l.b16 %v180
      %v253 = vunpack.c.l.b16 %v181
      %v254 = vpack.c.b16 %v223, %v222
      %v255 = vpack.c.b16 %v225, %v224
      %v256 = vpack.c.b16 %v227, %v226
      %v257 = vpack.c.b16 %v229, %v228
      %v258 = vpack.c.b16 %v231, %v230
      %v259 = vpack.c.b16 %v233, %v232
      %v260 = vpack.c.b16 %v235, %v234
      %v261 = vpack.c.b16 %v237, %v236
      %v262 = vpack.c.b16 %v239, %v238
      %v263 = vpack.c.b16 %v241, %v240
      %v264 = vpack.c.b16 %v243, %v242
      %v265 = vpack.c.b16 %v245, %v244
      %v266 = vpack.c.b16 %v247, %v246
      %v267 = vpack.c.b16 %v249, %v248
      %v268 = vpack.c.b16 %v251, %v250
      %v269 = vpack.c.b16 %v253, %v252
      %v278 = vunpack.c.l.b16 %v182
      %v279 = vunpack.c.h.b16 %v182
      %v280 = vunpack.c.l.b16 %v183
      %v281 = vunpack.c.h.b16 %v183
      %v282 = vunpack.c.l.b16 %v184
      %v283 = vunpack.c.h.b16 %v184
      %v284 = vunpack.c.l.b16 %v185
      %v285 = vunpack.c.h.b16 %v185
      %v286 = vunpack.c.l.b16 %v186
      %v287 = vunpack.c.h.b16 %v186
      %v288 = vunpack.c.l.b16 %v187
      %v289 = vunpack.c.h.b16 %v187
      %v290 = vunpack.c.l.b16 %v188
      %v291 = vunpack.c.h.b16 %v188
      %v292 = vunpack.c.l.b16 %v189
      %v293 = vunpack.c.h.b16 %v189
      %v294 = vpack.c.b16 %v282, %v278
      %v295 = vpack.c.b16 %v283, %v279
      %v296 = vpack.c.b16 %v284, %v280
      %v297 = vpack.c.b16 %v285, %v281
      %v298 = vpack.c.b16 %v290, %v286
      %v299 = vpack.c.b16 %v291, %v287
      %v300 = vpack.c.b16 %v292, %v288
      %v301 = vpack.c.b16 %v293, %v289
      %vm310 = vcmask 261120
      %v312 = vsel %vm310, %v254, 0
      %v315 = vsel %vm310, %v255, 0
      %v318 = vsel %vm310, %v256, 0
      %v321 = vsel %vm310, %v257, 0
      %v324 = vsel %vm310, %v258, 0
      %v327 = vsel %vm310, %v259, 0
      %v330 = vsel %vm310, %v260, 0
      %v333 = vsel %vm310, %v261, 0
      %v336 = vsel %vm310, %v262, 0
      %v339 = vsel %vm310, %v263, 0
      %v342 = vsel %vm310, %v264, 0
      %v345 = vsel %vm310, %v265, 0
      %v348 = vsel %vm310, %v266, 0
      %v351 = vsel %vm310, %v267, 0
      %v354 = vsel %vm310, %v268, 0
      %v357 = vsel %vm310, %v269, 0
      %359 = vmatpush.bf16.msra.mxu0 0
      %360 = vmatpush.bf16.msra.mxu0 0
      %361 = vmatpush.bf16.msra.mxu0 0
      %362 = vmatpush.bf16.msra.mxu0 0
      %363 = vmatpush.bf16.msra.mxu0 0
      %364 = vmatpush.bf16.msra.mxu0 0
      %365 = vmatpush.bf16.msra.mxu0 %v298
      %366 = vmatpush.bf16.msra.mxu0 %v294
      %367 = vmatmul.bf16.gmra.mxu0 %v312
      %v368 = vpop.f32.mrf.mxu0
      %v369 = vadd.f32 0.0, %v368
      %v370 = vpop.f32.mrf.mxu0
      %v371 = vadd.f32 0.0, %v370
      %372 = vmatmul.bf16.gmra.mxu0 %v315
      %v373 = vpop.f32.mrf.mxu0
      %v374 = vadd.f32 0.0, %v373
      %v375 = vpop.f32.mrf.mxu0
      %v376 = vadd.f32 0.0, %v375
      %377 = vmatmul.bf16.gmra.mxu0 %v318
      %v378 = vpop.f32.mrf.mxu0
      %v379 = vadd.f32 0.0, %v378
      %v380 = vpop.f32.mrf.mxu0
      %v381 = vadd.f32 0.0, %v380
      %382 = vmatmul.bf16.gmra.mxu0 %v321
      %v383 = vpop.f32.mrf.mxu0
      %v384 = vadd.f32 0.0, %v383
      %v385 = vpop.f32.mrf.mxu0
      %v386 = vadd.f32 0.0, %v385
      %387 = vmatmul.bf16.gmra.mxu0 %v324
      %v388 = vpop.f32.mrf.mxu0
      %v389 = vadd.f32 0.0, %v388
      %v390 = vpop.f32.mrf.mxu0
      %v391 = vadd.f32 0.0, %v390
      %392 = vmatmul.bf16.gmra.mxu0 %v327
      %v393 = vpop.f32.mrf.mxu0
      %v394 = vadd.f32 0.0, %v393
      %v395 = vpop.f32.mrf.mxu0
      %v396 = vadd.f32 0.0, %v395
      %397 = vmatmul.bf16.gmra.mxu0 %v330
      %v398 = vpop.f32.mrf.mxu0
      %v399 = vadd.f32 0.0, %v398
      %v400 = vpop.f32.mrf.mxu0
      %v401 = vadd.f32 0.0, %v400
      %402 = vmatmul.bf16.gmra.mxu0 %v333
      %v403 = vpop.f32.mrf.mxu0
      %v404 = vadd.f32 0.0, %v403
      %v405 = vpop.f32.mrf.mxu0
      %v406 = vadd.f32 0.0, %v405
      %407 = vmatmul.bf16.gmra.mxu0 %v336
      %v408 = vpop.f32.mrf.mxu0
      %v409 = vadd.f32 0.0, %v408
      %v410 = vpop.f32.mrf.mxu0
      %v411 = vadd.f32 0.0, %v410
      %412 = vmatmul.bf16.gmra.mxu0 %v339
      %v413 = vpop.f32.mrf.mxu0
      %v414 = vadd.f32 0.0, %v413
      %v415 = vpop.f32.mrf.mxu0
      %v416 = vadd.f32 0.0, %v415
      %417 = vmatmul.bf16.gmra.mxu0 %v342
      %v418 = vpop.f32.mrf.mxu0
      %v419 = vadd.f32 0.0, %v418
      %v420 = vpop.f32.mrf.mxu0
      %v421 = vadd.f32 0.0, %v420
      %422 = vmatmul.bf16.gmra.mxu0 %v345
      %v423 = vpop.f32.mrf.mxu0
      %v424 = vadd.f32 0.0, %v423
      %v425 = vpop.f32.mrf.mxu0
      %v426 = vadd.f32 0.0, %v425
      %427 = vmatmul.bf16.gmra.mxu0 %v348
      %v428 = vpop.f32.mrf.mxu0
      %v429 = vadd.f32 0.0, %v428
      %v430 = vpop.f32.mrf.mxu0
      %v431 = vadd.f32 0.0, %v430
      %432 = vmatmul.bf16.gmra.mxu0 %v351
      %v433 = vpop.f32.mrf.mxu0
      %v434 = vadd.f32 0.0, %v433
      %v435 = vpop.f32.mrf.mxu0
      %v436 = vadd.f32 0.0, %v435
      %437 = vmatmul.bf16.gmra.mxu0 %v354
      %v438 = vpop.f32.mrf.mxu0
      %v439 = vadd.f32 0.0, %v438
      %v440 = vpop.f32.mrf.mxu0
      %v441 = vadd.f32 0.0, %v440
      %442 = vmatmul.bf16.gmra.mxu0 %v357
      %v443 = vpop.f32.mrf.mxu0
      %v444 = vadd.f32 0.0, %v443
      %v445 = vpop.f32.mrf.mxu0
      %v446 = vadd.f32 0.0, %v445
      %447 = vdwg.mxu0
      %448 = vmatpush.bf16.msra.mxu0 0
      %449 = vmatpush.bf16.msra.mxu0 0
      %450 = vmatpush.bf16.msra.mxu0 0
      %451 = vmatpush.bf16.msra.mxu0 0
      %452 = vmatpush.bf16.msra.mxu0 0
      %453 = vmatpush.bf16.msra.mxu0 0
      %454 = vmatpush.bf16.msra.mxu0 %v299
      %455 = vmatpush.bf16.msra.mxu0 %v295
      %456 = vmatmul.bf16.gmra.mxu0 %v312
      %v457 = vpop.f32.mrf.mxu0
      %v458 = vadd.f32 0.0, %v457
      %v459 = vpop.f32.mrf.mxu0
      %v460 = vadd.f32 0.0, %v459
      %461 = vmatmul.bf16.gmra.mxu0 %v315
      %v462 = vpop.f32.mrf.mxu0
      %v463 = vadd.f32 0.0, %v462
      %v464 = vpop.f32.mrf.mxu0
      %v465 = vadd.f32 0.0, %v464
      %466 = vmatmul.bf16.gmra.mxu0 %v318
      %v467 = vpop.f32.mrf.mxu0
      %v468 = vadd.f32 0.0, %v467
      %v469 = vpop.f32.mrf.mxu0
      %v470 = vadd.f32 0.0, %v469
      %471 = vmatmul.bf16.gmra.mxu0 %v321
      %v472 = vpop.f32.mrf.mxu0
      %v473 = vadd.f32 0.0, %v472
      %v474 = vpop.f32.mrf.mxu0
      %v475 = vadd.f32 0.0, %v474
      %476 = vmatmul.bf16.gmra.mxu0 %v324
      %v477 = vpop.f32.mrf.mxu0
      %v478 = vadd.f32 0.0, %v477
      %v479 = vpop.f32.mrf.mxu0
      %v480 = vadd.f32 0.0, %v479
      %481 = vmatmul.bf16.gmra.mxu0 %v327
      %v482 = vpop.f32.mrf.mxu0
      %v483 = vadd.f32 0.0, %v482
      %v484 = vpop.f32.mrf.mxu0
      %v485 = vadd.f32 0.0, %v484
      %486 = vmatmul.bf16.gmra.mxu0 %v330
      %v487 = vpop.f32.mrf.mxu0
      %v488 = vadd.f32 0.0, %v487
      %v489 = vpop.f32.mrf.mxu0
      %v490 = vadd.f32 0.0, %v489
      %491 = vmatmul.bf16.gmra.mxu0 %v333
      %v492 = vpop.f32.mrf.mxu0
      %v493 = vadd.f32 0.0, %v492
      %v494 = vpop.f32.mrf.mxu0
      %v495 = vadd.f32 0.0, %v494
      %496 = vmatmul.bf16.gmra.mxu0 %v336
      %v497 = vpop.f32.mrf.mxu0
      %v498 = vadd.f32 0.0, %v497
      %v499 = vpop.f32.mrf.mxu0
      %v500 = vadd.f32 0.0, %v499
      %501 = vmatmul.bf16.gmra.mxu0 %v339
      %v502 = vpop.f32.mrf.mxu0
      %v503 = vadd.f32 0.0, %v502
      %v504 = vpop.f32.mrf.mxu0
      %v505 = vadd.f32 0.0, %v504
      %506 = vmatmul.bf16.gmra.mxu0 %v342
      %v507 = vpop.f32.mrf.mxu0
      %v508 = vadd.f32 0.0, %v507
      %v509 = vpop.f32.mrf.mxu0
      %v510 = vadd.f32 0.0, %v509
      %511 = vmatmul.bf16.gmra.mxu0 %v345
      %v512 = vpop.f32.mrf.mxu0
      %v513 = vadd.f32 0.0, %v512
      %v514 = vpop.f32.mrf.mxu0
      %v515 = vadd.f32 0.0, %v514
      %516 = vmatmul.bf16.gmra.mxu0 %v348
      %v517 = vpop.f32.mrf.mxu0
      %v518 = vadd.f32 0.0, %v517
      %v519 = vpop.f32.mrf.mxu0
      %v520 = vadd.f32 0.0, %v519
      %521 = vmatmul.bf16.gmra.mxu0 %v351
      %v522 = vpop.f32.mrf.mxu0
      %v523 = vadd.f32 0.0, %v522
      %v524 = vpop.f32.mrf.mxu0
      %v525 = vadd.f32 0.0, %v524
      %526 = vmatmul.bf16.gmra.mxu0 %v354
      %v527 = vpop.f32.mrf.mxu0
      %v528 = vadd.f32 0.0, %v527
      %v529 = vpop.f32.mrf.mxu0
      %v530 = vadd.f32 0.0, %v529
      %531 = vmatmul.bf16.gmra.mxu0 %v357
      %v532 = vpop.f32.mrf.mxu0
      %v533 = vadd.f32 0.0, %v532
      %v534 = vpop.f32.mrf.mxu0
      %v535 = vadd.f32 0.0, %v534
      %536 = vdwg.mxu0
      %537 = vmatpush.bf16.msra.mxu0 0
      %538 = vmatpush.bf16.msra.mxu0 0
      %539 = vmatpush.bf16.msra.mxu0 0
      %540 = vmatpush.bf16.msra.mxu0 0
      %541 = vmatpush.bf16.msra.mxu0 0
      %542 = vmatpush.bf16.msra.mxu0 0
      %543 = vmatpush.bf16.msra.mxu0 %v300
      %544 = vmatpush.bf16.msra.mxu0 %v296
      %545 = vmatmul.bf16.gmra.mxu0 %v312
      %v546 = vpop.f32.mrf.mxu0
      %v547 = vadd.f32 0.0, %v546
      %v548 = vpop.f32.mrf.mxu0
      %v549 = vadd.f32 0.0, %v548
      %550 = vmatmul.bf16.gmra.mxu0 %v315
      %v551 = vpop.f32.mrf.mxu0
      %v552 = vadd.f32 0.0, %v551
      %v553 = vpop.f32.mrf.mxu0
      %v554 = vadd.f32 0.0, %v553
      %555 = vmatmul.bf16.gmra.mxu0 %v318
      %v556 = vpop.f32.mrf.mxu0
      %v557 = vadd.f32 0.0, %v556
      %v558 = vpop.f32.mrf.mxu0
      %v559 = vadd.f32 0.0, %v558
      %560 = vmatmul.bf16.gmra.mxu0 %v321
      %v561 = vpop.f32.mrf.mxu0
      %v562 = vadd.f32 0.0, %v561
      %v563 = vpop.f32.mrf.mxu0
      %v564 = vadd.f32 0.0, %v563
      %565 = vmatmul.bf16.gmra.mxu0 %v324
      %v566 = vpop.f32.mrf.mxu0
      %v567 = vadd.f32 0.0, %v566
      %v568 = vpop.f32.mrf.mxu0
      %v569 = vadd.f32 0.0, %v568
      %570 = vmatmul.bf16.gmra.mxu0 %v327
      %v571 = vpop.f32.mrf.mxu0
      %v572 = vadd.f32 0.0, %v571
      %v573 = vpop.f32.mrf.mxu0
      %v574 = vadd.f32 0.0, %v573
      %575 = vmatmul.bf16.gmra.mxu0 %v330
      %v576 = vpop.f32.mrf.mxu0
      %v577 = vadd.f32 0.0, %v576
      %v578 = vpop.f32.mrf.mxu0
      %v579 = vadd.f32 0.0, %v578
      %580 = vmatmul.bf16.gmra.mxu0 %v333
      %v581 = vpop.f32.mrf.mxu0
      %v582 = vadd.f32 0.0, %v581
      %v583 = vpop.f32.mrf.mxu0
      %v584 = vadd.f32 0.0, %v583
      %585 = vmatmul.bf16.gmra.mxu0 %v336
      %v586 = vpop.f32.mrf.mxu0
      %v587 = vadd.f32 0.0, %v586
      %v588 = vpop.f32.mrf.mxu0
      %v589 = vadd.f32 0.0, %v588
      %590 = vmatmul.bf16.gmra.mxu0 %v339
      %v591 = vpop.f32.mrf.mxu0
      %v592 = vadd.f32 0.0, %v591
      %v593 = vpop.f32.mrf.mxu0
      %v594 = vadd.f32 0.0, %v593
      %595 = vmatmul.bf16.gmra.mxu0 %v342
      %v596 = vpop.f32.mrf.mxu0
      %v597 = vadd.f32 0.0, %v596
      %v598 = vpop.f32.mrf.mxu0
      %v599 = vadd.f32 0.0, %v598
      %600 = vmatmul.bf16.gmra.mxu0 %v345
      %v601 = vpop.f32.mrf.mxu0
      %v602 = vadd.f32 0.0, %v601
      %v603 = vpop.f32.mrf.mxu0
      %v604 = vadd.f32 0.0, %v603
      %605 = vmatmul.bf16.gmra.mxu0 %v348
      %v606 = vpop.f32.mrf.mxu0
      %v607 = vadd.f32 0.0, %v606
      %v608 = vpop.f32.mrf.mxu0
      %v609 = vadd.f32 0.0, %v608
      %610 = vmatmul.bf16.gmra.mxu0 %v351
      %v611 = vpop.f32.mrf.mxu0
      %v612 = vadd.f32 0.0, %v611
      %v613 = vpop.f32.mrf.mxu0
      %v614 = vadd.f32 0.0, %v613
      %615 = vmatmul.bf16.gmra.mxu0 %v354
      %v616 = vpop.f32.mrf.mxu0
      %v617 = vadd.f32 0.0, %v616
      %v618 = vpop.f32.mrf.mxu0
      %v619 = vadd.f32 0.0, %v618
      %620 = vmatmul.bf16.gmra.mxu0 %v357
      %v621 = vpop.f32.mrf.mxu0
      %v622 = vadd.f32 0.0, %v621
      %v623 = vpop.f32.mrf.mxu0
      %v624 = vadd.f32 0.0, %v623
      %625 = vdwg.mxu0
      %626 = vmatpush.bf16.msra.mxu0 0
      %627 = vmatpush.bf16.msra.mxu0 0
      %628 = vmatpush.bf16.msra.mxu0 0
      %629 = vmatpush.bf16.msra.mxu0 0
      %630 = vmatpush.bf16.msra.mxu0 0
      %631 = vmatpush.bf16.msra.mxu0 0
      %632 = vmatpush.bf16.msra.mxu0 %v301
      %633 = vmatpush.bf16.msra.mxu0 %v297
      %634 = vmatmul.bf16.gmra.mxu0 %v312
      %v635 = vpop.f32.mrf.mxu0
      %v636 = vadd.f32 0.0, %v635
      %v637 = vpop.f32.mrf.mxu0
      %v638 = vadd.f32 0.0, %v637
      %639 = vmatmul.bf16.gmra.mxu0 %v315
      %v640 = vpop.f32.mrf.mxu0
      %v641 = vadd.f32 0.0, %v640
      %v642 = vpop.f32.mrf.mxu0
      %v643 = vadd.f32 0.0, %v642
      %644 = vmatmul.bf16.gmra.mxu0 %v318
      %v645 = vpop.f32.mrf.mxu0
      %v646 = vadd.f32 0.0, %v645
      %v647 = vpop.f32.mrf.mxu0
      %v648 = vadd.f32 0.0, %v647
      %649 = vmatmul.bf16.gmra.mxu0 %v321
      %v650 = vpop.f32.mrf.mxu0
      %v651 = vadd.f32 0.0, %v650
      %v652 = vpop.f32.mrf.mxu0
      %v653 = vadd.f32 0.0, %v652
      %654 = vmatmul.bf16.gmra.mxu0 %v324
      %v655 = vpop.f32.mrf.mxu0
      %v656 = vadd.f32 0.0, %v655
      %v657 = vpop.f32.mrf.mxu0
      %v658 = vadd.f32 0.0, %v657
      %659 = vmatmul.bf16.gmra.mxu0 %v327
      %v660 = vpop.f32.mrf.mxu0
      %v661 = vadd.f32 0.0, %v660
      %v662 = vpop.f32.mrf.mxu0
      %v663 = vadd.f32 0.0, %v662
      %664 = vmatmul.bf16.gmra.mxu0 %v330
      %v665 = vpop.f32.mrf.mxu0
      %v666 = vadd.f32 0.0, %v665
      %v667 = vpop.f32.mrf.mxu0
      %v668 = vadd.f32 0.0, %v667
      %669 = vmatmul.bf16.gmra.mxu0 %v333
      %v670 = vpop.f32.mrf.mxu0
      %v671 = vadd.f32 0.0, %v670
      %v672 = vpop.f32.mrf.mxu0
      %v673 = vadd.f32 0.0, %v672
      %674 = vmatmul.bf16.gmra.mxu0 %v336
      %v675 = vpop.f32.mrf.mxu0
      %v676 = vadd.f32 0.0, %v675
      %v677 = vpop.f32.mrf.mxu0
      %v678 = vadd.f32 0.0, %v677
      %679 = vmatmul.bf16.gmra.mxu0 %v339
      %v680 = vpop.f32.mrf.mxu0
      %v681 = vadd.f32 0.0, %v680
      %v682 = vpop.f32.mrf.mxu0
      %v683 = vadd.f32 0.0, %v682
      %684 = vmatmul.bf16.gmra.mxu0 %v342
      %v685 = vpop.f32.mrf.mxu0
      %v686 = vadd.f32 0.0, %v685
      %v687 = vpop.f32.mrf.mxu0
      %v688 = vadd.f32 0.0, %v687
      %689 = vmatmul.bf16.gmra.mxu0 %v345
      %v690 = vpop.f32.mrf.mxu0
      %v691 = vadd.f32 0.0, %v690
      %v692 = vpop.f32.mrf.mxu0
      %v693 = vadd.f32 0.0, %v692
      %694 = vmatmul.bf16.gmra.mxu0 %v348
      %v695 = vpop.f32.mrf.mxu0
      %v696 = vadd.f32 0.0, %v695
      %v697 = vpop.f32.mrf.mxu0
      %v698 = vadd.f32 0.0, %v697
      %699 = vmatmul.bf16.gmra.mxu0 %v351
      %v700 = vpop.f32.mrf.mxu0
      %v701 = vadd.f32 0.0, %v700
      %v702 = vpop.f32.mrf.mxu0
      %v703 = vadd.f32 0.0, %v702
      %704 = vmatmul.bf16.gmra.mxu0 %v354
      %v705 = vpop.f32.mrf.mxu0
      %v706 = vadd.f32 0.0, %v705
      %v707 = vpop.f32.mrf.mxu0
      %v708 = vadd.f32 0.0, %v707
      %709 = vmatmul.bf16.gmra.mxu0 %v357
      %v710 = vpop.f32.mrf.mxu0
      %v711 = vadd.f32 0.0, %v710
      %v712 = vpop.f32.mrf.mxu0
      %v713 = vadd.f32 0.0, %v712
      %714 = vdwg.mxu0
      %715 = vst [vmem:[%s147] sm:$0xff] %v369
      %716 = vst [vmem:[%s147 + $0x8] sm:$0xff] %v458
      %717 = vst [vmem:[%s147 + $0x10] sm:$0xff] %v547
      %718 = vst [vmem:[%s147 + $0x18] sm:$0xff] %v636
      %719 = vst [vmem:[%s147 + $0x20] sm:$0xff] %v371
      %720 = vst [vmem:[%s147 + $0x28] sm:$0xff] %v460
      %721 = vst [vmem:[%s147 + $0x30] sm:$0xff] %v549
      %722 = vst [vmem:[%s147 + $0x38] sm:$0xff] %v638
      %723 = vst [vmem:[%s147 + $0x40] sm:$0xff] %v374
      %724 = vst [vmem:[%s147 + $0x48] sm:$0xff] %v463
      %725 = vst [vmem:[%s147 + $0x50] sm:$0xff] %v552
      %726 = vst [vmem:[%s147 + $0x58] sm:$0xff] %v641
      %727 = vst [vmem:[%s147 + $0x60] sm:$0xff] %v376
      %728 = vst [vmem:[%s147 + $0x68] sm:$0xff] %v465
      %729 = vst [vmem:[%s147 + $0x70] sm:$0xff] %v554
      %730 = vst [vmem:[%s147 + $0x78] sm:$0xff] %v643
      %731 = vst [vmem:[%s147 + $0x80] sm:$0xff] %v379
      %732 = vst [vmem:[%s147 + $0x88] sm:$0xff] %v468
      %733 = vst [vmem:[%s147 + $0x90] sm:$0xff] %v557
      %734 = vst [vmem:[%s147 + $0x98] sm:$0xff] %v646
      %735 = vst [vmem:[%s147 + $0xa0] sm:$0xff] %v381
      %736 = vst [vmem:[%s147 + $0xa8] sm:$0xff] %v470
      %737 = vst [vmem:[%s147 + $0xb0] sm:$0xff] %v559
      %738 = vst [vmem:[%s147 + $0xb8] sm:$0xff] %v648
      %739 = vst [vmem:[%s147 + $0xc0] sm:$0xff] %v384
      %740 = vst [vmem:[%s147 + $0xc8] sm:$0xff] %v473
      %741 = vst [vmem:[%s147 + $0xd0] sm:$0xff] %v562
      %742 = vst [vmem:[%s147 + $0xd8] sm:$0xff] %v651
      %743 = vst [vmem:[%s147 + $0xe0] sm:$0xff] %v386
      %744 = vst [vmem:[%s147 + $0xe8] sm:$0xff] %v475
      %745 = vst [vmem:[%s147 + $0xf0] sm:$0xff] %v564
      %746 = vst [vmem:[%s147 + $0xf8] sm:$0xff] %v653
      %747 = vst [vmem:[%s147 + $0x100] sm:$0xff] %v389
      %748 = vst [vmem:[%s147 + $0x108] sm:$0xff] %v478
      %749 = vst [vmem:[%s147 + $0x110] sm:$0xff] %v567
      %750 = vst [vmem:[%s147 + $0x118] sm:$0xff] %v656
      %751 = vst [vmem:[%s147 + $0x120] sm:$0xff] %v391
      %752 = vst [vmem:[%s147 + $0x128] sm:$0xff] %v480
      %753 = vst [vmem:[%s147 + $0x130] sm:$0xff] %v569
      %754 = vst [vmem:[%s147 + $0x138] sm:$0xff] %v658
      %755 = vst [vmem:[%s147 + $0x140] sm:$0xff] %v394
      %756 = vst [vmem:[%s147 + $0x148] sm:$0xff] %v483
      %757 = vst [vmem:[%s147 + $0x150] sm:$0xff] %v572
      %758 = vst [vmem:[%s147 + $0x158] sm:$0xff] %v661
      %759 = vst [vmem:[%s147 + $0x160] sm:$0xff] %v396
      %760 = vst [vmem:[%s147 + $0x168] sm:$0xff] %v485
      %761 = vst [vmem:[%s147 + $0x170] sm:$0xff] %v574
      %762 = vst [vmem:[%s147 + $0x178] sm:$0xff] %v663
      %763 = vst [vmem:[%s147 + $0x180] sm:$0xff] %v399
      %764 = vst [vmem:[%s147 + $0x188] sm:$0xff] %v488
      %765 = vst [vmem:[%s147 + $0x190] sm:$0xff] %v577
      %766 = vst [vmem:[%s147 + $0x198] sm:$0xff] %v666
      %767 = vst [vmem:[%s147 + $0x1a0] sm:$0xff] %v401
      %768 = vst [vmem:[%s147 + $0x1a8] sm:$0xff] %v490
      %769 = vst [vmem:[%s147 + $0x1b0] sm:$0xff] %v579
      %770 = vst [vmem:[%s147 + $0x1b8] sm:$0xff] %v668
      %771 = vst [vmem:[%s147 + $0x1c0] sm:$0xff] %v404
      %772 = vst [vmem:[%s147 + $0x1c8] sm:$0xff] %v493
      %773 = vst [vmem:[%s147 + $0x1d0] sm:$0xff] %v582
      %774 = vst [vmem:[%s147 + $0x1d8] sm:$0xff] %v671
      %775 = vst [vmem:[%s147 + $0x1e0] sm:$0xff] %v406
      %776 = vst [vmem:[%s147 + $0x1e8] sm:$0xff] %v495
      %777 = vst [vmem:[%s147 + $0x1f0] sm:$0xff] %v584
      %778 = vst [vmem:[%s147 + $0x1f8] sm:$0xff] %v673
      %779 = vst [vmem:[%s147 + $0x200] sm:$0xff] %v409
      %780 = vst [vmem:[%s147 + $0x208] sm:$0xff] %v498
      %781 = vst [vmem:[%s147 + $0x210] sm:$0xff] %v587
      %782 = vst [vmem:[%s147 + $0x218] sm:$0xff] %v676
      %783 = vst [vmem:[%s147 + $0x220] sm:$0xff] %v411
      %784 = vst [vmem:[%s147 + $0x228] sm:$0xff] %v500
      %785 = vst [vmem:[%s147 + $0x230] sm:$0xff] %v589
      %786 = vst [vmem:[%s147 + $0x238] sm:$0xff] %v678
      %787 = vst [vmem:[%s147 + $0x240] sm:$0xff] %v414
      %788 = vst [vmem:[%s147 + $0x248] sm:$0xff] %v503
      %789 = vst [vmem:[%s147 + $0x250] sm:$0xff] %v592
      %790 = vst [vmem:[%s147 + $0x258] sm:$0xff] %v681
      %791 = vst [vmem:[%s147 + $0x260] sm:$0xff] %v416
      %792 = vst [vmem:[%s147 + $0x268] sm:$0xff] %v505
      %793 = vst [vmem:[%s147 + $0x270] sm:$0xff] %v594
      %794 = vst [vmem:[%s147 + $0x278] sm:$0xff] %v683
      %795 = vst [vmem:[%s147 + $0x280] sm:$0xff] %v419
      %796 = vst [vmem:[%s147 + $0x288] sm:$0xff] %v508
      %797 = vst [vmem:[%s147 + $0x290] sm:$0xff] %v597
      %798 = vst [vmem:[%s147 + $0x298] sm:$0xff] %v686
      %799 = vst [vmem:[%s147 + $0x2a0] sm:$0xff] %v421
      %800 = vst [vmem:[%s147 + $0x2a8] sm:$0xff] %v510
      %801 = vst [vmem:[%s147 + $0x2b0] sm:$0xff] %v599
      %802 = vst [vmem:[%s147 + $0x2b8] sm:$0xff] %v688
      %803 = vst [vmem:[%s147 + $0x2c0] sm:$0xff] %v424
      %804 = vst [vmem:[%s147 + $0x2c8] sm:$0xff] %v513
      %805 = vst [vmem:[%s147 + $0x2d0] sm:$0xff] %v602
      %806 = vst [vmem:[%s147 + $0x2d8] sm:$0xff] %v691
      %807 = vst [vmem:[%s147 + $0x2e0] sm:$0xff] %v426
      %808 = vst [vmem:[%s147 + $0x2e8] sm:$0xff] %v515
      %809 = vst [vmem:[%s147 + $0x2f0] sm:$0xff] %v604
      %810 = vst [vmem:[%s147 + $0x2f8] sm:$0xff] %v693
      %811 = vst [vmem:[%s147 + $0x300] sm:$0xff] %v429
      %812 = vst [vmem:[%s147 + $0x308] sm:$0xff] %v518
      %813 = vst [vmem:[%s147 + $0x310] sm:$0xff] %v607
      %814 = vst [vmem:[%s147 + $0x318] sm:$0xff] %v696
      %815 = vst [vmem:[%s147 + $0x320] sm:$0xff] %v431
      %816 = vst [vmem:[%s147 + $0x328] sm:$0xff] %v520
      %817 = vst [vmem:[%s147 + $0x330] sm:$0xff] %v609
      %818 = vst [vmem:[%s147 + $0x338] sm:$0xff] %v698
      %819 = vst [vmem:[%s147 + $0x340] sm:$0xff] %v434
      %820 = vst [vmem:[%s147 + $0x348] sm:$0xff] %v523
      %821 = vst [vmem:[%s147 + $0x350] sm:$0xff] %v612
      %822 = vst [vmem:[%s147 + $0x358] sm:$0xff] %v701
      %823 = vst [vmem:[%s147 + $0x360] sm:$0xff] %v436
      %824 = vst [vmem:[%s147 + $0x368] sm:$0xff] %v525
      %825 = vst [vmem:[%s147 + $0x370] sm:$0xff] %v614
      %826 = vst [vmem:[%s147 + $0x378] sm:$0xff] %v703
      %827 = vst [vmem:[%s147 + $0x380] sm:$0xff] %v439
      %828 = vst [vmem:[%s147 + $0x388] sm:$0xff] %v528
      %829 = vst [vmem:[%s147 + $0x390] sm:$0xff] %v617
      %830 = vst [vmem:[%s147 + $0x398] sm:$0xff] %v706
      %831 = vst [vmem:[%s147 + $0x3a0] sm:$0xff] %v441
      %832 = vst [vmem:[%s147 + $0x3a8] sm:$0xff] %v530
      %833 = vst [vmem:[%s147 + $0x3b0] sm:$0xff] %v619
      %834 = vst [vmem:[%s147 + $0x3b8] sm:$0xff] %v708
      %835 = vst [vmem:[%s147 + $0x3c0] sm:$0xff] %v444
      %836 = vst [vmem:[%s147 + $0x3c8] sm:$0xff] %v533
      %837 = vst [vmem:[%s147 + $0x3d0] sm:$0xff] %v622
      %838 = vst [vmem:[%s147 + $0x3d8] sm:$0xff] %v711
      %839 = vst [vmem:[%s147 + $0x3e0] sm:$0xff] %v446
      %840 = vst [vmem:[%s147 + $0x3e8] sm:$0xff] %v535
      %841 = vst [vmem:[%s147 + $0x3f0] sm:$0xff] %v624
      %842 = vst [vmem:[%s147 + $0x3f8] sm:$0xff] %v713
      %s843 = smul.u32 32, %s13
      %p844 = scmp.lt.s32.totalorder %s843, 63
      %s845 = scalar_select %p844, %s843, 63
      %s846 = smul.addr %s845, 4
      %s847 = smul.addr %s846, 8
      %s848 = scalar_lea.vmem %s2, %s847
      // Predicated region
      $region29: #{factor_vae1_forward.18} parent=27 // pred_check
        %p849 = pneg %p78
      $region30: #{factor_vae1_forward.18} parent=27 // pred_check_branch
        %851 = sbr.rel (%p849) target = $region32
      $region31: #{factor_vae1_forward.18} parent=27 // pred_region
        %s852 = smul.u32 32, %s13
      $region32: #{factor_vae1_forward.18} parent=27 // pred_fallthru
        _
    $region28: #{factor_vae1_forward.18} parent=5 // pred_fallthru
      _
    %p853 = scmp.le.s32.totalorder 2, %s8
    // Predicated region
    $region33: #{factor_vae1_forward.18} parent=5 // pred_check
      %p854 = pneg %p853
    $region34: #{factor_vae1_forward.18} parent=5 // pred_check_branch
      %856 = sbr.rel (%p854) target = $region36
    $region35: #{factor_vae1_forward.18} parent=5 // pred_region
      %s857 = ssub.s32 %s8, 2
      // Predicated region
      $region37: #{factor_vae1_forward.18} parent=35 // pred_check
        %p858 = pneg %p84
      $region38: #{factor_vae1_forward.18} parent=35 // pred_check_branch
        %860 = sbr.rel (%p858) target = $region40
      $region39: #{factor_vae1_forward.18} parent=35 // pred_region
        %s861 = smul.u32 32, %s14
        %p862 = scmp.lt.s32.totalorder %s861, 63
        %s863 = scalar_select %p862, %s861, 63
        %s864 = smul.addr %s863, 4
        %s865 = smul.addr %s864, 8
        %s866 = scalar_lea.vmem %s2, %s865
      $region40: #{factor_vae1_forward.18} parent=35 // pred_fallthru
        _
    $region36: #{factor_vae1_forward.18} parent=5 // pred_fallthru
      _
  $region6: #{factor_vae1_forward.18} parent=0 // loop_footer
    %s12 = sadd.s32 1, %s8
  $region7: #{factor_vae1_forward.18} parent=0 // loop_footer_branch
    %7 = sbr.rel target = $region3
  $region8: #{factor_vae1_forward.18} parent=0 // loop_exit
    _

// kernel: factor_vae1_forward.19
$region0: #{factor_vae1_forward.19}
  #allocation0 [shape = 'u32[]', space=smem, size = 0x4, offset = 0x4, fixed_abs, tag = 'smem constant byte address 0x4 - core index']
  #allocation1 [shape = 'u32[72,128]{1,0:T(1,128)}', space=vmem, size = 0x9000, scoped, tag = 'internal scratch']
  %s0 = inlined_call_operand.vmem [shape: bf16[2048,32], index: 0, kind: input, shape index: {}]
  %s1 = inlined_call_operand.vmem [shape: bf16[32,16], index: 1, kind: input, shape index: {}]
  %s2 = inlined_call_operand.vmem [shape: f32[2048,16], index: 2, kind: output, shape index: {}]
  %s3 = sld [smem:[#allocation0]]
  $region41: #{factor_vae1_forward.19} parent=0
    _
  %s5 = ssub.s32 1, %s3
  %s6 = scalar_select 0, %s5, %s3
  loop: start=0, step=1, limit=6
  $region2: #{factor_vae1_forward.19} parent=0 // loop_pre_header
    _
  $region3: #{factor_vae1_forward.19} parent=0 // loop_header
    %s8 = sphi 0, %s12
    %p9 = scmp.ge.s32.totalorder %s8, 6
    %s18 = sphi 0, %s20
    %s21 = sphi 0, %s18
    %s22 = sphi 0, %s21
    %s38 = sphi 0, %s22
    %s42 = sphi 0, %s42
    %s44 = sphi 0, %s42
    %s45 = sphi 0, %s44
    %s59 = sphi 0, %s45
    %s65 = sphi 0, %s67
    %s68 = sphi 0, %s65
    %s69 = sphi 0, %s68
    %s85 = sphi 0, %s69
  $region4: #{factor_vae1_forward.19} parent=0 // loop_header_branch
    %11 = sbr.rel (%p9) target = $region8
  $region5: #{factor_vae1_forward.19} parent=0 // loop_body
    %s13 = ssub.s32 %s8, 1
    %s14 = ssub.s32 %s8, 2
    %s15 = sadd.s32 %s8, 1
    %s16 = ssub.s32 %s8, %s15
    %p17 = scmp.eq.s32.totalorder %s16, 0
    %s19 = sadd.s32 %s18, 1
    %s20 = scalar_select %p17, %s18, %s19
    %p23 = pneg %p17
    %p24 = scmp.eq.s32.totalorder %s8, 3
    %p25 = por %p23, %p24
    %p26 = scmp.ne.s32.totalorder %s18, %s21
    %p27 = scmp.eq.s32.totalorder %s8, 0
    %p28 = por %p26, %p27
    %p29 = scmp.ne.s32.totalorder %s18, %s21
    %p30 = scmp.eq.s32.totalorder %s13, 3
    %p31 = por %p29, %p30
    %p32 = scmp.ne.s32.totalorder %s21, %s22
    %p33 = scmp.eq.s32.totalorder %s13, 0
    %p34 = por %p32, %p33
    %p35 = scmp.ne.s32.totalorder %s21, %s22
    %p36 = scmp.eq.s32.totalorder %s14, 3
    %p37 = por %p35, %p36
    %p39 = scmp.ne.s32.totalorder %s22, %s38
    %p40 = scmp.eq.s32.totalorder %s14, 0
    %p41 = por %p39, %p40
    %s43 = sadd.s32 %s42, 1
    %p46 = scmp.eq.s32.totalorder %s8, 3
    %p47 = scmp.ne.s32.totalorder %s42, %s44
    %p48 = scmp.eq.s32.totalorder %s8, 0
    %p49 = por %p47, %p48
    %p50 = scmp.ne.s32.totalorder %s42, %s44
    %p51 = scmp.eq.s32.totalorder %s13, 3
    %p52 = por %p50, %p51
    %p53 = scmp.ne.s32.totalorder %s44, %s45
    %p54 = scmp.eq.s32.totalorder %s13, 0
    %p55 = por %p53, %p54
    %p56 = scmp.ne.s32.totalorder %s44, %s45
    %p57 = scmp.eq.s32.totalorder %s14, 3
    %p58 = por %p56, %p57
    %p60 = scmp.ne.s32.totalorder %s45, %s59
    %p61 = scmp.eq.s32.totalorder %s14, 0
    %p62 = por %p60, %p61
    %s63 = ssub.s32 %s8, %s15
    %p64 = scmp.eq.s32.totalorder %s63, 0
    %s66 = sadd.s32 %s65, 1
    %s67 = scalar_select %p64, %s65, %s66
    %p70 = pneg %p64
    %p71 = scmp.eq.s32.totalorder %s8, 3
    %p72 = por %p70, %p71
    %p73 = scmp.ne.s32.totalorder %s65, %s68
    %p74 = scmp.eq.s32.totalorder %s8, 0
    %p75 = por %p73, %p74
    %p76 = scmp.ne.s32.totalorder %s65, %s68
    %p77 = scmp.eq.s32.totalorder %s13, 3
    %p78 = por %p76, %p77
    %p79 = scmp.ne.s32.totalorder %s68, %s69
    %p80 = scmp.eq.s32.totalorder %s13, 0
    %p81 = por %p79, %p80
    %p82 = scmp.ne.s32.totalorder %s68, %s69
    %p83 = scmp.eq.s32.totalorder %s14, 3
    %p84 = por %p82, %p83
    %p86 = scmp.ne.s32.totalorder %s69, %s85
    %p87 = scmp.eq.s32.totalorder %s14, 0
    %p88 = por %p86, %p87
    %p89 = scmp.le.s32.totalorder 1, %s8
    %p90 = scmp.lt.s32.totalorder %s8, 5
    %p91 = pnand %p89, %p90
    %p92 = pneg %p91
    // Predicated region
    $region9: #{factor_vae1_forward.19} parent=5 // pred_check
      _
    $region10: #{factor_vae1_forward.19} parent=5 // pred_check_branch
      %94 = sbr.rel (%p91) target = $region12
    $region11: #{factor_vae1_forward.19} parent=5 // pred_region
      %s95 = ssub.s32 %s8, 1
      // Predicated region
      $region13: #{factor_vae1_forward.19} parent=11 // pred_check
        %p96 = pneg %p55
      $region14: #{factor_vae1_forward.19} parent=11 // pred_check_branch
        %98 = sbr.rel (%p96) target = $region16
      $region15: #{factor_vae1_forward.19} parent=11 // pred_region
        _
      $region16: #{factor_vae1_forward.19} parent=11 // pred_fallthru
        _
    $region12: #{factor_vae1_forward.19} parent=5 // pred_fallthru
      _
    %p99 = scmp.lt.s32.totalorder %s8, 4
    // Predicated region
    $region17: #{factor_vae1_forward.19} parent=5 // pred_check
      %p100 = pneg %p99
    $region18: #{factor_vae1_forward.19} parent=5 // pred_check_branch
      %102 = sbr.rel (%p100) target = $region20
    $region19: #{factor_vae1_forward.19} parent=5 // pred_region
      // Predicated region
      $region21: #{factor_vae1_forward.19} parent=19 // pred_check
        %p103 = pneg %p28
      $region22: #{factor_vae1_forward.19} parent=19 // pred_check_branch
        %105 = sbr.rel (%p103) target = $region24
      $region23: #{factor_vae1_forward.19} parent=19 // pred_region
        %s106 = smul.u32 64, %s8
        %p107 = scmp.lt.s32.totalorder %s106, 255
        %s108 = scalar_select %p107, %s106, 255
        %s109 = smul.addr %s108, 4
        %s110 = scalar_lea.vmem %s0, %s109
        %s111 = smul.u32 64, %s8
      $region24: #{factor_vae1_forward.19} parent=19 // pred_fallthru
        _
    $region20: #{factor_vae1_forward.19} parent=5 // pred_fallthru
      _
    %p112 = scmp.le.s32.totalorder 1, %s8
    %p113 = scmp.lt.s32.totalorder %s8, 5
    %p114 = pnand %p112, %p113
    %p115 = pneg %p114
    // Predicated region
    $region25: #{factor_vae1_forward.19} parent=5 // pred_check
      _
    $region26: #{factor_vae1_forward.19} parent=5 // pred_check_branch
      %117 = sbr.rel (%p114) target = $region28
    $region27: #{factor_vae1_forward.19} parent=5 // pred_region
      %s118 = ssub.s32 %s8, 1
      %s119 = smul.u32 64, %s13
      %p120 = scmp.lt.s32.totalorder %s119, 255
      %s121 = scalar_select %p120, %s119, 255
      %s122 = smul.addr %s121, 4
      %s123 = scalar_lea.vmem %s0, %s122
      %p124 = pneg %p34
      %p125 = pneg %p31
      %p126 = pneg %p55
      %p127 = pneg %p52
      %p128 = pneg %p81
      %p129 = pneg %p78
      %s130 = smul.u32 64, %s13
      %p131 = scmp.lt.s32.totalorder %s130, 255
      %s132 = scalar_select %p131, %s130, 255
      %s133 = smul.addr %s132, 8
      %s134 = scalar_lea.vmem %s2, %s133
      %s135 = smul.u32 64, %s13
      %p136 = scmp.lt.s32.totalorder %s135, 255
      %s137 = scalar_select %p136, %s135, 255
      %s138 = smul.addr %s137, 4
      %s139 = scalar_lea.vmem %s0, %s138
      %s140 = smul.u32 64, %s13
      %s141 = smul.u32 64, %s13
      %p142 = scmp.lt.s32.totalorder %s141, 255
      %s143 = scalar_select %p142, %s141, 255
      %s144 = smul.addr %s143, 8
      %s145 = scalar_lea.vmem %s2, %s144
      %s146 = smul.u32 64, %s13
      %v148 = vld [vmem:[%s139] sm:$0xf]
      %v149 = vld [vmem:[%s139 + $0x4] sm:$0xf]
      %v150 = vld [vmem:[%s139 + $0x8] sm:$0xf]
      %v151 = vld [vmem:[%s139 + $0xc] sm:$0xf]
      %v152 = vld [vmem:[%s139 + $0x10] sm:$0xf]
      %v153 = vld [vmem:[%s139 + $0x14] sm:$0xf]
      %v154 = vld [vmem:[%s139 + $0x18] sm:$0xf]
      %v155 = vld [vmem:[%s139 + $0x1c] sm:$0xf]
      %v156 = vld [vmem:[%s139 + $0x20] sm:$0xf]
      %v157 = vld [vmem:[%s139 + $0x24] sm:$0xf]
      %v158 = vld [vmem:[%s139 + $0x28] sm:$0xf]
      %v159 = vld [vmem:[%s139 + $0x2c] sm:$0xf]
      %v160 = vld [vmem:[%s139 + $0x30] sm:$0xf]
      %v161 = vld [vmem:[%s139 + $0x34] sm:$0xf]
      %v162 = vld [vmem:[%s139 + $0x38] sm:$0xf]
      %v163 = vld [vmem:[%s139 + $0x3c] sm:$0xf]
      %v164 = vld [vmem:[%s139 + $0x40] sm:$0xf]
      %v165 = vld [vmem:[%s139 + $0x44] sm:$0xf]
      %v166 = vld [vmem:[%s139 + $0x48] sm:$0xf]
      %v167 = vld [vmem:[%s139 + $0x4c] sm:$0xf]
      %v168 = vld [vmem:[%s139 + $0x50] sm:$0xf]
      %v169 = vld [vmem:[%s139 + $0x54] sm:$0xf]
      %v170 = vld [vmem:[%s139 + $0x58] sm:$0xf]
      %v171 = vld [vmem:[%s139 + $0x5c] sm:$0xf]
      %v172 = vld [vmem:[%s139 + $0x60] sm:$0xf]
      %v173 = vld [vmem:[%s139 + $0x64] sm:$0xf]
      %v174 = vld [vmem:[%s139 + $0x68] sm:$0xf]
      %v175 = vld [vmem:[%s139 + $0x6c] sm:$0xf]
      %v176 = vld [vmem:[%s139 + $0x70] sm:$0xf]
      %v177 = vld [vmem:[%s139 + $0x74] sm:$0xf]
      %v178 = vld [vmem:[%s139 + $0x78] sm:$0xf]
      %v179 = vld [vmem:[%s139 + $0x7c] sm:$0xf]
      %v180 = vld [vmem:[%s139 + $0x80] sm:$0xf]
      %v181 = vld [vmem:[%s139 + $0x84] sm:$0xf]
      %v182 = vld [vmem:[%s139 + $0x88] sm:$0xf]
      %v183 = vld [vmem:[%s139 + $0x8c] sm:$0xf]
      %v184 = vld [vmem:[%s139 + $0x90] sm:$0xf]
      %v185 = vld [vmem:[%s139 + $0x94] sm:$0xf]
      %v186 = vld [vmem:[%s139 + $0x98] sm:$0xf]
      %v187 = vld [vmem:[%s139 + $0x9c] sm:$0xf]
      %v188 = vld [vmem:[%s139 + $0xa0] sm:$0xf]
      %v189 = vld [vmem:[%s139 + $0xa4] sm:$0xf]
      %v190 = vld [vmem:[%s139 + $0xa8] sm:$0xf]
      %v191 = vld [vmem:[%s139 + $0xac] sm:$0xf]
      %v192 = vld [vmem:[%s139 + $0xb0] sm:$0xf]
      %v193 = vld [vmem:[%s139 + $0xb4] sm:$0xf]
      %v194 = vld [vmem:[%s139 + $0xb8] sm:$0xf]
      %v195 = vld [vmem:[%s139 + $0xbc] sm:$0xf]
      %v196 = vld [vmem:[%s139 + $0xc0] sm:$0xf]
      %v197 = vld [vmem:[%s139 + $0xc4] sm:$0xf]
      %v198 = vld [vmem:[%s139 + $0xc8] sm:$0xf]
      %v199 = vld [vmem:[%s139 + $0xcc] sm:$0xf]
      %v200 = vld [vmem:[%s139 + $0xd0] sm:$0xf]
      %v201 = vld [vmem:[%s139 + $0xd4] sm:$0xf]
      %v202 = vld [vmem:[%s139 + $0xd8] sm:$0xf]
      %v203 = vld [vmem:[%s139 + $0xdc] sm:$0xf]
      %v204 = vld [vmem:[%s139 + $0xe0] sm:$0xf]
      %v205 = vld [vmem:[%s139 + $0xe4] sm:$0xf]
      %v206 = vld [vmem:[%s139 + $0xe8] sm:$0xf]
      %v207 = vld [vmem:[%s139 + $0xec] sm:$0xf]
      %v208 = vld [vmem:[%s139 + $0xf0] sm:$0xf]
      %v209 = vld [vmem:[%s139 + $0xf4] sm:$0xf]
      %v210 = vld [vmem:[%s139 + $0xf8] sm:$0xf]
      %v211 = vld [vmem:[%s139 + $0xfc] sm:$0xf]
      %v212 = vld [vmem:[%s1] sm:$0xf]
      %v213 = vld [vmem:[%s1 + $0x4] sm:$0xf]
      %v214 = vld [vmem:[%s1 + $0x8] sm:$0xf]
      %v215 = vld [vmem:[%s1 + $0xc] sm:$0xf]
      %v280 = vunpack.c.l.b16 %v148
      %v281 = vunpack.c.l.b16 %v149
      %v282 = vunpack.c.l.b16 %v150
      %v283 = vunpack.c.l.b16 %v151
      %v284 = vunpack.c.l.b16 %v152
      %v285 = vunpack.c.l.b16 %v153
      %v286 = vunpack.c.l.b16 %v154
      %v287 = vunpack.c.l.b16 %v155
      %v288 = vunpack.c.l.b16 %v156
      %v289 = vunpack.c.l.b16 %v157
      %v290 = vunpack.c.l.b16 %v158
      %v291 = vunpack.c.l.b16 %v159
      %v292 = vunpack.c.l.b16 %v160
      %v293 = vunpack.c.l.b16 %v161
      %v294 = vunpack.c.l.b16 %v162
      %v295 = vunpack.c.l.b16 %v163
      %v296 = vunpack.c.l.b16 %v164
      %v297 = vunpack.c.l.b16 %v165
      %v298 = vunpack.c.l.b16 %v166
      %v299 = vunpack.c.l.b16 %v167
      %v300 = vunpack.c.l.b16 %v168
      %v301 = vunpack.c.l.b16 %v169
      %v302 = vunpack.c.l.b16 %v170
      %v303 = vunpack.c.l.b16 %v171
      %v304 = vunpack.c.l.b16 %v172
      %v305 = vunpack.c.l.b16 %v173
      %v306 = vunpack.c.l.b16 %v174
      %v307 = vunpack.c.l.b16 %v175
      %v308 = vunpack.c.l.b16 %v176
      %v309 = vunpack.c.l.b16 %v177
      %v310 = vunpack.c.l.b16 %v178
      %v311 = vunpack.c.l.b16 %v179
      %v312 = vunpack.c.l.b16 %v180
      %v313 = vunpack.c.l.b16 %v181
      %v314 = vunpack.c.l.b16 %v182
      %v315 = vunpack.c.l.b16 %v183
      %v316 = vunpack.c.l.b16 %v184
      %v317 = vunpack.c.l.b16 %v185
      %v318 = vunpack.c.l.b16 %v186
      %v319 = vunpack.c.l.b16 %v187
      %v320 = vunpack.c.l.b16 %v188
      %v321 = vunpack.c.l.b16 %v189
      %v322 = vunpack.c.l.b16 %v190
      %v323 = vunpack.c.l.b16 %v191
      %v324 = vunpack.c.l.b16 %v192
      %v325 = vunpack.c.l.b16 %v193
      %v326 = vunpack.c.l.b16 %v194
      %v327 = vunpack.c.l.b16 %v195
      %v328 = vunpack.c.l.b16 %v196
      %v329 = vunpack.c.l.b16 %v197
      %v330 = vunpack.c.l.b16 %v198
      %v331 = vunpack.c.l.b16 %v199
      %v332 = vunpack.c.l.b16 %v200
      %v333 = vunpack.c.l.b16 %v201
      %v334 = vunpack.c.l.b16 %v202
      %v335 = vunpack.c.l.b16 %v203
      %v336 = vunpack.c.l.b16 %v204
      %v337 = vunpack.c.l.b16 %v205
      %v338 = vunpack.c.l.b16 %v206
      %v339 = vunpack.c.l.b16 %v207
      %v340 = vunpack.c.l.b16 %v208
      %v341 = vunpack.c.l.b16 %v209
      %v342 = vunpack.c.l.b16 %v210
      %v343 = vunpack.c.l.b16 %v211
      %v344 = vpack.c.b16 %v281, %v280
      %v345 = vpack.c.b16 %v283, %v282
      %v346 = vpack.c.b16 %v285, %v284
      %v347 = vpack.c.b16 %v287, %v286
      %v348 = vpack.c.b16 %v289, %v288
      %v349 = vpack.c.b16 %v291, %v290
      %v350 = vpack.c.b16 %v293, %v292
      %v351 = vpack.c.b16 %v295, %v294
      %v352 = vpack.c.b16 %v297, %v296
      %v353 = vpack.c.b16 %v299, %v298
      %v354 = vpack.c.b16 %v301, %v300
      %v355 = vpack.c.b16 %v303, %v302
      %v356 = vpack.c.b16 %v305, %v304
      %v357 = vpack.c.b16 %v307, %v306
      %v358 = vpack.c.b16 %v309, %v308
      %v359 = vpack.c.b16 %v311, %v310
      %v360 = vpack.c.b16 %v313, %v312
      %v361 = vpack.c.b16 %v315, %v314
      %v362 = vpack.c.b16 %v317, %v316
      %v363 = vpack.c.b16 %v319, %v318
      %v364 = vpack.c.b16 %v321, %v320
      %v365 = vpack.c.b16 %v323, %v322
      %v366 = vpack.c.b16 %v325, %v324
      %v367 = vpack.c.b16 %v327, %v326
      %v368 = vpack.c.b16 %v329, %v328
      %v369 = vpack.c.b16 %v331, %v330
      %v370 = vpack.c.b16 %v333, %v332
      %v371 = vpack.c.b16 %v335, %v334
      %v372 = vpack.c.b16 %v337, %v336
      %v373 = vpack.c.b16 %v339, %v338
      %v374 = vpack.c.b16 %v341, %v340
      %v375 = vpack.c.b16 %v343, %v342
      %v380 = vunpack.c.l.b16 %v212
      %v381 = vunpack.c.l.b16 %v213
      %v382 = vunpack.c.l.b16 %v214
      %v383 = vunpack.c.l.b16 %v215
      %v384 = vpack.c.b16 %v381, %v380
      %v385 = vpack.c.b16 %v383, %v382
      %vm388 = vcmask 261120
      %v390 = vsel %vm388, %v344, 0
      %v393 = vsel %vm388, %v345, 0
      %v396 = vsel %vm388, %v346, 0
      %v399 = vsel %vm388, %v347, 0
      %v402 = vsel %vm388, %v348, 0
      %v405 = vsel %vm388, %v349, 0
      %v408 = vsel %vm388, %v350, 0
      %v411 = vsel %vm388, %v351, 0
      %v414 = vsel %vm388, %v352, 0
      %v417 = vsel %vm388, %v353, 0
      %v420 = vsel %vm388, %v354, 0
      %v423 = vsel %vm388, %v355, 0
      %v426 = vsel %vm388, %v356, 0
      %v429 = vsel %vm388, %v357, 0
      %v432 = vsel %vm388, %v358, 0
      %v435 = vsel %vm388, %v359, 0
      %v438 = vsel %vm388, %v360, 0
      %v441 = vsel %vm388, %v361, 0
      %v444 = vsel %vm388, %v362, 0
      %v447 = vsel %vm388, %v363, 0
      %v450 = vsel %vm388, %v364, 0
      %v453 = vsel %vm388, %v365, 0
      %v456 = vsel %vm388, %v366, 0
      %v459 = vsel %vm388, %v367, 0
      %v462 = vsel %vm388, %v368, 0
      %v465 = vsel %vm388, %v369, 0
      %v468 = vsel %vm388, %v370, 0
      %v471 = vsel %vm388, %v371, 0
      %v474 = vsel %vm388, %v372, 0
      %v477 = vsel %vm388, %v373, 0
      %v480 = vsel %vm388, %v374, 0
      %v483 = vsel %vm388, %v375, 0
      %485 = vmatpush.bf16.msra.mxu0 0
      %486 = vmatpush.bf16.msra.mxu0 0
      %487 = vmatpush.bf16.msra.mxu0 0
      %488 = vmatpush.bf16.msra.mxu0 0
      %489 = vmatpush.bf16.msra.mxu0 0
      %490 = vmatpush.bf16.msra.mxu0 0
      %491 = vmatpush.bf16.msra.mxu0 %v385
      %492 = vmatpush.bf16.msra.mxu0 %v384
      %493 = vmatmul.bf16.gmra.mxu0 %v390
      %v494 = vpop.f32.mrf.mxu0
      %v495 = vadd.f32 0.0, %v494
      %v496 = vpop.f32.mrf.mxu0
      %v497 = vadd.f32 0.0, %v496
      %498 = vmatmul.bf16.gmra.mxu0 %v393
      %v499 = vpop.f32.mrf.mxu0
      %v500 = vadd.f32 0.0, %v499
      %v501 = vpop.f32.mrf.mxu0
      %v502 = vadd.f32 0.0, %v501
      %503 = vmatmul.bf16.gmra.mxu0 %v396
      %v504 = vpop.f32.mrf.mxu0
      %v505 = vadd.f32 0.0, %v504
      %v506 = vpop.f32.mrf.mxu0
      %v507 = vadd.f32 0.0, %v506
      %508 = vmatmul.bf16.gmra.mxu0 %v399
      %v509 = vpop.f32.mrf.mxu0
      %v510 = vadd.f32 0.0, %v509
      %v511 = vpop.f32.mrf.mxu0
      %v512 = vadd.f32 0.0, %v511
      %513 = vmatmul.bf16.gmra.mxu0 %v402
      %v514 = vpop.f32.mrf.mxu0
      %v515 = vadd.f32 0.0, %v514
      %v516 = vpop.f32.mrf.mxu0
      %v517 = vadd.f32 0.0, %v516
      %518 = vmatmul.bf16.gmra.mxu0 %v405
      %v519 = vpop.f32.mrf.mxu0
      %v520 = vadd.f32 0.0, %v519
      %v521 = vpop.f32.mrf.mxu0
      %v522 = vadd.f32 0.0, %v521
      %523 = vmatmul.bf16.gmra.mxu0 %v408
      %v524 = vpop.f32.mrf.mxu0
      %v525 = vadd.f32 0.0, %v524
      %v526 = vpop.f32.mrf.mxu0
      %v527 = vadd.f32 0.0, %v526
      %528 = vmatmul.bf16.gmra.mxu0 %v411
      %v529 = vpop.f32.mrf.mxu0
      %v530 = vadd.f32 0.0, %v529
      %v531 = vpop.f32.mrf.mxu0
      %v532 = vadd.f32 0.0, %v531
      %533 = vmatmul.bf16.gmra.mxu0 %v414
      %v534 = vpop.f32.mrf.mxu0
      %v535 = vadd.f32 0.0, %v534
      %v536 = vpop.f32.mrf.mxu0
      %v537 = vadd.f32 0.0, %v536
      %538 = vmatmul.bf16.gmra.mxu0 %v417
      %v539 = vpop.f32.mrf.mxu0
      %v540 = vadd.f32 0.0, %v539
      %v541 = vpop.f32.mrf.mxu0
      %v542 = vadd.f32 0.0, %v541
      %543 = vmatmul.bf16.gmra.mxu0 %v420
      %v544 = vpop.f32.mrf.mxu0
      %v545 = vadd.f32 0.0, %v544
      %v546 = vpop.f32.mrf.mxu0
      %v547 = vadd.f32 0.0, %v546
      %548 = vmatmul.bf16.gmra.mxu0 %v423
      %v549 = vpop.f32.mrf.mxu0
      %v550 = vadd.f32 0.0, %v549
      %v551 = vpop.f32.mrf.mxu0
      %v552 = vadd.f32 0.0, %v551
      %553 = vmatmul.bf16.gmra.mxu0 %v426
      %v554 = vpop.f32.mrf.mxu0
      %v555 = vadd.f32 0.0, %v554
      %v556 = vpop.f32.mrf.mxu0
      %v557 = vadd.f32 0.0, %v556
      %558 = vmatmul.bf16.gmra.mxu0 %v429
      %v559 = vpop.f32.mrf.mxu0
      %v560 = vadd.f32 0.0, %v559
      %v561 = vpop.f32.mrf.mxu0
      %v562 = vadd.f32 0.0, %v561
      %563 = vmatmul.bf16.gmra.mxu0 %v432
      %v564 = vpop.f32.mrf.mxu0
      %v565 = vadd.f32 0.0, %v564
      %v566 = vpop.f32.mrf.mxu0
      %v567 = vadd.f32 0.0, %v566
      %568 = vmatmul.bf16.gmra.mxu0 %v435
      %v569 = vpop.f32.mrf.mxu0
      %v570 = vadd.f32 0.0, %v569
      %v571 = vpop.f32.mrf.mxu0
      %v572 = vadd.f32 0.0, %v571
      %573 = vmatmul.bf16.gmra.mxu0 %v438
      %v574 = vpop.f32.mrf.mxu0
      %v575 = vadd.f32 0.0, %v574
      %v576 = vpop.f32.mrf.mxu0
      %v577 = vadd.f32 0.0, %v576
      %578 = vmatmul.bf16.gmra.mxu0 %v441
      %v579 = vpop.f32.mrf.mxu0
      %v580 = vadd.f32 0.0, %v579
      %v581 = vpop.f32.mrf.mxu0
      %v582 = vadd.f32 0.0, %v581
      %583 = vmatmul.bf16.gmra.mxu0 %v444
      %v584 = vpop.f32.mrf.mxu0
      %v585 = vadd.f32 0.0, %v584
      %v586 = vpop.f32.mrf.mxu0
      %v587 = vadd.f32 0.0, %v586
      %588 = vmatmul.bf16.gmra.mxu0 %v447
      %v589 = vpop.f32.mrf.mxu0
      %v590 = vadd.f32 0.0, %v589
      %v591 = vpop.f32.mrf.mxu0
      %v592 = vadd.f32 0.0, %v591
      %593 = vmatmul.bf16.gmra.mxu0 %v450
      %v594 = vpop.f32.mrf.mxu0
      %v595 = vadd.f32 0.0, %v594
      %v596 = vpop.f32.mrf.mxu0
      %v597 = vadd.f32 0.0, %v596
      %598 = vmatmul.bf16.gmra.mxu0 %v453
      %v599 = vpop.f32.mrf.mxu0
      %v600 = vadd.f32 0.0, %v599
      %v601 = vpop.f32.mrf.mxu0
      %v602 = vadd.f32 0.0, %v601
      %603 = vmatmul.bf16.gmra.mxu0 %v456
      %v604 = vpop.f32.mrf.mxu0
      %v605 = vadd.f32 0.0, %v604
      %v606 = vpop.f32.mrf.mxu0
      %v607 = vadd.f32 0.0, %v606
      %608 = vmatmul.bf16.gmra.mxu0 %v459
      %v609 = vpop.f32.mrf.mxu0
      %v610 = vadd.f32 0.0, %v609
      %v611 = vpop.f32.mrf.mxu0
      %v612 = vadd.f32 0.0, %v611
      %613 = vmatmul.bf16.gmra.mxu0 %v462
      %v614 = vpop.f32.mrf.mxu0
      %v615 = vadd.f32 0.0, %v614
      %v616 = vpop.f32.mrf.mxu0
      %v617 = vadd.f32 0.0, %v616
      %618 = vmatmul.bf16.gmra.mxu0 %v465
      %v619 = vpop.f32.mrf.mxu0
      %v620 = vadd.f32 0.0, %v619
      %v621 = vpop.f32.mrf.mxu0
      %v622 = vadd.f32 0.0, %v621
      %623 = vmatmul.bf16.gmra.mxu0 %v468
      %v624 = vpop.f32.mrf.mxu0
      %v625 = vadd.f32 0.0, %v624
      %v626 = vpop.f32.mrf.mxu0
      %v627 = vadd.f32 0.0, %v626
      %628 = vmatmul.bf16.gmra.mxu0 %v471
      %v629 = vpop.f32.mrf.mxu0
      %v630 = vadd.f32 0.0, %v629
      %v631 = vpop.f32.mrf.mxu0
      %v632 = vadd.f32 0.0, %v631
      %633 = vmatmul.bf16.gmra.mxu0 %v474
      %v634 = vpop.f32.mrf.mxu0
      %v635 = vadd.f32 0.0, %v634
      %v636 = vpop.f32.mrf.mxu0
      %v637 = vadd.f32 0.0, %v636
      %638 = vmatmul.bf16.gmra.mxu0 %v477
      %v639 = vpop.f32.mrf.mxu0
      %v640 = vadd.f32 0.0, %v639
      %v641 = vpop.f32.mrf.mxu0
      %v642 = vadd.f32 0.0, %v641
      %643 = vmatmul.bf16.gmra.mxu0 %v480
      %v644 = vpop.f32.mrf.mxu0
      %v645 = vadd.f32 0.0, %v644
      %v646 = vpop.f32.mrf.mxu0
      %v647 = vadd.f32 0.0, %v646
      %648 = vmatmul.bf16.gmra.mxu0 %v483
      %v649 = vpop.f32.mrf.mxu0
      %v650 = vadd.f32 0.0, %v649
      %v651 = vpop.f32.mrf.mxu0
      %v652 = vadd.f32 0.0, %v651
      %653 = vdwg.mxu0
      %vm654 = vcmask 130048
      %655 = vst.msk [vmem:[%s145] sm:$0xff] %vm654, %v495
      %656 = vst.msk [vmem:[%s145 + $0x8] sm:$0xff] %vm654, %v497
      %657 = vst.msk [vmem:[%s145 + $0x10] sm:$0xff] %vm654, %v500
      %658 = vst.msk [vmem:[%s145 + $0x18] sm:$0xff] %vm654, %v502
      %659 = vst.msk [vmem:[%s145 + $0x20] sm:$0xff] %vm654, %v505
      %660 = vst.msk [vmem:[%s145 + $0x28] sm:$0xff] %vm654, %v507
      %661 = vst.msk [vmem:[%s145 + $0x30] sm:$0xff] %vm654, %v510
      %662 = vst.msk [vmem:[%s145 + $0x38] sm:$0xff] %vm654, %v512
      %663 = vst.msk [vmem:[%s145 + $0x40] sm:$0xff] %vm654, %v515
      %664 = vst.msk [vmem:[%s145 + $0x48] sm:$0xff] %vm654, %v517
      %665 = vst.msk [vmem:[%s145 + $0x50] sm:$0xff] %vm654, %v520
      %666 = vst.msk [vmem:[%s145 + $0x58] sm:$0xff] %vm654, %v522
      %667 = vst.msk [vmem:[%s145 + $0x60] sm:$0xff] %vm654, %v525
      %668 = vst.msk [vmem:[%s145 + $0x68] sm:$0xff] %vm654, %v527
      %669 = vst.msk [vmem:[%s145 + $0x70] sm:$0xff] %vm654, %v530
      %670 = vst.msk [vmem:[%s145 + $0x78] sm:$0xff] %vm654, %v532
      %671 = vst.msk [vmem:[%s145 + $0x80] sm:$0xff] %vm654, %v535
      %672 = vst.msk [vmem:[%s145 + $0x88] sm:$0xff] %vm654, %v537
      %673 = vst.msk [vmem:[%s145 + $0x90] sm:$0xff] %vm654, %v540
      %674 = vst.msk [vmem:[%s145 + $0x98] sm:$0xff] %vm654, %v542
      %675 = vst.msk [vmem:[%s145 + $0xa0] sm:$0xff] %vm654, %v545
      %676 = vst.msk [vmem:[%s145 + $0xa8] sm:$0xff] %vm654, %v547
      %677 = vst.msk [vmem:[%s145 + $0xb0] sm:$0xff] %vm654, %v550
      %678 = vst.msk [vmem:[%s145 + $0xb8] sm:$0xff] %vm654, %v552
      %679 = vst.msk [vmem:[%s145 + $0xc0] sm:$0xff] %vm654, %v555
      %680 = vst.msk [vmem:[%s145 + $0xc8] sm:$0xff] %vm654, %v557
      %681 = vst.msk [vmem:[%s145 + $0xd0] sm:$0xff] %vm654, %v560
      %682 = vst.msk [vmem:[%s145 + $0xd8] sm:$0xff] %vm654, %v562
      %683 = vst.msk [vmem:[%s145 + $0xe0] sm:$0xff] %vm654, %v565
      %684 = vst.msk [vmem:[%s145 + $0xe8] sm:$0xff] %vm654, %v567
      %685 = vst.msk [vmem:[%s145 + $0xf0] sm:$0xff] %vm654, %v570
      %686 = vst.msk [vmem:[%s145 + $0xf8] sm:$0xff] %vm654, %v572
      %687 = vst.msk [vmem:[%s145 + $0x100] sm:$0xff] %vm654, %v575
      %688 = vst.msk [vmem:[%s145 + $0x108] sm:$0xff] %vm654, %v577
      %689 = vst.msk [vmem:[%s145 + $0x110] sm:$0xff] %vm654, %v580
      %690 = vst.msk [vmem:[%s145 + $0x118] sm:$0xff] %vm654, %v582
      %691 = vst.msk [vmem:[%s145 + $0x120] sm:$0xff] %vm654, %v585
      %692 = vst.msk [vmem:[%s145 + $0x128] sm:$0xff] %vm654, %v587
      %693 = vst.msk [vmem:[%s145 + $0x130] sm:$0xff] %vm654, %v590
      %694 = vst.msk [vmem:[%s145 + $0x138] sm:$0xff] %vm654, %v592
      %695 = vst.msk [vmem:[%s145 + $0x140] sm:$0xff] %vm654, %v595
      %696 = vst.msk [vmem:[%s145 + $0x148] sm:$0xff] %vm654, %v597
      %697 = vst.msk [vmem:[%s145 + $0x150] sm:$0xff] %vm654, %v600
      %698 = vst.msk [vmem:[%s145 + $0x158] sm:$0xff] %vm654, %v602
      %699 = vst.msk [vmem:[%s145 + $0x160] sm:$0xff] %vm654, %v605
      %700 = vst.msk [vmem:[%s145 + $0x168] sm:$0xff] %vm654, %v607
      %701 = vst.msk [vmem:[%s145 + $0x170] sm:$0xff] %vm654, %v610
      %702 = vst.msk [vmem:[%s145 + $0x178] sm:$0xff] %vm654, %v612
      %703 = vst.msk [vmem:[%s145 + $0x180] sm:$0xff] %vm654, %v615
      %704 = vst.msk [vmem:[%s145 + $0x188] sm:$0xff] %vm654, %v617
      %705 = vst.msk [vmem:[%s145 + $0x190] sm:$0xff] %vm654, %v620
      %706 = vst.msk [vmem:[%s145 + $0x198] sm:$0xff] %vm654, %v622
      %707 = vst.msk [vmem:[%s145 + $0x1a0] sm:$0xff] %vm654, %v625
      %708 = vst.msk [vmem:[%s145 + $0x1a8] sm:$0xff] %vm654, %v627
      %709 = vst.msk [vmem:[%s145 + $0x1b0] sm:$0xff] %vm654, %v630
      %710 = vst.msk [vmem:[%s145 + $0x1b8] sm:$0xff] %vm654, %v632
      %711 = vst.msk [vmem:[%s145 + $0x1c0] sm:$0xff] %vm654, %v635
      %712 = vst.msk [vmem:[%s145 + $0x1c8] sm:$0xff] %vm654, %v637
      %713 = vst.msk [vmem:[%s145 + $0x1d0] sm:$0xff] %vm654, %v640
      %714 = vst.msk [vmem:[%s145 + $0x1d8] sm:$0xff] %vm654, %v642
      %715 = vst.msk [vmem:[%s145 + $0x1e0] sm:$0xff] %vm654, %v645
      %716 = vst.msk [vmem:[%s145 + $0x1e8] sm:$0xff] %vm654, %v647
      %717 = vst.msk [vmem:[%s145 + $0x1f0] sm:$0xff] %vm654, %v650
      %718 = vst.msk [vmem:[%s145 + $0x1f8] sm:$0xff] %vm654, %v652
      %s719 = smul.u32 64, %s13
      %p720 = scmp.lt.s32.totalorder %s719, 255
      %s721 = scalar_select %p720, %s719, 255
      %s722 = smul.addr %s721, 8
      %s723 = scalar_lea.vmem %s2, %s722
      // Predicated region
      $region29: #{factor_vae1_forward.19} parent=27 // pred_check
        %p724 = pneg %p78
      $region30: #{factor_vae1_forward.19} parent=27 // pred_check_branch
        %726 = sbr.rel (%p724) target = $region32
      $region31: #{factor_vae1_forward.19} parent=27 // pred_region
        %s727 = smul.u32 64, %s13
      $region32: #{factor_vae1_forward.19} parent=27 // pred_fallthru
        _
    $region28: #{factor_vae1_forward.19} parent=5 // pred_fallthru
      _
    %p728 = scmp.le.s32.totalorder 2, %s8
    // Predicated region
    $region33: #{factor_vae1_forward.19} parent=5 // pred_check
      %p729 = pneg %p728
    $region34: #{factor_vae1_forward.19} parent=5 // pred_check_branch
      %731 = sbr.rel (%p729) target = $region36
    $region35: #{factor_vae1_forward.19} parent=5 // pred_region
      %s732 = ssub.s32 %s8, 2
      // Predicated region
      $region37: #{factor_vae1_forward.19} parent=35 // pred_check
        %p733 = pneg %p84
      $region38: #{factor_vae1_forward.19} parent=35 // pred_check_branch
        %735 = sbr.rel (%p733) target = $region40
      $region39: #{factor_vae1_forward.19} parent=35 // pred_region
        %s736 = smul.u32 64, %s14
        %p737 = scmp.lt.s32.totalorder %s736, 255
        %s738 = scalar_select %p737, %s736, 255
        %s739 = smul.addr %s738, 8
        %s740 = scalar_lea.vmem %s2, %s739
      $region40: #{factor_vae1_forward.19} parent=35 // pred_fallthru
        _
    $region36: #{factor_vae1_forward.19} parent=5 // pred_fallthru
      _
  $region6: #{factor_vae1_forward.19} parent=0 // loop_footer
    %s12 = sadd.s32 1, %s8
  $region7: #{factor_vae1_forward.19} parent=0 // loop_footer_branch
    %7 = sbr.rel target = $region3
  $region8: #{factor_vae1_forward.19} parent=0 // loop_exit
    _

</llo_original>
